<compile_context>
chip_gen: v7x
topology: tpu7x:2x2x1
jax: 0.10.0
libtpu: 0.0.40
codegen_flags: <defaults>
</compile_context>

<pallas_src>
import functools

import jax
import jax.numpy as jnp
from jax.experimental import pallas as pl
from jax.experimental.pallas import tpu as pltpu


def _round_up(x, m):
    return (x + m - 1) // m * m


def lstm_block_kernel(xp_ref, len_ref, whh_ref, hseq_ref, cseq_ref,
                      h_scr, c_scr):
    """One grid step = one (batch_block, time_block) tile of the recurrence.

    xp_ref  : (Tb, Bblk, 4*Hp) bf16  pre-activations x@W_ih + b (hoisted)
    len_ref : (Bblk, 1)        i32   per-example lengths
    whh_ref : (Hp, 4*Hp)       f32   recurrent weight, whole-array VMEM resident
    hseq_ref/cseq_ref : (Bblk, Tb, Hp) bf16 outputs (batch-major, no post-transpose)
    h_scr/c_scr       : (Bblk, Hp)   f32  carried state across time blocks
    """
    tb = pl.program_id(1)
    t_block = xp_ref.shape[0]
    bblk, hp = h_scr.shape

    @pl.when(tb == 0)
    def _init():
        h_scr[...] = jnp.zeros_like(h_scr)
        c_scr[...] = jnp.zeros_like(c_scr)

    lens = len_ref[...]                       # (Bblk, 1) int32
    whh = whh_ref[...]                        # (Hp, 4Hp) f32, loaded once per block
    h = h_scr[...]                            # (Bblk, Hp) f32
    c = c_scr[...]
    base_t = tb * t_block

    # Statically unrolled time loop: static time index i keeps the batch-major
    # output store a static-offset (lane-dense) vst and lets the LLO scheduler
    # overlap MXU / VPU / EUP slots across steps.
    for i in range(t_block):
        # f32 x f32 dot (portable; avoids the unsupported bf16 x bf16 -> f32 path).
        gates = xp_ref[i].astype(jnp.float32) + jnp.dot(
            h, whh, preferred_element_type=jnp.float32)
        # Hp is a multiple of 128 -> every gate slice is lane-aligned.
        i_g = jax.nn.sigmoid(gates[:, 0 * hp:1 * hp])
        f_g = jax.nn.sigmoid(gates[:, 1 * hp:2 * hp])
        g_g = jnp.tanh(gates[:, 2 * hp:3 * hp])
        o_g = jax.nn.sigmoid(gates[:, 3 * hp:4 * hp])
        c_new = f_g * c + i_g * g_g
        h_new = o_g * jnp.tanh(c_new)

        # One scalar compare + one hoisted broadcast, reused by both selects.
        upd = jnp.broadcast_to((base_t + i) < lens, (bblk, hp))
        h = jnp.where(upd, h_new, h)
        c = jnp.where(upd, c_new, c)

        # Batch-major, bf16 stores (Hp lanes dense) -> no wrapper transpose pass.
        hseq_ref[:, i, :] = h.astype(hseq_ref.dtype)
        cseq_ref[:, i, :] = c.astype(cseq_ref.dtype)

    h_scr[...] = h
    c_scr[...] = c


def lstm_pallas(x_proj, lens, whh, *, t_block, batch_blocks):
    """x_proj: (Tp, Bp, 4*Hp) bf16 pre-activations (time-major, bias folded in),
       lens:   (Bp, 1) int32,
       whh:    (Hp, 4*Hp) f32 (W_hh transposed + per-gate padded).
       Returns (Bp, Tp, Hp) bf16 h- and c-sequences, batch-major."""
    tp, bp, g4 = x_proj.shape
    hp = whh.shape[0]
    assert g4 == 4 * hp and hp % 128 == 0
    assert tp % t_block == 0 and t_block % 8 == 0 and bp % 8 == 0

    # Split the batch across TensorCores only when requested (multi-TC parts)
    # and when the halves stay sublane-aligned. Single-TC (v5e/v6e): no split.
    if batch_blocks > 1 and bp % (8 * batch_blocks) != 0:
        batch_blocks = 1
    b_block = bp // batch_blocks
    nb, nt = batch_blocks, tp // t_block

    # Explicit VMEM budget (review feedback): double-buffered bf16 input block
    # + 2x double-buffered bf16 output blocks + one resident f32 W_hh + state.
    vmem_needed = (
        2 * t_block * b_block * g4 * 2          # x_proj blocks (bf16, 2 bufs)
        + 2 * 2 * t_block * b_block * hp * 2    # h/c out blocks (bf16, 2 bufs each)
        + hp * g4 * 4                           # resident W_hh (f32, single copy)
        + 2 * b_block * hp * 4                  # h/c scratch (f32)
        + 2 * b_block * 128 * 4)                # lens blocks (padded estimate)
    vmem_limit = max(32 << 20, min(int(vmem_needed * 1.25) + (2 << 20), 100 << 20))

    grid_spec = pltpu.PrefetchScalarGridSpec(
        num_scalar_prefetch=0,
        grid=(nb, nt),                          # sequential (state) axis last
        in_specs=[
            pl.BlockSpec((t_block, b_block, g4), lambda b, t: (t, b, 0)),
            pl.BlockSpec((b_block, 1), lambda b, t: (b, 0)),
            # Recurrent weight: whole array resident in VMEM, single copy,
            # never re-DMA'd / double-buffered across grid steps.
            pl.BlockSpec(memory_space=pltpu.MemorySpace.VMEM),
        ],
        out_specs=[
            pl.BlockSpec((b_block, t_block, hp), lambda b, t: (b, t, 0)),
            pl.BlockSpec((b_block, t_block, hp), lambda b, t: (b, t, 0)),
        ],
        scratch_shapes=[
            pltpu.VMEM((b_block, hp), jnp.float32),   # carried h
            pltpu.VMEM((b_block, hp), jnp.float32),   # carried c
        ],
    )

    out_shapes = (
        jax.ShapeDtypeStruct((bp, tp, hp), jnp.bfloat16),
        jax.ShapeDtypeStruct((bp, tp, hp), jnp.bfloat16),
    )

    return pl.pallas_call(
        lstm_block_kernel,
        out_shape=out_shapes,
        grid_spec=grid_spec,
        compiler_params=pltpu.CompilerParams(
            dimension_semantics=("parallel", "arbitrary"),
            vmem_limit_bytes=vmem_limit),
    )(x_proj, lens, whh)


def _input_projection(emb, w_ih, b_ih, b_hh):
    """Hoisted, non-recurrent part: one big (B*T, E) x (E, 4H) f32 matmul,
    emitted time-major (T, B, 4H) and cast to bf16 for the kernel stream."""
    bias = (b_ih + b_hh).astype(jnp.float32)
    x = jnp.einsum("bte,eg->tbg",
                   emb.astype(jnp.float32),
                   w_ih.T.astype(jnp.float32),
                   preferred_element_type=jnp.float32)
    return (x + bias).astype(jnp.bfloat16)


def _auto_batch_blocks(bp):
    """2-way batch split only on multi-TensorCore chips (v7x); otherwise 1."""
    # TODO(synk): refine per-generation detection (device_kind naming varies).
    try:
        kind = jax.devices()[0].device_kind.lower()
        multi_tc = ("v7" in kind) or ("tpu7" in kind)
    except Exception:
        multi_tc = False
    return 2 if (multi_tc and bp % 16 == 0 and bp >= 16) else 1


@functools.partial(jax.jit, static_argnames=("t_block", "batch_blocks"))
def encoder_forward(seq, lengths, params, *, t_block=16, batch_blocks=None):
    """seq: (B, T) int32 token ids, lengths: (B,) int32."""
    emb = params["embedding"][seq]                 # (B, T, E) lookup (XLA glue)
    B, T, _ = emb.shape
    H = params["w_hh"].shape[1]
    Hp = _round_up(H, 128)        # lane-aligned gates & stores
    Bp = _round_up(B, 8)          # sublane-aligned batch
    Tp = _round_up(T, t_block)
    if batch_blocks is None:
        batch_blocks = _auto_batch_blocks(Bp)

    # Hoisted input projection (time-major, bf16 stream).
    x_proj = _input_projection(emb, params["w_ih"], params["b_ih"],
                               params["b_hh"])     # (T, B, 4H) bf16

    # Per-gate padding H -> Hp so the [i|f|g|o] blocks stay lane-aligned.
    # Padded gate lanes get 0 pre-activation and 0 weights => state stays 0.
    x_proj = x_proj.reshape(T, B, 4, H)
    x_proj = jnp.pad(x_proj, ((0, Tp - T), (0, Bp - B), (0, 0), (0, Hp - H)))
    x_proj = x_proj.reshape(Tp, Bp, 4 * Hp)

    whh = params["w_hh"].T.reshape(H, 4, H)        # torch (4H,H) -> (H,4,H)
    whh = jnp.pad(whh, ((0, Hp - H), (0, 0), (0, Hp - H)))
    whh = whh.reshape(Hp, 4 * Hp).astype(jnp.float32)

    lens = jnp.pad(lengths.astype(jnp.int32), (0, Bp - B))[:, None]  # (Bp, 1)

    hseq, cseq = lstm_pallas(x_proj, lens, whh, t_block=t_block,
                             batch_blocks=batch_blocks)   # (Bp, Tp, Hp) bf16

    # Kernel already stores batch-major: just unpad + widen (fuses into 1 pass).
    hidden = hseq[:B, :T, :H].astype(jnp.float32)   # data.hidden     (B, T, H)
    cell = cseq[:B, :T, :H].astype(jnp.float32)     # data.cell_state (B, T, H)
    return dict(
        hidden=hidden,
        cell_state=cell,
        last_hidden=hidden[:, -1, :],   # state frozen past length -> last slice
        last_cell=cell[:, -1, :],
        embedding=emb,                  # data.embedding (B, T, E)
    )


def init_params(key, vocab_size, embed_size, hidden_size):
    k_emb, k_wih, k_whh, k_bih, k_bhh = jax.random.split(key, 5)
    emb = jax.random.normal(k_emb, (vocab_size, embed_size), jnp.float32)
    emb = emb.at[0].set(0.0)                      # padding_idx=0
    bound = 1.0 / jnp.sqrt(hidden_size)
    u = lambda k, s: jax.random.uniform(k, s, jnp.float32, -bound, bound)
    w_ih = u(k_wih, (4 * hidden_size, embed_size))   # torch layout (4H, E)
    w_hh = u(k_whh, (4 * hidden_size, hidden_size))  # torch layout (4H, H)
    b_ih = u(k_bih, (4 * hidden_size,))
    b_hh = u(k_bhh, (4 * hidden_size,))
    return dict(embedding=emb, w_ih=w_ih, w_hh=w_hh, b_ih=b_ih, b_hh=b_hh)


def encoder_forward_ref(seq, lengths, params):
    """Pure-JAX reference (lax.scan LSTMCell) with matching numerics."""
    emb = params["embedding"][seq]
    B, T, _ = emb.shape
    H = params["w_hh"].shape[1]
    x_proj = _input_projection(emb, params["w_ih"], params["b_ih"],
                               params["b_hh"])                # (T, B, 4H) bf16
    whh = params["w_hh"].T.astype(jnp.float32)                # (H, 4H)

    def step(carry, inp):
        h, c = carry
        xp_t, t = inp
        gates = xp_t.astype(jnp.float32) + jnp.dot(
            h, whh, preferred_element_type=jnp.float32)
        i = jax.nn.sigmoid(gates[:, 0 * H:1 * H])
        f = jax.nn.sigmoid(gates[:, 1 * H:2 * H])
        g = jnp.tanh(gates[:, 2 * H:3 * H])
        o = jax.nn.sigmoid(gates[:, 3 * H:4 * H])
        c_new = f * c + i * g
        h_new = o * jnp.tanh(c_new)
        m = (t < lengths)[:, None]
        h_u = jnp.where(m, h_new, h)
        c_u = jnp.where(m, c_new, c)
        return (h_u, c_u), (h_u.astype(jnp.bfloat16), c_u.astype(jnp.bfloat16))

    init = (jnp.zeros((B, H), jnp.float32), jnp.zeros((B, H), jnp.float32))
    _, (hs, cs) = jax.lax.scan(step, init, (x_proj, jnp.arange(T)))
    hidden = jnp.transpose(hs, (1, 0, 2)).astype(jnp.float32)
    cell = jnp.transpose(cs, (1, 0, 2)).astype(jnp.float32)
    return dict(hidden=hidden, cell_state=cell,
                last_hidden=hidden[:, -1, :], last_cell=cell[:, -1, :],
                embedding=emb)


if __name__ == "__main__":
    VOCAB, EMBED, HIDDEN = 50, 32, 32
    B, T = 2, 8

    key = jax.random.PRNGKey(0)
    k_params, k_seq = jax.random.split(key)
    params = init_params(k_params, VOCAB, EMBED, HIDDEN)

    seq = jax.random.randint(k_seq, (B, T), 1, VOCAB, dtype=jnp.int32)
    lengths = jnp.array([T, 5], dtype=jnp.int32)
    # zero-pad beyond lengths like a real batch
    tpos = jnp.arange(T)[None, :]
    seq = jnp.where(tpos < lengths[:, None], seq, 0)

    out = encoder_forward(seq, lengths, params)
    out = jax.tree_util.tree_map(jax.block_until_ready, out)

    ref = encoder_forward_ref(seq, lengths, params)
    # Streams are bf16 -> tolerance-based validation (bf16 ulp ~0.4%).
    for k in ("hidden", "cell_state", "last_hidden", "last_cell", "embedding"):
        assert jnp.allclose(out[k], ref[k], atol=1e-2, rtol=1e-2), k

    print("KERNEL_OK")
</pallas_src>

<mosaic_0001>
module attributes {stable_mosaic.version = 11 : i64} {
  func.func @lstm_block_kernel(%arg0: i32, %arg1: i32, %arg2: memref<16x8x512xbf16, #tpu.memory_space<vmem>>, %arg3: memref<8x1xi32, #tpu.memory_space<vmem>>, %arg4: memref<128x512xf32, #tpu.memory_space<vmem>>, %arg5: memref<8x16x128xbf16, #tpu.memory_space<vmem>>, %arg6: memref<8x16x128xbf16, #tpu.memory_space<vmem>>, %arg7: memref<8x128xf32, #tpu.memory_space<vmem>>, %arg8: memref<8x128xf32, #tpu.memory_space<vmem>>) attributes {dimension_semantics = [#tpu.dimension_semantics<parallel>, #tpu.dimension_semantics<arbitrary>], iteration_bounds = array<i64: 1, 1>, scalar_prefetch = 0 : i64, scratch_operands = 2 : i64, tpu.core_type = #tpu.core_type<tc>, window_params = [{transform_indices = @transform_0, window_bounds = array<i64: 16, 8, 512>}, {transform_indices = @transform_1, window_bounds = array<i64: 8, 1>}, {pipeline_mode = #tpu.pipeline_mode<synchronous>, transform_indices = @transform_2, window_bounds = array<i64: 128, 512>}, {transform_indices = @transform_3, window_bounds = array<i64: 8, 16, 128>}, {transform_indices = @transform_4, window_bounds = array<i64: 8, 16, 128>}]} {
    %c0_i32 = arith.constant 0 : i32
    %0 = arith.cmpi eq, %arg1, %c0_i32 : i32
    %1 = arith.extui %0 : i1 to i32
    %c0_i32_0 = arith.constant 0 : i32
    %2 = arith.cmpi ne, %1, %c0_i32_0 : i32
    scf.if %2 {
      %cst_205 = arith.constant 0.000000e+00 : f32
      %730 = vector.broadcast %cst_205 : f32 to vector<8x128xf32>
      %c0_206 = arith.constant 0 : index
      %c0_207 = arith.constant 0 : index
      %731 = vector.load %arg7[%c0_206, %c0_207] : memref<8x128xf32, #tpu.memory_space<vmem>>, vector<8x128xf32>
      tpu.vector_store %arg7[%c0_206, %c0_207], %730 {strides = array<i32>} : memref<8x128xf32, #tpu.memory_space<vmem>>, vector<8x128xf32>,
      %cst_208 = arith.constant 0.000000e+00 : f32
      %732 = vector.broadcast %cst_208 : f32 to vector<8x128xf32>
      %c0_209 = arith.constant 0 : index
      %c0_210 = arith.constant 0 : index
      %733 = vector.load %arg8[%c0_209, %c0_210] : memref<8x128xf32, #tpu.memory_space<vmem>>, vector<8x128xf32>
      tpu.vector_store %arg8[%c0_209, %c0_210], %732 {strides = array<i32>} : memref<8x128xf32, #tpu.memory_space<vmem>>, vector<8x128xf32>,
    } else {
    }
    %c0 = arith.constant 0 : index
    %c0_1 = arith.constant 0 : index
    %3 = vector.load %arg3[%c0, %c0_1] : memref<8x1xi32, #tpu.memory_space<vmem>>, vector<8x1xi32>
    %c0_2 = arith.constant 0 : index
    %c0_3 = arith.constant 0 : index
    %4 = vector.load %arg4[%c0_2, %c0_3] : memref<128x512xf32, #tpu.memory_space<vmem>>, vector<128x512xf32>
    %c0_4 = arith.constant 0 : index
    %c0_5 = arith.constant 0 : index
    %5 = vector.load %arg7[%c0_4, %c0_5] : memref<8x128xf32, #tpu.memory_space<vmem>>, vector<8x128xf32>
    %c0_6 = arith.constant 0 : index
    %c0_7 = arith.constant 0 : index
    %6 = vector.load %arg8[%c0_6, %c0_7] : memref<8x128xf32, #tpu.memory_space<vmem>>, vector<8x128xf32>
    %c16_i32 = arith.constant 16 : i32
    %7 = arith.muli %arg1, %c16_i32 : i32
    %c0_8 = arith.constant 0 : index
    %c0_9 = arith.constant 0 : index
    %c0_10 = arith.constant 0 : index
    %8 = vector.load %arg2[%c0_8, %c0_9, %c0_10] : memref<16x8x512xbf16, #tpu.memory_space<vmem>>, vector<1x8x512xbf16>
    %9 = vector.shape_cast %8 : vector<1x8x512xbf16> to vector<8x512xbf16>
    %10 = arith.extf %9 : vector<8x512xbf16> to vector<8x512xf32>
    %cst = arith.constant dense<0.000000e+00> : vector<8x512xf32>
    %11 = tpu.matmul %5, %4, %cst {dimension_numbers = #tpu.dot_dimension_numbers<[1], [0], [0], [1], [0, 0, 1, 1], [], []>} : vector<8x128xf32>, vector<128x512xf32>, vector<8x512xf32> -> vector<8x512xf32>
    %12 = arith.addf %10, %11 : vector<8x512xf32>
    %13 = vector.extract_strided_slice %12 {offsets = [0, 0], sizes = [8, 128], strides = [1, 1]} : vector<8x512xf32> to vector<8x128xf32>
    %14 = arith.negf %13 : vector<8x128xf32>
    %15 = math.exp %14 : vector<8x128xf32>
    %cst_11 = arith.constant 1.000000e+00 : f32
    %16 = vector.broadcast %cst_11 : f32 to vector<8x128xf32>
    %17 = arith.addf %16, %15 : vector<8x128xf32>
    %18 = arith.divf %16, %17 : vector<8x128xf32>
    %19 = vector.extract_strided_slice %12 {offsets = [0, 128], sizes = [8, 128], strides = [1, 1]} : vector<8x512xf32> to vector<8x128xf32>
    %20 = arith.negf %19 : vector<8x128xf32>
    %21 = math.exp %20 : vector<8x128xf32>
    %cst_12 = arith.constant 1.000000e+00 : f32
    %22 = vector.broadcast %cst_12 : f32 to vector<8x128xf32>
    %23 = arith.addf %22, %21 : vector<8x128xf32>
    %24 = arith.divf %22, %23 : vector<8x128xf32>
    %25 = vector.extract_strided_slice %12 {offsets = [0, 256], sizes = [8, 128], strides = [1, 1]} : vector<8x512xf32> to vector<8x128xf32>
    %26 = math.tanh %25 : vector<8x128xf32>
    %27 = vector.extract_strided_slice %12 {offsets = [0, 384], sizes = [8, 128], strides = [1, 1]} : vector<8x512xf32> to vector<8x128xf32>
    %28 = arith.negf %27 : vector<8x128xf32>
    %29 = math.exp %28 : vector<8x128xf32>
    %cst_13 = arith.constant 1.000000e+00 : f32
    %30 = vector.broadcast %cst_13 : f32 to vector<8x128xf32>
    %31 = arith.addf %30, %29 : vector<8x128xf32>
    %32 = arith.divf %30, %31 : vector<8x128xf32>
    %33 = arith.mulf %24, %6 : vector<8x128xf32>
    %34 = arith.mulf %18, %26 : vector<8x128xf32>
    %35 = arith.addf %33, %34 : vector<8x128xf32>
    %36 = math.tanh %35 : vector<8x128xf32>
    %37 = arith.mulf %32, %36 : vector<8x128xf32>
    %c0_i32_14 = arith.constant 0 : i32
    %38 = arith.addi %7, %c0_i32_14 : i32
    %39 = vector.broadcast %38 : i32 to vector<8x1xi32>
    %40 = arith.cmpi slt, %39, %3 : vector<8x1xi32>
    %41 = vector.shape_cast %40 : vector<8x1xi1> to vector<8x1xi1>
    %42 = vector.broadcast %41 : vector<8x1xi1> to vector<8x128xi1>
    %43 = arith.select %42, %37, %5 : vector<8x128xi1>, vector<8x128xf32>
    %44 = arith.select %42, %35, %6 : vector<8x128xi1>, vector<8x128xf32>
    %45 = arith.truncf %43 : vector<8x128xf32> to vector<8x128xbf16>
    %c0_15 = arith.constant 0 : index
    %c0_16 = arith.constant 0 : index
    %c0_17 = arith.constant 0 : index
    %46 = vector.load %arg5[%c0_15, %c0_16, %c0_17] : memref<8x16x128xbf16, #tpu.memory_space<vmem>>, vector<8x1x128xbf16>
    %47 = vector.shape_cast %46 : vector<8x1x128xbf16> to vector<8x128xbf16>
    %48 = vector.shape_cast %45 : vector<8x128xbf16> to vector<8x1x128xbf16>
    tpu.vector_store %arg5[%c0_15, %c0_16, %c0_17], %48 {strides = array<i32>} : memref<8x16x128xbf16, #tpu.memory_space<vmem>>, vector<8x1x128xbf16>,
    %49 = arith.truncf %44 : vector<8x128xf32> to vector<8x128xbf16>
    %c0_18 = arith.constant 0 : index
    %c0_19 = arith.constant 0 : index
    %c0_20 = arith.constant 0 : index
    %50 = vector.load %arg6[%c0_18, %c0_19, %c0_20] : memref<8x16x128xbf16, #tpu.memory_space<vmem>>, vector<8x1x128xbf16>
    %51 = vector.shape_cast %50 : vector<8x1x128xbf16> to vector<8x128xbf16>
    %52 = vector.shape_cast %49 : vector<8x128xbf16> to vector<8x1x128xbf16>
    tpu.vector_store %arg6[%c0_18, %c0_19, %c0_20], %52 {strides = array<i32>} : memref<8x16x128xbf16, #tpu.memory_space<vmem>>, vector<8x1x128xbf16>,
    %c1 = arith.constant 1 : index
    %c0_21 = arith.constant 0 : index
    %c0_22 = arith.constant 0 : index
    %53 = vector.load %arg2[%c1, %c0_21, %c0_22] : memref<16x8x512xbf16, #tpu.memory_space<vmem>>, vector<1x8x512xbf16>
    %54 = vector.shape_cast %53 : vector<1x8x512xbf16> to vector<8x512xbf16>
    %55 = arith.extf %54 : vector<8x512xbf16> to vector<8x512xf32>
    %cst_23 = arith.constant dense<0.000000e+00> : vector<8x512xf32>
    %56 = tpu.matmul %43, %4, %cst_23 {dimension_numbers = #tpu.dot_dimension_numbers<[1], [0], [0], [1], [0, 0, 1, 1], [], []>} : vector<8x128xf32>, vector<128x512xf32>, vector<8x512xf32> -> vector<8x512xf32>
    %57 = arith.addf %55, %56 : vector<8x512xf32>
    %58 = vector.extract_strided_slice %57 {offsets = [0, 0], sizes = [8, 128], strides = [1, 1]} : vector<8x512xf32> to vector<8x128xf32>
    %59 = arith.negf %58 : vector<8x128xf32>
    %60 = math.exp %59 : vector<8x128xf32>
    %cst_24 = arith.constant 1.000000e+00 : f32
    %61 = vector.broadcast %cst_24 : f32 to vector<8x128xf32>
    %62 = arith.addf %61, %60 : vector<8x128xf32>
    %63 = arith.divf %61, %62 : vector<8x128xf32>
    %64 = vector.extract_strided_slice %57 {offsets = [0, 128], sizes = [8, 128], strides = [1, 1]} : vector<8x512xf32> to vector<8x128xf32>
    %65 = arith.negf %64 : vector<8x128xf32>
    %66 = math.exp %65 : vector<8x128xf32>
    %cst_25 = arith.constant 1.000000e+00 : f32
    %67 = vector.broadcast %cst_25 : f32 to vector<8x128xf32>
    %68 = arith.addf %67, %66 : vector<8x128xf32>
    %69 = arith.divf %67, %68 : vector<8x128xf32>
    %70 = vector.extract_strided_slice %57 {offsets = [0, 256], sizes = [8, 128], strides = [1, 1]} : vector<8x512xf32> to vector<8x128xf32>
    %71 = math.tanh %70 : vector<8x128xf32>
    %72 = vector.extract_strided_slice %57 {offsets = [0, 384], sizes = [8, 128], strides = [1, 1]} : vector<8x512xf32> to vector<8x128xf32>
    %73 = arith.negf %72 : vector<8x128xf32>
    %74 = math.exp %73 : vector<8x128xf32>
    %cst_26 = arith.constant 1.000000e+00 : f32
    %75 = vector.broadcast %cst_26 : f32 to vector<8x128xf32>
    %76 = arith.addf %75, %74 : vector<8x128xf32>
    %77 = arith.divf %75, %76 : vector<8x128xf32>
    %78 = arith.mulf %69, %44 : vector<8x128xf32>
    %79 = arith.mulf %63, %71 : vector<8x128xf32>
    %80 = arith.addf %78, %79 : vector<8x128xf32>
    %81 = math.tanh %80 : vector<8x128xf32>
    %82 = arith.mulf %77, %81 : vector<8x128xf32>
    %c1_i32 = arith.constant 1 : i32
    %83 = arith.addi %7, %c1_i32 : i32
    %84 = vector.broadcast %83 : i32 to vector<8x1xi32>
    %85 = arith.cmpi slt, %84, %3 : vector<8x1xi32>
    %86 = vector.shape_cast %85 : vector<8x1xi1> to vector<8x1xi1>
    %87 = vector.broadcast %86 : vector<8x1xi1> to vector<8x128xi1>
    %88 = arith.select %87, %82, %43 : vector<8x128xi1>, vector<8x128xf32>
    %89 = arith.select %87, %80, %44 : vector<8x128xi1>, vector<8x128xf32>
    %90 = arith.truncf %88 : vector<8x128xf32> to vector<8x128xbf16>
    %c0_27 = arith.constant 0 : index
    %c1_28 = arith.constant 1 : index
    %c0_29 = arith.constant 0 : index
    %91 = vector.load %arg5[%c0_27, %c1_28, %c0_29] : memref<8x16x128xbf16, #tpu.memory_space<vmem>>, vector<8x1x128xbf16>
    %92 = vector.shape_cast %91 : vector<8x1x128xbf16> to vector<8x128xbf16>
    %93 = vector.shape_cast %90 : vector<8x128xbf16> to vector<8x1x128xbf16>
    tpu.vector_store %arg5[%c0_27, %c1_28, %c0_29], %93 {strides = array<i32>} : memref<8x16x128xbf16, #tpu.memory_space<vmem>>, vector<8x1x128xbf16>,
    %94 = arith.truncf %89 : vector<8x128xf32> to vector<8x128xbf16>
    %c0_30 = arith.constant 0 : index
    %c1_31 = arith.constant 1 : index
    %c0_32 = arith.constant 0 : index
    %95 = vector.load %arg6[%c0_30, %c1_31, %c0_32] : memref<8x16x128xbf16, #tpu.memory_space<vmem>>, vector<8x1x128xbf16>
    %96 = vector.shape_cast %95 : vector<8x1x128xbf16> to vector<8x128xbf16>
    %97 = vector.shape_cast %94 : vector<8x128xbf16> to vector<8x1x128xbf16>
    tpu.vector_store %arg6[%c0_30, %c1_31, %c0_32], %97 {strides = array<i32>} : memref<8x16x128xbf16, #tpu.memory_space<vmem>>, vector<8x1x128xbf16>,
    %c2 = arith.constant 2 : index
    %c0_33 = arith.constant 0 : index
    %c0_34 = arith.constant 0 : index
    %98 = vector.load %arg2[%c2, %c0_33, %c0_34] : memref<16x8x512xbf16, #tpu.memory_space<vmem>>, vector<1x8x512xbf16>
    %99 = vector.shape_cast %98 : vector<1x8x512xbf16> to vector<8x512xbf16>
    %100 = arith.extf %99 : vector<8x512xbf16> to vector<8x512xf32>
    %cst_35 = arith.constant dense<0.000000e+00> : vector<8x512xf32>
    %101 = tpu.matmul %88, %4, %cst_35 {dimension_numbers = #tpu.dot_dimension_numbers<[1], [0], [0], [1], [0, 0, 1, 1], [], []>} : vector<8x128xf32>, vector<128x512xf32>, vector<8x512xf32> -> vector<8x512xf32>
    %102 = arith.addf %100, %101 : vector<8x512xf32>
    %103 = vector.extract_strided_slice %102 {offsets = [0, 0], sizes = [8, 128], strides = [1, 1]} : vector<8x512xf32> to vector<8x128xf32>
    %104 = arith.negf %103 : vector<8x128xf32>
    %105 = math.exp %104 : vector<8x128xf32>
    %cst_36 = arith.constant 1.000000e+00 : f32
    %106 = vector.broadcast %cst_36 : f32 to vector<8x128xf32>
    %107 = arith.addf %106, %105 : vector<8x128xf32>
    %108 = arith.divf %106, %107 : vector<8x128xf32>
    %109 = vector.extract_strided_slice %102 {offsets = [0, 128], sizes = [8, 128], strides = [1, 1]} : vector<8x512xf32> to vector<8x128xf32>
    %110 = arith.negf %109 : vector<8x128xf32>
    %111 = math.exp %110 : vector<8x128xf32>
    %cst_37 = arith.constant 1.000000e+00 : f32
    %112 = vector.broadcast %cst_37 : f32 to vector<8x128xf32>
    %113 = arith.addf %112, %111 : vector<8x128xf32>
    %114 = arith.divf %112, %113 : vector<8x128xf32>
    %115 = vector.extract_strided_slice %102 {offsets = [0, 256], sizes = [8, 128], strides = [1, 1]} : vector<8x512xf32> to vector<8x128xf32>
    %116 = math.tanh %115 : vector<8x128xf32>
    %117 = vector.extract_strided_slice %102 {offsets = [0, 384], sizes = [8, 128], strides = [1, 1]} : vector<8x512xf32> to vector<8x128xf32>
    %118 = arith.negf %117 : vector<8x128xf32>
    %119 = math.exp %118 : vector<8x128xf32>
    %cst_38 = arith.constant 1.000000e+00 : f32
    %120 = vector.broadcast %cst_38 : f32 to vector<8x128xf32>
    %121 = arith.addf %120, %119 : vector<8x128xf32>
    %122 = arith.divf %120, %121 : vector<8x128xf32>
    %123 = arith.mulf %114, %89 : vector<8x128xf32>
    %124 = arith.mulf %108, %116 : vector<8x128xf32>
    %125 = arith.addf %123, %124 : vector<8x128xf32>
    %126 = math.tanh %125 : vector<8x128xf32>
    %127 = arith.mulf %122, %126 : vector<8x128xf32>
    %c2_i32 = arith.constant 2 : i32
    %128 = arith.addi %7, %c2_i32 : i32
    %129 = vector.broadcast %128 : i32 to vector<8x1xi32>
    %130 = arith.cmpi slt, %129, %3 : vector<8x1xi32>
    %131 = vector.shape_cast %130 : vector<8x1xi1> to vector<8x1xi1>
    %132 = vector.broadcast %131 : vector<8x1xi1> to vector<8x128xi1>
    %133 = arith.select %132, %127, %88 : vector<8x128xi1>, vector<8x128xf32>
    %134 = arith.select %132, %125, %89 : vector<8x128xi1>, vector<8x128xf32>
    %135 = arith.truncf %133 : vector<8x128xf32> to vector<8x128xbf16>
    %c0_39 = arith.constant 0 : index
    %c2_40 = arith.constant 2 : index
    %c0_41 = arith.constant 0 : index
    %136 = vector.load %arg5[%c0_39, %c2_40, %c0_41] : memref<8x16x128xbf16, #tpu.memory_space<vmem>>, vector<8x1x128xbf16>
    %137 = vector.shape_cast %136 : vector<8x1x128xbf16> to vector<8x128xbf16>
    %138 = vector.shape_cast %135 : vector<8x128xbf16> to vector<8x1x128xbf16>
    tpu.vector_store %arg5[%c0_39, %c2_40, %c0_41], %138 {strides = array<i32>} : memref<8x16x128xbf16, #tpu.memory_space<vmem>>, vector<8x1x128xbf16>,
    %139 = arith.truncf %134 : vector<8x128xf32> to vector<8x128xbf16>
    %c0_42 = arith.constant 0 : index
    %c2_43 = arith.constant 2 : index
    %c0_44 = arith.constant 0 : index
    %140 = vector.load %arg6[%c0_42, %c2_43, %c0_44] : memref<8x16x128xbf16, #tpu.memory_space<vmem>>, vector<8x1x128xbf16>
    %141 = vector.shape_cast %140 : vector<8x1x128xbf16> to vector<8x128xbf16>
    %142 = vector.shape_cast %139 : vector<8x128xbf16> to vector<8x1x128xbf16>
    tpu.vector_store %arg6[%c0_42, %c2_43, %c0_44], %142 {strides = array<i32>} : memref<8x16x128xbf16, #tpu.memory_space<vmem>>, vector<8x1x128xbf16>,
    %c3 = arith.constant 3 : index
    %c0_45 = arith.constant 0 : index
    %c0_46 = arith.constant 0 : index
    %143 = vector.load %arg2[%c3, %c0_45, %c0_46] : memref<16x8x512xbf16, #tpu.memory_space<vmem>>, vector<1x8x512xbf16>
    %144 = vector.shape_cast %143 : vector<1x8x512xbf16> to vector<8x512xbf16>
    %145 = arith.extf %144 : vector<8x512xbf16> to vector<8x512xf32>
    %cst_47 = arith.constant dense<0.000000e+00> : vector<8x512xf32>
    %146 = tpu.matmul %133, %4, %cst_47 {dimension_numbers = #tpu.dot_dimension_numbers<[1], [0], [0], [1], [0, 0, 1, 1], [], []>} : vector<8x128xf32>, vector<128x512xf32>, vector<8x512xf32> -> vector<8x512xf32>
    %147 = arith.addf %145, %146 : vector<8x512xf32>
    %148 = vector.extract_strided_slice %147 {offsets = [0, 0], sizes = [8, 128], strides = [1, 1]} : vector<8x512xf32> to vector<8x128xf32>
    %149 = arith.negf %148 : vector<8x128xf32>
    %150 = math.exp %149 : vector<8x128xf32>
    %cst_48 = arith.constant 1.000000e+00 : f32
    %151 = vector.broadcast %cst_48 : f32 to vector<8x128xf32>
    %152 = arith.addf %151, %150 : vector<8x128xf32>
    %153 = arith.divf %151, %152 : vector<8x128xf32>
    %154 = vector.extract_strided_slice %147 {offsets = [0, 128], sizes = [8, 128], strides = [1, 1]} : vector<8x512xf32> to vector<8x128xf32>
    %155 = arith.negf %154 : vector<8x128xf32>
    %156 = math.exp %155 : vector<8x128xf32>
    %cst_49 = arith.constant 1.000000e+00 : f32
    %157 = vector.broadcast %cst_49 : f32 to vector<8x128xf32>
    %158 = arith.addf %157, %156 : vector<8x128xf32>
    %159 = arith.divf %157, %158 : vector<8x128xf32>
    %160 = vector.extract_strided_slice %147 {offsets = [0, 256], sizes = [8, 128], strides = [1, 1]} : vector<8x512xf32> to vector<8x128xf32>
    %161 = math.tanh %160 : vector<8x128xf32>
    %162 = vector.extract_strided_slice %147 {offsets = [0, 384], sizes = [8, 128], strides = [1, 1]} : vector<8x512xf32> to vector<8x128xf32>
    %163 = arith.negf %162 : vector<8x128xf32>
    %164 = math.exp %163 : vector<8x128xf32>
    %cst_50 = arith.constant 1.000000e+00 : f32
    %165 = vector.broadcast %cst_50 : f32 to vector<8x128xf32>
    %166 = arith.addf %165, %164 : vector<8x128xf32>
    %167 = arith.divf %165, %166 : vector<8x128xf32>
    %168 = arith.mulf %159, %134 : vector<8x128xf32>
    %169 = arith.mulf %153, %161 : vector<8x128xf32>
    %170 = arith.addf %168, %169 : vector<8x128xf32>
    %171 = math.tanh %170 : vector<8x128xf32>
    %172 = arith.mulf %167, %171 : vector<8x128xf32>
    %c3_i32 = arith.constant 3 : i32
    %173 = arith.addi %7, %c3_i32 : i32
    %174 = vector.broadcast %173 : i32 to vector<8x1xi32>
    %175 = arith.cmpi slt, %174, %3 : vector<8x1xi32>
    %176 = vector.shape_cast %175 : vector<8x1xi1> to vector<8x1xi1>
    %177 = vector.broadcast %176 : vector<8x1xi1> to vector<8x128xi1>
    %178 = arith.select %177, %172, %133 : vector<8x128xi1>, vector<8x128xf32>
    %179 = arith.select %177, %170, %134 : vector<8x128xi1>, vector<8x128xf32>
    %180 = arith.truncf %178 : vector<8x128xf32> to vector<8x128xbf16>
    %c0_51 = arith.constant 0 : index
    %c3_52 = arith.constant 3 : index
    %c0_53 = arith.constant 0 : index
    %181 = vector.load %arg5[%c0_51, %c3_52, %c0_53] : memref<8x16x128xbf16, #tpu.memory_space<vmem>>, vector<8x1x128xbf16>
    %182 = vector.shape_cast %181 : vector<8x1x128xbf16> to vector<8x128xbf16>
    %183 = vector.shape_cast %180 : vector<8x128xbf16> to vector<8x1x128xbf16>
    tpu.vector_store %arg5[%c0_51, %c3_52, %c0_53], %183 {strides = array<i32>} : memref<8x16x128xbf16, #tpu.memory_space<vmem>>, vector<8x1x128xbf16>,
    %184 = arith.truncf %179 : vector<8x128xf32> to vector<8x128xbf16>
    %c0_54 = arith.constant 0 : index
    %c3_55 = arith.constant 3 : index
    %c0_56 = arith.constant 0 : index
    %185 = vector.load %arg6[%c0_54, %c3_55, %c0_56] : memref<8x16x128xbf16, #tpu.memory_space<vmem>>, vector<8x1x128xbf16>
    %186 = vector.shape_cast %185 : vector<8x1x128xbf16> to vector<8x128xbf16>
    %187 = vector.shape_cast %184 : vector<8x128xbf16> to vector<8x1x128xbf16>
    tpu.vector_store %arg6[%c0_54, %c3_55, %c0_56], %187 {strides = array<i32>} : memref<8x16x128xbf16, #tpu.memory_space<vmem>>, vector<8x1x128xbf16>,
    %c4 = arith.constant 4 : index
    %c0_57 = arith.constant 0 : index
    %c0_58 = arith.constant 0 : index
    %188 = vector.load %arg2[%c4, %c0_57, %c0_58] : memref<16x8x512xbf16, #tpu.memory_space<vmem>>, vector<1x8x512xbf16>
    %189 = vector.shape_cast %188 : vector<1x8x512xbf16> to vector<8x512xbf16>
    %190 = arith.extf %189 : vector<8x512xbf16> to vector<8x512xf32>
    %cst_59 = arith.constant dense<0.000000e+00> : vector<8x512xf32>
    %191 = tpu.matmul %178, %4, %cst_59 {dimension_numbers = #tpu.dot_dimension_numbers<[1], [0], [0], [1], [0, 0, 1, 1], [], []>} : vector<8x128xf32>, vector<128x512xf32>, vector<8x512xf32> -> vector<8x512xf32>
    %192 = arith.addf %190, %191 : vector<8x512xf32>
    %193 = vector.extract_strided_slice %192 {offsets = [0, 0], sizes = [8, 128], strides = [1, 1]} : vector<8x512xf32> to vector<8x128xf32>
    %194 = arith.negf %193 : vector<8x128xf32>
    %195 = math.exp %194 : vector<8x128xf32>
    %cst_60 = arith.constant 1.000000e+00 : f32
    %196 = vector.broadcast %cst_60 : f32 to vector<8x128xf32>
    %197 = arith.addf %196, %195 : vector<8x128xf32>
    %198 = arith.divf %196, %197 : vector<8x128xf32>
    %199 = vector.extract_strided_slice %192 {offsets = [0, 128], sizes = [8, 128], strides = [1, 1]} : vector<8x512xf32> to vector<8x128xf32>
    %200 = arith.negf %199 : vector<8x128xf32>
    %201 = math.exp %200 : vector<8x128xf32>
    %cst_61 = arith.constant 1.000000e+00 : f32
    %202 = vector.broadcast %cst_61 : f32 to vector<8x128xf32>
    %203 = arith.addf %202, %201 : vector<8x128xf32>
    %204 = arith.divf %202, %203 : vector<8x128xf32>
    %205 = vector.extract_strided_slice %192 {offsets = [0, 256], sizes = [8, 128], strides = [1, 1]} : vector<8x512xf32> to vector<8x128xf32>
    %206 = math.tanh %205 : vector<8x128xf32>
    %207 = vector.extract_strided_slice %192 {offsets = [0, 384], sizes = [8, 128], strides = [1, 1]} : vector<8x512xf32> to vector<8x128xf32>
    %208 = arith.negf %207 : vector<8x128xf32>
    %209 = math.exp %208 : vector<8x128xf32>
    %cst_62 = arith.constant 1.000000e+00 : f32
    %210 = vector.broadcast %cst_62 : f32 to vector<8x128xf32>
    %211 = arith.addf %210, %209 : vector<8x128xf32>
    %212 = arith.divf %210, %211 : vector<8x128xf32>
    %213 = arith.mulf %204, %179 : vector<8x128xf32>
    %214 = arith.mulf %198, %206 : vector<8x128xf32>
    %215 = arith.addf %213, %214 : vector<8x128xf32>
    %216 = math.tanh %215 : vector<8x128xf32>
    %217 = arith.mulf %212, %216 : vector<8x128xf32>
    %c4_i32 = arith.constant 4 : i32
    %218 = arith.addi %7, %c4_i32 : i32
    %219 = vector.broadcast %218 : i32 to vector<8x1xi32>
    %220 = arith.cmpi slt, %219, %3 : vector<8x1xi32>
    %221 = vector.shape_cast %220 : vector<8x1xi1> to vector<8x1xi1>
    %222 = vector.broadcast %221 : vector<8x1xi1> to vector<8x128xi1>
    %223 = arith.select %222, %217, %178 : vector<8x128xi1>, vector<8x128xf32>
    %224 = arith.select %222, %215, %179 : vector<8x128xi1>, vector<8x128xf32>
    %225 = arith.truncf %223 : vector<8x128xf32> to vector<8x128xbf16>
    %c0_63 = arith.constant 0 : index
    %c4_64 = arith.constant 4 : index
    %c0_65 = arith.constant 0 : index
    %226 = vector.load %arg5[%c0_63, %c4_64, %c0_65] : memref<8x16x128xbf16, #tpu.memory_space<vmem>>, vector<8x1x128xbf16>
    %227 = vector.shape_cast %226 : vector<8x1x128xbf16> to vector<8x128xbf16>
    %228 = vector.shape_cast %225 : vector<8x128xbf16> to vector<8x1x128xbf16>
    tpu.vector_store %arg5[%c0_63, %c4_64, %c0_65], %228 {strides = array<i32>} : memref<8x16x128xbf16, #tpu.memory_space<vmem>>, vector<8x1x128xbf16>,
    %229 = arith.truncf %224 : vector<8x128xf32> to vector<8x128xbf16>
    %c0_66 = arith.constant 0 : index
    %c4_67 = arith.constant 4 : index
    %c0_68 = arith.constant 0 : index
    %230 = vector.load %arg6[%c0_66, %c4_67, %c0_68] : memref<8x16x128xbf16, #tpu.memory_space<vmem>>, vector<8x1x128xbf16>
    %231 = vector.shape_cast %230 : vector<8x1x128xbf16> to vector<8x128xbf16>
    %232 = vector.shape_cast %229 : vector<8x128xbf16> to vector<8x1x128xbf16>
    tpu.vector_store %arg6[%c0_66, %c4_67, %c0_68], %232 {strides = array<i32>} : memref<8x16x128xbf16, #tpu.memory_space<vmem>>, vector<8x1x128xbf16>,
    %c5 = arith.constant 5 : index
    %c0_69 = arith.constant 0 : index
    %c0_70 = arith.constant 0 : index
    %233 = vector.load %arg2[%c5, %c0_69, %c0_70] : memref<16x8x512xbf16, #tpu.memory_space<vmem>>, vector<1x8x512xbf16>
    %234 = vector.shape_cast %233 : vector<1x8x512xbf16> to vector<8x512xbf16>
    %235 = arith.extf %234 : vector<8x512xbf16> to vector<8x512xf32>
    %cst_71 = arith.constant dense<0.000000e+00> : vector<8x512xf32>
    %236 = tpu.matmul %223, %4, %cst_71 {dimension_numbers = #tpu.dot_dimension_numbers<[1], [0], [0], [1], [0, 0, 1, 1], [], []>} : vector<8x128xf32>, vector<128x512xf32>, vector<8x512xf32> -> vector<8x512xf32>
    %237 = arith.addf %235, %236 : vector<8x512xf32>
    %238 = vector.extract_strided_slice %237 {offsets = [0, 0], sizes = [8, 128], strides = [1, 1]} : vector<8x512xf32> to vector<8x128xf32>
    %239 = arith.negf %238 : vector<8x128xf32>
    %240 = math.exp %239 : vector<8x128xf32>
    %cst_72 = arith.constant 1.000000e+00 : f32
    %241 = vector.broadcast %cst_72 : f32 to vector<8x128xf32>
    %242 = arith.addf %241, %240 : vector<8x128xf32>
    %243 = arith.divf %241, %242 : vector<8x128xf32>
    %244 = vector.extract_strided_slice %237 {offsets = [0, 128], sizes = [8, 128], strides = [1, 1]} : vector<8x512xf32> to vector<8x128xf32>
    %245 = arith.negf %244 : vector<8x128xf32>
    %246 = math.exp %245 : vector<8x128xf32>
    %cst_73 = arith.constant 1.000000e+00 : f32
    %247 = vector.broadcast %cst_73 : f32 to vector<8x128xf32>
    %248 = arith.addf %247, %246 : vector<8x128xf32>
    %249 = arith.divf %247, %248 : vector<8x128xf32>
    %250 = vector.extract_strided_slice %237 {offsets = [0, 256], sizes = [8, 128], strides = [1, 1]} : vector<8x512xf32> to vector<8x128xf32>
    %251 = math.tanh %250 : vector<8x128xf32>
    %252 = vector.extract_strided_slice %237 {offsets = [0, 384], sizes = [8, 128], strides = [1, 1]} : vector<8x512xf32> to vector<8x128xf32>
    %253 = arith.negf %252 : vector<8x128xf32>
    %254 = math.exp %253 : vector<8x128xf32>
    %cst_74 = arith.constant 1.000000e+00 : f32
    %255 = vector.broadcast %cst_74 : f32 to vector<8x128xf32>
    %256 = arith.addf %255, %254 : vector<8x128xf32>
    %257 = arith.divf %255, %256 : vector<8x128xf32>
    %258 = arith.mulf %249, %224 : vector<8x128xf32>
    %259 = arith.mulf %243, %251 : vector<8x128xf32>
    %260 = arith.addf %258, %259 : vector<8x128xf32>
    %261 = math.tanh %260 : vector<8x128xf32>
    %262 = arith.mulf %257, %261 : vector<8x128xf32>
    %c5_i32 = arith.constant 5 : i32
    %263 = arith.addi %7, %c5_i32 : i32
    %264 = vector.broadcast %263 : i32 to vector<8x1xi32>
    %265 = arith.cmpi slt, %264, %3 : vector<8x1xi32>
    %266 = vector.shape_cast %265 : vector<8x1xi1> to vector<8x1xi1>
    %267 = vector.broadcast %266 : vector<8x1xi1> to vector<8x128xi1>
    %268 = arith.select %267, %262, %223 : vector<8x128xi1>, vector<8x128xf32>
    %269 = arith.select %267, %260, %224 : vector<8x128xi1>, vector<8x128xf32>
    %270 = arith.truncf %268 : vector<8x128xf32> to vector<8x128xbf16>
    %c0_75 = arith.constant 0 : index
    %c5_76 = arith.constant 5 : index
    %c0_77 = arith.constant 0 : index
    %271 = vector.load %arg5[%c0_75, %c5_76, %c0_77] : memref<8x16x128xbf16, #tpu.memory_space<vmem>>, vector<8x1x128xbf16>
    %272 = vector.shape_cast %271 : vector<8x1x128xbf16> to vector<8x128xbf16>
    %273 = vector.shape_cast %270 : vector<8x128xbf16> to vector<8x1x128xbf16>
    tpu.vector_store %arg5[%c0_75, %c5_76, %c0_77], %273 {strides = array<i32>} : memref<8x16x128xbf16, #tpu.memory_space<vmem>>, vector<8x1x128xbf16>,
    %274 = arith.truncf %269 : vector<8x128xf32> to vector<8x128xbf16>
    %c0_78 = arith.constant 0 : index
    %c5_79 = arith.constant 5 : index
    %c0_80 = arith.constant 0 : index
    %275 = vector.load %arg6[%c0_78, %c5_79, %c0_80] : memref<8x16x128xbf16, #tpu.memory_space<vmem>>, vector<8x1x128xbf16>
    %276 = vector.shape_cast %275 : vector<8x1x128xbf16> to vector<8x128xbf16>
    %277 = vector.shape_cast %274 : vector<8x128xbf16> to vector<8x1x128xbf16>
    tpu.vector_store %arg6[%c0_78, %c5_79, %c0_80], %277 {strides = array<i32>} : memref<8x16x128xbf16, #tpu.memory_space<vmem>>, vector<8x1x128xbf16>,
    %c6 = arith.constant 6 : index
    %c0_81 = arith.constant 0 : index
    %c0_82 = arith.constant 0 : index
    %278 = vector.load %arg2[%c6, %c0_81, %c0_82] : memref<16x8x512xbf16, #tpu.memory_space<vmem>>, vector<1x8x512xbf16>
    %279 = vector.shape_cast %278 : vector<1x8x512xbf16> to vector<8x512xbf16>
    %280 = arith.extf %279 : vector<8x512xbf16> to vector<8x512xf32>
    %cst_83 = arith.constant dense<0.000000e+00> : vector<8x512xf32>
    %281 = tpu.matmul %268, %4, %cst_83 {dimension_numbers = #tpu.dot_dimension_numbers<[1], [0], [0], [1], [0, 0, 1, 1], [], []>} : vector<8x128xf32>, vector<128x512xf32>, vector<8x512xf32> -> vector<8x512xf32>
    %282 = arith.addf %280, %281 : vector<8x512xf32>
    %283 = vector.extract_strided_slice %282 {offsets = [0, 0], sizes = [8, 128], strides = [1, 1]} : vector<8x512xf32> to vector<8x128xf32>
    %284 = arith.negf %283 : vector<8x128xf32>
    %285 = math.exp %284 : vector<8x128xf32>
    %cst_84 = arith.constant 1.000000e+00 : f32
    %286 = vector.broadcast %cst_84 : f32 to vector<8x128xf32>
    %287 = arith.addf %286, %285 : vector<8x128xf32>
    %288 = arith.divf %286, %287 : vector<8x128xf32>
    %289 = vector.extract_strided_slice %282 {offsets = [0, 128], sizes = [8, 128], strides = [1, 1]} : vector<8x512xf32> to vector<8x128xf32>
    %290 = arith.negf %289 : vector<8x128xf32>
    %291 = math.exp %290 : vector<8x128xf32>
    %cst_85 = arith.constant 1.000000e+00 : f32
    %292 = vector.broadcast %cst_85 : f32 to vector<8x128xf32>
    %293 = arith.addf %292, %291 : vector<8x128xf32>
    %294 = arith.divf %292, %293 : vector<8x128xf32>
    %295 = vector.extract_strided_slice %282 {offsets = [0, 256], sizes = [8, 128], strides = [1, 1]} : vector<8x512xf32> to vector<8x128xf32>
    %296 = math.tanh %295 : vector<8x128xf32>
    %297 = vector.extract_strided_slice %282 {offsets = [0, 384], sizes = [8, 128], strides = [1, 1]} : vector<8x512xf32> to vector<8x128xf32>
    %298 = arith.negf %297 : vector<8x128xf32>
    %299 = math.exp %298 : vector<8x128xf32>
    %cst_86 = arith.constant 1.000000e+00 : f32
    %300 = vector.broadcast %cst_86 : f32 to vector<8x128xf32>
    %301 = arith.addf %300, %299 : vector<8x128xf32>
    %302 = arith.divf %300, %301 : vector<8x128xf32>
    %303 = arith.mulf %294, %269 : vector<8x128xf32>
    %304 = arith.mulf %288, %296 : vector<8x128xf32>
    %305 = arith.addf %303, %304 : vector<8x128xf32>
    %306 = math.tanh %305 : vector<8x128xf32>
    %307 = arith.mulf %302, %306 : vector<8x128xf32>
    %c6_i32 = arith.constant 6 : i32
    %308 = arith.addi %7, %c6_i32 : i32
    %309 = vector.broadcast %308 : i32 to vector<8x1xi32>
    %310 = arith.cmpi slt, %309, %3 : vector<8x1xi32>
    %311 = vector.shape_cast %310 : vector<8x1xi1> to vector<8x1xi1>
    %312 = vector.broadcast %311 : vector<8x1xi1> to vector<8x128xi1>
    %313 = arith.select %312, %307, %268 : vector<8x128xi1>, vector<8x128xf32>
    %314 = arith.select %312, %305, %269 : vector<8x128xi1>, vector<8x128xf32>
    %315 = arith.truncf %313 : vector<8x128xf32> to vector<8x128xbf16>
    %c0_87 = arith.constant 0 : index
    %c6_88 = arith.constant 6 : index
    %c0_89 = arith.constant 0 : index
    %316 = vector.load %arg5[%c0_87, %c6_88, %c0_89] : memref<8x16x128xbf16, #tpu.memory_space<vmem>>, vector<8x1x128xbf16>
    %317 = vector.shape_cast %316 : vector<8x1x128xbf16> to vector<8x128xbf16>
    %318 = vector.shape_cast %315 : vector<8x128xbf16> to vector<8x1x128xbf16>
    tpu.vector_store %arg5[%c0_87, %c6_88, %c0_89], %318 {strides = array<i32>} : memref<8x16x128xbf16, #tpu.memory_space<vmem>>, vector<8x1x128xbf16>,
    %319 = arith.truncf %314 : vector<8x128xf32> to vector<8x128xbf16>
    %c0_90 = arith.constant 0 : index
    %c6_91 = arith.constant 6 : index
    %c0_92 = arith.constant 0 : index
    %320 = vector.load %arg6[%c0_90, %c6_91, %c0_92] : memref<8x16x128xbf16, #tpu.memory_space<vmem>>, vector<8x1x128xbf16>
    %321 = vector.shape_cast %320 : vector<8x1x128xbf16> to vector<8x128xbf16>
    %322 = vector.shape_cast %319 : vector<8x128xbf16> to vector<8x1x128xbf16>
    tpu.vector_store %arg6[%c0_90, %c6_91, %c0_92], %322 {strides = array<i32>} : memref<8x16x128xbf16, #tpu.memory_space<vmem>>, vector<8x1x128xbf16>,
    %c7 = arith.constant 7 : index
    %c0_93 = arith.constant 0 : index
    %c0_94 = arith.constant 0 : index
    %323 = vector.load %arg2[%c7, %c0_93, %c0_94] : memref<16x8x512xbf16, #tpu.memory_space<vmem>>, vector<1x8x512xbf16>
    %324 = vector.shape_cast %323 : vector<1x8x512xbf16> to vector<8x512xbf16>
    %325 = arith.extf %324 : vector<8x512xbf16> to vector<8x512xf32>
    %cst_95 = arith.constant dense<0.000000e+00> : vector<8x512xf32>
    %326 = tpu.matmul %313, %4, %cst_95 {dimension_numbers = #tpu.dot_dimension_numbers<[1], [0], [0], [1], [0, 0, 1, 1], [], []>} : vector<8x128xf32>, vector<128x512xf32>, vector<8x512xf32> -> vector<8x512xf32>
    %327 = arith.addf %325, %326 : vector<8x512xf32>
    %328 = vector.extract_strided_slice %327 {offsets = [0, 0], sizes = [8, 128], strides = [1, 1]} : vector<8x512xf32> to vector<8x128xf32>
    %329 = arith.negf %328 : vector<8x128xf32>
    %330 = math.exp %329 : vector<8x128xf32>
    %cst_96 = arith.constant 1.000000e+00 : f32
    %331 = vector.broadcast %cst_96 : f32 to vector<8x128xf32>
    %332 = arith.addf %331, %330 : vector<8x128xf32>
    %333 = arith.divf %331, %332 : vector<8x128xf32>
    %334 = vector.extract_strided_slice %327 {offsets = [0, 128], sizes = [8, 128], strides = [1, 1]} : vector<8x512xf32> to vector<8x128xf32>
    %335 = arith.negf %334 : vector<8x128xf32>
    %336 = math.exp %335 : vector<8x128xf32>
    %cst_97 = arith.constant 1.000000e+00 : f32
    %337 = vector.broadcast %cst_97 : f32 to vector<8x128xf32>
    %338 = arith.addf %337, %336 : vector<8x128xf32>
    %339 = arith.divf %337, %338 : vector<8x128xf32>
    %340 = vector.extract_strided_slice %327 {offsets = [0, 256], sizes = [8, 128], strides = [1, 1]} : vector<8x512xf32> to vector<8x128xf32>
    %341 = math.tanh %340 : vector<8x128xf32>
    %342 = vector.extract_strided_slice %327 {offsets = [0, 384], sizes = [8, 128], strides = [1, 1]} : vector<8x512xf32> to vector<8x128xf32>
    %343 = arith.negf %342 : vector<8x128xf32>
    %344 = math.exp %343 : vector<8x128xf32>
    %cst_98 = arith.constant 1.000000e+00 : f32
    %345 = vector.broadcast %cst_98 : f32 to vector<8x128xf32>
    %346 = arith.addf %345, %344 : vector<8x128xf32>
    %347 = arith.divf %345, %346 : vector<8x128xf32>
    %348 = arith.mulf %339, %314 : vector<8x128xf32>
    %349 = arith.mulf %333, %341 : vector<8x128xf32>
    %350 = arith.addf %348, %349 : vector<8x128xf32>
    %351 = math.tanh %350 : vector<8x128xf32>
    %352 = arith.mulf %347, %351 : vector<8x128xf32>
    %c7_i32 = arith.constant 7 : i32
    %353 = arith.addi %7, %c7_i32 : i32
    %354 = vector.broadcast %353 : i32 to vector<8x1xi32>
    %355 = arith.cmpi slt, %354, %3 : vector<8x1xi32>
    %356 = vector.shape_cast %355 : vector<8x1xi1> to vector<8x1xi1>
    %357 = vector.broadcast %356 : vector<8x1xi1> to vector<8x128xi1>
    %358 = arith.select %357, %352, %313 : vector<8x128xi1>, vector<8x128xf32>
    %359 = arith.select %357, %350, %314 : vector<8x128xi1>, vector<8x128xf32>
    %360 = arith.truncf %358 : vector<8x128xf32> to vector<8x128xbf16>
    %c0_99 = arith.constant 0 : index
    %c7_100 = arith.constant 7 : index
    %c0_101 = arith.constant 0 : index
    %361 = vector.load %arg5[%c0_99, %c7_100, %c0_101] : memref<8x16x128xbf16, #tpu.memory_space<vmem>>, vector<8x1x128xbf16>
    %362 = vector.shape_cast %361 : vector<8x1x128xbf16> to vector<8x128xbf16>
    %363 = vector.shape_cast %360 : vector<8x128xbf16> to vector<8x1x128xbf16>
    tpu.vector_store %arg5[%c0_99, %c7_100, %c0_101], %363 {strides = array<i32>} : memref<8x16x128xbf16, #tpu.memory_space<vmem>>, vector<8x1x128xbf16>,
    %364 = arith.truncf %359 : vector<8x128xf32> to vector<8x128xbf16>
    %c0_102 = arith.constant 0 : index
    %c7_103 = arith.constant 7 : index
    %c0_104 = arith.constant 0 : index
    %365 = vector.load %arg6[%c0_102, %c7_103, %c0_104] : memref<8x16x128xbf16, #tpu.memory_space<vmem>>, vector<8x1x128xbf16>
    %366 = vector.shape_cast %365 : vector<8x1x128xbf16> to vector<8x128xbf16>
    %367 = vector.shape_cast %364 : vector<8x128xbf16> to vector<8x1x128xbf16>
    tpu.vector_store %arg6[%c0_102, %c7_103, %c0_104], %367 {strides = array<i32>} : memref<8x16x128xbf16, #tpu.memory_space<vmem>>, vector<8x1x128xbf16>,
    %c8 = arith.constant 8 : index
    %c0_105 = arith.constant 0 : index
    %c0_106 = arith.constant 0 : index
    %368 = vector.load %arg2[%c8, %c0_105, %c0_106] : memref<16x8x512xbf16, #tpu.memory_space<vmem>>, vector<1x8x512xbf16>
    %369 = vector.shape_cast %368 : vector<1x8x512xbf16> to vector<8x512xbf16>
    %370 = arith.extf %369 : vector<8x512xbf16> to vector<8x512xf32>
    %cst_107 = arith.constant dense<0.000000e+00> : vector<8x512xf32>
    %371 = tpu.matmul %358, %4, %cst_107 {dimension_numbers = #tpu.dot_dimension_numbers<[1], [0], [0], [1], [0, 0, 1, 1], [], []>} : vector<8x128xf32>, vector<128x512xf32>, vector<8x512xf32> -> vector<8x512xf32>
    %372 = arith.addf %370, %371 : vector<8x512xf32>
    %373 = vector.extract_strided_slice %372 {offsets = [0, 0], sizes = [8, 128], strides = [1, 1]} : vector<8x512xf32> to vector<8x128xf32>
    %374 = arith.negf %373 : vector<8x128xf32>
    %375 = math.exp %374 : vector<8x128xf32>
    %cst_108 = arith.constant 1.000000e+00 : f32
    %376 = vector.broadcast %cst_108 : f32 to vector<8x128xf32>
    %377 = arith.addf %376, %375 : vector<8x128xf32>
    %378 = arith.divf %376, %377 : vector<8x128xf32>
    %379 = vector.extract_strided_slice %372 {offsets = [0, 128], sizes = [8, 128], strides = [1, 1]} : vector<8x512xf32> to vector<8x128xf32>
    %380 = arith.negf %379 : vector<8x128xf32>
    %381 = math.exp %380 : vector<8x128xf32>
    %cst_109 = arith.constant 1.000000e+00 : f32
    %382 = vector.broadcast %cst_109 : f32 to vector<8x128xf32>
    %383 = arith.addf %382, %381 : vector<8x128xf32>
    %384 = arith.divf %382, %383 : vector<8x128xf32>
    %385 = vector.extract_strided_slice %372 {offsets = [0, 256], sizes = [8, 128], strides = [1, 1]} : vector<8x512xf32> to vector<8x128xf32>
    %386 = math.tanh %385 : vector<8x128xf32>
    %387 = vector.extract_strided_slice %372 {offsets = [0, 384], sizes = [8, 128], strides = [1, 1]} : vector<8x512xf32> to vector<8x128xf32>
    %388 = arith.negf %387 : vector<8x128xf32>
    %389 = math.exp %388 : vector<8x128xf32>
    %cst_110 = arith.constant 1.000000e+00 : f32
    %390 = vector.broadcast %cst_110 : f32 to vector<8x128xf32>
    %391 = arith.addf %390, %389 : vector<8x128xf32>
    %392 = arith.divf %390, %391 : vector<8x128xf32>
    %393 = arith.mulf %384, %359 : vector<8x128xf32>
    %394 = arith.mulf %378, %386 : vector<8x128xf32>
    %395 = arith.addf %393, %394 : vector<8x128xf32>
    %396 = math.tanh %395 : vector<8x128xf32>
    %397 = arith.mulf %392, %396 : vector<8x128xf32>
    %c8_i32 = arith.constant 8 : i32
    %398 = arith.addi %7, %c8_i32 : i32
    %399 = vector.broadcast %398 : i32 to vector<8x1xi32>
    %400 = arith.cmpi slt, %399, %3 : vector<8x1xi32>
    %401 = vector.shape_cast %400 : vector<8x1xi1> to vector<8x1xi1>
    %402 = vector.broadcast %401 : vector<8x1xi1> to vector<8x128xi1>
    %403 = arith.select %402, %397, %358 : vector<8x128xi1>, vector<8x128xf32>
    %404 = arith.select %402, %395, %359 : vector<8x128xi1>, vector<8x128xf32>
    %405 = arith.truncf %403 : vector<8x128xf32> to vector<8x128xbf16>
    %c0_111 = arith.constant 0 : index
    %c8_112 = arith.constant 8 : index
    %c0_113 = arith.constant 0 : index
    %406 = vector.load %arg5[%c0_111, %c8_112, %c0_113] : memref<8x16x128xbf16, #tpu.memory_space<vmem>>, vector<8x1x128xbf16>
    %407 = vector.shape_cast %406 : vector<8x1x128xbf16> to vector<8x128xbf16>
    %408 = vector.shape_cast %405 : vector<8x128xbf16> to vector<8x1x128xbf16>
    tpu.vector_store %arg5[%c0_111, %c8_112, %c0_113], %408 {strides = array<i32>} : memref<8x16x128xbf16, #tpu.memory_space<vmem>>, vector<8x1x128xbf16>,
    %409 = arith.truncf %404 : vector<8x128xf32> to vector<8x128xbf16>
    %c0_114 = arith.constant 0 : index
    %c8_115 = arith.constant 8 : index
    %c0_116 = arith.constant 0 : index
    %410 = vector.load %arg6[%c0_114, %c8_115, %c0_116] : memref<8x16x128xbf16, #tpu.memory_space<vmem>>, vector<8x1x128xbf16>
    %411 = vector.shape_cast %410 : vector<8x1x128xbf16> to vector<8x128xbf16>
    %412 = vector.shape_cast %409 : vector<8x128xbf16> to vector<8x1x128xbf16>
    tpu.vector_store %arg6[%c0_114, %c8_115, %c0_116], %412 {strides = array<i32>} : memref<8x16x128xbf16, #tpu.memory_space<vmem>>, vector<8x1x128xbf16>,
    %c9 = arith.constant 9 : index
    %c0_117 = arith.constant 0 : index
    %c0_118 = arith.constant 0 : index
    %413 = vector.load %arg2[%c9, %c0_117, %c0_118] : memref<16x8x512xbf16, #tpu.memory_space<vmem>>, vector<1x8x512xbf16>
    %414 = vector.shape_cast %413 : vector<1x8x512xbf16> to vector<8x512xbf16>
    %415 = arith.extf %414 : vector<8x512xbf16> to vector<8x512xf32>
    %cst_119 = arith.constant dense<0.000000e+00> : vector<8x512xf32>
    %416 = tpu.matmul %403, %4, %cst_119 {dimension_numbers = #tpu.dot_dimension_numbers<[1], [0], [0], [1], [0, 0, 1, 1], [], []>} : vector<8x128xf32>, vector<128x512xf32>, vector<8x512xf32> -> vector<8x512xf32>
    %417 = arith.addf %415, %416 : vector<8x512xf32>
    %418 = vector.extract_strided_slice %417 {offsets = [0, 0], sizes = [8, 128], strides = [1, 1]} : vector<8x512xf32> to vector<8x128xf32>
    %419 = arith.negf %418 : vector<8x128xf32>
    %420 = math.exp %419 : vector<8x128xf32>
    %cst_120 = arith.constant 1.000000e+00 : f32
    %421 = vector.broadcast %cst_120 : f32 to vector<8x128xf32>
    %422 = arith.addf %421, %420 : vector<8x128xf32>
    %423 = arith.divf %421, %422 : vector<8x128xf32>
    %424 = vector.extract_strided_slice %417 {offsets = [0, 128], sizes = [8, 128], strides = [1, 1]} : vector<8x512xf32> to vector<8x128xf32>
    %425 = arith.negf %424 : vector<8x128xf32>
    %426 = math.exp %425 : vector<8x128xf32>
    %cst_121 = arith.constant 1.000000e+00 : f32
    %427 = vector.broadcast %cst_121 : f32 to vector<8x128xf32>
    %428 = arith.addf %427, %426 : vector<8x128xf32>
    %429 = arith.divf %427, %428 : vector<8x128xf32>
    %430 = vector.extract_strided_slice %417 {offsets = [0, 256], sizes = [8, 128], strides = [1, 1]} : vector<8x512xf32> to vector<8x128xf32>
    %431 = math.tanh %430 : vector<8x128xf32>
    %432 = vector.extract_strided_slice %417 {offsets = [0, 384], sizes = [8, 128], strides = [1, 1]} : vector<8x512xf32> to vector<8x128xf32>
    %433 = arith.negf %432 : vector<8x128xf32>
    %434 = math.exp %433 : vector<8x128xf32>
    %cst_122 = arith.constant 1.000000e+00 : f32
    %435 = vector.broadcast %cst_122 : f32 to vector<8x128xf32>
    %436 = arith.addf %435, %434 : vector<8x128xf32>
    %437 = arith.divf %435, %436 : vector<8x128xf32>
    %438 = arith.mulf %429, %404 : vector<8x128xf32>
    %439 = arith.mulf %423, %431 : vector<8x128xf32>
    %440 = arith.addf %438, %439 : vector<8x128xf32>
    %441 = math.tanh %440 : vector<8x128xf32>
    %442 = arith.mulf %437, %441 : vector<8x128xf32>
    %c9_i32 = arith.constant 9 : i32
    %443 = arith.addi %7, %c9_i32 : i32
    %444 = vector.broadcast %443 : i32 to vector<8x1xi32>
    %445 = arith.cmpi slt, %444, %3 : vector<8x1xi32>
    %446 = vector.shape_cast %445 : vector<8x1xi1> to vector<8x1xi1>
    %447 = vector.broadcast %446 : vector<8x1xi1> to vector<8x128xi1>
    %448 = arith.select %447, %442, %403 : vector<8x128xi1>, vector<8x128xf32>
    %449 = arith.select %447, %440, %404 : vector<8x128xi1>, vector<8x128xf32>
    %450 = arith.truncf %448 : vector<8x128xf32> to vector<8x128xbf16>
    %c0_123 = arith.constant 0 : index
    %c9_124 = arith.constant 9 : index
    %c0_125 = arith.constant 0 : index
    %451 = vector.load %arg5[%c0_123, %c9_124, %c0_125] : memref<8x16x128xbf16, #tpu.memory_space<vmem>>, vector<8x1x128xbf16>
    %452 = vector.shape_cast %451 : vector<8x1x128xbf16> to vector<8x128xbf16>
    %453 = vector.shape_cast %450 : vector<8x128xbf16> to vector<8x1x128xbf16>
    tpu.vector_store %arg5[%c0_123, %c9_124, %c0_125], %453 {strides = array<i32>} : memref<8x16x128xbf16, #tpu.memory_space<vmem>>, vector<8x1x128xbf16>,
    %454 = arith.truncf %449 : vector<8x128xf32> to vector<8x128xbf16>
    %c0_126 = arith.constant 0 : index
    %c9_127 = arith.constant 9 : index
    %c0_128 = arith.constant 0 : index
    %455 = vector.load %arg6[%c0_126, %c9_127, %c0_128] : memref<8x16x128xbf16, #tpu.memory_space<vmem>>, vector<8x1x128xbf16>
    %456 = vector.shape_cast %455 : vector<8x1x128xbf16> to vector<8x128xbf16>
    %457 = vector.shape_cast %454 : vector<8x128xbf16> to vector<8x1x128xbf16>
    tpu.vector_store %arg6[%c0_126, %c9_127, %c0_128], %457 {strides = array<i32>} : memref<8x16x128xbf16, #tpu.memory_space<vmem>>, vector<8x1x128xbf16>,
    %c10 = arith.constant 10 : index
    %c0_129 = arith.constant 0 : index
    %c0_130 = arith.constant 0 : index
    %458 = vector.load %arg2[%c10, %c0_129, %c0_130] : memref<16x8x512xbf16, #tpu.memory_space<vmem>>, vector<1x8x512xbf16>
    %459 = vector.shape_cast %458 : vector<1x8x512xbf16> to vector<8x512xbf16>
    %460 = arith.extf %459 : vector<8x512xbf16> to vector<8x512xf32>
    %cst_131 = arith.constant dense<0.000000e+00> : vector<8x512xf32>
    %461 = tpu.matmul %448, %4, %cst_131 {dimension_numbers = #tpu.dot_dimension_numbers<[1], [0], [0], [1], [0, 0, 1, 1], [], []>} : vector<8x128xf32>, vector<128x512xf32>, vector<8x512xf32> -> vector<8x512xf32>
    %462 = arith.addf %460, %461 : vector<8x512xf32>
    %463 = vector.extract_strided_slice %462 {offsets = [0, 0], sizes = [8, 128], strides = [1, 1]} : vector<8x512xf32> to vector<8x128xf32>
    %464 = arith.negf %463 : vector<8x128xf32>
    %465 = math.exp %464 : vector<8x128xf32>
    %cst_132 = arith.constant 1.000000e+00 : f32
    %466 = vector.broadcast %cst_132 : f32 to vector<8x128xf32>
    %467 = arith.addf %466, %465 : vector<8x128xf32>
    %468 = arith.divf %466, %467 : vector<8x128xf32>
    %469 = vector.extract_strided_slice %462 {offsets = [0, 128], sizes = [8, 128], strides = [1, 1]} : vector<8x512xf32> to vector<8x128xf32>
    %470 = arith.negf %469 : vector<8x128xf32>
    %471 = math.exp %470 : vector<8x128xf32>
    %cst_133 = arith.constant 1.000000e+00 : f32
    %472 = vector.broadcast %cst_133 : f32 to vector<8x128xf32>
    %473 = arith.addf %472, %471 : vector<8x128xf32>
    %474 = arith.divf %472, %473 : vector<8x128xf32>
    %475 = vector.extract_strided_slice %462 {offsets = [0, 256], sizes = [8, 128], strides = [1, 1]} : vector<8x512xf32> to vector<8x128xf32>
    %476 = math.tanh %475 : vector<8x128xf32>
    %477 = vector.extract_strided_slice %462 {offsets = [0, 384], sizes = [8, 128], strides = [1, 1]} : vector<8x512xf32> to vector<8x128xf32>
    %478 = arith.negf %477 : vector<8x128xf32>
    %479 = math.exp %478 : vector<8x128xf32>
    %cst_134 = arith.constant 1.000000e+00 : f32
    %480 = vector.broadcast %cst_134 : f32 to vector<8x128xf32>
    %481 = arith.addf %480, %479 : vector<8x128xf32>
    %482 = arith.divf %480, %481 : vector<8x128xf32>
    %483 = arith.mulf %474, %449 : vector<8x128xf32>
    %484 = arith.mulf %468, %476 : vector<8x128xf32>
    %485 = arith.addf %483, %484 : vector<8x128xf32>
    %486 = math.tanh %485 : vector<8x128xf32>
    %487 = arith.mulf %482, %486 : vector<8x128xf32>
    %c10_i32 = arith.constant 10 : i32
    %488 = arith.addi %7, %c10_i32 : i32
    %489 = vector.broadcast %488 : i32 to vector<8x1xi32>
    %490 = arith.cmpi slt, %489, %3 : vector<8x1xi32>
    %491 = vector.shape_cast %490 : vector<8x1xi1> to vector<8x1xi1>
    %492 = vector.broadcast %491 : vector<8x1xi1> to vector<8x128xi1>
    %493 = arith.select %492, %487, %448 : vector<8x128xi1>, vector<8x128xf32>
    %494 = arith.select %492, %485, %449 : vector<8x128xi1>, vector<8x128xf32>
    %495 = arith.truncf %493 : vector<8x128xf32> to vector<8x128xbf16>
    %c0_135 = arith.constant 0 : index
    %c10_136 = arith.constant 10 : index
    %c0_137 = arith.constant 0 : index
    %496 = vector.load %arg5[%c0_135, %c10_136, %c0_137] : memref<8x16x128xbf16, #tpu.memory_space<vmem>>, vector<8x1x128xbf16>
    %497 = vector.shape_cast %496 : vector<8x1x128xbf16> to vector<8x128xbf16>
    %498 = vector.shape_cast %495 : vector<8x128xbf16> to vector<8x1x128xbf16>
    tpu.vector_store %arg5[%c0_135, %c10_136, %c0_137], %498 {strides = array<i32>} : memref<8x16x128xbf16, #tpu.memory_space<vmem>>, vector<8x1x128xbf16>,
    %499 = arith.truncf %494 : vector<8x128xf32> to vector<8x128xbf16>
    %c0_138 = arith.constant 0 : index
    %c10_139 = arith.constant 10 : index
    %c0_140 = arith.constant 0 : index
    %500 = vector.load %arg6[%c0_138, %c10_139, %c0_140] : memref<8x16x128xbf16, #tpu.memory_space<vmem>>, vector<8x1x128xbf16>
    %501 = vector.shape_cast %500 : vector<8x1x128xbf16> to vector<8x128xbf16>
    %502 = vector.shape_cast %499 : vector<8x128xbf16> to vector<8x1x128xbf16>
    tpu.vector_store %arg6[%c0_138, %c10_139, %c0_140], %502 {strides = array<i32>} : memref<8x16x128xbf16, #tpu.memory_space<vmem>>, vector<8x1x128xbf16>,
    %c11 = arith.constant 11 : index
    %c0_141 = arith.constant 0 : index
    %c0_142 = arith.constant 0 : index
    %503 = vector.load %arg2[%c11, %c0_141, %c0_142] : memref<16x8x512xbf16, #tpu.memory_space<vmem>>, vector<1x8x512xbf16>
    %504 = vector.shape_cast %503 : vector<1x8x512xbf16> to vector<8x512xbf16>
    %505 = arith.extf %504 : vector<8x512xbf16> to vector<8x512xf32>
    %cst_143 = arith.constant dense<0.000000e+00> : vector<8x512xf32>
    %506 = tpu.matmul %493, %4, %cst_143 {dimension_numbers = #tpu.dot_dimension_numbers<[1], [0], [0], [1], [0, 0, 1, 1], [], []>} : vector<8x128xf32>, vector<128x512xf32>, vector<8x512xf32> -> vector<8x512xf32>
    %507 = arith.addf %505, %506 : vector<8x512xf32>
    %508 = vector.extract_strided_slice %507 {offsets = [0, 0], sizes = [8, 128], strides = [1, 1]} : vector<8x512xf32> to vector<8x128xf32>
    %509 = arith.negf %508 : vector<8x128xf32>
    %510 = math.exp %509 : vector<8x128xf32>
    %cst_144 = arith.constant 1.000000e+00 : f32
    %511 = vector.broadcast %cst_144 : f32 to vector<8x128xf32>
    %512 = arith.addf %511, %510 : vector<8x128xf32>
    %513 = arith.divf %511, %512 : vector<8x128xf32>
    %514 = vector.extract_strided_slice %507 {offsets = [0, 128], sizes = [8, 128], strides = [1, 1]} : vector<8x512xf32> to vector<8x128xf32>
    %515 = arith.negf %514 : vector<8x128xf32>
    %516 = math.exp %515 : vector<8x128xf32>
    %cst_145 = arith.constant 1.000000e+00 : f32
    %517 = vector.broadcast %cst_145 : f32 to vector<8x128xf32>
    %518 = arith.addf %517, %516 : vector<8x128xf32>
    %519 = arith.divf %517, %518 : vector<8x128xf32>
    %520 = vector.extract_strided_slice %507 {offsets = [0, 256], sizes = [8, 128], strides = [1, 1]} : vector<8x512xf32> to vector<8x128xf32>
    %521 = math.tanh %520 : vector<8x128xf32>
    %522 = vector.extract_strided_slice %507 {offsets = [0, 384], sizes = [8, 128], strides = [1, 1]} : vector<8x512xf32> to vector<8x128xf32>
    %523 = arith.negf %522 : vector<8x128xf32>
    %524 = math.exp %523 : vector<8x128xf32>
    %cst_146 = arith.constant 1.000000e+00 : f32
    %525 = vector.broadcast %cst_146 : f32 to vector<8x128xf32>
    %526 = arith.addf %525, %524 : vector<8x128xf32>
    %527 = arith.divf %525, %526 : vector<8x128xf32>
    %528 = arith.mulf %519, %494 : vector<8x128xf32>
    %529 = arith.mulf %513, %521 : vector<8x128xf32>
    %530 = arith.addf %528, %529 : vector<8x128xf32>
    %531 = math.tanh %530 : vector<8x128xf32>
    %532 = arith.mulf %527, %531 : vector<8x128xf32>
    %c11_i32 = arith.constant 11 : i32
    %533 = arith.addi %7, %c11_i32 : i32
    %534 = vector.broadcast %533 : i32 to vector<8x1xi32>
    %535 = arith.cmpi slt, %534, %3 : vector<8x1xi32>
    %536 = vector.shape_cast %535 : vector<8x1xi1> to vector<8x1xi1>
    %537 = vector.broadcast %536 : vector<8x1xi1> to vector<8x128xi1>
    %538 = arith.select %537, %532, %493 : vector<8x128xi1>, vector<8x128xf32>
    %539 = arith.select %537, %530, %494 : vector<8x128xi1>, vector<8x128xf32>
    %540 = arith.truncf %538 : vector<8x128xf32> to vector<8x128xbf16>
    %c0_147 = arith.constant 0 : index
    %c11_148 = arith.constant 11 : index
    %c0_149 = arith.constant 0 : index
    %541 = vector.load %arg5[%c0_147, %c11_148, %c0_149] : memref<8x16x128xbf16, #tpu.memory_space<vmem>>, vector<8x1x128xbf16>
    %542 = vector.shape_cast %541 : vector<8x1x128xbf16> to vector<8x128xbf16>
    %543 = vector.shape_cast %540 : vector<8x128xbf16> to vector<8x1x128xbf16>
    tpu.vector_store %arg5[%c0_147, %c11_148, %c0_149], %543 {strides = array<i32>} : memref<8x16x128xbf16, #tpu.memory_space<vmem>>, vector<8x1x128xbf16>,
    %544 = arith.truncf %539 : vector<8x128xf32> to vector<8x128xbf16>
    %c0_150 = arith.constant 0 : index
    %c11_151 = arith.constant 11 : index
    %c0_152 = arith.constant 0 : index
    %545 = vector.load %arg6[%c0_150, %c11_151, %c0_152] : memref<8x16x128xbf16, #tpu.memory_space<vmem>>, vector<8x1x128xbf16>
    %546 = vector.shape_cast %545 : vector<8x1x128xbf16> to vector<8x128xbf16>
    %547 = vector.shape_cast %544 : vector<8x128xbf16> to vector<8x1x128xbf16>
    tpu.vector_store %arg6[%c0_150, %c11_151, %c0_152], %547 {strides = array<i32>} : memref<8x16x128xbf16, #tpu.memory_space<vmem>>, vector<8x1x128xbf16>,
    %c12 = arith.constant 12 : index
    %c0_153 = arith.constant 0 : index
    %c0_154 = arith.constant 0 : index
    %548 = vector.load %arg2[%c12, %c0_153, %c0_154] : memref<16x8x512xbf16, #tpu.memory_space<vmem>>, vector<1x8x512xbf16>
    %549 = vector.shape_cast %548 : vector<1x8x512xbf16> to vector<8x512xbf16>
    %550 = arith.extf %549 : vector<8x512xbf16> to vector<8x512xf32>
    %cst_155 = arith.constant dense<0.000000e+00> : vector<8x512xf32>
    %551 = tpu.matmul %538, %4, %cst_155 {dimension_numbers = #tpu.dot_dimension_numbers<[1], [0], [0], [1], [0, 0, 1, 1], [], []>} : vector<8x128xf32>, vector<128x512xf32>, vector<8x512xf32> -> vector<8x512xf32>
    %552 = arith.addf %550, %551 : vector<8x512xf32>
    %553 = vector.extract_strided_slice %552 {offsets = [0, 0], sizes = [8, 128], strides = [1, 1]} : vector<8x512xf32> to vector<8x128xf32>
    %554 = arith.negf %553 : vector<8x128xf32>
    %555 = math.exp %554 : vector<8x128xf32>
    %cst_156 = arith.constant 1.000000e+00 : f32
    %556 = vector.broadcast %cst_156 : f32 to vector<8x128xf32>
    %557 = arith.addf %556, %555 : vector<8x128xf32>
    %558 = arith.divf %556, %557 : vector<8x128xf32>
    %559 = vector.extract_strided_slice %552 {offsets = [0, 128], sizes = [8, 128], strides = [1, 1]} : vector<8x512xf32> to vector<8x128xf32>
    %560 = arith.negf %559 : vector<8x128xf32>
    %561 = math.exp %560 : vector<8x128xf32>
    %cst_157 = arith.constant 1.000000e+00 : f32
    %562 = vector.broadcast %cst_157 : f32 to vector<8x128xf32>
    %563 = arith.addf %562, %561 : vector<8x128xf32>
    %564 = arith.divf %562, %563 : vector<8x128xf32>
    %565 = vector.extract_strided_slice %552 {offsets = [0, 256], sizes = [8, 128], strides = [1, 1]} : vector<8x512xf32> to vector<8x128xf32>
    %566 = math.tanh %565 : vector<8x128xf32>
    %567 = vector.extract_strided_slice %552 {offsets = [0, 384], sizes = [8, 128], strides = [1, 1]} : vector<8x512xf32> to vector<8x128xf32>
    %568 = arith.negf %567 : vector<8x128xf32>
    %569 = math.exp %568 : vector<8x128xf32>
    %cst_158 = arith.constant 1.000000e+00 : f32
    %570 = vector.broadcast %cst_158 : f32 to vector<8x128xf32>
    %571 = arith.addf %570, %569 : vector<8x128xf32>
    %572 = arith.divf %570, %571 : vector<8x128xf32>
    %573 = arith.mulf %564, %539 : vector<8x128xf32>
    %574 = arith.mulf %558, %566 : vector<8x128xf32>
    %575 = arith.addf %573, %574 : vector<8x128xf32>
    %576 = math.tanh %575 : vector<8x128xf32>
    %577 = arith.mulf %572, %576 : vector<8x128xf32>
    %c12_i32 = arith.constant 12 : i32
    %578 = arith.addi %7, %c12_i32 : i32
    %579 = vector.broadcast %578 : i32 to vector<8x1xi32>
    %580 = arith.cmpi slt, %579, %3 : vector<8x1xi32>
    %581 = vector.shape_cast %580 : vector<8x1xi1> to vector<8x1xi1>
    %582 = vector.broadcast %581 : vector<8x1xi1> to vector<8x128xi1>
    %583 = arith.select %582, %577, %538 : vector<8x128xi1>, vector<8x128xf32>
    %584 = arith.select %582, %575, %539 : vector<8x128xi1>, vector<8x128xf32>
    %585 = arith.truncf %583 : vector<8x128xf32> to vector<8x128xbf16>
    %c0_159 = arith.constant 0 : index
    %c12_160 = arith.constant 12 : index
    %c0_161 = arith.constant 0 : index
    %586 = vector.load %arg5[%c0_159, %c12_160, %c0_161] : memref<8x16x128xbf16, #tpu.memory_space<vmem>>, vector<8x1x128xbf16>
    %587 = vector.shape_cast %586 : vector<8x1x128xbf16> to vector<8x128xbf16>
    %588 = vector.shape_cast %585 : vector<8x128xbf16> to vector<8x1x128xbf16>
    tpu.vector_store %arg5[%c0_159, %c12_160, %c0_161], %588 {strides = array<i32>} : memref<8x16x128xbf16, #tpu.memory_space<vmem>>, vector<8x1x128xbf16>,
    %589 = arith.truncf %584 : vector<8x128xf32> to vector<8x128xbf16>
    %c0_162 = arith.constant 0 : index
    %c12_163 = arith.constant 12 : index
    %c0_164 = arith.constant 0 : index
    %590 = vector.load %arg6[%c0_162, %c12_163, %c0_164] : memref<8x16x128xbf16, #tpu.memory_space<vmem>>, vector<8x1x128xbf16>
    %591 = vector.shape_cast %590 : vector<8x1x128xbf16> to vector<8x128xbf16>
    %592 = vector.shape_cast %589 : vector<8x128xbf16> to vector<8x1x128xbf16>
    tpu.vector_store %arg6[%c0_162, %c12_163, %c0_164], %592 {strides = array<i32>} : memref<8x16x128xbf16, #tpu.memory_space<vmem>>, vector<8x1x128xbf16>,
    %c13 = arith.constant 13 : index
    %c0_165 = arith.constant 0 : index
    %c0_166 = arith.constant 0 : index
    %593 = vector.load %arg2[%c13, %c0_165, %c0_166] : memref<16x8x512xbf16, #tpu.memory_space<vmem>>, vector<1x8x512xbf16>
    %594 = vector.shape_cast %593 : vector<1x8x512xbf16> to vector<8x512xbf16>
    %595 = arith.extf %594 : vector<8x512xbf16> to vector<8x512xf32>
    %cst_167 = arith.constant dense<0.000000e+00> : vector<8x512xf32>
    %596 = tpu.matmul %583, %4, %cst_167 {dimension_numbers = #tpu.dot_dimension_numbers<[1], [0], [0], [1], [0, 0, 1, 1], [], []>} : vector<8x128xf32>, vector<128x512xf32>, vector<8x512xf32> -> vector<8x512xf32>
    %597 = arith.addf %595, %596 : vector<8x512xf32>
    %598 = vector.extract_strided_slice %597 {offsets = [0, 0], sizes = [8, 128], strides = [1, 1]} : vector<8x512xf32> to vector<8x128xf32>
    %599 = arith.negf %598 : vector<8x128xf32>
    %600 = math.exp %599 : vector<8x128xf32>
    %cst_168 = arith.constant 1.000000e+00 : f32
    %601 = vector.broadcast %cst_168 : f32 to vector<8x128xf32>
    %602 = arith.addf %601, %600 : vector<8x128xf32>
    %603 = arith.divf %601, %602 : vector<8x128xf32>
    %604 = vector.extract_strided_slice %597 {offsets = [0, 128], sizes = [8, 128], strides = [1, 1]} : vector<8x512xf32> to vector<8x128xf32>
    %605 = arith.negf %604 : vector<8x128xf32>
    %606 = math.exp %605 : vector<8x128xf32>
    %cst_169 = arith.constant 1.000000e+00 : f32
    %607 = vector.broadcast %cst_169 : f32 to vector<8x128xf32>
    %608 = arith.addf %607, %606 : vector<8x128xf32>
    %609 = arith.divf %607, %608 : vector<8x128xf32>
    %610 = vector.extract_strided_slice %597 {offsets = [0, 256], sizes = [8, 128], strides = [1, 1]} : vector<8x512xf32> to vector<8x128xf32>
    %611 = math.tanh %610 : vector<8x128xf32>
    %612 = vector.extract_strided_slice %597 {offsets = [0, 384], sizes = [8, 128], strides = [1, 1]} : vector<8x512xf32> to vector<8x128xf32>
    %613 = arith.negf %612 : vector<8x128xf32>
    %614 = math.exp %613 : vector<8x128xf32>
    %cst_170 = arith.constant 1.000000e+00 : f32
    %615 = vector.broadcast %cst_170 : f32 to vector<8x128xf32>
    %616 = arith.addf %615, %614 : vector<8x128xf32>
    %617 = arith.divf %615, %616 : vector<8x128xf32>
    %618 = arith.mulf %609, %584 : vector<8x128xf32>
    %619 = arith.mulf %603, %611 : vector<8x128xf32>
    %620 = arith.addf %618, %619 : vector<8x128xf32>
    %621 = math.tanh %620 : vector<8x128xf32>
    %622 = arith.mulf %617, %621 : vector<8x128xf32>
    %c13_i32 = arith.constant 13 : i32
    %623 = arith.addi %7, %c13_i32 : i32
    %624 = vector.broadcast %623 : i32 to vector<8x1xi32>
    %625 = arith.cmpi slt, %624, %3 : vector<8x1xi32>
    %626 = vector.shape_cast %625 : vector<8x1xi1> to vector<8x1xi1>
    %627 = vector.broadcast %626 : vector<8x1xi1> to vector<8x128xi1>
    %628 = arith.select %627, %622, %583 : vector<8x128xi1>, vector<8x128xf32>
    %629 = arith.select %627, %620, %584 : vector<8x128xi1>, vector<8x128xf32>
    %630 = arith.truncf %628 : vector<8x128xf32> to vector<8x128xbf16>
    %c0_171 = arith.constant 0 : index
    %c13_172 = arith.constant 13 : index
    %c0_173 = arith.constant 0 : index
    %631 = vector.load %arg5[%c0_171, %c13_172, %c0_173] : memref<8x16x128xbf16, #tpu.memory_space<vmem>>, vector<8x1x128xbf16>
    %632 = vector.shape_cast %631 : vector<8x1x128xbf16> to vector<8x128xbf16>
    %633 = vector.shape_cast %630 : vector<8x128xbf16> to vector<8x1x128xbf16>
    tpu.vector_store %arg5[%c0_171, %c13_172, %c0_173], %633 {strides = array<i32>} : memref<8x16x128xbf16, #tpu.memory_space<vmem>>, vector<8x1x128xbf16>,
    %634 = arith.truncf %629 : vector<8x128xf32> to vector<8x128xbf16>
    %c0_174 = arith.constant 0 : index
    %c13_175 = arith.constant 13 : index
    %c0_176 = arith.constant 0 : index
    %635 = vector.load %arg6[%c0_174, %c13_175, %c0_176] : memref<8x16x128xbf16, #tpu.memory_space<vmem>>, vector<8x1x128xbf16>
    %636 = vector.shape_cast %635 : vector<8x1x128xbf16> to vector<8x128xbf16>
    %637 = vector.shape_cast %634 : vector<8x128xbf16> to vector<8x1x128xbf16>
    tpu.vector_store %arg6[%c0_174, %c13_175, %c0_176], %637 {strides = array<i32>} : memref<8x16x128xbf16, #tpu.memory_space<vmem>>, vector<8x1x128xbf16>,
    %c14 = arith.constant 14 : index
    %c0_177 = arith.constant 0 : index
    %c0_178 = arith.constant 0 : index
    %638 = vector.load %arg2[%c14, %c0_177, %c0_178] : memref<16x8x512xbf16, #tpu.memory_space<vmem>>, vector<1x8x512xbf16>
    %639 = vector.shape_cast %638 : vector<1x8x512xbf16> to vector<8x512xbf16>
    %640 = arith.extf %639 : vector<8x512xbf16> to vector<8x512xf32>
    %cst_179 = arith.constant dense<0.000000e+00> : vector<8x512xf32>
    %641 = tpu.matmul %628, %4, %cst_179 {dimension_numbers = #tpu.dot_dimension_numbers<[1], [0], [0], [1], [0, 0, 1, 1], [], []>} : vector<8x128xf32>, vector<128x512xf32>, vector<8x512xf32> -> vector<8x512xf32>
    %642 = arith.addf %640, %641 : vector<8x512xf32>
    %643 = vector.extract_strided_slice %642 {offsets = [0, 0], sizes = [8, 128], strides = [1, 1]} : vector<8x512xf32> to vector<8x128xf32>
    %644 = arith.negf %643 : vector<8x128xf32>
    %645 = math.exp %644 : vector<8x128xf32>
    %cst_180 = arith.constant 1.000000e+00 : f32
    %646 = vector.broadcast %cst_180 : f32 to vector<8x128xf32>
    %647 = arith.addf %646, %645 : vector<8x128xf32>
    %648 = arith.divf %646, %647 : vector<8x128xf32>
    %649 = vector.extract_strided_slice %642 {offsets = [0, 128], sizes = [8, 128], strides = [1, 1]} : vector<8x512xf32> to vector<8x128xf32>
    %650 = arith.negf %649 : vector<8x128xf32>
    %651 = math.exp %650 : vector<8x128xf32>
    %cst_181 = arith.constant 1.000000e+00 : f32
    %652 = vector.broadcast %cst_181 : f32 to vector<8x128xf32>
    %653 = arith.addf %652, %651 : vector<8x128xf32>
    %654 = arith.divf %652, %653 : vector<8x128xf32>
    %655 = vector.extract_strided_slice %642 {offsets = [0, 256], sizes = [8, 128], strides = [1, 1]} : vector<8x512xf32> to vector<8x128xf32>
    %656 = math.tanh %655 : vector<8x128xf32>
    %657 = vector.extract_strided_slice %642 {offsets = [0, 384], sizes = [8, 128], strides = [1, 1]} : vector<8x512xf32> to vector<8x128xf32>
    %658 = arith.negf %657 : vector<8x128xf32>
    %659 = math.exp %658 : vector<8x128xf32>
    %cst_182 = arith.constant 1.000000e+00 : f32
    %660 = vector.broadcast %cst_182 : f32 to vector<8x128xf32>
    %661 = arith.addf %660, %659 : vector<8x128xf32>
    %662 = arith.divf %660, %661 : vector<8x128xf32>
    %663 = arith.mulf %654, %629 : vector<8x128xf32>
    %664 = arith.mulf %648, %656 : vector<8x128xf32>
    %665 = arith.addf %663, %664 : vector<8x128xf32>
    %666 = math.tanh %665 : vector<8x128xf32>
    %667 = arith.mulf %662, %666 : vector<8x128xf32>
    %c14_i32 = arith.constant 14 : i32
    %668 = arith.addi %7, %c14_i32 : i32
    %669 = vector.broadcast %668 : i32 to vector<8x1xi32>
    %670 = arith.cmpi slt, %669, %3 : vector<8x1xi32>
    %671 = vector.shape_cast %670 : vector<8x1xi1> to vector<8x1xi1>
    %672 = vector.broadcast %671 : vector<8x1xi1> to vector<8x128xi1>
    %673 = arith.select %672, %667, %628 : vector<8x128xi1>, vector<8x128xf32>
    %674 = arith.select %672, %665, %629 : vector<8x128xi1>, vector<8x128xf32>
    %675 = arith.truncf %673 : vector<8x128xf32> to vector<8x128xbf16>
    %c0_183 = arith.constant 0 : index
    %c14_184 = arith.constant 14 : index
    %c0_185 = arith.constant 0 : index
    %676 = vector.load %arg5[%c0_183, %c14_184, %c0_185] : memref<8x16x128xbf16, #tpu.memory_space<vmem>>, vector<8x1x128xbf16>
    %677 = vector.shape_cast %676 : vector<8x1x128xbf16> to vector<8x128xbf16>
    %678 = vector.shape_cast %675 : vector<8x128xbf16> to vector<8x1x128xbf16>
    tpu.vector_store %arg5[%c0_183, %c14_184, %c0_185], %678 {strides = array<i32>} : memref<8x16x128xbf16, #tpu.memory_space<vmem>>, vector<8x1x128xbf16>,
    %679 = arith.truncf %674 : vector<8x128xf32> to vector<8x128xbf16>
    %c0_186 = arith.constant 0 : index
    %c14_187 = arith.constant 14 : index
    %c0_188 = arith.constant 0 : index
    %680 = vector.load %arg6[%c0_186, %c14_187, %c0_188] : memref<8x16x128xbf16, #tpu.memory_space<vmem>>, vector<8x1x128xbf16>
    %681 = vector.shape_cast %680 : vector<8x1x128xbf16> to vector<8x128xbf16>
    %682 = vector.shape_cast %679 : vector<8x128xbf16> to vector<8x1x128xbf16>
    tpu.vector_store %arg6[%c0_186, %c14_187, %c0_188], %682 {strides = array<i32>} : memref<8x16x128xbf16, #tpu.memory_space<vmem>>, vector<8x1x128xbf16>,
    %c15 = arith.constant 15 : index
    %c0_189 = arith.constant 0 : index
    %c0_190 = arith.constant 0 : index
    %683 = vector.load %arg2[%c15, %c0_189, %c0_190] : memref<16x8x512xbf16, #tpu.memory_space<vmem>>, vector<1x8x512xbf16>
    %684 = vector.shape_cast %683 : vector<1x8x512xbf16> to vector<8x512xbf16>
    %685 = arith.extf %684 : vector<8x512xbf16> to vector<8x512xf32>
    %cst_191 = arith.constant dense<0.000000e+00> : vector<8x512xf32>
    %686 = tpu.matmul %673, %4, %cst_191 {dimension_numbers = #tpu.dot_dimension_numbers<[1], [0], [0], [1], [0, 0, 1, 1], [], []>} : vector<8x128xf32>, vector<128x512xf32>, vector<8x512xf32> -> vector<8x512xf32>
    %687 = arith.addf %685, %686 : vector<8x512xf32>
    %688 = vector.extract_strided_slice %687 {offsets = [0, 0], sizes = [8, 128], strides = [1, 1]} : vector<8x512xf32> to vector<8x128xf32>
    %689 = arith.negf %688 : vector<8x128xf32>
    %690 = math.exp %689 : vector<8x128xf32>
    %cst_192 = arith.constant 1.000000e+00 : f32
    %691 = vector.broadcast %cst_192 : f32 to vector<8x128xf32>
    %692 = arith.addf %691, %690 : vector<8x128xf32>
    %693 = arith.divf %691, %692 : vector<8x128xf32>
    %694 = vector.extract_strided_slice %687 {offsets = [0, 128], sizes = [8, 128], strides = [1, 1]} : vector<8x512xf32> to vector<8x128xf32>
    %695 = arith.negf %694 : vector<8x128xf32>
    %696 = math.exp %695 : vector<8x128xf32>
    %cst_193 = arith.constant 1.000000e+00 : f32
    %697 = vector.broadcast %cst_193 : f32 to vector<8x128xf32>
    %698 = arith.addf %697, %696 : vector<8x128xf32>
    %699 = arith.divf %697, %698 : vector<8x128xf32>
    %700 = vector.extract_strided_slice %687 {offsets = [0, 256], sizes = [8, 128], strides = [1, 1]} : vector<8x512xf32> to vector<8x128xf32>
    %701 = math.tanh %700 : vector<8x128xf32>
    %702 = vector.extract_strided_slice %687 {offsets = [0, 384], sizes = [8, 128], strides = [1, 1]} : vector<8x512xf32> to vector<8x128xf32>
    %703 = arith.negf %702 : vector<8x128xf32>
    %704 = math.exp %703 : vector<8x128xf32>
    %cst_194 = arith.constant 1.000000e+00 : f32
    %705 = vector.broadcast %cst_194 : f32 to vector<8x128xf32>
    %706 = arith.addf %705, %704 : vector<8x128xf32>
    %707 = arith.divf %705, %706 : vector<8x128xf32>
    %708 = arith.mulf %699, %674 : vector<8x128xf32>
    %709 = arith.mulf %693, %701 : vector<8x128xf32>
    %710 = arith.addf %708, %709 : vector<8x128xf32>
    %711 = math.tanh %710 : vector<8x128xf32>
    %712 = arith.mulf %707, %711 : vector<8x128xf32>
    %c15_i32 = arith.constant 15 : i32
    %713 = arith.addi %7, %c15_i32 : i32
    %714 = vector.broadcast %713 : i32 to vector<8x1xi32>
    %715 = arith.cmpi slt, %714, %3 : vector<8x1xi32>
    %716 = vector.shape_cast %715 : vector<8x1xi1> to vector<8x1xi1>
    %717 = vector.broadcast %716 : vector<8x1xi1> to vector<8x128xi1>
    %718 = arith.select %717, %712, %673 : vector<8x128xi1>, vector<8x128xf32>
    %719 = arith.select %717, %710, %674 : vector<8x128xi1>, vector<8x128xf32>
    %720 = arith.truncf %718 : vector<8x128xf32> to vector<8x128xbf16>
    %c0_195 = arith.constant 0 : index
    %c15_196 = arith.constant 15 : index
    %c0_197 = arith.constant 0 : index
    %721 = vector.load %arg5[%c0_195, %c15_196, %c0_197] : memref<8x16x128xbf16, #tpu.memory_space<vmem>>, vector<8x1x128xbf16>
    %722 = vector.shape_cast %721 : vector<8x1x128xbf16> to vector<8x128xbf16>
    %723 = vector.shape_cast %720 : vector<8x128xbf16> to vector<8x1x128xbf16>
    tpu.vector_store %arg5[%c0_195, %c15_196, %c0_197], %723 {strides = array<i32>} : memref<8x16x128xbf16, #tpu.memory_space<vmem>>, vector<8x1x128xbf16>,
    %724 = arith.truncf %719 : vector<8x128xf32> to vector<8x128xbf16>
    %c0_198 = arith.constant 0 : index
    %c15_199 = arith.constant 15 : index
    %c0_200 = arith.constant 0 : index
    %725 = vector.load %arg6[%c0_198, %c15_199, %c0_200] : memref<8x16x128xbf16, #tpu.memory_space<vmem>>, vector<8x1x128xbf16>
    %726 = vector.shape_cast %725 : vector<8x1x128xbf16> to vector<8x128xbf16>
    %727 = vector.shape_cast %724 : vector<8x128xbf16> to vector<8x1x128xbf16>
    tpu.vector_store %arg6[%c0_198, %c15_199, %c0_200], %727 {strides = array<i32>} : memref<8x16x128xbf16, #tpu.memory_space<vmem>>, vector<8x1x128xbf16>,
    %c0_201 = arith.constant 0 : index
    %c0_202 = arith.constant 0 : index
    %728 = vector.load %arg7[%c0_201, %c0_202] : memref<8x128xf32, #tpu.memory_space<vmem>>, vector<8x128xf32>
    tpu.vector_store %arg7[%c0_201, %c0_202], %718 {strides = array<i32>} : memref<8x128xf32, #tpu.memory_space<vmem>>, vector<8x128xf32>,
    %c0_203 = arith.constant 0 : index
    %c0_204 = arith.constant 0 : index
    %729 = vector.load %arg8[%c0_203, %c0_204] : memref<8x128xf32, #tpu.memory_space<vmem>>, vector<8x128xf32>
    tpu.vector_store %arg8[%c0_203, %c0_204], %719 {strides = array<i32>} : memref<8x128xf32, #tpu.memory_space<vmem>>, vector<8x128xf32>,
    return
  }
  func.func @transform_0(%arg0: i32, %arg1: i32) -> (i32, i32, i32) {
    %c0_i32 = arith.constant 0 : i32
    %c0_i32_0 = arith.constant 0 : i32
    return %arg1, %arg0, %c0_i32 : i32, i32, i32
  }
  func.func @transform_1(%arg0: i32, %arg1: i32) -> (i32, i32) {
    %c0_i32 = arith.constant 0 : i32
    %c0_i32_0 = arith.constant 0 : i32
    return %arg0, %c0_i32 : i32, i32
  }
  func.func @transform_2(%arg0: i32, %arg1: i32) -> (i32, i32) {
    %c0_i32 = arith.constant 0 : i32
    %c0_i32_0 = arith.constant 0 : i32
    %c0_i32_1 = arith.constant 0 : i32
    return %c0_i32, %c0_i32_0 : i32, i32
  }
  func.func @transform_3(%arg0: i32, %arg1: i32) -> (i32, i32, i32) {
    %c0_i32 = arith.constant 0 : i32
    %c0_i32_0 = arith.constant 0 : i32
    return %arg0, %arg1, %c0_i32 : i32, i32, i32
  }
  func.func @transform_4(%arg0: i32, %arg1: i32) -> (i32, i32, i32) {
    %c0_i32 = arith.constant 0 : i32
    %c0_i32_0 = arith.constant 0 : i32
    return %arg0, %arg1, %c0_i32 : i32, i32, i32
  }
}

</mosaic_0001>

<llo_original>
// kernel: encoder_forward.1
$region0: #{encoder_forward.1}
  #allocation0 [shape = 'u32[]', space=smem, size = 0x4, offset = 0x4, fixed_abs, tag = 'smem constant byte address 0x4 - core index']
  #allocation1 [shape = 'u32[144,128]{1,0:T(1,128)}', space=vmem, size = 0x12000, scoped, tag = 'internal scratch']
  #allocation2 [shape = 'f32[8,128]{1,0:T(8,128)}', space=vmem, size = 0x1000, scoped, tag = 'scratch operand']
  #allocation3 [shape = 'f32[8,128]{1,0:T(8,128)}', space=vmem, size = 0x1000, scoped, tag = 'scratch operand']
  %s0 = inlined_call_operand.vmem [shape: bf16[16,8,512], index: 0, kind: input, shape index: {}]
  %s1 = inlined_call_operand.vmem [shape: s32[8,1], index: 1, kind: input, shape index: {}]
  %s2 = inlined_call_operand.vmem [shape: f32[128,512], index: 2, kind: input, shape index: {}]
  %s3 = inlined_call_operand.vmem [shape: bf16[8,16,128], index: 3, kind: output, shape index: {0}]
  %s4 = inlined_call_operand.vmem [shape: bf16[8,16,128], index: 4, kind: output, shape index: {1}]
  %5 = xla_tuple %s3, %s4
  %s6 = sld [smem:[#allocation0]]
  $region34: #{encoder_forward.1} parent=0
    _
  %s8 = ssub.s32 1, %s6
  %s9 = scalar_select 0, %s8, %s6
  // Predicated region
  $region2: #{encoder_forward.1} parent=0 // pred_check
    _
  $region3: #{encoder_forward.1} parent=0 // pred_check_branch
    %11 = sbr.rel (0) target = $region5
  $region4: #{encoder_forward.1} parent=0 // pred_region
    _
  $region5: #{encoder_forward.1} parent=0 // pred_fallthru
    _
  // Predicated region
  $region6: #{encoder_forward.1} parent=0 // pred_check
    _
  $region7: #{encoder_forward.1} parent=0 // pred_check_branch
    %13 = sbr.rel (0) target = $region9
  $region8: #{encoder_forward.1} parent=0 // pred_region
    _
  $region9: #{encoder_forward.1} parent=0 // pred_fallthru
    _
  // Predicated region
  $region10: #{encoder_forward.1} parent=0 // pred_check
    _
  $region11: #{encoder_forward.1} parent=0 // pred_check_branch
    %15 = sbr.rel (0) target = $region13
  $region12: #{encoder_forward.1} parent=0 // pred_region
    _
  $region13: #{encoder_forward.1} parent=0 // pred_fallthru
    _
  %p16 = scmp.eq.s32.totalorder 0, 0
  // Predicated region
  $region14: #{encoder_forward.1} parent=0 // pred_check
    %p17 = pneg %p16
  $region15: #{encoder_forward.1} parent=0 // pred_check_branch
    %19 = sbr.rel (%p17) target = $region17
  $region16: #{encoder_forward.1} parent=0 // pred_region
    %20 = vst [vmem:[#allocation2] sm:$0xff] 0.0
    %21 = vst [vmem:[#allocation3] sm:$0xff] 0.0
  $region17: #{encoder_forward.1} parent=0 // pred_fallthru
    _
  %v22 = vld [vmem:[%s1] sm:$0xff]
  %v23 = vld [vmem:[%s2] sm:$0xff]
  %v24 = vld [vmem:[%s2 + $0x8] sm:$0xff]
  %v25 = vld [vmem:[%s2 + $0x10] sm:$0xff]
  %v26 = vld [vmem:[%s2 + $0x18] sm:$0xff]
  %v27 = vld [vmem:[%s2 + $0x20] sm:$0xff]
  %v28 = vld [vmem:[%s2 + $0x28] sm:$0xff]
  %v29 = vld [vmem:[%s2 + $0x30] sm:$0xff]
  %v30 = vld [vmem:[%s2 + $0x38] sm:$0xff]
  %v31 = vld [vmem:[%s2 + $0x40] sm:$0xff]
  %v32 = vld [vmem:[%s2 + $0x48] sm:$0xff]
  %v33 = vld [vmem:[%s2 + $0x50] sm:$0xff]
  %v34 = vld [vmem:[%s2 + $0x58] sm:$0xff]
  %v35 = vld [vmem:[%s2 + $0x60] sm:$0xff]
  %v36 = vld [vmem:[%s2 + $0x68] sm:$0xff]
  %v37 = vld [vmem:[%s2 + $0x70] sm:$0xff]
  %v38 = vld [vmem:[%s2 + $0x78] sm:$0xff]
  %v39 = vld [vmem:[%s2 + $0x80] sm:$0xff]
  %v40 = vld [vmem:[%s2 + $0x88] sm:$0xff]
  %v41 = vld [vmem:[%s2 + $0x90] sm:$0xff]
  %v42 = vld [vmem:[%s2 + $0x98] sm:$0xff]
  %v43 = vld [vmem:[%s2 + $0xa0] sm:$0xff]
  %v44 = vld [vmem:[%s2 + $0xa8] sm:$0xff]
  %v45 = vld [vmem:[%s2 + $0xb0] sm:$0xff]
  %v46 = vld [vmem:[%s2 + $0xb8] sm:$0xff]
  %v47 = vld [vmem:[%s2 + $0xc0] sm:$0xff]
  %v48 = vld [vmem:[%s2 + $0xc8] sm:$0xff]
  %v49 = vld [vmem:[%s2 + $0xd0] sm:$0xff]
  %v50 = vld [vmem:[%s2 + $0xd8] sm:$0xff]
  %v51 = vld [vmem:[%s2 + $0xe0] sm:$0xff]
  %v52 = vld [vmem:[%s2 + $0xe8] sm:$0xff]
  %v53 = vld [vmem:[%s2 + $0xf0] sm:$0xff]
  %v54 = vld [vmem:[%s2 + $0xf8] sm:$0xff]
  %v55 = vld [vmem:[%s2 + $0x100] sm:$0xff]
  %v56 = vld [vmem:[%s2 + $0x108] sm:$0xff]
  %v57 = vld [vmem:[%s2 + $0x110] sm:$0xff]
  %v58 = vld [vmem:[%s2 + $0x118] sm:$0xff]
  %v59 = vld [vmem:[%s2 + $0x120] sm:$0xff]
  %v60 = vld [vmem:[%s2 + $0x128] sm:$0xff]
  %v61 = vld [vmem:[%s2 + $0x130] sm:$0xff]
  %v62 = vld [vmem:[%s2 + $0x138] sm:$0xff]
  %v63 = vld [vmem:[%s2 + $0x140] sm:$0xff]
  %v64 = vld [vmem:[%s2 + $0x148] sm:$0xff]
  %v65 = vld [vmem:[%s2 + $0x150] sm:$0xff]
  %v66 = vld [vmem:[%s2 + $0x158] sm:$0xff]
  %v67 = vld [vmem:[%s2 + $0x160] sm:$0xff]
  %v68 = vld [vmem:[%s2 + $0x168] sm:$0xff]
  %v69 = vld [vmem:[%s2 + $0x170] sm:$0xff]
  %v70 = vld [vmem:[%s2 + $0x178] sm:$0xff]
  %v71 = vld [vmem:[%s2 + $0x180] sm:$0xff]
  %v72 = vld [vmem:[%s2 + $0x188] sm:$0xff]
  %v73 = vld [vmem:[%s2 + $0x190] sm:$0xff]
  %v74 = vld [vmem:[%s2 + $0x198] sm:$0xff]
  %v75 = vld [vmem:[%s2 + $0x1a0] sm:$0xff]
  %v76 = vld [vmem:[%s2 + $0x1a8] sm:$0xff]
  %v77 = vld [vmem:[%s2 + $0x1b0] sm:$0xff]
  %v78 = vld [vmem:[%s2 + $0x1b8] sm:$0xff]
  %v79 = vld [vmem:[%s2 + $0x1c0] sm:$0xff]
  %v80 = vld [vmem:[%s2 + $0x1c8] sm:$0xff]
  %v81 = vld [vmem:[%s2 + $0x1d0] sm:$0xff]
  %v82 = vld [vmem:[%s2 + $0x1d8] sm:$0xff]
  %v83 = vld [vmem:[%s2 + $0x1e0] sm:$0xff]
  %v84 = vld [vmem:[%s2 + $0x1e8] sm:$0xff]
  %v85 = vld [vmem:[%s2 + $0x1f0] sm:$0xff]
  %v86 = vld [vmem:[%s2 + $0x1f8] sm:$0xff]
  %v87 = vld [vmem:[#allocation2] sm:$0xff]
  %v88 = vld [vmem:[#allocation3] sm:$0xff]
  %s89 = smul.u32 0, 16
  %v90 = vld [vmem:[%s0] sm:$0xff]
  %v91 = vld [vmem:[%s0 + $0x8] sm:$0xff]
  %v92 = vunpack.c.l.bf16 %v90
  %v93 = vunpack.c.h.bf16 %v90
  %v94 = vunpack.c.l.bf16 %v91
  %v95 = vunpack.c.h.bf16 %v91
  %96 = vmatprep.subr.mxu0 %v24
  %97 = vmatpush1.msra.mxu0 %v23
  %98 = vmatprep.subr.mxu0 %v28
  %99 = vmatpush1.msra.mxu0 %v27
  %100 = vmatprep.subr.mxu0 %v32
  %101 = vmatpush1.msra.mxu0 %v31
  %102 = vmatprep.subr.mxu0 %v36
  %103 = vmatpush1.msra.mxu0 %v35
  %104 = vmatprep.subr.mxu0 %v40
  %105 = vmatpush1.msra.mxu0 %v39
  %106 = vmatprep.subr.mxu0 %v44
  %107 = vmatpush1.msra.mxu0 %v43
  %108 = vmatprep.subr.mxu0 %v48
  %109 = vmatpush1.msra.mxu0 %v47
  %110 = vmatprep.subr.mxu0 %v52
  %111 = vmatpush1.msra.mxu0 %v51
  %112 = vmatprep.subr.mxu0 %v56
  %113 = vmatpush1.msra.mxu0 %v55
  %114 = vmatprep.subr.mxu0 %v60
  %115 = vmatpush1.msra.mxu0 %v59
  %116 = vmatprep.subr.mxu0 %v64
  %117 = vmatpush1.msra.mxu0 %v63
  %118 = vmatprep.subr.mxu0 %v68
  %119 = vmatpush1.msra.mxu0 %v67
  %120 = vmatprep.subr.mxu0 %v72
  %121 = vmatpush1.msra.mxu0 %v71
  %122 = vmatprep.subr.mxu0 %v76
  %123 = vmatpush1.msra.mxu0 %v75
  %124 = vmatprep.subr.mxu0 %v80
  %125 = vmatpush1.msra.mxu0 %v79
  %126 = vmatprep.subr.mxu0 %v84
  %127 = vmatpush1.msra.mxu0 %v83
  %128 = vmatprep.subr.mxu0 0.0
  %129 = vmatpush1.msra.mxu0 0.0
  %130 = vmatprep.subr.mxu0 0.0
  %131 = vmatpush1.msra.mxu0 0.0
  %132 = vmatprep.subr.mxu0 0.0
  %133 = vmatpush1.msra.mxu0 0.0
  %134 = vmatprep.subr.mxu0 0.0
  %135 = vmatpush1.msra.mxu0 0.0
  %136 = vmatprep.subr.mxu0 0.0
  %137 = vmatpush1.msra.mxu0 0.0
  %138 = vmatprep.subr.mxu0 0.0
  %139 = vmatpush1.msra.mxu0 0.0
  %140 = vmatprep.subr.mxu0 0.0
  %141 = vmatpush1.msra.mxu0 0.0
  %142 = vmatprep.subr.mxu0 0.0
  %143 = vmatpush1.msra.mxu0 0.0
  %144 = vmatprep.subr.mxu0 0.0
  %145 = vmatpush1.msra.mxu0 0.0
  %146 = vmatprep.subr.mxu0 0.0
  %147 = vmatpush1.msra.mxu0 0.0
  %148 = vmatprep.subr.mxu0 0.0
  %149 = vmatpush1.msra.mxu0 0.0
  %150 = vmatprep.subr.mxu0 0.0
  %151 = vmatpush1.msra.mxu0 0.0
  %152 = vmatprep.subr.mxu0 0.0
  %153 = vmatpush1.msra.mxu0 0.0
  %154 = vmatprep.subr.mxu0 0.0
  %155 = vmatpush1.msra.mxu0 0.0
  %156 = vmatprep.subr.mxu0 0.0
  %157 = vmatpush1.msra.mxu0 0.0
  %158 = vmatprep.subr.mxu0 0.0
  %159 = vmatpush1.msra.mxu0 0.0
  %160 = vmatprep.mubr.f32.mxu0 0.0
  %161 = vmatmul.mubr.f32.gmra.mrb[0].mxu0 %v87
  %v162 = vpop.f32.mrb[0].mxu0
  %v163 = vadd.f32 0.0, %v162
  %v164 = vpop.f32.mrb[0].mxu0
  %v165 = vadd.f32 0.0, %v164
  %166 = vdwg.mxu0
  %167 = vmatprep.subr.mxu0 %v26
  %168 = vmatpush1.msra.mxu0 %v25
  %169 = vmatprep.subr.mxu0 %v30
  %170 = vmatpush1.msra.mxu0 %v29
  %171 = vmatprep.subr.mxu0 %v34
  %172 = vmatpush1.msra.mxu0 %v33
  %173 = vmatprep.subr.mxu0 %v38
  %174 = vmatpush1.msra.mxu0 %v37
  %175 = vmatprep.subr.mxu0 %v42
  %176 = vmatpush1.msra.mxu0 %v41
  %177 = vmatprep.subr.mxu0 %v46
  %178 = vmatpush1.msra.mxu0 %v45
  %179 = vmatprep.subr.mxu0 %v50
  %180 = vmatpush1.msra.mxu0 %v49
  %181 = vmatprep.subr.mxu0 %v54
  %182 = vmatpush1.msra.mxu0 %v53
  %183 = vmatprep.subr.mxu0 %v58
  %184 = vmatpush1.msra.mxu0 %v57
  %185 = vmatprep.subr.mxu0 %v62
  %186 = vmatpush1.msra.mxu0 %v61
  %187 = vmatprep.subr.mxu0 %v66
  %188 = vmatpush1.msra.mxu0 %v65
  %189 = vmatprep.subr.mxu0 %v70
  %190 = vmatpush1.msra.mxu0 %v69
  %191 = vmatprep.subr.mxu0 %v74
  %192 = vmatpush1.msra.mxu0 %v73
  %193 = vmatprep.subr.mxu0 %v78
  %194 = vmatpush1.msra.mxu0 %v77
  %195 = vmatprep.subr.mxu0 %v82
  %196 = vmatpush1.msra.mxu0 %v81
  %197 = vmatprep.subr.mxu0 %v86
  %198 = vmatpush1.msra.mxu0 %v85
  %199 = vmatprep.subr.mxu0 0.0
  %200 = vmatpush1.msra.mxu0 0.0
  %201 = vmatprep.subr.mxu0 0.0
  %202 = vmatpush1.msra.mxu0 0.0
  %203 = vmatprep.subr.mxu0 0.0
  %204 = vmatpush1.msra.mxu0 0.0
  %205 = vmatprep.subr.mxu0 0.0
  %206 = vmatpush1.msra.mxu0 0.0
  %207 = vmatprep.subr.mxu0 0.0
  %208 = vmatpush1.msra.mxu0 0.0
  %209 = vmatprep.subr.mxu0 0.0
  %210 = vmatpush1.msra.mxu0 0.0
  %211 = vmatprep.subr.mxu0 0.0
  %212 = vmatpush1.msra.mxu0 0.0
  %213 = vmatprep.subr.mxu0 0.0
  %214 = vmatpush1.msra.mxu0 0.0
  %215 = vmatprep.subr.mxu0 0.0
  %216 = vmatpush1.msra.mxu0 0.0
  %217 = vmatprep.subr.mxu0 0.0
  %218 = vmatpush1.msra.mxu0 0.0
  %219 = vmatprep.subr.mxu0 0.0
  %220 = vmatpush1.msra.mxu0 0.0
  %221 = vmatprep.subr.mxu0 0.0
  %222 = vmatpush1.msra.mxu0 0.0
  %223 = vmatprep.subr.mxu0 0.0
  %224 = vmatpush1.msra.mxu0 0.0
  %225 = vmatprep.subr.mxu0 0.0
  %226 = vmatpush1.msra.mxu0 0.0
  %227 = vmatprep.subr.mxu0 0.0
  %228 = vmatpush1.msra.mxu0 0.0
  %229 = vmatprep.subr.mxu0 0.0
  %230 = vmatpush1.msra.mxu0 0.0
  %231 = vmatprep.mubr.f32.mxu0 0.0
  %232 = vmatmul.mubr.f32.gmra.mrb[0].mxu0 %v87
  %v233 = vpop.f32.mrb[0].mxu0
  %v234 = vadd.f32 0.0, %v233
  %v235 = vpop.f32.mrb[0].mxu0
  %v236 = vadd.f32 0.0, %v235
  %237 = vdwg.mxu0
  %v238 = vadd.f32 %v92, %v163
  %v239 = vadd.f32 %v93, %v165
  %v240 = vadd.f32 %v94, %v234
  %v241 = vadd.f32 %v95, %v236
  %v242 = vxor.u32 %v238, 2147483648
  %v243 = vmul.f32 %v242, 1.442695
  %v244 = vpow.pop %v243
  %v245 = vadd.f32 %v244, 1.0
  %v246 = vrcp.pop %v245
  %v247 = vmul.f32 1.0, %v246
  %v248 = vxor.u32 %v239, 2147483648
  %v249 = vmul.f32 %v248, 1.442695
  %v250 = vpow.pop %v249
  %v251 = vadd.f32 %v250, 1.0
  %v252 = vrcp.pop %v251
  %v253 = vmul.f32 1.0, %v252
  %v254 = vtanh.pop %v240
  %v255 = vxor.u32 %v241, 2147483648
  %v256 = vmul.f32 %v255, 1.442695
  %v257 = vpow.pop %v256
  %v258 = vadd.f32 %v257, 1.0
  %v259 = vrcp.pop %v258
  %v260 = vmul.f32 1.0, %v259
  %v261 = vmul.f32 %v253, %v88
  %v262 = vmul.f32 %v247, %v254
  %v263 = vadd.f32 %v261, %v262
  %v264 = vtanh.pop %v263
  %v265 = vmul.f32 %v260, %v264
  %v266 = vstv %s89
  %vm267 = vcmp.lt.s32.totalorder %v266, %v22
  %v268 = vsel %vm267, 1, 0
  %269 = vset.pattern.permute.xlu0 0
  %270 = vperm.xlu0 %269, %v268
  %v271 = vpop.permute.xlu0 %270
  %vm272 = vcmp.eq.s32.totalorder %v271, 1
  %v273 = vsel %vm272, %v265, %v87
  %v274 = vsel %vm272, %v263, %v88
  %v275 = vpack.c.bf16 %v273, %v273
  %v278 = vunpack.c.l.s4 1966171168
  %v279 = vunpack.c.0.s8 %v278
  %v280 = vlaneseq
  %v281 = vshrl.u32 %v280, 7
  %v282 = vsub.s32 %v279, %v281
  %v283 = vrot.slane %v275, %v282
  %v284 = vcombine.high %v283, %v283
  %v286 = vunpack.c.l.s4 1966171168
  %v287 = vunpack.c.0.s8 %v286
  %v288 = vlaneseq
  %v289 = vshrl.u32 %v288, 7
  %v290 = vsub.s32 %v287, %v289
  %v291 = vrot.slane %v283, %v290
  %v293 = vunpack.c.l.s4 1966171168
  %v294 = vunpack.c.0.s8 %v293
  %v295 = vlaneseq
  %v296 = vshrl.u32 %v295, 7
  %v297 = vsub.s32 %v294, %v296
  %v298 = vrot.slane %v284, %v297
  %v299 = vcombine.high %v291, %v291
  %v300 = vcombine.high %v298, %v298
  %v301 = vunpack.i.l.s16 %v291
  %v302 = vunpack.i.h.s16 %v291
  %v303 = vunpack.i.l.s16 %v298
  %v304 = vunpack.i.h.s16 %v298
  %v305 = vunpack.i.l.s16 %v299
  %v306 = vunpack.i.h.s16 %v299
  %v307 = vunpack.i.l.s16 %v300
  %v308 = vunpack.i.h.s16 %v300
  %v309 = vpack.i.b16 %v301, %v301
  %v310 = vpack.i.b16 %v302, %v302
  %v311 = vpack.i.b16 %v303, %v303
  %v312 = vpack.i.b16 %v304, %v304
  %v313 = vpack.i.b16 %v305, %v305
  %v314 = vpack.i.b16 %v306, %v306
  %v315 = vpack.i.b16 %v307, %v307
  %v316 = vpack.i.b16 %v308, %v308
  %v318 = vunpack.c.l.s4 286326784
  %v319 = vunpack.c.0.s8 %v318
  %v320 = vlaneseq
  %v321 = vshrl.u32 %v320, 7
  %v322 = vsub.s32 %v319, %v321
  %v323 = vrot.slane %v309, %v322
  %v325 = vunpack.c.l.s4 286326784
  %v326 = vunpack.c.0.s8 %v325
  %v327 = vlaneseq
  %v328 = vshrl.u32 %v327, 7
  %v329 = vsub.s32 %v326, %v328
  %v330 = vrot.slane %v310, %v329
  %v332 = vunpack.c.l.s4 286326784
  %v333 = vunpack.c.0.s8 %v332
  %v334 = vlaneseq
  %v335 = vshrl.u32 %v334, 7
  %v336 = vsub.s32 %v333, %v335
  %v337 = vrot.slane %v311, %v336
  %v339 = vunpack.c.l.s4 286326784
  %v340 = vunpack.c.0.s8 %v339
  %v341 = vlaneseq
  %v342 = vshrl.u32 %v341, 7
  %v343 = vsub.s32 %v340, %v342
  %v344 = vrot.slane %v312, %v343
  %v346 = vunpack.c.l.s4 286326784
  %v347 = vunpack.c.0.s8 %v346
  %v348 = vlaneseq
  %v349 = vshrl.u32 %v348, 7
  %v350 = vsub.s32 %v347, %v349
  %v351 = vrot.slane %v313, %v350
  %v353 = vunpack.c.l.s4 286326784
  %v354 = vunpack.c.0.s8 %v353
  %v355 = vlaneseq
  %v356 = vshrl.u32 %v355, 7
  %v357 = vsub.s32 %v354, %v356
  %v358 = vrot.slane %v314, %v357
  %v360 = vunpack.c.l.s4 286326784
  %v361 = vunpack.c.0.s8 %v360
  %v362 = vlaneseq
  %v363 = vshrl.u32 %v362, 7
  %v364 = vsub.s32 %v361, %v363
  %v365 = vrot.slane %v315, %v364
  %v367 = vunpack.c.l.s4 286326784
  %v368 = vunpack.c.0.s8 %v367
  %v369 = vlaneseq
  %v370 = vshrl.u32 %v369, 7
  %v371 = vsub.s32 %v368, %v370
  %v372 = vrot.slane %v316, %v371
  %vm381 = vcmask 1040384
  %vm382 = vsmask.f32 256
  %vm383 = vmand %vm381, %vm382
  %v384 = vld [vmem:[%s3] sm:$0x1]
  %v385 = vsel %vm383, %v323, %v384
  %386 = vst [vmem:[%s3] sm:$0x1] %v385
  %v387 = vld [vmem:[%s3 + $0x8] sm:$0x1]
  %v388 = vsel %vm383, %v330, %v387
  %389 = vst [vmem:[%s3 + $0x8] sm:$0x1] %v388
  %v390 = vld [vmem:[%s3 + $0x10] sm:$0x1]
  %v391 = vsel %vm383, %v337, %v390
  %392 = vst [vmem:[%s3 + $0x10] sm:$0x1] %v391
  %v393 = vld [vmem:[%s3 + $0x18] sm:$0x1]
  %v394 = vsel %vm383, %v344, %v393
  %395 = vst [vmem:[%s3 + $0x18] sm:$0x1] %v394
  %v396 = vld [vmem:[%s3 + $0x20] sm:$0x1]
  %v397 = vsel %vm383, %v351, %v396
  %398 = vst [vmem:[%s3 + $0x20] sm:$0x1] %v397
  %v399 = vld [vmem:[%s3 + $0x28] sm:$0x1]
  %v400 = vsel %vm383, %v358, %v399
  %401 = vst [vmem:[%s3 + $0x28] sm:$0x1] %v400
  %v402 = vld [vmem:[%s3 + $0x30] sm:$0x1]
  %v403 = vsel %vm383, %v365, %v402
  %404 = vst [vmem:[%s3 + $0x30] sm:$0x1] %v403
  %v405 = vld [vmem:[%s3 + $0x38] sm:$0x1]
  %v406 = vsel %vm383, %v372, %v405
  %407 = vst [vmem:[%s3 + $0x38] sm:$0x1] %v406
  %v408 = vpack.c.bf16 %v274, %v274
  %v411 = vunpack.c.l.s4 1966171168
  %v412 = vunpack.c.0.s8 %v411
  %v413 = vlaneseq
  %v414 = vshrl.u32 %v413, 7
  %v415 = vsub.s32 %v412, %v414
  %v416 = vrot.slane %v408, %v415
  %v417 = vcombine.high %v416, %v416
  %v419 = vunpack.c.l.s4 1966171168
  %v420 = vunpack.c.0.s8 %v419
  %v421 = vlaneseq
  %v422 = vshrl.u32 %v421, 7
  %v423 = vsub.s32 %v420, %v422
  %v424 = vrot.slane %v416, %v423
  %v426 = vunpack.c.l.s4 1966171168
  %v427 = vunpack.c.0.s8 %v426
  %v428 = vlaneseq
  %v429 = vshrl.u32 %v428, 7
  %v430 = vsub.s32 %v427, %v429
  %v431 = vrot.slane %v417, %v430
  %v432 = vcombine.high %v424, %v424
  %v433 = vcombine.high %v431, %v431
  %v434 = vunpack.i.l.s16 %v424
  %v435 = vunpack.i.h.s16 %v424
  %v436 = vunpack.i.l.s16 %v431
  %v437 = vunpack.i.h.s16 %v431
  %v438 = vunpack.i.l.s16 %v432
  %v439 = vunpack.i.h.s16 %v432
  %v440 = vunpack.i.l.s16 %v433
  %v441 = vunpack.i.h.s16 %v433
  %v442 = vpack.i.b16 %v434, %v434
  %v443 = vpack.i.b16 %v435, %v435
  %v444 = vpack.i.b16 %v436, %v436
  %v445 = vpack.i.b16 %v437, %v437
  %v446 = vpack.i.b16 %v438, %v438
  %v447 = vpack.i.b16 %v439, %v439
  %v448 = vpack.i.b16 %v440, %v440
  %v449 = vpack.i.b16 %v441, %v441
  %v451 = vunpack.c.l.s4 286326784
  %v452 = vunpack.c.0.s8 %v451
  %v453 = vlaneseq
  %v454 = vshrl.u32 %v453, 7
  %v455 = vsub.s32 %v452, %v454
  %v456 = vrot.slane %v442, %v455
  %v458 = vunpack.c.l.s4 286326784
  %v459 = vunpack.c.0.s8 %v458
  %v460 = vlaneseq
  %v461 = vshrl.u32 %v460, 7
  %v462 = vsub.s32 %v459, %v461
  %v463 = vrot.slane %v443, %v462
  %v465 = vunpack.c.l.s4 286326784
  %v466 = vunpack.c.0.s8 %v465
  %v467 = vlaneseq
  %v468 = vshrl.u32 %v467, 7
  %v469 = vsub.s32 %v466, %v468
  %v470 = vrot.slane %v444, %v469
  %v472 = vunpack.c.l.s4 286326784
  %v473 = vunpack.c.0.s8 %v472
  %v474 = vlaneseq
  %v475 = vshrl.u32 %v474, 7
  %v476 = vsub.s32 %v473, %v475
  %v477 = vrot.slane %v445, %v476
  %v479 = vunpack.c.l.s4 286326784
  %v480 = vunpack.c.0.s8 %v479
  %v481 = vlaneseq
  %v482 = vshrl.u32 %v481, 7
  %v483 = vsub.s32 %v480, %v482
  %v484 = vrot.slane %v446, %v483
  %v486 = vunpack.c.l.s4 286326784
  %v487 = vunpack.c.0.s8 %v486
  %v488 = vlaneseq
  %v489 = vshrl.u32 %v488, 7
  %v490 = vsub.s32 %v487, %v489
  %v491 = vrot.slane %v447, %v490
  %v493 = vunpack.c.l.s4 286326784
  %v494 = vunpack.c.0.s8 %v493
  %v495 = vlaneseq
  %v496 = vshrl.u32 %v495, 7
  %v497 = vsub.s32 %v494, %v496
  %v498 = vrot.slane %v448, %v497
  %v500 = vunpack.c.l.s4 286326784
  %v501 = vunpack.c.0.s8 %v500
  %v502 = vlaneseq
  %v503 = vshrl.u32 %v502, 7
  %v504 = vsub.s32 %v501, %v503
  %v505 = vrot.slane %v449, %v504
  %v514 = vld [vmem:[%s4] sm:$0x1]
  %v515 = vsel %vm383, %v456, %v514
  %516 = vst [vmem:[%s4] sm:$0x1] %v515
  %v517 = vld [vmem:[%s4 + $0x8] sm:$0x1]
  %v518 = vsel %vm383, %v463, %v517
  %519 = vst [vmem:[%s4 + $0x8] sm:$0x1] %v518
  %v520 = vld [vmem:[%s4 + $0x10] sm:$0x1]
  %v521 = vsel %vm383, %v470, %v520
  %522 = vst [vmem:[%s4 + $0x10] sm:$0x1] %v521
  %v523 = vld [vmem:[%s4 + $0x18] sm:$0x1]
  %v524 = vsel %vm383, %v477, %v523
  %525 = vst [vmem:[%s4 + $0x18] sm:$0x1] %v524
  %v526 = vld [vmem:[%s4 + $0x20] sm:$0x1]
  %v527 = vsel %vm383, %v484, %v526
  %528 = vst [vmem:[%s4 + $0x20] sm:$0x1] %v527
  %v529 = vld [vmem:[%s4 + $0x28] sm:$0x1]
  %v530 = vsel %vm383, %v491, %v529
  %531 = vst [vmem:[%s4 + $0x28] sm:$0x1] %v530
  %v532 = vld [vmem:[%s4 + $0x30] sm:$0x1]
  %v533 = vsel %vm383, %v498, %v532
  %534 = vst [vmem:[%s4 + $0x30] sm:$0x1] %v533
  %v535 = vld [vmem:[%s4 + $0x38] sm:$0x1]
  %v536 = vsel %vm383, %v505, %v535
  %537 = vst [vmem:[%s4 + $0x38] sm:$0x1] %v536
  %s538 = scalar_lea.vmem %s0, 16
  %v539 = vld [vmem:[%s538] sm:$0xff]
  %v540 = vld [vmem:[%s538 + $0x8] sm:$0xff]
  %v541 = vunpack.c.l.bf16 %v539
  %v542 = vunpack.c.h.bf16 %v539
  %v543 = vunpack.c.l.bf16 %v540
  %v544 = vunpack.c.h.bf16 %v540
  %545 = vmatprep.subr.mxu0 %v24
  %546 = vmatpush1.msra.mxu0 %v23
  %547 = vmatprep.subr.mxu0 %v28
  %548 = vmatpush1.msra.mxu0 %v27
  %549 = vmatprep.subr.mxu0 %v32
  %550 = vmatpush1.msra.mxu0 %v31
  %551 = vmatprep.subr.mxu0 %v36
  %552 = vmatpush1.msra.mxu0 %v35
  %553 = vmatprep.subr.mxu0 %v40
  %554 = vmatpush1.msra.mxu0 %v39
  %555 = vmatprep.subr.mxu0 %v44
  %556 = vmatpush1.msra.mxu0 %v43
  %557 = vmatprep.subr.mxu0 %v48
  %558 = vmatpush1.msra.mxu0 %v47
  %559 = vmatprep.subr.mxu0 %v52
  %560 = vmatpush1.msra.mxu0 %v51
  %561 = vmatprep.subr.mxu0 %v56
  %562 = vmatpush1.msra.mxu0 %v55
  %563 = vmatprep.subr.mxu0 %v60
  %564 = vmatpush1.msra.mxu0 %v59
  %565 = vmatprep.subr.mxu0 %v64
  %566 = vmatpush1.msra.mxu0 %v63
  %567 = vmatprep.subr.mxu0 %v68
  %568 = vmatpush1.msra.mxu0 %v67
  %569 = vmatprep.subr.mxu0 %v72
  %570 = vmatpush1.msra.mxu0 %v71
  %571 = vmatprep.subr.mxu0 %v76
  %572 = vmatpush1.msra.mxu0 %v75
  %573 = vmatprep.subr.mxu0 %v80
  %574 = vmatpush1.msra.mxu0 %v79
  %575 = vmatprep.subr.mxu0 %v84
  %576 = vmatpush1.msra.mxu0 %v83
  %577 = vmatprep.subr.mxu0 0.0
  %578 = vmatpush1.msra.mxu0 0.0
  %579 = vmatprep.subr.mxu0 0.0
  %580 = vmatpush1.msra.mxu0 0.0
  %581 = vmatprep.subr.mxu0 0.0
  %582 = vmatpush1.msra.mxu0 0.0
  %583 = vmatprep.subr.mxu0 0.0
  %584 = vmatpush1.msra.mxu0 0.0
  %585 = vmatprep.subr.mxu0 0.0
  %586 = vmatpush1.msra.mxu0 0.0
  %587 = vmatprep.subr.mxu0 0.0
  %588 = vmatpush1.msra.mxu0 0.0
  %589 = vmatprep.subr.mxu0 0.0
  %590 = vmatpush1.msra.mxu0 0.0
  %591 = vmatprep.subr.mxu0 0.0
  %592 = vmatpush1.msra.mxu0 0.0
  %593 = vmatprep.subr.mxu0 0.0
  %594 = vmatpush1.msra.mxu0 0.0
  %595 = vmatprep.subr.mxu0 0.0
  %596 = vmatpush1.msra.mxu0 0.0
  %597 = vmatprep.subr.mxu0 0.0
  %598 = vmatpush1.msra.mxu0 0.0
  %599 = vmatprep.subr.mxu0 0.0
  %600 = vmatpush1.msra.mxu0 0.0
  %601 = vmatprep.subr.mxu0 0.0
  %602 = vmatpush1.msra.mxu0 0.0
  %603 = vmatprep.subr.mxu0 0.0
  %604 = vmatpush1.msra.mxu0 0.0
  %605 = vmatprep.subr.mxu0 0.0
  %606 = vmatpush1.msra.mxu0 0.0
  %607 = vmatprep.subr.mxu0 0.0
  %608 = vmatpush1.msra.mxu0 0.0
  %609 = vmatprep.mubr.f32.mxu0 0.0
  %610 = vmatmul.mubr.f32.gmra.mrb[0].mxu0 %v273
  %v611 = vpop.f32.mrb[0].mxu0
  %v612 = vadd.f32 0.0, %v611
  %v613 = vpop.f32.mrb[0].mxu0
  %v614 = vadd.f32 0.0, %v613
  %615 = vdwg.mxu0
  %616 = vmatprep.subr.mxu0 %v26
  %617 = vmatpush1.msra.mxu0 %v25
  %618 = vmatprep.subr.mxu0 %v30
  %619 = vmatpush1.msra.mxu0 %v29
  %620 = vmatprep.subr.mxu0 %v34
  %621 = vmatpush1.msra.mxu0 %v33
  %622 = vmatprep.subr.mxu0 %v38
  %623 = vmatpush1.msra.mxu0 %v37
  %624 = vmatprep.subr.mxu0 %v42
  %625 = vmatpush1.msra.mxu0 %v41
  %626 = vmatprep.subr.mxu0 %v46
  %627 = vmatpush1.msra.mxu0 %v45
  %628 = vmatprep.subr.mxu0 %v50
  %629 = vmatpush1.msra.mxu0 %v49
  %630 = vmatprep.subr.mxu0 %v54
  %631 = vmatpush1.msra.mxu0 %v53
  %632 = vmatprep.subr.mxu0 %v58
  %633 = vmatpush1.msra.mxu0 %v57
  %634 = vmatprep.subr.mxu0 %v62
  %635 = vmatpush1.msra.mxu0 %v61
  %636 = vmatprep.subr.mxu0 %v66
  %637 = vmatpush1.msra.mxu0 %v65
  %638 = vmatprep.subr.mxu0 %v70
  %639 = vmatpush1.msra.mxu0 %v69
  %640 = vmatprep.subr.mxu0 %v74
  %641 = vmatpush1.msra.mxu0 %v73
  %642 = vmatprep.subr.mxu0 %v78
  %643 = vmatpush1.msra.mxu0 %v77
  %644 = vmatprep.subr.mxu0 %v82
  %645 = vmatpush1.msra.mxu0 %v81
  %646 = vmatprep.subr.mxu0 %v86
  %647 = vmatpush1.msra.mxu0 %v85
  %648 = vmatprep.subr.mxu0 0.0
  %649 = vmatpush1.msra.mxu0 0.0
  %650 = vmatprep.subr.mxu0 0.0
  %651 = vmatpush1.msra.mxu0 0.0
  %652 = vmatprep.subr.mxu0 0.0
  %653 = vmatpush1.msra.mxu0 0.0
  %654 = vmatprep.subr.mxu0 0.0
  %655 = vmatpush1.msra.mxu0 0.0
  %656 = vmatprep.subr.mxu0 0.0
  %657 = vmatpush1.msra.mxu0 0.0
  %658 = vmatprep.subr.mxu0 0.0
  %659 = vmatpush1.msra.mxu0 0.0
  %660 = vmatprep.subr.mxu0 0.0
  %661 = vmatpush1.msra.mxu0 0.0
  %662 = vmatprep.subr.mxu0 0.0
  %663 = vmatpush1.msra.mxu0 0.0
  %664 = vmatprep.subr.mxu0 0.0
  %665 = vmatpush1.msra.mxu0 0.0
  %666 = vmatprep.subr.mxu0 0.0
  %667 = vmatpush1.msra.mxu0 0.0
  %668 = vmatprep.subr.mxu0 0.0
  %669 = vmatpush1.msra.mxu0 0.0
  %670 = vmatprep.subr.mxu0 0.0
  %671 = vmatpush1.msra.mxu0 0.0
  %672 = vmatprep.subr.mxu0 0.0
  %673 = vmatpush1.msra.mxu0 0.0
  %674 = vmatprep.subr.mxu0 0.0
  %675 = vmatpush1.msra.mxu0 0.0
  %676 = vmatprep.subr.mxu0 0.0
  %677 = vmatpush1.msra.mxu0 0.0
  %678 = vmatprep.subr.mxu0 0.0
  %679 = vmatpush1.msra.mxu0 0.0
  %680 = vmatprep.mubr.f32.mxu0 0.0
  %681 = vmatmul.mubr.f32.gmra.mrb[0].mxu0 %v273
  %v682 = vpop.f32.mrb[0].mxu0
  %v683 = vadd.f32 0.0, %v682
  %v684 = vpop.f32.mrb[0].mxu0
  %v685 = vadd.f32 0.0, %v684
  %686 = vdwg.mxu0
  %v687 = vadd.f32 %v541, %v612
  %v688 = vadd.f32 %v542, %v614
  %v689 = vadd.f32 %v543, %v683
  %v690 = vadd.f32 %v544, %v685
  %v691 = vxor.u32 %v687, 2147483648
  %v692 = vmul.f32 %v691, 1.442695
  %v693 = vpow.pop %v692
  %v694 = vadd.f32 %v693, 1.0
  %v695 = vrcp.pop %v694
  %v696 = vmul.f32 1.0, %v695
  %v697 = vxor.u32 %v688, 2147483648
  %v698 = vmul.f32 %v697, 1.442695
  %v699 = vpow.pop %v698
  %v700 = vadd.f32 %v699, 1.0
  %v701 = vrcp.pop %v700
  %v702 = vmul.f32 1.0, %v701
  %v703 = vtanh.pop %v689
  %v704 = vxor.u32 %v690, 2147483648
  %v705 = vmul.f32 %v704, 1.442695
  %v706 = vpow.pop %v705
  %v707 = vadd.f32 %v706, 1.0
  %v708 = vrcp.pop %v707
  %v709 = vmul.f32 1.0, %v708
  %v710 = vmul.f32 %v702, %v274
  %v711 = vmul.f32 %v696, %v703
  %v712 = vadd.f32 %v710, %v711
  %v713 = vtanh.pop %v712
  %v714 = vmul.f32 %v709, %v713
  %s715 = sadd.s32 %s89, 1
  %v716 = vstv %s715
  %vm717 = vcmp.lt.s32.totalorder %v716, %v22
  %v718 = vsel %vm717, 1, 0
  %719 = vset.pattern.permute.xlu0 0
  %720 = vperm.xlu0 %719, %v718
  %v721 = vpop.permute.xlu0 %720
  %vm722 = vcmp.eq.s32.totalorder %v721, 1
  %v723 = vsel %vm722, %v714, %v273
  %v724 = vsel %vm722, %v712, %v274
  %v725 = vpack.c.bf16 %v723, %v723
  %v728 = vunpack.c.l.s4 1966171168
  %v729 = vunpack.c.0.s8 %v728
  %v730 = vlaneseq
  %v731 = vshrl.u32 %v730, 7
  %v732 = vsub.s32 %v729, %v731
  %v733 = vrot.slane %v725, %v732
  %v734 = vcombine.high %v733, %v733
  %v736 = vunpack.c.l.s4 1966171168
  %v737 = vunpack.c.0.s8 %v736
  %v738 = vlaneseq
  %v739 = vshrl.u32 %v738, 7
  %v740 = vsub.s32 %v737, %v739
  %v741 = vrot.slane %v733, %v740
  %v743 = vunpack.c.l.s4 1966171168
  %v744 = vunpack.c.0.s8 %v743
  %v745 = vlaneseq
  %v746 = vshrl.u32 %v745, 7
  %v747 = vsub.s32 %v744, %v746
  %v748 = vrot.slane %v734, %v747
  %v749 = vcombine.high %v741, %v741
  %v750 = vcombine.high %v748, %v748
  %v751 = vunpack.i.l.s16 %v741
  %v752 = vunpack.i.h.s16 %v741
  %v753 = vunpack.i.l.s16 %v748
  %v754 = vunpack.i.h.s16 %v748
  %v755 = vunpack.i.l.s16 %v749
  %v756 = vunpack.i.h.s16 %v749
  %v757 = vunpack.i.l.s16 %v750
  %v758 = vunpack.i.h.s16 %v750
  %v759 = vpack.i.b16 %v751, %v751
  %v760 = vpack.i.b16 %v752, %v752
  %v761 = vpack.i.b16 %v753, %v753
  %v762 = vpack.i.b16 %v754, %v754
  %v763 = vpack.i.b16 %v755, %v755
  %v764 = vpack.i.b16 %v756, %v756
  %v765 = vpack.i.b16 %v757, %v757
  %v766 = vpack.i.b16 %v758, %v758
  %v768 = vunpack.c.l.s4 286326784
  %v769 = vunpack.c.0.s8 %v768
  %v770 = vlaneseq
  %v771 = vshrl.u32 %v770, 7
  %v772 = vsub.s32 %v769, %v771
  %v773 = vrot.slane %v759, %v772
  %v775 = vunpack.c.l.s4 286326784
  %v776 = vunpack.c.0.s8 %v775
  %v777 = vlaneseq
  %v778 = vshrl.u32 %v777, 7
  %v779 = vsub.s32 %v776, %v778
  %v780 = vrot.slane %v760, %v779
  %v782 = vunpack.c.l.s4 286326784
  %v783 = vunpack.c.0.s8 %v782
  %v784 = vlaneseq
  %v785 = vshrl.u32 %v784, 7
  %v786 = vsub.s32 %v783, %v785
  %v787 = vrot.slane %v761, %v786
  %v789 = vunpack.c.l.s4 286326784
  %v790 = vunpack.c.0.s8 %v789
  %v791 = vlaneseq
  %v792 = vshrl.u32 %v791, 7
  %v793 = vsub.s32 %v790, %v792
  %v794 = vrot.slane %v762, %v793
  %v796 = vunpack.c.l.s4 286326784
  %v797 = vunpack.c.0.s8 %v796
  %v798 = vlaneseq
  %v799 = vshrl.u32 %v798, 7
  %v800 = vsub.s32 %v797, %v799
  %v801 = vrot.slane %v763, %v800
  %v803 = vunpack.c.l.s4 286326784
  %v804 = vunpack.c.0.s8 %v803
  %v805 = vlaneseq
  %v806 = vshrl.u32 %v805, 7
  %v807 = vsub.s32 %v804, %v806
  %v808 = vrot.slane %v764, %v807
  %v810 = vunpack.c.l.s4 286326784
  %v811 = vunpack.c.0.s8 %v810
  %v812 = vlaneseq
  %v813 = vshrl.u32 %v812, 7
  %v814 = vsub.s32 %v811, %v813
  %v815 = vrot.slane %v765, %v814
  %v817 = vunpack.c.l.s4 286326784
  %v818 = vunpack.c.0.s8 %v817
  %v819 = vlaneseq
  %v820 = vshrl.u32 %v819, 7
  %v821 = vsub.s32 %v818, %v820
  %v822 = vrot.slane %v766, %v821
  %vm831 = vsmask.f32 7938
  %vm832 = vmand %vm381, %vm831
  %v833 = vld [vmem:[%s3] sm:$0x1]
  %v834 = vsel %vm832, %v773, %v833
  %835 = vst [vmem:[%s3] sm:$0x1] %v834
  %v836 = vld [vmem:[%s3 + $0x8] sm:$0x1]
  %v837 = vsel %vm832, %v780, %v836
  %838 = vst [vmem:[%s3 + $0x8] sm:$0x1] %v837
  %v839 = vld [vmem:[%s3 + $0x10] sm:$0x1]
  %v840 = vsel %vm832, %v787, %v839
  %841 = vst [vmem:[%s3 + $0x10] sm:$0x1] %v840
  %v842 = vld [vmem:[%s3 + $0x18] sm:$0x1]
  %v843 = vsel %vm832, %v794, %v842
  %844 = vst [vmem:[%s3 + $0x18] sm:$0x1] %v843
  %v845 = vld [vmem:[%s3 + $0x20] sm:$0x1]
  %v846 = vsel %vm832, %v801, %v845
  %847 = vst [vmem:[%s3 + $0x20] sm:$0x1] %v846
  %v848 = vld [vmem:[%s3 + $0x28] sm:$0x1]
  %v849 = vsel %vm832, %v808, %v848
  %850 = vst [vmem:[%s3 + $0x28] sm:$0x1] %v849
  %v851 = vld [vmem:[%s3 + $0x30] sm:$0x1]
  %v852 = vsel %vm832, %v815, %v851
  %853 = vst [vmem:[%s3 + $0x30] sm:$0x1] %v852
  %v854 = vld [vmem:[%s3 + $0x38] sm:$0x1]
  %v855 = vsel %vm832, %v822, %v854
  %856 = vst [vmem:[%s3 + $0x38] sm:$0x1] %v855
  %v857 = vpack.c.bf16 %v724, %v724
  %v860 = vunpack.c.l.s4 1966171168
  %v861 = vunpack.c.0.s8 %v860
  %v862 = vlaneseq
  %v863 = vshrl.u32 %v862, 7
  %v864 = vsub.s32 %v861, %v863
  %v865 = vrot.slane %v857, %v864
  %v866 = vcombine.high %v865, %v865
  %v868 = vunpack.c.l.s4 1966171168
  %v869 = vunpack.c.0.s8 %v868
  %v870 = vlaneseq
  %v871 = vshrl.u32 %v870, 7
  %v872 = vsub.s32 %v869, %v871
  %v873 = vrot.slane %v865, %v872
  %v875 = vunpack.c.l.s4 1966171168
  %v876 = vunpack.c.0.s8 %v875
  %v877 = vlaneseq
  %v878 = vshrl.u32 %v877, 7
  %v879 = vsub.s32 %v876, %v878
  %v880 = vrot.slane %v866, %v879
  %v881 = vcombine.high %v873, %v873
  %v882 = vcombine.high %v880, %v880
  %v883 = vunpack.i.l.s16 %v873
  %v884 = vunpack.i.h.s16 %v873
  %v885 = vunpack.i.l.s16 %v880
  %v886 = vunpack.i.h.s16 %v880
  %v887 = vunpack.i.l.s16 %v881
  %v888 = vunpack.i.h.s16 %v881
  %v889 = vunpack.i.l.s16 %v882
  %v890 = vunpack.i.h.s16 %v882
  %v891 = vpack.i.b16 %v883, %v883
  %v892 = vpack.i.b16 %v884, %v884
  %v893 = vpack.i.b16 %v885, %v885
  %v894 = vpack.i.b16 %v886, %v886
  %v895 = vpack.i.b16 %v887, %v887
  %v896 = vpack.i.b16 %v888, %v888
  %v897 = vpack.i.b16 %v889, %v889
  %v898 = vpack.i.b16 %v890, %v890
  %v900 = vunpack.c.l.s4 286326784
  %v901 = vunpack.c.0.s8 %v900
  %v902 = vlaneseq
  %v903 = vshrl.u32 %v902, 7
  %v904 = vsub.s32 %v901, %v903
  %v905 = vrot.slane %v891, %v904
  %v907 = vunpack.c.l.s4 286326784
  %v908 = vunpack.c.0.s8 %v907
  %v909 = vlaneseq
  %v910 = vshrl.u32 %v909, 7
  %v911 = vsub.s32 %v908, %v910
  %v912 = vrot.slane %v892, %v911
  %v914 = vunpack.c.l.s4 286326784
  %v915 = vunpack.c.0.s8 %v914
  %v916 = vlaneseq
  %v917 = vshrl.u32 %v916, 7
  %v918 = vsub.s32 %v915, %v917
  %v919 = vrot.slane %v893, %v918
  %v921 = vunpack.c.l.s4 286326784
  %v922 = vunpack.c.0.s8 %v921
  %v923 = vlaneseq
  %v924 = vshrl.u32 %v923, 7
  %v925 = vsub.s32 %v922, %v924
  %v926 = vrot.slane %v894, %v925
  %v928 = vunpack.c.l.s4 286326784
  %v929 = vunpack.c.0.s8 %v928
  %v930 = vlaneseq
  %v931 = vshrl.u32 %v930, 7
  %v932 = vsub.s32 %v929, %v931
  %v933 = vrot.slane %v895, %v932
  %v935 = vunpack.c.l.s4 286326784
  %v936 = vunpack.c.0.s8 %v935
  %v937 = vlaneseq
  %v938 = vshrl.u32 %v937, 7
  %v939 = vsub.s32 %v936, %v938
  %v940 = vrot.slane %v896, %v939
  %v942 = vunpack.c.l.s4 286326784
  %v943 = vunpack.c.0.s8 %v942
  %v944 = vlaneseq
  %v945 = vshrl.u32 %v944, 7
  %v946 = vsub.s32 %v943, %v945
  %v947 = vrot.slane %v897, %v946
  %v949 = vunpack.c.l.s4 286326784
  %v950 = vunpack.c.0.s8 %v949
  %v951 = vlaneseq
  %v952 = vshrl.u32 %v951, 7
  %v953 = vsub.s32 %v950, %v952
  %v954 = vrot.slane %v898, %v953
  %v963 = vld [vmem:[%s4] sm:$0x1]
  %v964 = vsel %vm832, %v905, %v963
  %965 = vst [vmem:[%s4] sm:$0x1] %v964
  %v966 = vld [vmem:[%s4 + $0x8] sm:$0x1]
  %v967 = vsel %vm832, %v912, %v966
  %968 = vst [vmem:[%s4 + $0x8] sm:$0x1] %v967
  %v969 = vld [vmem:[%s4 + $0x10] sm:$0x1]
  %v970 = vsel %vm832, %v919, %v969
  %971 = vst [vmem:[%s4 + $0x10] sm:$0x1] %v970
  %v972 = vld [vmem:[%s4 + $0x18] sm:$0x1]
  %v973 = vsel %vm832, %v926, %v972
  %974 = vst [vmem:[%s4 + $0x18] sm:$0x1] %v973
  %v975 = vld [vmem:[%s4 + $0x20] sm:$0x1]
  %v976 = vsel %vm832, %v933, %v975
  %977 = vst [vmem:[%s4 + $0x20] sm:$0x1] %v976
  %v978 = vld [vmem:[%s4 + $0x28] sm:$0x1]
  %v979 = vsel %vm832, %v940, %v978
  %980 = vst [vmem:[%s4 + $0x28] sm:$0x1] %v979
  %v981 = vld [vmem:[%s4 + $0x30] sm:$0x1]
  %v982 = vsel %vm832, %v947, %v981
  %983 = vst [vmem:[%s4 + $0x30] sm:$0x1] %v982
  %v984 = vld [vmem:[%s4 + $0x38] sm:$0x1]
  %v985 = vsel %vm832, %v954, %v984
  %986 = vst [vmem:[%s4 + $0x38] sm:$0x1] %v985
  %s987 = scalar_lea.vmem %s0, 32
  %v988 = vld [vmem:[%s987] sm:$0xff]
  %v989 = vld [vmem:[%s987 + $0x8] sm:$0xff]
  %v990 = vunpack.c.l.bf16 %v988
  %v991 = vunpack.c.h.bf16 %v988
  %v992 = vunpack.c.l.bf16 %v989
  %v993 = vunpack.c.h.bf16 %v989
  %994 = vmatprep.subr.mxu0 %v24
  %995 = vmatpush1.msra.mxu0 %v23
  %996 = vmatprep.subr.mxu0 %v28
  %997 = vmatpush1.msra.mxu0 %v27
  %998 = vmatprep.subr.mxu0 %v32
  %999 = vmatpush1.msra.mxu0 %v31
  %1000 = vmatprep.subr.mxu0 %v36
  %1001 = vmatpush1.msra.mxu0 %v35
  %1002 = vmatprep.subr.mxu0 %v40
  %1003 = vmatpush1.msra.mxu0 %v39
  %1004 = vmatprep.subr.mxu0 %v44
  %1005 = vmatpush1.msra.mxu0 %v43
  %1006 = vmatprep.subr.mxu0 %v48
  %1007 = vmatpush1.msra.mxu0 %v47
  %1008 = vmatprep.subr.mxu0 %v52
  %1009 = vmatpush1.msra.mxu0 %v51
  %1010 = vmatprep.subr.mxu0 %v56
  %1011 = vmatpush1.msra.mxu0 %v55
  %1012 = vmatprep.subr.mxu0 %v60
  %1013 = vmatpush1.msra.mxu0 %v59
  %1014 = vmatprep.subr.mxu0 %v64
  %1015 = vmatpush1.msra.mxu0 %v63
  %1016 = vmatprep.subr.mxu0 %v68
  %1017 = vmatpush1.msra.mxu0 %v67
  %1018 = vmatprep.subr.mxu0 %v72
  %1019 = vmatpush1.msra.mxu0 %v71
  %1020 = vmatprep.subr.mxu0 %v76
  %1021 = vmatpush1.msra.mxu0 %v75
  %1022 = vmatprep.subr.mxu0 %v80
  %1023 = vmatpush1.msra.mxu0 %v79
  %1024 = vmatprep.subr.mxu0 %v84
  %1025 = vmatpush1.msra.mxu0 %v83
  %1026 = vmatprep.subr.mxu0 0.0
  %1027 = vmatpush1.msra.mxu0 0.0
  %1028 = vmatprep.subr.mxu0 0.0
  %1029 = vmatpush1.msra.mxu0 0.0
  %1030 = vmatprep.subr.mxu0 0.0
  %1031 = vmatpush1.msra.mxu0 0.0
  %1032 = vmatprep.subr.mxu0 0.0
  %1033 = vmatpush1.msra.mxu0 0.0
  %1034 = vmatprep.subr.mxu0 0.0
  %1035 = vmatpush1.msra.mxu0 0.0
  %1036 = vmatprep.subr.mxu0 0.0
  %1037 = vmatpush1.msra.mxu0 0.0
  %1038 = vmatprep.subr.mxu0 0.0
  %1039 = vmatpush1.msra.mxu0 0.0
  %1040 = vmatprep.subr.mxu0 0.0
  %1041 = vmatpush1.msra.mxu0 0.0
  %1042 = vmatprep.subr.mxu0 0.0
  %1043 = vmatpush1.msra.mxu0 0.0
  %1044 = vmatprep.subr.mxu0 0.0
  %1045 = vmatpush1.msra.mxu0 0.0
  %1046 = vmatprep.subr.mxu0 0.0
  %1047 = vmatpush1.msra.mxu0 0.0
  %1048 = vmatprep.subr.mxu0 0.0
  %1049 = vmatpush1.msra.mxu0 0.0
  %1050 = vmatprep.subr.mxu0 0.0
  %1051 = vmatpush1.msra.mxu0 0.0
  %1052 = vmatprep.subr.mxu0 0.0
  %1053 = vmatpush1.msra.mxu0 0.0
  %1054 = vmatprep.subr.mxu0 0.0
  %1055 = vmatpush1.msra.mxu0 0.0
  %1056 = vmatprep.subr.mxu0 0.0
  %1057 = vmatpush1.msra.mxu0 0.0
  %1058 = vmatprep.mubr.f32.mxu0 0.0
  %1059 = vmatmul.mubr.f32.gmra.mrb[0].mxu0 %v723
  %v1060 = vpop.f32.mrb[0].mxu0
  %v1061 = vadd.f32 0.0, %v1060
  %v1062 = vpop.f32.mrb[0].mxu0
  %v1063 = vadd.f32 0.0, %v1062
  %1064 = vdwg.mxu0
  %1065 = vmatprep.subr.mxu0 %v26
  %1066 = vmatpush1.msra.mxu0 %v25
  %1067 = vmatprep.subr.mxu0 %v30
  %1068 = vmatpush1.msra.mxu0 %v29
  %1069 = vmatprep.subr.mxu0 %v34
  %1070 = vmatpush1.msra.mxu0 %v33
  %1071 = vmatprep.subr.mxu0 %v38
  %1072 = vmatpush1.msra.mxu0 %v37
  %1073 = vmatprep.subr.mxu0 %v42
  %1074 = vmatpush1.msra.mxu0 %v41
  %1075 = vmatprep.subr.mxu0 %v46
  %1076 = vmatpush1.msra.mxu0 %v45
  %1077 = vmatprep.subr.mxu0 %v50
  %1078 = vmatpush1.msra.mxu0 %v49
  %1079 = vmatprep.subr.mxu0 %v54
  %1080 = vmatpush1.msra.mxu0 %v53
  %1081 = vmatprep.subr.mxu0 %v58
  %1082 = vmatpush1.msra.mxu0 %v57
  %1083 = vmatprep.subr.mxu0 %v62
  %1084 = vmatpush1.msra.mxu0 %v61
  %1085 = vmatprep.subr.mxu0 %v66
  %1086 = vmatpush1.msra.mxu0 %v65
  %1087 = vmatprep.subr.mxu0 %v70
  %1088 = vmatpush1.msra.mxu0 %v69
  %1089 = vmatprep.subr.mxu0 %v74
  %1090 = vmatpush1.msra.mxu0 %v73
  %1091 = vmatprep.subr.mxu0 %v78
  %1092 = vmatpush1.msra.mxu0 %v77
  %1093 = vmatprep.subr.mxu0 %v82
  %1094 = vmatpush1.msra.mxu0 %v81
  %1095 = vmatprep.subr.mxu0 %v86
  %1096 = vmatpush1.msra.mxu0 %v85
  %1097 = vmatprep.subr.mxu0 0.0
  %1098 = vmatpush1.msra.mxu0 0.0
  %1099 = vmatprep.subr.mxu0 0.0
  %1100 = vmatpush1.msra.mxu0 0.0
  %1101 = vmatprep.subr.mxu0 0.0
  %1102 = vmatpush1.msra.mxu0 0.0
  %1103 = vmatprep.subr.mxu0 0.0
  %1104 = vmatpush1.msra.mxu0 0.0
  %1105 = vmatprep.subr.mxu0 0.0
  %1106 = vmatpush1.msra.mxu0 0.0
  %1107 = vmatprep.subr.mxu0 0.0
  %1108 = vmatpush1.msra.mxu0 0.0
  %1109 = vmatprep.subr.mxu0 0.0
  %1110 = vmatpush1.msra.mxu0 0.0
  %1111 = vmatprep.subr.mxu0 0.0
  %1112 = vmatpush1.msra.mxu0 0.0
  %1113 = vmatprep.subr.mxu0 0.0
  %1114 = vmatpush1.msra.mxu0 0.0
  %1115 = vmatprep.subr.mxu0 0.0
  %1116 = vmatpush1.msra.mxu0 0.0
  %1117 = vmatprep.subr.mxu0 0.0
  %1118 = vmatpush1.msra.mxu0 0.0
  %1119 = vmatprep.subr.mxu0 0.0
  %1120 = vmatpush1.msra.mxu0 0.0
  %1121 = vmatprep.subr.mxu0 0.0
  %1122 = vmatpush1.msra.mxu0 0.0
  %1123 = vmatprep.subr.mxu0 0.0
  %1124 = vmatpush1.msra.mxu0 0.0
  %1125 = vmatprep.subr.mxu0 0.0
  %1126 = vmatpush1.msra.mxu0 0.0
  %1127 = vmatprep.subr.mxu0 0.0
  %1128 = vmatpush1.msra.mxu0 0.0
  %1129 = vmatprep.mubr.f32.mxu0 0.0
  %1130 = vmatmul.mubr.f32.gmra.mrb[0].mxu0 %v723
  %v1131 = vpop.f32.mrb[0].mxu0
  %v1132 = vadd.f32 0.0, %v1131
  %v1133 = vpop.f32.mrb[0].mxu0
  %v1134 = vadd.f32 0.0, %v1133
  %1135 = vdwg.mxu0
  %v1136 = vadd.f32 %v990, %v1061
  %v1137 = vadd.f32 %v991, %v1063
  %v1138 = vadd.f32 %v992, %v1132
  %v1139 = vadd.f32 %v993, %v1134
  %v1140 = vxor.u32 %v1136, 2147483648
  %v1141 = vmul.f32 %v1140, 1.442695
  %v1142 = vpow.pop %v1141
  %v1143 = vadd.f32 %v1142, 1.0
  %v1144 = vrcp.pop %v1143
  %v1145 = vmul.f32 1.0, %v1144
  %v1146 = vxor.u32 %v1137, 2147483648
  %v1147 = vmul.f32 %v1146, 1.442695
  %v1148 = vpow.pop %v1147
  %v1149 = vadd.f32 %v1148, 1.0
  %v1150 = vrcp.pop %v1149
  %v1151 = vmul.f32 1.0, %v1150
  %v1152 = vtanh.pop %v1138
  %v1153 = vxor.u32 %v1139, 2147483648
  %v1154 = vmul.f32 %v1153, 1.442695
  %v1155 = vpow.pop %v1154
  %v1156 = vadd.f32 %v1155, 1.0
  %v1157 = vrcp.pop %v1156
  %v1158 = vmul.f32 1.0, %v1157
  %v1159 = vmul.f32 %v1151, %v724
  %v1160 = vmul.f32 %v1145, %v1152
  %v1161 = vadd.f32 %v1159, %v1160
  %v1162 = vtanh.pop %v1161
  %v1163 = vmul.f32 %v1158, %v1162
  %s1164 = sadd.s32 %s89, 2
  %v1165 = vstv %s1164
  %vm1166 = vcmp.lt.s32.totalorder %v1165, %v22
  %v1167 = vsel %vm1166, 1, 0
  %1168 = vset.pattern.permute.xlu0 0
  %1169 = vperm.xlu0 %1168, %v1167
  %v1170 = vpop.permute.xlu0 %1169
  %vm1171 = vcmp.eq.s32.totalorder %v1170, 1
  %v1172 = vsel %vm1171, %v1163, %v723
  %v1173 = vsel %vm1171, %v1161, %v724
  %v1174 = vpack.c.bf16 %v1172, %v1172
  %v1177 = vunpack.c.l.s4 1966171168
  %v1178 = vunpack.c.0.s8 %v1177
  %v1179 = vlaneseq
  %v1180 = vshrl.u32 %v1179, 7
  %v1181 = vsub.s32 %v1178, %v1180
  %v1182 = vrot.slane %v1174, %v1181
  %v1183 = vcombine.high %v1182, %v1182
  %v1185 = vunpack.c.l.s4 1966171168
  %v1186 = vunpack.c.0.s8 %v1185
  %v1187 = vlaneseq
  %v1188 = vshrl.u32 %v1187, 7
  %v1189 = vsub.s32 %v1186, %v1188
  %v1190 = vrot.slane %v1182, %v1189
  %v1192 = vunpack.c.l.s4 1966171168
  %v1193 = vunpack.c.0.s8 %v1192
  %v1194 = vlaneseq
  %v1195 = vshrl.u32 %v1194, 7
  %v1196 = vsub.s32 %v1193, %v1195
  %v1197 = vrot.slane %v1183, %v1196
  %v1198 = vcombine.high %v1190, %v1190
  %v1199 = vcombine.high %v1197, %v1197
  %v1200 = vunpack.i.l.s16 %v1190
  %v1201 = vunpack.i.h.s16 %v1190
  %v1202 = vunpack.i.l.s16 %v1197
  %v1203 = vunpack.i.h.s16 %v1197
  %v1204 = vunpack.i.l.s16 %v1198
  %v1205 = vunpack.i.h.s16 %v1198
  %v1206 = vunpack.i.l.s16 %v1199
  %v1207 = vunpack.i.h.s16 %v1199
  %v1208 = vpack.i.b16 %v1200, %v1200
  %v1209 = vpack.i.b16 %v1201, %v1201
  %v1210 = vpack.i.b16 %v1202, %v1202
  %v1211 = vpack.i.b16 %v1203, %v1203
  %v1212 = vpack.i.b16 %v1204, %v1204
  %v1213 = vpack.i.b16 %v1205, %v1205
  %v1214 = vpack.i.b16 %v1206, %v1206
  %v1215 = vpack.i.b16 %v1207, %v1207
  %v1217 = vunpack.c.l.s4 286326784
  %v1218 = vunpack.c.0.s8 %v1217
  %v1219 = vlaneseq
  %v1220 = vshrl.u32 %v1219, 7
  %v1221 = vsub.s32 %v1218, %v1220
  %v1222 = vrot.slane %v1208, %v1221
  %v1224 = vunpack.c.l.s4 286326784
  %v1225 = vunpack.c.0.s8 %v1224
  %v1226 = vlaneseq
  %v1227 = vshrl.u32 %v1226, 7
  %v1228 = vsub.s32 %v1225, %v1227
  %v1229 = vrot.slane %v1209, %v1228
  %v1231 = vunpack.c.l.s4 286326784
  %v1232 = vunpack.c.0.s8 %v1231
  %v1233 = vlaneseq
  %v1234 = vshrl.u32 %v1233, 7
  %v1235 = vsub.s32 %v1232, %v1234
  %v1236 = vrot.slane %v1210, %v1235
  %v1238 = vunpack.c.l.s4 286326784
  %v1239 = vunpack.c.0.s8 %v1238
  %v1240 = vlaneseq
  %v1241 = vshrl.u32 %v1240, 7
  %v1242 = vsub.s32 %v1239, %v1241
  %v1243 = vrot.slane %v1211, %v1242
  %v1245 = vunpack.c.l.s4 286326784
  %v1246 = vunpack.c.0.s8 %v1245
  %v1247 = vlaneseq
  %v1248 = vshrl.u32 %v1247, 7
  %v1249 = vsub.s32 %v1246, %v1248
  %v1250 = vrot.slane %v1212, %v1249
  %v1252 = vunpack.c.l.s4 286326784
  %v1253 = vunpack.c.0.s8 %v1252
  %v1254 = vlaneseq
  %v1255 = vshrl.u32 %v1254, 7
  %v1256 = vsub.s32 %v1253, %v1255
  %v1257 = vrot.slane %v1213, %v1256
  %v1259 = vunpack.c.l.s4 286326784
  %v1260 = vunpack.c.0.s8 %v1259
  %v1261 = vlaneseq
  %v1262 = vshrl.u32 %v1261, 7
  %v1263 = vsub.s32 %v1260, %v1262
  %v1264 = vrot.slane %v1214, %v1263
  %v1266 = vunpack.c.l.s4 286326784
  %v1267 = vunpack.c.0.s8 %v1266
  %v1268 = vlaneseq
  %v1269 = vshrl.u32 %v1268, 7
  %v1270 = vsub.s32 %v1267, %v1269
  %v1271 = vrot.slane %v1215, %v1270
  %vm1280 = vcmask 1041409
  %vm1281 = vsmask.f32 1280
  %vm1282 = vmand %vm1280, %vm1281
  %v1283 = vld [vmem:[%s3] sm:$0x2]
  %v1284 = vsel %vm1282, %v1222, %v1283
  %1285 = vst [vmem:[%s3] sm:$0x2] %v1284
  %v1286 = vld [vmem:[%s3 + $0x8] sm:$0x2]
  %v1287 = vsel %vm1282, %v1229, %v1286
  %1288 = vst [vmem:[%s3 + $0x8] sm:$0x2] %v1287
  %v1289 = vld [vmem:[%s3 + $0x10] sm:$0x2]
  %v1290 = vsel %vm1282, %v1236, %v1289
  %1291 = vst [vmem:[%s3 + $0x10] sm:$0x2] %v1290
  %v1292 = vld [vmem:[%s3 + $0x18] sm:$0x2]
  %v1293 = vsel %vm1282, %v1243, %v1292
  %1294 = vst [vmem:[%s3 + $0x18] sm:$0x2] %v1293
  %v1295 = vld [vmem:[%s3 + $0x20] sm:$0x2]
  %v1296 = vsel %vm1282, %v1250, %v1295
  %1297 = vst [vmem:[%s3 + $0x20] sm:$0x2] %v1296
  %v1298 = vld [vmem:[%s3 + $0x28] sm:$0x2]
  %v1299 = vsel %vm1282, %v1257, %v1298
  %1300 = vst [vmem:[%s3 + $0x28] sm:$0x2] %v1299
  %v1301 = vld [vmem:[%s3 + $0x30] sm:$0x2]
  %v1302 = vsel %vm1282, %v1264, %v1301
  %1303 = vst [vmem:[%s3 + $0x30] sm:$0x2] %v1302
  %v1304 = vld [vmem:[%s3 + $0x38] sm:$0x2]
  %v1305 = vsel %vm1282, %v1271, %v1304
  %1306 = vst [vmem:[%s3 + $0x38] sm:$0x2] %v1305
  %v1307 = vpack.c.bf16 %v1173, %v1173
  %v1310 = vunpack.c.l.s4 1966171168
  %v1311 = vunpack.c.0.s8 %v1310
  %v1312 = vlaneseq
  %v1313 = vshrl.u32 %v1312, 7
  %v1314 = vsub.s32 %v1311, %v1313
  %v1315 = vrot.slane %v1307, %v1314
  %v1316 = vcombine.high %v1315, %v1315
  %v1318 = vunpack.c.l.s4 1966171168
  %v1319 = vunpack.c.0.s8 %v1318
  %v1320 = vlaneseq
  %v1321 = vshrl.u32 %v1320, 7
  %v1322 = vsub.s32 %v1319, %v1321
  %v1323 = vrot.slane %v1315, %v1322
  %v1325 = vunpack.c.l.s4 1966171168
  %v1326 = vunpack.c.0.s8 %v1325
  %v1327 = vlaneseq
  %v1328 = vshrl.u32 %v1327, 7
  %v1329 = vsub.s32 %v1326, %v1328
  %v1330 = vrot.slane %v1316, %v1329
  %v1331 = vcombine.high %v1323, %v1323
  %v1332 = vcombine.high %v1330, %v1330
  %v1333 = vunpack.i.l.s16 %v1323
  %v1334 = vunpack.i.h.s16 %v1323
  %v1335 = vunpack.i.l.s16 %v1330
  %v1336 = vunpack.i.h.s16 %v1330
  %v1337 = vunpack.i.l.s16 %v1331
  %v1338 = vunpack.i.h.s16 %v1331
  %v1339 = vunpack.i.l.s16 %v1332
  %v1340 = vunpack.i.h.s16 %v1332
  %v1341 = vpack.i.b16 %v1333, %v1333
  %v1342 = vpack.i.b16 %v1334, %v1334
  %v1343 = vpack.i.b16 %v1335, %v1335
  %v1344 = vpack.i.b16 %v1336, %v1336
  %v1345 = vpack.i.b16 %v1337, %v1337
  %v1346 = vpack.i.b16 %v1338, %v1338
  %v1347 = vpack.i.b16 %v1339, %v1339
  %v1348 = vpack.i.b16 %v1340, %v1340
  %v1350 = vunpack.c.l.s4 286326784
  %v1351 = vunpack.c.0.s8 %v1350
  %v1352 = vlaneseq
  %v1353 = vshrl.u32 %v1352, 7
  %v1354 = vsub.s32 %v1351, %v1353
  %v1355 = vrot.slane %v1341, %v1354
  %v1357 = vunpack.c.l.s4 286326784
  %v1358 = vunpack.c.0.s8 %v1357
  %v1359 = vlaneseq
  %v1360 = vshrl.u32 %v1359, 7
  %v1361 = vsub.s32 %v1358, %v1360
  %v1362 = vrot.slane %v1342, %v1361
  %v1364 = vunpack.c.l.s4 286326784
  %v1365 = vunpack.c.0.s8 %v1364
  %v1366 = vlaneseq
  %v1367 = vshrl.u32 %v1366, 7
  %v1368 = vsub.s32 %v1365, %v1367
  %v1369 = vrot.slane %v1343, %v1368
  %v1371 = vunpack.c.l.s4 286326784
  %v1372 = vunpack.c.0.s8 %v1371
  %v1373 = vlaneseq
  %v1374 = vshrl.u32 %v1373, 7
  %v1375 = vsub.s32 %v1372, %v1374
  %v1376 = vrot.slane %v1344, %v1375
  %v1378 = vunpack.c.l.s4 286326784
  %v1379 = vunpack.c.0.s8 %v1378
  %v1380 = vlaneseq
  %v1381 = vshrl.u32 %v1380, 7
  %v1382 = vsub.s32 %v1379, %v1381
  %v1383 = vrot.slane %v1345, %v1382
  %v1385 = vunpack.c.l.s4 286326784
  %v1386 = vunpack.c.0.s8 %v1385
  %v1387 = vlaneseq
  %v1388 = vshrl.u32 %v1387, 7
  %v1389 = vsub.s32 %v1386, %v1388
  %v1390 = vrot.slane %v1346, %v1389
  %v1392 = vunpack.c.l.s4 286326784
  %v1393 = vunpack.c.0.s8 %v1392
  %v1394 = vlaneseq
  %v1395 = vshrl.u32 %v1394, 7
  %v1396 = vsub.s32 %v1393, %v1395
  %v1397 = vrot.slane %v1347, %v1396
  %v1399 = vunpack.c.l.s4 286326784
  %v1400 = vunpack.c.0.s8 %v1399
  %v1401 = vlaneseq
  %v1402 = vshrl.u32 %v1401, 7
  %v1403 = vsub.s32 %v1400, %v1402
  %v1404 = vrot.slane %v1348, %v1403
  %v1413 = vld [vmem:[%s4] sm:$0x2]
  %v1414 = vsel %vm1282, %v1355, %v1413
  %1415 = vst [vmem:[%s4] sm:$0x2] %v1414
  %v1416 = vld [vmem:[%s4 + $0x8] sm:$0x2]
  %v1417 = vsel %vm1282, %v1362, %v1416
  %1418 = vst [vmem:[%s4 + $0x8] sm:$0x2] %v1417
  %v1419 = vld [vmem:[%s4 + $0x10] sm:$0x2]
  %v1420 = vsel %vm1282, %v1369, %v1419
  %1421 = vst [vmem:[%s4 + $0x10] sm:$0x2] %v1420
  %v1422 = vld [vmem:[%s4 + $0x18] sm:$0x2]
  %v1423 = vsel %vm1282, %v1376, %v1422
  %1424 = vst [vmem:[%s4 + $0x18] sm:$0x2] %v1423
  %v1425 = vld [vmem:[%s4 + $0x20] sm:$0x2]
  %v1426 = vsel %vm1282, %v1383, %v1425
  %1427 = vst [vmem:[%s4 + $0x20] sm:$0x2] %v1426
  %v1428 = vld [vmem:[%s4 + $0x28] sm:$0x2]
  %v1429 = vsel %vm1282, %v1390, %v1428
  %1430 = vst [vmem:[%s4 + $0x28] sm:$0x2] %v1429
  %v1431 = vld [vmem:[%s4 + $0x30] sm:$0x2]
  %v1432 = vsel %vm1282, %v1397, %v1431
  %1433 = vst [vmem:[%s4 + $0x30] sm:$0x2] %v1432
  %v1434 = vld [vmem:[%s4 + $0x38] sm:$0x2]
  %v1435 = vsel %vm1282, %v1404, %v1434
  %1436 = vst [vmem:[%s4 + $0x38] sm:$0x2] %v1435
  %s1437 = scalar_lea.vmem %s0, 48
  %v1438 = vld [vmem:[%s1437] sm:$0xff]
  %v1439 = vld [vmem:[%s1437 + $0x8] sm:$0xff]
  %v1440 = vunpack.c.l.bf16 %v1438
  %v1441 = vunpack.c.h.bf16 %v1438
  %v1442 = vunpack.c.l.bf16 %v1439
  %v1443 = vunpack.c.h.bf16 %v1439
  %1444 = vmatprep.subr.mxu0 %v24
  %1445 = vmatpush1.msra.mxu0 %v23
  %1446 = vmatprep.subr.mxu0 %v28
  %1447 = vmatpush1.msra.mxu0 %v27
  %1448 = vmatprep.subr.mxu0 %v32
  %1449 = vmatpush1.msra.mxu0 %v31
  %1450 = vmatprep.subr.mxu0 %v36
  %1451 = vmatpush1.msra.mxu0 %v35
  %1452 = vmatprep.subr.mxu0 %v40
  %1453 = vmatpush1.msra.mxu0 %v39
  %1454 = vmatprep.subr.mxu0 %v44
  %1455 = vmatpush1.msra.mxu0 %v43
  %1456 = vmatprep.subr.mxu0 %v48
  %1457 = vmatpush1.msra.mxu0 %v47
  %1458 = vmatprep.subr.mxu0 %v52
  %1459 = vmatpush1.msra.mxu0 %v51
  %1460 = vmatprep.subr.mxu0 %v56
  %1461 = vmatpush1.msra.mxu0 %v55
  %1462 = vmatprep.subr.mxu0 %v60
  %1463 = vmatpush1.msra.mxu0 %v59
  %1464 = vmatprep.subr.mxu0 %v64
  %1465 = vmatpush1.msra.mxu0 %v63
  %1466 = vmatprep.subr.mxu0 %v68
  %1467 = vmatpush1.msra.mxu0 %v67
  %1468 = vmatprep.subr.mxu0 %v72
  %1469 = vmatpush1.msra.mxu0 %v71
  %1470 = vmatprep.subr.mxu0 %v76
  %1471 = vmatpush1.msra.mxu0 %v75
  %1472 = vmatprep.subr.mxu0 %v80
  %1473 = vmatpush1.msra.mxu0 %v79
  %1474 = vmatprep.subr.mxu0 %v84
  %1475 = vmatpush1.msra.mxu0 %v83
  %1476 = vmatprep.subr.mxu0 0.0
  %1477 = vmatpush1.msra.mxu0 0.0
  %1478 = vmatprep.subr.mxu0 0.0
  %1479 = vmatpush1.msra.mxu0 0.0
  %1480 = vmatprep.subr.mxu0 0.0
  %1481 = vmatpush1.msra.mxu0 0.0
  %1482 = vmatprep.subr.mxu0 0.0
  %1483 = vmatpush1.msra.mxu0 0.0
  %1484 = vmatprep.subr.mxu0 0.0
  %1485 = vmatpush1.msra.mxu0 0.0
  %1486 = vmatprep.subr.mxu0 0.0
  %1487 = vmatpush1.msra.mxu0 0.0
  %1488 = vmatprep.subr.mxu0 0.0
  %1489 = vmatpush1.msra.mxu0 0.0
  %1490 = vmatprep.subr.mxu0 0.0
  %1491 = vmatpush1.msra.mxu0 0.0
  %1492 = vmatprep.subr.mxu0 0.0
  %1493 = vmatpush1.msra.mxu0 0.0
  %1494 = vmatprep.subr.mxu0 0.0
  %1495 = vmatpush1.msra.mxu0 0.0
  %1496 = vmatprep.subr.mxu0 0.0
  %1497 = vmatpush1.msra.mxu0 0.0
  %1498 = vmatprep.subr.mxu0 0.0
  %1499 = vmatpush1.msra.mxu0 0.0
  %1500 = vmatprep.subr.mxu0 0.0
  %1501 = vmatpush1.msra.mxu0 0.0
  %1502 = vmatprep.subr.mxu0 0.0
  %1503 = vmatpush1.msra.mxu0 0.0
  %1504 = vmatprep.subr.mxu0 0.0
  %1505 = vmatpush1.msra.mxu0 0.0
  %1506 = vmatprep.subr.mxu0 0.0
  %1507 = vmatpush1.msra.mxu0 0.0
  %1508 = vmatprep.mubr.f32.mxu0 0.0
  %1509 = vmatmul.mubr.f32.gmra.mrb[0].mxu0 %v1172
  %v1510 = vpop.f32.mrb[0].mxu0
  %v1511 = vadd.f32 0.0, %v1510
  %v1512 = vpop.f32.mrb[0].mxu0
  %v1513 = vadd.f32 0.0, %v1512
  %1514 = vdwg.mxu0
  %1515 = vmatprep.subr.mxu0 %v26
  %1516 = vmatpush1.msra.mxu0 %v25
  %1517 = vmatprep.subr.mxu0 %v30
  %1518 = vmatpush1.msra.mxu0 %v29
  %1519 = vmatprep.subr.mxu0 %v34
  %1520 = vmatpush1.msra.mxu0 %v33
  %1521 = vmatprep.subr.mxu0 %v38
  %1522 = vmatpush1.msra.mxu0 %v37
  %1523 = vmatprep.subr.mxu0 %v42
  %1524 = vmatpush1.msra.mxu0 %v41
  %1525 = vmatprep.subr.mxu0 %v46
  %1526 = vmatpush1.msra.mxu0 %v45
  %1527 = vmatprep.subr.mxu0 %v50
  %1528 = vmatpush1.msra.mxu0 %v49
  %1529 = vmatprep.subr.mxu0 %v54
  %1530 = vmatpush1.msra.mxu0 %v53
  %1531 = vmatprep.subr.mxu0 %v58
  %1532 = vmatpush1.msra.mxu0 %v57
  %1533 = vmatprep.subr.mxu0 %v62
  %1534 = vmatpush1.msra.mxu0 %v61
  %1535 = vmatprep.subr.mxu0 %v66
  %1536 = vmatpush1.msra.mxu0 %v65
  %1537 = vmatprep.subr.mxu0 %v70
  %1538 = vmatpush1.msra.mxu0 %v69
  %1539 = vmatprep.subr.mxu0 %v74
  %1540 = vmatpush1.msra.mxu0 %v73
  %1541 = vmatprep.subr.mxu0 %v78
  %1542 = vmatpush1.msra.mxu0 %v77
  %1543 = vmatprep.subr.mxu0 %v82
  %1544 = vmatpush1.msra.mxu0 %v81
  %1545 = vmatprep.subr.mxu0 %v86
  %1546 = vmatpush1.msra.mxu0 %v85
  %1547 = vmatprep.subr.mxu0 0.0
  %1548 = vmatpush1.msra.mxu0 0.0
  %1549 = vmatprep.subr.mxu0 0.0
  %1550 = vmatpush1.msra.mxu0 0.0
  %1551 = vmatprep.subr.mxu0 0.0
  %1552 = vmatpush1.msra.mxu0 0.0
  %1553 = vmatprep.subr.mxu0 0.0
  %1554 = vmatpush1.msra.mxu0 0.0
  %1555 = vmatprep.subr.mxu0 0.0
  %1556 = vmatpush1.msra.mxu0 0.0
  %1557 = vmatprep.subr.mxu0 0.0
  %1558 = vmatpush1.msra.mxu0 0.0
  %1559 = vmatprep.subr.mxu0 0.0
  %1560 = vmatpush1.msra.mxu0 0.0
  %1561 = vmatprep.subr.mxu0 0.0
  %1562 = vmatpush1.msra.mxu0 0.0
  %1563 = vmatprep.subr.mxu0 0.0
  %1564 = vmatpush1.msra.mxu0 0.0
  %1565 = vmatprep.subr.mxu0 0.0
  %1566 = vmatpush1.msra.mxu0 0.0
  %1567 = vmatprep.subr.mxu0 0.0
  %1568 = vmatpush1.msra.mxu0 0.0
  %1569 = vmatprep.subr.mxu0 0.0
  %1570 = vmatpush1.msra.mxu0 0.0
  %1571 = vmatprep.subr.mxu0 0.0
  %1572 = vmatpush1.msra.mxu0 0.0
  %1573 = vmatprep.subr.mxu0 0.0
  %1574 = vmatpush1.msra.mxu0 0.0
  %1575 = vmatprep.subr.mxu0 0.0
  %1576 = vmatpush1.msra.mxu0 0.0
  %1577 = vmatprep.subr.mxu0 0.0
  %1578 = vmatpush1.msra.mxu0 0.0
  %1579 = vmatprep.mubr.f32.mxu0 0.0
  %1580 = vmatmul.mubr.f32.gmra.mrb[0].mxu0 %v1172
  %v1581 = vpop.f32.mrb[0].mxu0
  %v1582 = vadd.f32 0.0, %v1581
  %v1583 = vpop.f32.mrb[0].mxu0
  %v1584 = vadd.f32 0.0, %v1583
  %1585 = vdwg.mxu0
  %v1586 = vadd.f32 %v1440, %v1511
  %v1587 = vadd.f32 %v1441, %v1513
  %v1588 = vadd.f32 %v1442, %v1582
  %v1589 = vadd.f32 %v1443, %v1584
  %v1590 = vxor.u32 %v1586, 2147483648
  %v1591 = vmul.f32 %v1590, 1.442695
  %v1592 = vpow.pop %v1591
  %v1593 = vadd.f32 %v1592, 1.0
  %v1594 = vrcp.pop %v1593
  %v1595 = vmul.f32 1.0, %v1594
  %v1596 = vxor.u32 %v1587, 2147483648
  %v1597 = vmul.f32 %v1596, 1.442695
  %v1598 = vpow.pop %v1597
  %v1599 = vadd.f32 %v1598, 1.0
  %v1600 = vrcp.pop %v1599
  %v1601 = vmul.f32 1.0, %v1600
  %v1602 = vtanh.pop %v1588
  %v1603 = vxor.u32 %v1589, 2147483648
  %v1604 = vmul.f32 %v1603, 1.442695
  %v1605 = vpow.pop %v1604
  %v1606 = vadd.f32 %v1605, 1.0
  %v1607 = vrcp.pop %v1606
  %v1608 = vmul.f32 1.0, %v1607
  %v1609 = vmul.f32 %v1601, %v1173
  %v1610 = vmul.f32 %v1595, %v1602
  %v1611 = vadd.f32 %v1609, %v1610
  %v1612 = vtanh.pop %v1611
  %v1613 = vmul.f32 %v1608, %v1612
  %s1614 = sadd.s32 %s89, 3
  %v1615 = vstv %s1614
  %vm1616 = vcmp.lt.s32.totalorder %v1615, %v22
  %v1617 = vsel %vm1616, 1, 0
  %1618 = vset.pattern.permute.xlu0 0
  %1619 = vperm.xlu0 %1618, %v1617
  %v1620 = vpop.permute.xlu0 %1619
  %vm1621 = vcmp.eq.s32.totalorder %v1620, 1
  %v1622 = vsel %vm1621, %v1613, %v1172
  %v1623 = vsel %vm1621, %v1611, %v1173
  %v1624 = vpack.c.bf16 %v1622, %v1622
  %v1627 = vunpack.c.l.s4 1966171168
  %v1628 = vunpack.c.0.s8 %v1627
  %v1629 = vlaneseq
  %v1630 = vshrl.u32 %v1629, 7
  %v1631 = vsub.s32 %v1628, %v1630
  %v1632 = vrot.slane %v1624, %v1631
  %v1633 = vcombine.high %v1632, %v1632
  %v1635 = vunpack.c.l.s4 1966171168
  %v1636 = vunpack.c.0.s8 %v1635
  %v1637 = vlaneseq
  %v1638 = vshrl.u32 %v1637, 7
  %v1639 = vsub.s32 %v1636, %v1638
  %v1640 = vrot.slane %v1632, %v1639
  %v1642 = vunpack.c.l.s4 1966171168
  %v1643 = vunpack.c.0.s8 %v1642
  %v1644 = vlaneseq
  %v1645 = vshrl.u32 %v1644, 7
  %v1646 = vsub.s32 %v1643, %v1645
  %v1647 = vrot.slane %v1633, %v1646
  %v1648 = vcombine.high %v1640, %v1640
  %v1649 = vcombine.high %v1647, %v1647
  %v1650 = vunpack.i.l.s16 %v1640
  %v1651 = vunpack.i.h.s16 %v1640
  %v1652 = vunpack.i.l.s16 %v1647
  %v1653 = vunpack.i.h.s16 %v1647
  %v1654 = vunpack.i.l.s16 %v1648
  %v1655 = vunpack.i.h.s16 %v1648
  %v1656 = vunpack.i.l.s16 %v1649
  %v1657 = vunpack.i.h.s16 %v1649
  %v1658 = vpack.i.b16 %v1650, %v1650
  %v1659 = vpack.i.b16 %v1651, %v1651
  %v1660 = vpack.i.b16 %v1652, %v1652
  %v1661 = vpack.i.b16 %v1653, %v1653
  %v1662 = vpack.i.b16 %v1654, %v1654
  %v1663 = vpack.i.b16 %v1655, %v1655
  %v1664 = vpack.i.b16 %v1656, %v1656
  %v1665 = vpack.i.b16 %v1657, %v1657
  %v1667 = vunpack.c.l.s4 286326784
  %v1668 = vunpack.c.0.s8 %v1667
  %v1669 = vlaneseq
  %v1670 = vshrl.u32 %v1669, 7
  %v1671 = vsub.s32 %v1668, %v1670
  %v1672 = vrot.slane %v1658, %v1671
  %v1674 = vunpack.c.l.s4 286326784
  %v1675 = vunpack.c.0.s8 %v1674
  %v1676 = vlaneseq
  %v1677 = vshrl.u32 %v1676, 7
  %v1678 = vsub.s32 %v1675, %v1677
  %v1679 = vrot.slane %v1659, %v1678
  %v1681 = vunpack.c.l.s4 286326784
  %v1682 = vunpack.c.0.s8 %v1681
  %v1683 = vlaneseq
  %v1684 = vshrl.u32 %v1683, 7
  %v1685 = vsub.s32 %v1682, %v1684
  %v1686 = vrot.slane %v1660, %v1685
  %v1688 = vunpack.c.l.s4 286326784
  %v1689 = vunpack.c.0.s8 %v1688
  %v1690 = vlaneseq
  %v1691 = vshrl.u32 %v1690, 7
  %v1692 = vsub.s32 %v1689, %v1691
  %v1693 = vrot.slane %v1661, %v1692
  %v1695 = vunpack.c.l.s4 286326784
  %v1696 = vunpack.c.0.s8 %v1695
  %v1697 = vlaneseq
  %v1698 = vshrl.u32 %v1697, 7
  %v1699 = vsub.s32 %v1696, %v1698
  %v1700 = vrot.slane %v1662, %v1699
  %v1702 = vunpack.c.l.s4 286326784
  %v1703 = vunpack.c.0.s8 %v1702
  %v1704 = vlaneseq
  %v1705 = vshrl.u32 %v1704, 7
  %v1706 = vsub.s32 %v1703, %v1705
  %v1707 = vrot.slane %v1663, %v1706
  %v1709 = vunpack.c.l.s4 286326784
  %v1710 = vunpack.c.0.s8 %v1709
  %v1711 = vlaneseq
  %v1712 = vshrl.u32 %v1711, 7
  %v1713 = vsub.s32 %v1710, %v1712
  %v1714 = vrot.slane %v1664, %v1713
  %v1716 = vunpack.c.l.s4 286326784
  %v1717 = vunpack.c.0.s8 %v1716
  %v1718 = vlaneseq
  %v1719 = vshrl.u32 %v1718, 7
  %v1720 = vsub.s32 %v1717, %v1719
  %v1721 = vrot.slane %v1665, %v1720
  %vm1730 = vsmask.f32 7942
  %vm1731 = vmand %vm1280, %vm1730
  %v1732 = vld [vmem:[%s3] sm:$0x2]
  %v1733 = vsel %vm1731, %v1672, %v1732
  %1734 = vst [vmem:[%s3] sm:$0x2] %v1733
  %v1735 = vld [vmem:[%s3 + $0x8] sm:$0x2]
  %v1736 = vsel %vm1731, %v1679, %v1735
  %1737 = vst [vmem:[%s3 + $0x8] sm:$0x2] %v1736
  %v1738 = vld [vmem:[%s3 + $0x10] sm:$0x2]
  %v1739 = vsel %vm1731, %v1686, %v1738
  %1740 = vst [vmem:[%s3 + $0x10] sm:$0x2] %v1739
  %v1741 = vld [vmem:[%s3 + $0x18] sm:$0x2]
  %v1742 = vsel %vm1731, %v1693, %v1741
  %1743 = vst [vmem:[%s3 + $0x18] sm:$0x2] %v1742
  %v1744 = vld [vmem:[%s3 + $0x20] sm:$0x2]
  %v1745 = vsel %vm1731, %v1700, %v1744
  %1746 = vst [vmem:[%s3 + $0x20] sm:$0x2] %v1745
  %v1747 = vld [vmem:[%s3 + $0x28] sm:$0x2]
  %v1748 = vsel %vm1731, %v1707, %v1747
  %1749 = vst [vmem:[%s3 + $0x28] sm:$0x2] %v1748
  %v1750 = vld [vmem:[%s3 + $0x30] sm:$0x2]
  %v1751 = vsel %vm1731, %v1714, %v1750
  %1752 = vst [vmem:[%s3 + $0x30] sm:$0x2] %v1751
  %v1753 = vld [vmem:[%s3 + $0x38] sm:$0x2]
  %v1754 = vsel %vm1731, %v1721, %v1753
  %1755 = vst [vmem:[%s3 + $0x38] sm:$0x2] %v1754
  %v1756 = vpack.c.bf16 %v1623, %v1623
  %v1759 = vunpack.c.l.s4 1966171168
  %v1760 = vunpack.c.0.s8 %v1759
  %v1761 = vlaneseq
  %v1762 = vshrl.u32 %v1761, 7
  %v1763 = vsub.s32 %v1760, %v1762
  %v1764 = vrot.slane %v1756, %v1763
  %v1765 = vcombine.high %v1764, %v1764
  %v1767 = vunpack.c.l.s4 1966171168
  %v1768 = vunpack.c.0.s8 %v1767
  %v1769 = vlaneseq
  %v1770 = vshrl.u32 %v1769, 7
  %v1771 = vsub.s32 %v1768, %v1770
  %v1772 = vrot.slane %v1764, %v1771
  %v1774 = vunpack.c.l.s4 1966171168
  %v1775 = vunpack.c.0.s8 %v1774
  %v1776 = vlaneseq
  %v1777 = vshrl.u32 %v1776, 7
  %v1778 = vsub.s32 %v1775, %v1777
  %v1779 = vrot.slane %v1765, %v1778
  %v1780 = vcombine.high %v1772, %v1772
  %v1781 = vcombine.high %v1779, %v1779
  %v1782 = vunpack.i.l.s16 %v1772
  %v1783 = vunpack.i.h.s16 %v1772
  %v1784 = vunpack.i.l.s16 %v1779
  %v1785 = vunpack.i.h.s16 %v1779
  %v1786 = vunpack.i.l.s16 %v1780
  %v1787 = vunpack.i.h.s16 %v1780
  %v1788 = vunpack.i.l.s16 %v1781
  %v1789 = vunpack.i.h.s16 %v1781
  %v1790 = vpack.i.b16 %v1782, %v1782
  %v1791 = vpack.i.b16 %v1783, %v1783
  %v1792 = vpack.i.b16 %v1784, %v1784
  %v1793 = vpack.i.b16 %v1785, %v1785
  %v1794 = vpack.i.b16 %v1786, %v1786
  %v1795 = vpack.i.b16 %v1787, %v1787
  %v1796 = vpack.i.b16 %v1788, %v1788
  %v1797 = vpack.i.b16 %v1789, %v1789
  %v1799 = vunpack.c.l.s4 286326784
  %v1800 = vunpack.c.0.s8 %v1799
  %v1801 = vlaneseq
  %v1802 = vshrl.u32 %v1801, 7
  %v1803 = vsub.s32 %v1800, %v1802
  %v1804 = vrot.slane %v1790, %v1803
  %v1806 = vunpack.c.l.s4 286326784
  %v1807 = vunpack.c.0.s8 %v1806
  %v1808 = vlaneseq
  %v1809 = vshrl.u32 %v1808, 7
  %v1810 = vsub.s32 %v1807, %v1809
  %v1811 = vrot.slane %v1791, %v1810
  %v1813 = vunpack.c.l.s4 286326784
  %v1814 = vunpack.c.0.s8 %v1813
  %v1815 = vlaneseq
  %v1816 = vshrl.u32 %v1815, 7
  %v1817 = vsub.s32 %v1814, %v1816
  %v1818 = vrot.slane %v1792, %v1817
  %v1820 = vunpack.c.l.s4 286326784
  %v1821 = vunpack.c.0.s8 %v1820
  %v1822 = vlaneseq
  %v1823 = vshrl.u32 %v1822, 7
  %v1824 = vsub.s32 %v1821, %v1823
  %v1825 = vrot.slane %v1793, %v1824
  %v1827 = vunpack.c.l.s4 286326784
  %v1828 = vunpack.c.0.s8 %v1827
  %v1829 = vlaneseq
  %v1830 = vshrl.u32 %v1829, 7
  %v1831 = vsub.s32 %v1828, %v1830
  %v1832 = vrot.slane %v1794, %v1831
  %v1834 = vunpack.c.l.s4 286326784
  %v1835 = vunpack.c.0.s8 %v1834
  %v1836 = vlaneseq
  %v1837 = vshrl.u32 %v1836, 7
  %v1838 = vsub.s32 %v1835, %v1837
  %v1839 = vrot.slane %v1795, %v1838
  %v1841 = vunpack.c.l.s4 286326784
  %v1842 = vunpack.c.0.s8 %v1841
  %v1843 = vlaneseq
  %v1844 = vshrl.u32 %v1843, 7
  %v1845 = vsub.s32 %v1842, %v1844
  %v1846 = vrot.slane %v1796, %v1845
  %v1848 = vunpack.c.l.s4 286326784
  %v1849 = vunpack.c.0.s8 %v1848
  %v1850 = vlaneseq
  %v1851 = vshrl.u32 %v1850, 7
  %v1852 = vsub.s32 %v1849, %v1851
  %v1853 = vrot.slane %v1797, %v1852
  %v1862 = vld [vmem:[%s4] sm:$0x2]
  %v1863 = vsel %vm1731, %v1804, %v1862
  %1864 = vst [vmem:[%s4] sm:$0x2] %v1863
  %v1865 = vld [vmem:[%s4 + $0x8] sm:$0x2]
  %v1866 = vsel %vm1731, %v1811, %v1865
  %1867 = vst [vmem:[%s4 + $0x8] sm:$0x2] %v1866
  %v1868 = vld [vmem:[%s4 + $0x10] sm:$0x2]
  %v1869 = vsel %vm1731, %v1818, %v1868
  %1870 = vst [vmem:[%s4 + $0x10] sm:$0x2] %v1869
  %v1871 = vld [vmem:[%s4 + $0x18] sm:$0x2]
  %v1872 = vsel %vm1731, %v1825, %v1871
  %1873 = vst [vmem:[%s4 + $0x18] sm:$0x2] %v1872
  %v1874 = vld [vmem:[%s4 + $0x20] sm:$0x2]
  %v1875 = vsel %vm1731, %v1832, %v1874
  %1876 = vst [vmem:[%s4 + $0x20] sm:$0x2] %v1875
  %v1877 = vld [vmem:[%s4 + $0x28] sm:$0x2]
  %v1878 = vsel %vm1731, %v1839, %v1877
  %1879 = vst [vmem:[%s4 + $0x28] sm:$0x2] %v1878
  %v1880 = vld [vmem:[%s4 + $0x30] sm:$0x2]
  %v1881 = vsel %vm1731, %v1846, %v1880
  %1882 = vst [vmem:[%s4 + $0x30] sm:$0x2] %v1881
  %v1883 = vld [vmem:[%s4 + $0x38] sm:$0x2]
  %v1884 = vsel %vm1731, %v1853, %v1883
  %1885 = vst [vmem:[%s4 + $0x38] sm:$0x2] %v1884
  %s1886 = scalar_lea.vmem %s0, 64
  %v1887 = vld [vmem:[%s1886] sm:$0xff]
  %v1888 = vld [vmem:[%s1886 + $0x8] sm:$0xff]
  %v1889 = vunpack.c.l.bf16 %v1887
  %v1890 = vunpack.c.h.bf16 %v1887
  %v1891 = vunpack.c.l.bf16 %v1888
  %v1892 = vunpack.c.h.bf16 %v1888
  %1893 = vmatprep.subr.mxu0 %v24
  %1894 = vmatpush1.msra.mxu0 %v23
  %1895 = vmatprep.subr.mxu0 %v28
  %1896 = vmatpush1.msra.mxu0 %v27
  %1897 = vmatprep.subr.mxu0 %v32
  %1898 = vmatpush1.msra.mxu0 %v31
  %1899 = vmatprep.subr.mxu0 %v36
  %1900 = vmatpush1.msra.mxu0 %v35
  %1901 = vmatprep.subr.mxu0 %v40
  %1902 = vmatpush1.msra.mxu0 %v39
  %1903 = vmatprep.subr.mxu0 %v44
  %1904 = vmatpush1.msra.mxu0 %v43
  %1905 = vmatprep.subr.mxu0 %v48
  %1906 = vmatpush1.msra.mxu0 %v47
  %1907 = vmatprep.subr.mxu0 %v52
  %1908 = vmatpush1.msra.mxu0 %v51
  %1909 = vmatprep.subr.mxu0 %v56
  %1910 = vmatpush1.msra.mxu0 %v55
  %1911 = vmatprep.subr.mxu0 %v60
  %1912 = vmatpush1.msra.mxu0 %v59
  %1913 = vmatprep.subr.mxu0 %v64
  %1914 = vmatpush1.msra.mxu0 %v63
  %1915 = vmatprep.subr.mxu0 %v68
  %1916 = vmatpush1.msra.mxu0 %v67
  %1917 = vmatprep.subr.mxu0 %v72
  %1918 = vmatpush1.msra.mxu0 %v71
  %1919 = vmatprep.subr.mxu0 %v76
  %1920 = vmatpush1.msra.mxu0 %v75
  %1921 = vmatprep.subr.mxu0 %v80
  %1922 = vmatpush1.msra.mxu0 %v79
  %1923 = vmatprep.subr.mxu0 %v84
  %1924 = vmatpush1.msra.mxu0 %v83
  %1925 = vmatprep.subr.mxu0 0.0
  %1926 = vmatpush1.msra.mxu0 0.0
  %1927 = vmatprep.subr.mxu0 0.0
  %1928 = vmatpush1.msra.mxu0 0.0
  %1929 = vmatprep.subr.mxu0 0.0
  %1930 = vmatpush1.msra.mxu0 0.0
  %1931 = vmatprep.subr.mxu0 0.0
  %1932 = vmatpush1.msra.mxu0 0.0
  %1933 = vmatprep.subr.mxu0 0.0
  %1934 = vmatpush1.msra.mxu0 0.0
  %1935 = vmatprep.subr.mxu0 0.0
  %1936 = vmatpush1.msra.mxu0 0.0
  %1937 = vmatprep.subr.mxu0 0.0
  %1938 = vmatpush1.msra.mxu0 0.0
  %1939 = vmatprep.subr.mxu0 0.0
  %1940 = vmatpush1.msra.mxu0 0.0
  %1941 = vmatprep.subr.mxu0 0.0
  %1942 = vmatpush1.msra.mxu0 0.0
  %1943 = vmatprep.subr.mxu0 0.0
  %1944 = vmatpush1.msra.mxu0 0.0
  %1945 = vmatprep.subr.mxu0 0.0
  %1946 = vmatpush1.msra.mxu0 0.0
  %1947 = vmatprep.subr.mxu0 0.0
  %1948 = vmatpush1.msra.mxu0 0.0
  %1949 = vmatprep.subr.mxu0 0.0
  %1950 = vmatpush1.msra.mxu0 0.0
  %1951 = vmatprep.subr.mxu0 0.0
  %1952 = vmatpush1.msra.mxu0 0.0
  %1953 = vmatprep.subr.mxu0 0.0
  %1954 = vmatpush1.msra.mxu0 0.0
  %1955 = vmatprep.subr.mxu0 0.0
  %1956 = vmatpush1.msra.mxu0 0.0
  %1957 = vmatprep.mubr.f32.mxu0 0.0
  %1958 = vmatmul.mubr.f32.gmra.mrb[0].mxu0 %v1622
  %v1959 = vpop.f32.mrb[0].mxu0
  %v1960 = vadd.f32 0.0, %v1959
  %v1961 = vpop.f32.mrb[0].mxu0
  %v1962 = vadd.f32 0.0, %v1961
  %1963 = vdwg.mxu0
  %1964 = vmatprep.subr.mxu0 %v26
  %1965 = vmatpush1.msra.mxu0 %v25
  %1966 = vmatprep.subr.mxu0 %v30
  %1967 = vmatpush1.msra.mxu0 %v29
  %1968 = vmatprep.subr.mxu0 %v34
  %1969 = vmatpush1.msra.mxu0 %v33
  %1970 = vmatprep.subr.mxu0 %v38
  %1971 = vmatpush1.msra.mxu0 %v37
  %1972 = vmatprep.subr.mxu0 %v42
  %1973 = vmatpush1.msra.mxu0 %v41
  %1974 = vmatprep.subr.mxu0 %v46
  %1975 = vmatpush1.msra.mxu0 %v45
  %1976 = vmatprep.subr.mxu0 %v50
  %1977 = vmatpush1.msra.mxu0 %v49
  %1978 = vmatprep.subr.mxu0 %v54
  %1979 = vmatpush1.msra.mxu0 %v53
  %1980 = vmatprep.subr.mxu0 %v58
  %1981 = vmatpush1.msra.mxu0 %v57
  %1982 = vmatprep.subr.mxu0 %v62
  %1983 = vmatpush1.msra.mxu0 %v61
  %1984 = vmatprep.subr.mxu0 %v66
  %1985 = vmatpush1.msra.mxu0 %v65
  %1986 = vmatprep.subr.mxu0 %v70
  %1987 = vmatpush1.msra.mxu0 %v69
  %1988 = vmatprep.subr.mxu0 %v74
  %1989 = vmatpush1.msra.mxu0 %v73
  %1990 = vmatprep.subr.mxu0 %v78
  %1991 = vmatpush1.msra.mxu0 %v77
  %1992 = vmatprep.subr.mxu0 %v82
  %1993 = vmatpush1.msra.mxu0 %v81
  %1994 = vmatprep.subr.mxu0 %v86
  %1995 = vmatpush1.msra.mxu0 %v85
  %1996 = vmatprep.subr.mxu0 0.0
  %1997 = vmatpush1.msra.mxu0 0.0
  %1998 = vmatprep.subr.mxu0 0.0
  %1999 = vmatpush1.msra.mxu0 0.0
  %2000 = vmatprep.subr.mxu0 0.0
  %2001 = vmatpush1.msra.mxu0 0.0
  %2002 = vmatprep.subr.mxu0 0.0
  %2003 = vmatpush1.msra.mxu0 0.0
  %2004 = vmatprep.subr.mxu0 0.0
  %2005 = vmatpush1.msra.mxu0 0.0
  %2006 = vmatprep.subr.mxu0 0.0
  %2007 = vmatpush1.msra.mxu0 0.0
  %2008 = vmatprep.subr.mxu0 0.0
  %2009 = vmatpush1.msra.mxu0 0.0
  %2010 = vmatprep.subr.mxu0 0.0
  %2011 = vmatpush1.msra.mxu0 0.0
  %2012 = vmatprep.subr.mxu0 0.0
  %2013 = vmatpush1.msra.mxu0 0.0
  %2014 = vmatprep.subr.mxu0 0.0
  %2015 = vmatpush1.msra.mxu0 0.0
  %2016 = vmatprep.subr.mxu0 0.0
  %2017 = vmatpush1.msra.mxu0 0.0
  %2018 = vmatprep.subr.mxu0 0.0
  %2019 = vmatpush1.msra.mxu0 0.0
  %2020 = vmatprep.subr.mxu0 0.0
  %2021 = vmatpush1.msra.mxu0 0.0
  %2022 = vmatprep.subr.mxu0 0.0
  %2023 = vmatpush1.msra.mxu0 0.0
  %2024 = vmatprep.subr.mxu0 0.0
  %2025 = vmatpush1.msra.mxu0 0.0
  %2026 = vmatprep.subr.mxu0 0.0
  %2027 = vmatpush1.msra.mxu0 0.0
  %2028 = vmatprep.mubr.f32.mxu0 0.0
  %2029 = vmatmul.mubr.f32.gmra.mrb[0].mxu0 %v1622
  %v2030 = vpop.f32.mrb[0].mxu0
  %v2031 = vadd.f32 0.0, %v2030
  %v2032 = vpop.f32.mrb[0].mxu0
  %v2033 = vadd.f32 0.0, %v2032
  %2034 = vdwg.mxu0
  %v2035 = vadd.f32 %v1889, %v1960
  %v2036 = vadd.f32 %v1890, %v1962
  %v2037 = vadd.f32 %v1891, %v2031
  %v2038 = vadd.f32 %v1892, %v2033
  %v2039 = vxor.u32 %v2035, 2147483648
  %v2040 = vmul.f32 %v2039, 1.442695
  %v2041 = vpow.pop %v2040
  %v2042 = vadd.f32 %v2041, 1.0
  %v2043 = vrcp.pop %v2042
  %v2044 = vmul.f32 1.0, %v2043
  %v2045 = vxor.u32 %v2036, 2147483648
  %v2046 = vmul.f32 %v2045, 1.442695
  %v2047 = vpow.pop %v2046
  %v2048 = vadd.f32 %v2047, 1.0
  %v2049 = vrcp.pop %v2048
  %v2050 = vmul.f32 1.0, %v2049
  %v2051 = vtanh.pop %v2037
  %v2052 = vxor.u32 %v2038, 2147483648
  %v2053 = vmul.f32 %v2052, 1.442695
  %v2054 = vpow.pop %v2053
  %v2055 = vadd.f32 %v2054, 1.0
  %v2056 = vrcp.pop %v2055
  %v2057 = vmul.f32 1.0, %v2056
  %v2058 = vmul.f32 %v2050, %v1623
  %v2059 = vmul.f32 %v2044, %v2051
  %v2060 = vadd.f32 %v2058, %v2059
  %v2061 = vtanh.pop %v2060
  %v2062 = vmul.f32 %v2057, %v2061
  %s2063 = sadd.s32 %s89, 4
  %v2064 = vstv %s2063
  %vm2065 = vcmp.lt.s32.totalorder %v2064, %v22
  %v2066 = vsel %vm2065, 1, 0
  %2067 = vset.pattern.permute.xlu0 0
  %2068 = vperm.xlu0 %2067, %v2066
  %v2069 = vpop.permute.xlu0 %2068
  %vm2070 = vcmp.eq.s32.totalorder %v2069, 1
  %v2071 = vsel %vm2070, %v2062, %v1622
  %v2072 = vsel %vm2070, %v2060, %v1623
  %v2073 = vpack.c.bf16 %v2071, %v2071
  %v2076 = vunpack.c.l.s4 1966171168
  %v2077 = vunpack.c.0.s8 %v2076
  %v2078 = vlaneseq
  %v2079 = vshrl.u32 %v2078, 7
  %v2080 = vsub.s32 %v2077, %v2079
  %v2081 = vrot.slane %v2073, %v2080
  %v2082 = vcombine.high %v2081, %v2081
  %v2084 = vunpack.c.l.s4 1966171168
  %v2085 = vunpack.c.0.s8 %v2084
  %v2086 = vlaneseq
  %v2087 = vshrl.u32 %v2086, 7
  %v2088 = vsub.s32 %v2085, %v2087
  %v2089 = vrot.slane %v2081, %v2088
  %v2091 = vunpack.c.l.s4 1966171168
  %v2092 = vunpack.c.0.s8 %v2091
  %v2093 = vlaneseq
  %v2094 = vshrl.u32 %v2093, 7
  %v2095 = vsub.s32 %v2092, %v2094
  %v2096 = vrot.slane %v2082, %v2095
  %v2097 = vcombine.high %v2089, %v2089
  %v2098 = vcombine.high %v2096, %v2096
  %v2099 = vunpack.i.l.s16 %v2089
  %v2100 = vunpack.i.h.s16 %v2089
  %v2101 = vunpack.i.l.s16 %v2096
  %v2102 = vunpack.i.h.s16 %v2096
  %v2103 = vunpack.i.l.s16 %v2097
  %v2104 = vunpack.i.h.s16 %v2097
  %v2105 = vunpack.i.l.s16 %v2098
  %v2106 = vunpack.i.h.s16 %v2098
  %v2107 = vpack.i.b16 %v2099, %v2099
  %v2108 = vpack.i.b16 %v2100, %v2100
  %v2109 = vpack.i.b16 %v2101, %v2101
  %v2110 = vpack.i.b16 %v2102, %v2102
  %v2111 = vpack.i.b16 %v2103, %v2103
  %v2112 = vpack.i.b16 %v2104, %v2104
  %v2113 = vpack.i.b16 %v2105, %v2105
  %v2114 = vpack.i.b16 %v2106, %v2106
  %v2116 = vunpack.c.l.s4 286326784
  %v2117 = vunpack.c.0.s8 %v2116
  %v2118 = vlaneseq
  %v2119 = vshrl.u32 %v2118, 7
  %v2120 = vsub.s32 %v2117, %v2119
  %v2121 = vrot.slane %v2107, %v2120
  %v2123 = vunpack.c.l.s4 286326784
  %v2124 = vunpack.c.0.s8 %v2123
  %v2125 = vlaneseq
  %v2126 = vshrl.u32 %v2125, 7
  %v2127 = vsub.s32 %v2124, %v2126
  %v2128 = vrot.slane %v2108, %v2127
  %v2130 = vunpack.c.l.s4 286326784
  %v2131 = vunpack.c.0.s8 %v2130
  %v2132 = vlaneseq
  %v2133 = vshrl.u32 %v2132, 7
  %v2134 = vsub.s32 %v2131, %v2133
  %v2135 = vrot.slane %v2109, %v2134
  %v2137 = vunpack.c.l.s4 286326784
  %v2138 = vunpack.c.0.s8 %v2137
  %v2139 = vlaneseq
  %v2140 = vshrl.u32 %v2139, 7
  %v2141 = vsub.s32 %v2138, %v2140
  %v2142 = vrot.slane %v2110, %v2141
  %v2144 = vunpack.c.l.s4 286326784
  %v2145 = vunpack.c.0.s8 %v2144
  %v2146 = vlaneseq
  %v2147 = vshrl.u32 %v2146, 7
  %v2148 = vsub.s32 %v2145, %v2147
  %v2149 = vrot.slane %v2111, %v2148
  %v2151 = vunpack.c.l.s4 286326784
  %v2152 = vunpack.c.0.s8 %v2151
  %v2153 = vlaneseq
  %v2154 = vshrl.u32 %v2153, 7
  %v2155 = vsub.s32 %v2152, %v2154
  %v2156 = vrot.slane %v2112, %v2155
  %v2158 = vunpack.c.l.s4 286326784
  %v2159 = vunpack.c.0.s8 %v2158
  %v2160 = vlaneseq
  %v2161 = vshrl.u32 %v2160, 7
  %v2162 = vsub.s32 %v2159, %v2161
  %v2163 = vrot.slane %v2113, %v2162
  %v2165 = vunpack.c.l.s4 286326784
  %v2166 = vunpack.c.0.s8 %v2165
  %v2167 = vlaneseq
  %v2168 = vshrl.u32 %v2167, 7
  %v2169 = vsub.s32 %v2166, %v2168
  %v2170 = vrot.slane %v2114, %v2169
  %vm2179 = vcmask 1042434
  %vm2180 = vsmask.f32 2304
  %vm2181 = vmand %vm2179, %vm2180
  %v2182 = vld [vmem:[%s3] sm:$0x4]
  %v2183 = vsel %vm2181, %v2121, %v2182
  %2184 = vst [vmem:[%s3] sm:$0x4] %v2183
  %v2185 = vld [vmem:[%s3 + $0x8] sm:$0x4]
  %v2186 = vsel %vm2181, %v2128, %v2185
  %2187 = vst [vmem:[%s3 + $0x8] sm:$0x4] %v2186
  %v2188 = vld [vmem:[%s3 + $0x10] sm:$0x4]
  %v2189 = vsel %vm2181, %v2135, %v2188
  %2190 = vst [vmem:[%s3 + $0x10] sm:$0x4] %v2189
  %v2191 = vld [vmem:[%s3 + $0x18] sm:$0x4]
  %v2192 = vsel %vm2181, %v2142, %v2191
  %2193 = vst [vmem:[%s3 + $0x18] sm:$0x4] %v2192
  %v2194 = vld [vmem:[%s3 + $0x20] sm:$0x4]
  %v2195 = vsel %vm2181, %v2149, %v2194
  %2196 = vst [vmem:[%s3 + $0x20] sm:$0x4] %v2195
  %v2197 = vld [vmem:[%s3 + $0x28] sm:$0x4]
  %v2198 = vsel %vm2181, %v2156, %v2197
  %2199 = vst [vmem:[%s3 + $0x28] sm:$0x4] %v2198
  %v2200 = vld [vmem:[%s3 + $0x30] sm:$0x4]
  %v2201 = vsel %vm2181, %v2163, %v2200
  %2202 = vst [vmem:[%s3 + $0x30] sm:$0x4] %v2201
  %v2203 = vld [vmem:[%s3 + $0x38] sm:$0x4]
  %v2204 = vsel %vm2181, %v2170, %v2203
  %2205 = vst [vmem:[%s3 + $0x38] sm:$0x4] %v2204
  %v2206 = vpack.c.bf16 %v2072, %v2072
  %v2209 = vunpack.c.l.s4 1966171168
  %v2210 = vunpack.c.0.s8 %v2209
  %v2211 = vlaneseq
  %v2212 = vshrl.u32 %v2211, 7
  %v2213 = vsub.s32 %v2210, %v2212
  %v2214 = vrot.slane %v2206, %v2213
  %v2215 = vcombine.high %v2214, %v2214
  %v2217 = vunpack.c.l.s4 1966171168
  %v2218 = vunpack.c.0.s8 %v2217
  %v2219 = vlaneseq
  %v2220 = vshrl.u32 %v2219, 7
  %v2221 = vsub.s32 %v2218, %v2220
  %v2222 = vrot.slane %v2214, %v2221
  %v2224 = vunpack.c.l.s4 1966171168
  %v2225 = vunpack.c.0.s8 %v2224
  %v2226 = vlaneseq
  %v2227 = vshrl.u32 %v2226, 7
  %v2228 = vsub.s32 %v2225, %v2227
  %v2229 = vrot.slane %v2215, %v2228
  %v2230 = vcombine.high %v2222, %v2222
  %v2231 = vcombine.high %v2229, %v2229
  %v2232 = vunpack.i.l.s16 %v2222
  %v2233 = vunpack.i.h.s16 %v2222
  %v2234 = vunpack.i.l.s16 %v2229
  %v2235 = vunpack.i.h.s16 %v2229
  %v2236 = vunpack.i.l.s16 %v2230
  %v2237 = vunpack.i.h.s16 %v2230
  %v2238 = vunpack.i.l.s16 %v2231
  %v2239 = vunpack.i.h.s16 %v2231
  %v2240 = vpack.i.b16 %v2232, %v2232
  %v2241 = vpack.i.b16 %v2233, %v2233
  %v2242 = vpack.i.b16 %v2234, %v2234
  %v2243 = vpack.i.b16 %v2235, %v2235
  %v2244 = vpack.i.b16 %v2236, %v2236
  %v2245 = vpack.i.b16 %v2237, %v2237
  %v2246 = vpack.i.b16 %v2238, %v2238
  %v2247 = vpack.i.b16 %v2239, %v2239
  %v2249 = vunpack.c.l.s4 286326784
  %v2250 = vunpack.c.0.s8 %v2249
  %v2251 = vlaneseq
  %v2252 = vshrl.u32 %v2251, 7
  %v2253 = vsub.s32 %v2250, %v2252
  %v2254 = vrot.slane %v2240, %v2253
  %v2256 = vunpack.c.l.s4 286326784
  %v2257 = vunpack.c.0.s8 %v2256
  %v2258 = vlaneseq
  %v2259 = vshrl.u32 %v2258, 7
  %v2260 = vsub.s32 %v2257, %v2259
  %v2261 = vrot.slane %v2241, %v2260
  %v2263 = vunpack.c.l.s4 286326784
  %v2264 = vunpack.c.0.s8 %v2263
  %v2265 = vlaneseq
  %v2266 = vshrl.u32 %v2265, 7
  %v2267 = vsub.s32 %v2264, %v2266
  %v2268 = vrot.slane %v2242, %v2267
  %v2270 = vunpack.c.l.s4 286326784
  %v2271 = vunpack.c.0.s8 %v2270
  %v2272 = vlaneseq
  %v2273 = vshrl.u32 %v2272, 7
  %v2274 = vsub.s32 %v2271, %v2273
  %v2275 = vrot.slane %v2243, %v2274
  %v2277 = vunpack.c.l.s4 286326784
  %v2278 = vunpack.c.0.s8 %v2277
  %v2279 = vlaneseq
  %v2280 = vshrl.u32 %v2279, 7
  %v2281 = vsub.s32 %v2278, %v2280
  %v2282 = vrot.slane %v2244, %v2281
  %v2284 = vunpack.c.l.s4 286326784
  %v2285 = vunpack.c.0.s8 %v2284
  %v2286 = vlaneseq
  %v2287 = vshrl.u32 %v2286, 7
  %v2288 = vsub.s32 %v2285, %v2287
  %v2289 = vrot.slane %v2245, %v2288
  %v2291 = vunpack.c.l.s4 286326784
  %v2292 = vunpack.c.0.s8 %v2291
  %v2293 = vlaneseq
  %v2294 = vshrl.u32 %v2293, 7
  %v2295 = vsub.s32 %v2292, %v2294
  %v2296 = vrot.slane %v2246, %v2295
  %v2298 = vunpack.c.l.s4 286326784
  %v2299 = vunpack.c.0.s8 %v2298
  %v2300 = vlaneseq
  %v2301 = vshrl.u32 %v2300, 7
  %v2302 = vsub.s32 %v2299, %v2301
  %v2303 = vrot.slane %v2247, %v2302
  %v2312 = vld [vmem:[%s4] sm:$0x4]
  %v2313 = vsel %vm2181, %v2254, %v2312
  %2314 = vst [vmem:[%s4] sm:$0x4] %v2313
  %v2315 = vld [vmem:[%s4 + $0x8] sm:$0x4]
  %v2316 = vsel %vm2181, %v2261, %v2315
  %2317 = vst [vmem:[%s4 + $0x8] sm:$0x4] %v2316
  %v2318 = vld [vmem:[%s4 + $0x10] sm:$0x4]
  %v2319 = vsel %vm2181, %v2268, %v2318
  %2320 = vst [vmem:[%s4 + $0x10] sm:$0x4] %v2319
  %v2321 = vld [vmem:[%s4 + $0x18] sm:$0x4]
  %v2322 = vsel %vm2181, %v2275, %v2321
  %2323 = vst [vmem:[%s4 + $0x18] sm:$0x4] %v2322
  %v2324 = vld [vmem:[%s4 + $0x20] sm:$0x4]
  %v2325 = vsel %vm2181, %v2282, %v2324
  %2326 = vst [vmem:[%s4 + $0x20] sm:$0x4] %v2325
  %v2327 = vld [vmem:[%s4 + $0x28] sm:$0x4]
  %v2328 = vsel %vm2181, %v2289, %v2327
  %2329 = vst [vmem:[%s4 + $0x28] sm:$0x4] %v2328
  %v2330 = vld [vmem:[%s4 + $0x30] sm:$0x4]
  %v2331 = vsel %vm2181, %v2296, %v2330
  %2332 = vst [vmem:[%s4 + $0x30] sm:$0x4] %v2331
  %v2333 = vld [vmem:[%s4 + $0x38] sm:$0x4]
  %v2334 = vsel %vm2181, %v2303, %v2333
  %2335 = vst [vmem:[%s4 + $0x38] sm:$0x4] %v2334
  %s2336 = scalar_lea.vmem %s0, 80
  %v2337 = vld [vmem:[%s2336] sm:$0xff]
  %v2338 = vld [vmem:[%s2336 + $0x8] sm:$0xff]
  %v2339 = vunpack.c.l.bf16 %v2337
  %v2340 = vunpack.c.h.bf16 %v2337
  %v2341 = vunpack.c.l.bf16 %v2338
  %v2342 = vunpack.c.h.bf16 %v2338
  %2343 = vmatprep.subr.mxu0 %v24
  %2344 = vmatpush1.msra.mxu0 %v23
  %2345 = vmatprep.subr.mxu0 %v28
  %2346 = vmatpush1.msra.mxu0 %v27
  %2347 = vmatprep.subr.mxu0 %v32
  %2348 = vmatpush1.msra.mxu0 %v31
  %2349 = vmatprep.subr.mxu0 %v36
  %2350 = vmatpush1.msra.mxu0 %v35
  %2351 = vmatprep.subr.mxu0 %v40
  %2352 = vmatpush1.msra.mxu0 %v39
  %2353 = vmatprep.subr.mxu0 %v44
  %2354 = vmatpush1.msra.mxu0 %v43
  %2355 = vmatprep.subr.mxu0 %v48
  %2356 = vmatpush1.msra.mxu0 %v47
  %2357 = vmatprep.subr.mxu0 %v52
  %2358 = vmatpush1.msra.mxu0 %v51
  %2359 = vmatprep.subr.mxu0 %v56
  %2360 = vmatpush1.msra.mxu0 %v55
  %2361 = vmatprep.subr.mxu0 %v60
  %2362 = vmatpush1.msra.mxu0 %v59
  %2363 = vmatprep.subr.mxu0 %v64
  %2364 = vmatpush1.msra.mxu0 %v63
  %2365 = vmatprep.subr.mxu0 %v68
  %2366 = vmatpush1.msra.mxu0 %v67
  %2367 = vmatprep.subr.mxu0 %v72
  %2368 = vmatpush1.msra.mxu0 %v71
  %2369 = vmatprep.subr.mxu0 %v76
  %2370 = vmatpush1.msra.mxu0 %v75
  %2371 = vmatprep.subr.mxu0 %v80
  %2372 = vmatpush1.msra.mxu0 %v79
  %2373 = vmatprep.subr.mxu0 %v84
  %2374 = vmatpush1.msra.mxu0 %v83
  %2375 = vmatprep.subr.mxu0 0.0
  %2376 = vmatpush1.msra.mxu0 0.0
  %2377 = vmatprep.subr.mxu0 0.0
  %2378 = vmatpush1.msra.mxu0 0.0
  %2379 = vmatprep.subr.mxu0 0.0
  %2380 = vmatpush1.msra.mxu0 0.0
  %2381 = vmatprep.subr.mxu0 0.0
  %2382 = vmatpush1.msra.mxu0 0.0
  %2383 = vmatprep.subr.mxu0 0.0
  %2384 = vmatpush1.msra.mxu0 0.0
  %2385 = vmatprep.subr.mxu0 0.0
  %2386 = vmatpush1.msra.mxu0 0.0
  %2387 = vmatprep.subr.mxu0 0.0
  %2388 = vmatpush1.msra.mxu0 0.0
  %2389 = vmatprep.subr.mxu0 0.0
  %2390 = vmatpush1.msra.mxu0 0.0
  %2391 = vmatprep.subr.mxu0 0.0
  %2392 = vmatpush1.msra.mxu0 0.0
  %2393 = vmatprep.subr.mxu0 0.0
  %2394 = vmatpush1.msra.mxu0 0.0
  %2395 = vmatprep.subr.mxu0 0.0
  %2396 = vmatpush1.msra.mxu0 0.0
  %2397 = vmatprep.subr.mxu0 0.0
  %2398 = vmatpush1.msra.mxu0 0.0
  %2399 = vmatprep.subr.mxu0 0.0
  %2400 = vmatpush1.msra.mxu0 0.0
  %2401 = vmatprep.subr.mxu0 0.0
  %2402 = vmatpush1.msra.mxu0 0.0
  %2403 = vmatprep.subr.mxu0 0.0
  %2404 = vmatpush1.msra.mxu0 0.0
  %2405 = vmatprep.subr.mxu0 0.0
  %2406 = vmatpush1.msra.mxu0 0.0
  %2407 = vmatprep.mubr.f32.mxu0 0.0
  %2408 = vmatmul.mubr.f32.gmra.mrb[0].mxu0 %v2071
  %v2409 = vpop.f32.mrb[0].mxu0
  %v2410 = vadd.f32 0.0, %v2409
  %v2411 = vpop.f32.mrb[0].mxu0
  %v2412 = vadd.f32 0.0, %v2411
  %2413 = vdwg.mxu0
  %2414 = vmatprep.subr.mxu0 %v26
  %2415 = vmatpush1.msra.mxu0 %v25
  %2416 = vmatprep.subr.mxu0 %v30
  %2417 = vmatpush1.msra.mxu0 %v29
  %2418 = vmatprep.subr.mxu0 %v34
  %2419 = vmatpush1.msra.mxu0 %v33
  %2420 = vmatprep.subr.mxu0 %v38
  %2421 = vmatpush1.msra.mxu0 %v37
  %2422 = vmatprep.subr.mxu0 %v42
  %2423 = vmatpush1.msra.mxu0 %v41
  %2424 = vmatprep.subr.mxu0 %v46
  %2425 = vmatpush1.msra.mxu0 %v45
  %2426 = vmatprep.subr.mxu0 %v50
  %2427 = vmatpush1.msra.mxu0 %v49
  %2428 = vmatprep.subr.mxu0 %v54
  %2429 = vmatpush1.msra.mxu0 %v53
  %2430 = vmatprep.subr.mxu0 %v58
  %2431 = vmatpush1.msra.mxu0 %v57
  %2432 = vmatprep.subr.mxu0 %v62
  %2433 = vmatpush1.msra.mxu0 %v61
  %2434 = vmatprep.subr.mxu0 %v66
  %2435 = vmatpush1.msra.mxu0 %v65
  %2436 = vmatprep.subr.mxu0 %v70
  %2437 = vmatpush1.msra.mxu0 %v69
  %2438 = vmatprep.subr.mxu0 %v74
  %2439 = vmatpush1.msra.mxu0 %v73
  %2440 = vmatprep.subr.mxu0 %v78
  %2441 = vmatpush1.msra.mxu0 %v77
  %2442 = vmatprep.subr.mxu0 %v82
  %2443 = vmatpush1.msra.mxu0 %v81
  %2444 = vmatprep.subr.mxu0 %v86
  %2445 = vmatpush1.msra.mxu0 %v85
  %2446 = vmatprep.subr.mxu0 0.0
  %2447 = vmatpush1.msra.mxu0 0.0
  %2448 = vmatprep.subr.mxu0 0.0
  %2449 = vmatpush1.msra.mxu0 0.0
  %2450 = vmatprep.subr.mxu0 0.0
  %2451 = vmatpush1.msra.mxu0 0.0
  %2452 = vmatprep.subr.mxu0 0.0
  %2453 = vmatpush1.msra.mxu0 0.0
  %2454 = vmatprep.subr.mxu0 0.0
  %2455 = vmatpush1.msra.mxu0 0.0
  %2456 = vmatprep.subr.mxu0 0.0
  %2457 = vmatpush1.msra.mxu0 0.0
  %2458 = vmatprep.subr.mxu0 0.0
  %2459 = vmatpush1.msra.mxu0 0.0
  %2460 = vmatprep.subr.mxu0 0.0
  %2461 = vmatpush1.msra.mxu0 0.0
  %2462 = vmatprep.subr.mxu0 0.0
  %2463 = vmatpush1.msra.mxu0 0.0
  %2464 = vmatprep.subr.mxu0 0.0
  %2465 = vmatpush1.msra.mxu0 0.0
  %2466 = vmatprep.subr.mxu0 0.0
  %2467 = vmatpush1.msra.mxu0 0.0
  %2468 = vmatprep.subr.mxu0 0.0
  %2469 = vmatpush1.msra.mxu0 0.0
  %2470 = vmatprep.subr.mxu0 0.0
  %2471 = vmatpush1.msra.mxu0 0.0
  %2472 = vmatprep.subr.mxu0 0.0
  %2473 = vmatpush1.msra.mxu0 0.0
  %2474 = vmatprep.subr.mxu0 0.0
  %2475 = vmatpush1.msra.mxu0 0.0
  %2476 = vmatprep.subr.mxu0 0.0
  %2477 = vmatpush1.msra.mxu0 0.0
  %2478 = vmatprep.mubr.f32.mxu0 0.0
  %2479 = vmatmul.mubr.f32.gmra.mrb[0].mxu0 %v2071
  %v2480 = vpop.f32.mrb[0].mxu0
  %v2481 = vadd.f32 0.0, %v2480
  %v2482 = vpop.f32.mrb[0].mxu0
  %v2483 = vadd.f32 0.0, %v2482
  %2484 = vdwg.mxu0
  %v2485 = vadd.f32 %v2339, %v2410
  %v2486 = vadd.f32 %v2340, %v2412
  %v2487 = vadd.f32 %v2341, %v2481
  %v2488 = vadd.f32 %v2342, %v2483
  %v2489 = vxor.u32 %v2485, 2147483648
  %v2490 = vmul.f32 %v2489, 1.442695
  %v2491 = vpow.pop %v2490
  %v2492 = vadd.f32 %v2491, 1.0
  %v2493 = vrcp.pop %v2492
  %v2494 = vmul.f32 1.0, %v2493
  %v2495 = vxor.u32 %v2486, 2147483648
  %v2496 = vmul.f32 %v2495, 1.442695
  %v2497 = vpow.pop %v2496
  %v2498 = vadd.f32 %v2497, 1.0
  %v2499 = vrcp.pop %v2498
  %v2500 = vmul.f32 1.0, %v2499
  %v2501 = vtanh.pop %v2487
  %v2502 = vxor.u32 %v2488, 2147483648
  %v2503 = vmul.f32 %v2502, 1.442695
  %v2504 = vpow.pop %v2503
  %v2505 = vadd.f32 %v2504, 1.0
  %v2506 = vrcp.pop %v2505
  %v2507 = vmul.f32 1.0, %v2506
  %v2508 = vmul.f32 %v2500, %v2072
  %v2509 = vmul.f32 %v2494, %v2501
  %v2510 = vadd.f32 %v2508, %v2509
  %v2511 = vtanh.pop %v2510
  %v2512 = vmul.f32 %v2507, %v2511
  %s2513 = sadd.s32 %s89, 5
  %v2514 = vstv %s2513
  %vm2515 = vcmp.lt.s32.totalorder %v2514, %v22
  %v2516 = vsel %vm2515, 1, 0
  %2517 = vset.pattern.permute.xlu0 0
  %2518 = vperm.xlu0 %2517, %v2516
  %v2519 = vpop.permute.xlu0 %2518
  %vm2520 = vcmp.eq.s32.totalorder %v2519, 1
  %v2521 = vsel %vm2520, %v2512, %v2071
  %v2522 = vsel %vm2520, %v2510, %v2072
  %v2523 = vpack.c.bf16 %v2521, %v2521
  %v2526 = vunpack.c.l.s4 1966171168
  %v2527 = vunpack.c.0.s8 %v2526
  %v2528 = vlaneseq
  %v2529 = vshrl.u32 %v2528, 7
  %v2530 = vsub.s32 %v2527, %v2529
  %v2531 = vrot.slane %v2523, %v2530
  %v2532 = vcombine.high %v2531, %v2531
  %v2534 = vunpack.c.l.s4 1966171168
  %v2535 = vunpack.c.0.s8 %v2534
  %v2536 = vlaneseq
  %v2537 = vshrl.u32 %v2536, 7
  %v2538 = vsub.s32 %v2535, %v2537
  %v2539 = vrot.slane %v2531, %v2538
  %v2541 = vunpack.c.l.s4 1966171168
  %v2542 = vunpack.c.0.s8 %v2541
  %v2543 = vlaneseq
  %v2544 = vshrl.u32 %v2543, 7
  %v2545 = vsub.s32 %v2542, %v2544
  %v2546 = vrot.slane %v2532, %v2545
  %v2547 = vcombine.high %v2539, %v2539
  %v2548 = vcombine.high %v2546, %v2546
  %v2549 = vunpack.i.l.s16 %v2539
  %v2550 = vunpack.i.h.s16 %v2539
  %v2551 = vunpack.i.l.s16 %v2546
  %v2552 = vunpack.i.h.s16 %v2546
  %v2553 = vunpack.i.l.s16 %v2547
  %v2554 = vunpack.i.h.s16 %v2547
  %v2555 = vunpack.i.l.s16 %v2548
  %v2556 = vunpack.i.h.s16 %v2548
  %v2557 = vpack.i.b16 %v2549, %v2549
  %v2558 = vpack.i.b16 %v2550, %v2550
  %v2559 = vpack.i.b16 %v2551, %v2551
  %v2560 = vpack.i.b16 %v2552, %v2552
  %v2561 = vpack.i.b16 %v2553, %v2553
  %v2562 = vpack.i.b16 %v2554, %v2554
  %v2563 = vpack.i.b16 %v2555, %v2555
  %v2564 = vpack.i.b16 %v2556, %v2556
  %v2566 = vunpack.c.l.s4 286326784
  %v2567 = vunpack.c.0.s8 %v2566
  %v2568 = vlaneseq
  %v2569 = vshrl.u32 %v2568, 7
  %v2570 = vsub.s32 %v2567, %v2569
  %v2571 = vrot.slane %v2557, %v2570
  %v2573 = vunpack.c.l.s4 286326784
  %v2574 = vunpack.c.0.s8 %v2573
  %v2575 = vlaneseq
  %v2576 = vshrl.u32 %v2575, 7
  %v2577 = vsub.s32 %v2574, %v2576
  %v2578 = vrot.slane %v2558, %v2577
  %v2580 = vunpack.c.l.s4 286326784
  %v2581 = vunpack.c.0.s8 %v2580
  %v2582 = vlaneseq
  %v2583 = vshrl.u32 %v2582, 7
  %v2584 = vsub.s32 %v2581, %v2583
  %v2585 = vrot.slane %v2559, %v2584
  %v2587 = vunpack.c.l.s4 286326784
  %v2588 = vunpack.c.0.s8 %v2587
  %v2589 = vlaneseq
  %v2590 = vshrl.u32 %v2589, 7
  %v2591 = vsub.s32 %v2588, %v2590
  %v2592 = vrot.slane %v2560, %v2591
  %v2594 = vunpack.c.l.s4 286326784
  %v2595 = vunpack.c.0.s8 %v2594
  %v2596 = vlaneseq
  %v2597 = vshrl.u32 %v2596, 7
  %v2598 = vsub.s32 %v2595, %v2597
  %v2599 = vrot.slane %v2561, %v2598
  %v2601 = vunpack.c.l.s4 286326784
  %v2602 = vunpack.c.0.s8 %v2601
  %v2603 = vlaneseq
  %v2604 = vshrl.u32 %v2603, 7
  %v2605 = vsub.s32 %v2602, %v2604
  %v2606 = vrot.slane %v2562, %v2605
  %v2608 = vunpack.c.l.s4 286326784
  %v2609 = vunpack.c.0.s8 %v2608
  %v2610 = vlaneseq
  %v2611 = vshrl.u32 %v2610, 7
  %v2612 = vsub.s32 %v2609, %v2611
  %v2613 = vrot.slane %v2563, %v2612
  %v2615 = vunpack.c.l.s4 286326784
  %v2616 = vunpack.c.0.s8 %v2615
  %v2617 = vlaneseq
  %v2618 = vshrl.u32 %v2617, 7
  %v2619 = vsub.s32 %v2616, %v2618
  %v2620 = vrot.slane %v2564, %v2619
  %vm2629 = vsmask.f32 7946
  %vm2630 = vmand %vm2179, %vm2629
  %v2631 = vld [vmem:[%s3] sm:$0x4]
  %v2632 = vsel %vm2630, %v2571, %v2631
  %2633 = vst [vmem:[%s3] sm:$0x4] %v2632
  %v2634 = vld [vmem:[%s3 + $0x8] sm:$0x4]
  %v2635 = vsel %vm2630, %v2578, %v2634
  %2636 = vst [vmem:[%s3 + $0x8] sm:$0x4] %v2635
  %v2637 = vld [vmem:[%s3 + $0x10] sm:$0x4]
  %v2638 = vsel %vm2630, %v2585, %v2637
  %2639 = vst [vmem:[%s3 + $0x10] sm:$0x4] %v2638
  %v2640 = vld [vmem:[%s3 + $0x18] sm:$0x4]
  %v2641 = vsel %vm2630, %v2592, %v2640
  %2642 = vst [vmem:[%s3 + $0x18] sm:$0x4] %v2641
  %v2643 = vld [vmem:[%s3 + $0x20] sm:$0x4]
  %v2644 = vsel %vm2630, %v2599, %v2643
  %2645 = vst [vmem:[%s3 + $0x20] sm:$0x4] %v2644
  %v2646 = vld [vmem:[%s3 + $0x28] sm:$0x4]
  %v2647 = vsel %vm2630, %v2606, %v2646
  %2648 = vst [vmem:[%s3 + $0x28] sm:$0x4] %v2647
  %v2649 = vld [vmem:[%s3 + $0x30] sm:$0x4]
  %v2650 = vsel %vm2630, %v2613, %v2649
  %2651 = vst [vmem:[%s3 + $0x30] sm:$0x4] %v2650
  %v2652 = vld [vmem:[%s3 + $0x38] sm:$0x4]
  %v2653 = vsel %vm2630, %v2620, %v2652
  %2654 = vst [vmem:[%s3 + $0x38] sm:$0x4] %v2653
  %v2655 = vpack.c.bf16 %v2522, %v2522
  %v2658 = vunpack.c.l.s4 1966171168
  %v2659 = vunpack.c.0.s8 %v2658
  %v2660 = vlaneseq
  %v2661 = vshrl.u32 %v2660, 7
  %v2662 = vsub.s32 %v2659, %v2661
  %v2663 = vrot.slane %v2655, %v2662
  %v2664 = vcombine.high %v2663, %v2663
  %v2666 = vunpack.c.l.s4 1966171168
  %v2667 = vunpack.c.0.s8 %v2666
  %v2668 = vlaneseq
  %v2669 = vshrl.u32 %v2668, 7
  %v2670 = vsub.s32 %v2667, %v2669
  %v2671 = vrot.slane %v2663, %v2670
  %v2673 = vunpack.c.l.s4 1966171168
  %v2674 = vunpack.c.0.s8 %v2673
  %v2675 = vlaneseq
  %v2676 = vshrl.u32 %v2675, 7
  %v2677 = vsub.s32 %v2674, %v2676
  %v2678 = vrot.slane %v2664, %v2677
  %v2679 = vcombine.high %v2671, %v2671
  %v2680 = vcombine.high %v2678, %v2678
  %v2681 = vunpack.i.l.s16 %v2671
  %v2682 = vunpack.i.h.s16 %v2671
  %v2683 = vunpack.i.l.s16 %v2678
  %v2684 = vunpack.i.h.s16 %v2678
  %v2685 = vunpack.i.l.s16 %v2679
  %v2686 = vunpack.i.h.s16 %v2679
  %v2687 = vunpack.i.l.s16 %v2680
  %v2688 = vunpack.i.h.s16 %v2680
  %v2689 = vpack.i.b16 %v2681, %v2681
  %v2690 = vpack.i.b16 %v2682, %v2682
  %v2691 = vpack.i.b16 %v2683, %v2683
  %v2692 = vpack.i.b16 %v2684, %v2684
  %v2693 = vpack.i.b16 %v2685, %v2685
  %v2694 = vpack.i.b16 %v2686, %v2686
  %v2695 = vpack.i.b16 %v2687, %v2687
  %v2696 = vpack.i.b16 %v2688, %v2688
  %v2698 = vunpack.c.l.s4 286326784
  %v2699 = vunpack.c.0.s8 %v2698
  %v2700 = vlaneseq
  %v2701 = vshrl.u32 %v2700, 7
  %v2702 = vsub.s32 %v2699, %v2701
  %v2703 = vrot.slane %v2689, %v2702
  %v2705 = vunpack.c.l.s4 286326784
  %v2706 = vunpack.c.0.s8 %v2705
  %v2707 = vlaneseq
  %v2708 = vshrl.u32 %v2707, 7
  %v2709 = vsub.s32 %v2706, %v2708
  %v2710 = vrot.slane %v2690, %v2709
  %v2712 = vunpack.c.l.s4 286326784
  %v2713 = vunpack.c.0.s8 %v2712
  %v2714 = vlaneseq
  %v2715 = vshrl.u32 %v2714, 7
  %v2716 = vsub.s32 %v2713, %v2715
  %v2717 = vrot.slane %v2691, %v2716
  %v2719 = vunpack.c.l.s4 286326784
  %v2720 = vunpack.c.0.s8 %v2719
  %v2721 = vlaneseq
  %v2722 = vshrl.u32 %v2721, 7
  %v2723 = vsub.s32 %v2720, %v2722
  %v2724 = vrot.slane %v2692, %v2723
  %v2726 = vunpack.c.l.s4 286326784
  %v2727 = vunpack.c.0.s8 %v2726
  %v2728 = vlaneseq
  %v2729 = vshrl.u32 %v2728, 7
  %v2730 = vsub.s32 %v2727, %v2729
  %v2731 = vrot.slane %v2693, %v2730
  %v2733 = vunpack.c.l.s4 286326784
  %v2734 = vunpack.c.0.s8 %v2733
  %v2735 = vlaneseq
  %v2736 = vshrl.u32 %v2735, 7
  %v2737 = vsub.s32 %v2734, %v2736
  %v2738 = vrot.slane %v2694, %v2737
  %v2740 = vunpack.c.l.s4 286326784
  %v2741 = vunpack.c.0.s8 %v2740
  %v2742 = vlaneseq
  %v2743 = vshrl.u32 %v2742, 7
  %v2744 = vsub.s32 %v2741, %v2743
  %v2745 = vrot.slane %v2695, %v2744
  %v2747 = vunpack.c.l.s4 286326784
  %v2748 = vunpack.c.0.s8 %v2747
  %v2749 = vlaneseq
  %v2750 = vshrl.u32 %v2749, 7
  %v2751 = vsub.s32 %v2748, %v2750
  %v2752 = vrot.slane %v2696, %v2751
  %v2761 = vld [vmem:[%s4] sm:$0x4]
  %v2762 = vsel %vm2630, %v2703, %v2761
  %2763 = vst [vmem:[%s4] sm:$0x4] %v2762
  %v2764 = vld [vmem:[%s4 + $0x8] sm:$0x4]
  %v2765 = vsel %vm2630, %v2710, %v2764
  %2766 = vst [vmem:[%s4 + $0x8] sm:$0x4] %v2765
  %v2767 = vld [vmem:[%s4 + $0x10] sm:$0x4]
  %v2768 = vsel %vm2630, %v2717, %v2767
  %2769 = vst [vmem:[%s4 + $0x10] sm:$0x4] %v2768
  %v2770 = vld [vmem:[%s4 + $0x18] sm:$0x4]
  %v2771 = vsel %vm2630, %v2724, %v2770
  %2772 = vst [vmem:[%s4 + $0x18] sm:$0x4] %v2771
  %v2773 = vld [vmem:[%s4 + $0x20] sm:$0x4]
  %v2774 = vsel %vm2630, %v2731, %v2773
  %2775 = vst [vmem:[%s4 + $0x20] sm:$0x4] %v2774
  %v2776 = vld [vmem:[%s4 + $0x28] sm:$0x4]
  %v2777 = vsel %vm2630, %v2738, %v2776
  %2778 = vst [vmem:[%s4 + $0x28] sm:$0x4] %v2777
  %v2779 = vld [vmem:[%s4 + $0x30] sm:$0x4]
  %v2780 = vsel %vm2630, %v2745, %v2779
  %2781 = vst [vmem:[%s4 + $0x30] sm:$0x4] %v2780
  %v2782 = vld [vmem:[%s4 + $0x38] sm:$0x4]
  %v2783 = vsel %vm2630, %v2752, %v2782
  %2784 = vst [vmem:[%s4 + $0x38] sm:$0x4] %v2783
  %s2785 = scalar_lea.vmem %s0, 96
  %v2786 = vld [vmem:[%s2785] sm:$0xff]
  %v2787 = vld [vmem:[%s2785 + $0x8] sm:$0xff]
  %v2788 = vunpack.c.l.bf16 %v2786
  %v2789 = vunpack.c.h.bf16 %v2786
  %v2790 = vunpack.c.l.bf16 %v2787
  %v2791 = vunpack.c.h.bf16 %v2787
  %2792 = vmatprep.subr.mxu0 %v24
  %2793 = vmatpush1.msra.mxu0 %v23
  %2794 = vmatprep.subr.mxu0 %v28
  %2795 = vmatpush1.msra.mxu0 %v27
  %2796 = vmatprep.subr.mxu0 %v32
  %2797 = vmatpush1.msra.mxu0 %v31
  %2798 = vmatprep.subr.mxu0 %v36
  %2799 = vmatpush1.msra.mxu0 %v35
  %2800 = vmatprep.subr.mxu0 %v40
  %2801 = vmatpush1.msra.mxu0 %v39
  %2802 = vmatprep.subr.mxu0 %v44
  %2803 = vmatpush1.msra.mxu0 %v43
  %2804 = vmatprep.subr.mxu0 %v48
  %2805 = vmatpush1.msra.mxu0 %v47
  %2806 = vmatprep.subr.mxu0 %v52
  %2807 = vmatpush1.msra.mxu0 %v51
  %2808 = vmatprep.subr.mxu0 %v56
  %2809 = vmatpush1.msra.mxu0 %v55
  %2810 = vmatprep.subr.mxu0 %v60
  %2811 = vmatpush1.msra.mxu0 %v59
  %2812 = vmatprep.subr.mxu0 %v64
  %2813 = vmatpush1.msra.mxu0 %v63
  %2814 = vmatprep.subr.mxu0 %v68
  %2815 = vmatpush1.msra.mxu0 %v67
  %2816 = vmatprep.subr.mxu0 %v72
  %2817 = vmatpush1.msra.mxu0 %v71
  %2818 = vmatprep.subr.mxu0 %v76
  %2819 = vmatpush1.msra.mxu0 %v75
  %2820 = vmatprep.subr.mxu0 %v80
  %2821 = vmatpush1.msra.mxu0 %v79
  %2822 = vmatprep.subr.mxu0 %v84
  %2823 = vmatpush1.msra.mxu0 %v83
  %2824 = vmatprep.subr.mxu0 0.0
  %2825 = vmatpush1.msra.mxu0 0.0
  %2826 = vmatprep.subr.mxu0 0.0
  %2827 = vmatpush1.msra.mxu0 0.0
  %2828 = vmatprep.subr.mxu0 0.0
  %2829 = vmatpush1.msra.mxu0 0.0
  %2830 = vmatprep.subr.mxu0 0.0
  %2831 = vmatpush1.msra.mxu0 0.0
  %2832 = vmatprep.subr.mxu0 0.0
  %2833 = vmatpush1.msra.mxu0 0.0
  %2834 = vmatprep.subr.mxu0 0.0
  %2835 = vmatpush1.msra.mxu0 0.0
  %2836 = vmatprep.subr.mxu0 0.0
  %2837 = vmatpush1.msra.mxu0 0.0
  %2838 = vmatprep.subr.mxu0 0.0
  %2839 = vmatpush1.msra.mxu0 0.0
  %2840 = vmatprep.subr.mxu0 0.0
  %2841 = vmatpush1.msra.mxu0 0.0
  %2842 = vmatprep.subr.mxu0 0.0
  %2843 = vmatpush1.msra.mxu0 0.0
  %2844 = vmatprep.subr.mxu0 0.0
  %2845 = vmatpush1.msra.mxu0 0.0
  %2846 = vmatprep.subr.mxu0 0.0
  %2847 = vmatpush1.msra.mxu0 0.0
  %2848 = vmatprep.subr.mxu0 0.0
  %2849 = vmatpush1.msra.mxu0 0.0
  %2850 = vmatprep.subr.mxu0 0.0
  %2851 = vmatpush1.msra.mxu0 0.0
  %2852 = vmatprep.subr.mxu0 0.0
  %2853 = vmatpush1.msra.mxu0 0.0
  %2854 = vmatprep.subr.mxu0 0.0
  %2855 = vmatpush1.msra.mxu0 0.0
  %2856 = vmatprep.mubr.f32.mxu0 0.0
  %2857 = vmatmul.mubr.f32.gmra.mrb[0].mxu0 %v2521
  %v2858 = vpop.f32.mrb[0].mxu0
  %v2859 = vadd.f32 0.0, %v2858
  %v2860 = vpop.f32.mrb[0].mxu0
  %v2861 = vadd.f32 0.0, %v2860
  %2862 = vdwg.mxu0
  %2863 = vmatprep.subr.mxu0 %v26
  %2864 = vmatpush1.msra.mxu0 %v25
  %2865 = vmatprep.subr.mxu0 %v30
  %2866 = vmatpush1.msra.mxu0 %v29
  %2867 = vmatprep.subr.mxu0 %v34
  %2868 = vmatpush1.msra.mxu0 %v33
  %2869 = vmatprep.subr.mxu0 %v38
  %2870 = vmatpush1.msra.mxu0 %v37
  %2871 = vmatprep.subr.mxu0 %v42
  %2872 = vmatpush1.msra.mxu0 %v41
  %2873 = vmatprep.subr.mxu0 %v46
  %2874 = vmatpush1.msra.mxu0 %v45
  %2875 = vmatprep.subr.mxu0 %v50
  %2876 = vmatpush1.msra.mxu0 %v49
  %2877 = vmatprep.subr.mxu0 %v54
  %2878 = vmatpush1.msra.mxu0 %v53
  %2879 = vmatprep.subr.mxu0 %v58
  %2880 = vmatpush1.msra.mxu0 %v57
  %2881 = vmatprep.subr.mxu0 %v62
  %2882 = vmatpush1.msra.mxu0 %v61
  %2883 = vmatprep.subr.mxu0 %v66
  %2884 = vmatpush1.msra.mxu0 %v65
  %2885 = vmatprep.subr.mxu0 %v70
  %2886 = vmatpush1.msra.mxu0 %v69
  %2887 = vmatprep.subr.mxu0 %v74
  %2888 = vmatpush1.msra.mxu0 %v73
  %2889 = vmatprep.subr.mxu0 %v78
  %2890 = vmatpush1.msra.mxu0 %v77
  %2891 = vmatprep.subr.mxu0 %v82
  %2892 = vmatpush1.msra.mxu0 %v81
  %2893 = vmatprep.subr.mxu0 %v86
  %2894 = vmatpush1.msra.mxu0 %v85
  %2895 = vmatprep.subr.mxu0 0.0
  %2896 = vmatpush1.msra.mxu0 0.0
  %2897 = vmatprep.subr.mxu0 0.0
  %2898 = vmatpush1.msra.mxu0 0.0
  %2899 = vmatprep.subr.mxu0 0.0
  %2900 = vmatpush1.msra.mxu0 0.0
  %2901 = vmatprep.subr.mxu0 0.0
  %2902 = vmatpush1.msra.mxu0 0.0
  %2903 = vmatprep.subr.mxu0 0.0
  %2904 = vmatpush1.msra.mxu0 0.0
  %2905 = vmatprep.subr.mxu0 0.0
  %2906 = vmatpush1.msra.mxu0 0.0
  %2907 = vmatprep.subr.mxu0 0.0
  %2908 = vmatpush1.msra.mxu0 0.0
  %2909 = vmatprep.subr.mxu0 0.0
  %2910 = vmatpush1.msra.mxu0 0.0
  %2911 = vmatprep.subr.mxu0 0.0
  %2912 = vmatpush1.msra.mxu0 0.0
  %2913 = vmatprep.subr.mxu0 0.0
  %2914 = vmatpush1.msra.mxu0 0.0
  %2915 = vmatprep.subr.mxu0 0.0
  %2916 = vmatpush1.msra.mxu0 0.0
  %2917 = vmatprep.subr.mxu0 0.0
  %2918 = vmatpush1.msra.mxu0 0.0
  %2919 = vmatprep.subr.mxu0 0.0
  %2920 = vmatpush1.msra.mxu0 0.0
  %2921 = vmatprep.subr.mxu0 0.0
  %2922 = vmatpush1.msra.mxu0 0.0
  %2923 = vmatprep.subr.mxu0 0.0
  %2924 = vmatpush1.msra.mxu0 0.0
  %2925 = vmatprep.subr.mxu0 0.0
  %2926 = vmatpush1.msra.mxu0 0.0
  %2927 = vmatprep.mubr.f32.mxu0 0.0
  %2928 = vmatmul.mubr.f32.gmra.mrb[0].mxu0 %v2521
  %v2929 = vpop.f32.mrb[0].mxu0
  %v2930 = vadd.f32 0.0, %v2929
  %v2931 = vpop.f32.mrb[0].mxu0
  %v2932 = vadd.f32 0.0, %v2931
  %2933 = vdwg.mxu0
  %v2934 = vadd.f32 %v2788, %v2859
  %v2935 = vadd.f32 %v2789, %v2861
  %v2936 = vadd.f32 %v2790, %v2930
  %v2937 = vadd.f32 %v2791, %v2932
  %v2938 = vxor.u32 %v2934, 2147483648
  %v2939 = vmul.f32 %v2938, 1.442695
  %v2940 = vpow.pop %v2939
  %v2941 = vadd.f32 %v2940, 1.0
  %v2942 = vrcp.pop %v2941
  %v2943 = vmul.f32 1.0, %v2942
  %v2944 = vxor.u32 %v2935, 2147483648
  %v2945 = vmul.f32 %v2944, 1.442695
  %v2946 = vpow.pop %v2945
  %v2947 = vadd.f32 %v2946, 1.0
  %v2948 = vrcp.pop %v2947
  %v2949 = vmul.f32 1.0, %v2948
  %v2950 = vtanh.pop %v2936
  %v2951 = vxor.u32 %v2937, 2147483648
  %v2952 = vmul.f32 %v2951, 1.442695
  %v2953 = vpow.pop %v2952
  %v2954 = vadd.f32 %v2953, 1.0
  %v2955 = vrcp.pop %v2954
  %v2956 = vmul.f32 1.0, %v2955
  %v2957 = vmul.f32 %v2949, %v2522
  %v2958 = vmul.f32 %v2943, %v2950
  %v2959 = vadd.f32 %v2957, %v2958
  %v2960 = vtanh.pop %v2959
  %v2961 = vmul.f32 %v2956, %v2960
  %s2962 = sadd.s32 %s89, 6
  %v2963 = vstv %s2962
  %vm2964 = vcmp.lt.s32.totalorder %v2963, %v22
  %v2965 = vsel %vm2964, 1, 0
  %2966 = vset.pattern.permute.xlu0 0
  %2967 = vperm.xlu0 %2966, %v2965
  %v2968 = vpop.permute.xlu0 %2967
  %vm2969 = vcmp.eq.s32.totalorder %v2968, 1
  %v2970 = vsel %vm2969, %v2961, %v2521
  %v2971 = vsel %vm2969, %v2959, %v2522
  %v2972 = vpack.c.bf16 %v2970, %v2970
  %v2975 = vunpack.c.l.s4 1966171168
  %v2976 = vunpack.c.0.s8 %v2975
  %v2977 = vlaneseq
  %v2978 = vshrl.u32 %v2977, 7
  %v2979 = vsub.s32 %v2976, %v2978
  %v2980 = vrot.slane %v2972, %v2979
  %v2981 = vcombine.high %v2980, %v2980
  %v2983 = vunpack.c.l.s4 1966171168
  %v2984 = vunpack.c.0.s8 %v2983
  %v2985 = vlaneseq
  %v2986 = vshrl.u32 %v2985, 7
  %v2987 = vsub.s32 %v2984, %v2986
  %v2988 = vrot.slane %v2980, %v2987
  %v2990 = vunpack.c.l.s4 1966171168
  %v2991 = vunpack.c.0.s8 %v2990
  %v2992 = vlaneseq
  %v2993 = vshrl.u32 %v2992, 7
  %v2994 = vsub.s32 %v2991, %v2993
  %v2995 = vrot.slane %v2981, %v2994
  %v2996 = vcombine.high %v2988, %v2988
  %v2997 = vcombine.high %v2995, %v2995
  %v2998 = vunpack.i.l.s16 %v2988
  %v2999 = vunpack.i.h.s16 %v2988
  %v3000 = vunpack.i.l.s16 %v2995
  %v3001 = vunpack.i.h.s16 %v2995
  %v3002 = vunpack.i.l.s16 %v2996
  %v3003 = vunpack.i.h.s16 %v2996
  %v3004 = vunpack.i.l.s16 %v2997
  %v3005 = vunpack.i.h.s16 %v2997
  %v3006 = vpack.i.b16 %v2998, %v2998
  %v3007 = vpack.i.b16 %v2999, %v2999
  %v3008 = vpack.i.b16 %v3000, %v3000
  %v3009 = vpack.i.b16 %v3001, %v3001
  %v3010 = vpack.i.b16 %v3002, %v3002
  %v3011 = vpack.i.b16 %v3003, %v3003
  %v3012 = vpack.i.b16 %v3004, %v3004
  %v3013 = vpack.i.b16 %v3005, %v3005
  %v3015 = vunpack.c.l.s4 286326784
  %v3016 = vunpack.c.0.s8 %v3015
  %v3017 = vlaneseq
  %v3018 = vshrl.u32 %v3017, 7
  %v3019 = vsub.s32 %v3016, %v3018
  %v3020 = vrot.slane %v3006, %v3019
  %v3022 = vunpack.c.l.s4 286326784
  %v3023 = vunpack.c.0.s8 %v3022
  %v3024 = vlaneseq
  %v3025 = vshrl.u32 %v3024, 7
  %v3026 = vsub.s32 %v3023, %v3025
  %v3027 = vrot.slane %v3007, %v3026
  %v3029 = vunpack.c.l.s4 286326784
  %v3030 = vunpack.c.0.s8 %v3029
  %v3031 = vlaneseq
  %v3032 = vshrl.u32 %v3031, 7
  %v3033 = vsub.s32 %v3030, %v3032
  %v3034 = vrot.slane %v3008, %v3033
  %v3036 = vunpack.c.l.s4 286326784
  %v3037 = vunpack.c.0.s8 %v3036
  %v3038 = vlaneseq
  %v3039 = vshrl.u32 %v3038, 7
  %v3040 = vsub.s32 %v3037, %v3039
  %v3041 = vrot.slane %v3009, %v3040
  %v3043 = vunpack.c.l.s4 286326784
  %v3044 = vunpack.c.0.s8 %v3043
  %v3045 = vlaneseq
  %v3046 = vshrl.u32 %v3045, 7
  %v3047 = vsub.s32 %v3044, %v3046
  %v3048 = vrot.slane %v3010, %v3047
  %v3050 = vunpack.c.l.s4 286326784
  %v3051 = vunpack.c.0.s8 %v3050
  %v3052 = vlaneseq
  %v3053 = vshrl.u32 %v3052, 7
  %v3054 = vsub.s32 %v3051, %v3053
  %v3055 = vrot.slane %v3011, %v3054
  %v3057 = vunpack.c.l.s4 286326784
  %v3058 = vunpack.c.0.s8 %v3057
  %v3059 = vlaneseq
  %v3060 = vshrl.u32 %v3059, 7
  %v3061 = vsub.s32 %v3058, %v3060
  %v3062 = vrot.slane %v3012, %v3061
  %v3064 = vunpack.c.l.s4 286326784
  %v3065 = vunpack.c.0.s8 %v3064
  %v3066 = vlaneseq
  %v3067 = vshrl.u32 %v3066, 7
  %v3068 = vsub.s32 %v3065, %v3067
  %v3069 = vrot.slane %v3013, %v3068
  %vm3078 = vcmask 1043459
  %vm3079 = vsmask.f32 3328
  %vm3080 = vmand %vm3078, %vm3079
  %v3081 = vld [vmem:[%s3] sm:$0x8]
  %v3082 = vsel %vm3080, %v3020, %v3081
  %3083 = vst [vmem:[%s3] sm:$0x8] %v3082
  %v3084 = vld [vmem:[%s3 + $0x8] sm:$0x8]
  %v3085 = vsel %vm3080, %v3027, %v3084
  %3086 = vst [vmem:[%s3 + $0x8] sm:$0x8] %v3085
  %v3087 = vld [vmem:[%s3 + $0x10] sm:$0x8]
  %v3088 = vsel %vm3080, %v3034, %v3087
  %3089 = vst [vmem:[%s3 + $0x10] sm:$0x8] %v3088
  %v3090 = vld [vmem:[%s3 + $0x18] sm:$0x8]
  %v3091 = vsel %vm3080, %v3041, %v3090
  %3092 = vst [vmem:[%s3 + $0x18] sm:$0x8] %v3091
  %v3093 = vld [vmem:[%s3 + $0x20] sm:$0x8]
  %v3094 = vsel %vm3080, %v3048, %v3093
  %3095 = vst [vmem:[%s3 + $0x20] sm:$0x8] %v3094
  %v3096 = vld [vmem:[%s3 + $0x28] sm:$0x8]
  %v3097 = vsel %vm3080, %v3055, %v3096
  %3098 = vst [vmem:[%s3 + $0x28] sm:$0x8] %v3097
  %v3099 = vld [vmem:[%s3 + $0x30] sm:$0x8]
  %v3100 = vsel %vm3080, %v3062, %v3099
  %3101 = vst [vmem:[%s3 + $0x30] sm:$0x8] %v3100
  %v3102 = vld [vmem:[%s3 + $0x38] sm:$0x8]
  %v3103 = vsel %vm3080, %v3069, %v3102
  %3104 = vst [vmem:[%s3 + $0x38] sm:$0x8] %v3103
  %v3105 = vpack.c.bf16 %v2971, %v2971
  %v3108 = vunpack.c.l.s4 1966171168
  %v3109 = vunpack.c.0.s8 %v3108
  %v3110 = vlaneseq
  %v3111 = vshrl.u32 %v3110, 7
  %v3112 = vsub.s32 %v3109, %v3111
  %v3113 = vrot.slane %v3105, %v3112
  %v3114 = vcombine.high %v3113, %v3113
  %v3116 = vunpack.c.l.s4 1966171168
  %v3117 = vunpack.c.0.s8 %v3116
  %v3118 = vlaneseq
  %v3119 = vshrl.u32 %v3118, 7
  %v3120 = vsub.s32 %v3117, %v3119
  %v3121 = vrot.slane %v3113, %v3120
  %v3123 = vunpack.c.l.s4 1966171168
  %v3124 = vunpack.c.0.s8 %v3123
  %v3125 = vlaneseq
  %v3126 = vshrl.u32 %v3125, 7
  %v3127 = vsub.s32 %v3124, %v3126
  %v3128 = vrot.slane %v3114, %v3127
  %v3129 = vcombine.high %v3121, %v3121
  %v3130 = vcombine.high %v3128, %v3128
  %v3131 = vunpack.i.l.s16 %v3121
  %v3132 = vunpack.i.h.s16 %v3121
  %v3133 = vunpack.i.l.s16 %v3128
  %v3134 = vunpack.i.h.s16 %v3128
  %v3135 = vunpack.i.l.s16 %v3129
  %v3136 = vunpack.i.h.s16 %v3129
  %v3137 = vunpack.i.l.s16 %v3130
  %v3138 = vunpack.i.h.s16 %v3130
  %v3139 = vpack.i.b16 %v3131, %v3131
  %v3140 = vpack.i.b16 %v3132, %v3132
  %v3141 = vpack.i.b16 %v3133, %v3133
  %v3142 = vpack.i.b16 %v3134, %v3134
  %v3143 = vpack.i.b16 %v3135, %v3135
  %v3144 = vpack.i.b16 %v3136, %v3136
  %v3145 = vpack.i.b16 %v3137, %v3137
  %v3146 = vpack.i.b16 %v3138, %v3138
  %v3148 = vunpack.c.l.s4 286326784
  %v3149 = vunpack.c.0.s8 %v3148
  %v3150 = vlaneseq
  %v3151 = vshrl.u32 %v3150, 7
  %v3152 = vsub.s32 %v3149, %v3151
  %v3153 = vrot.slane %v3139, %v3152
  %v3155 = vunpack.c.l.s4 286326784
  %v3156 = vunpack.c.0.s8 %v3155
  %v3157 = vlaneseq
  %v3158 = vshrl.u32 %v3157, 7
  %v3159 = vsub.s32 %v3156, %v3158
  %v3160 = vrot.slane %v3140, %v3159
  %v3162 = vunpack.c.l.s4 286326784
  %v3163 = vunpack.c.0.s8 %v3162
  %v3164 = vlaneseq
  %v3165 = vshrl.u32 %v3164, 7
  %v3166 = vsub.s32 %v3163, %v3165
  %v3167 = vrot.slane %v3141, %v3166
  %v3169 = vunpack.c.l.s4 286326784
  %v3170 = vunpack.c.0.s8 %v3169
  %v3171 = vlaneseq
  %v3172 = vshrl.u32 %v3171, 7
  %v3173 = vsub.s32 %v3170, %v3172
  %v3174 = vrot.slane %v3142, %v3173
  %v3176 = vunpack.c.l.s4 286326784
  %v3177 = vunpack.c.0.s8 %v3176
  %v3178 = vlaneseq
  %v3179 = vshrl.u32 %v3178, 7
  %v3180 = vsub.s32 %v3177, %v3179
  %v3181 = vrot.slane %v3143, %v3180
  %v3183 = vunpack.c.l.s4 286326784
  %v3184 = vunpack.c.0.s8 %v3183
  %v3185 = vlaneseq
  %v3186 = vshrl.u32 %v3185, 7
  %v3187 = vsub.s32 %v3184, %v3186
  %v3188 = vrot.slane %v3144, %v3187
  %v3190 = vunpack.c.l.s4 286326784
  %v3191 = vunpack.c.0.s8 %v3190
  %v3192 = vlaneseq
  %v3193 = vshrl.u32 %v3192, 7
  %v3194 = vsub.s32 %v3191, %v3193
  %v3195 = vrot.slane %v3145, %v3194
  %v3197 = vunpack.c.l.s4 286326784
  %v3198 = vunpack.c.0.s8 %v3197
  %v3199 = vlaneseq
  %v3200 = vshrl.u32 %v3199, 7
  %v3201 = vsub.s32 %v3198, %v3200
  %v3202 = vrot.slane %v3146, %v3201
  %v3211 = vld [vmem:[%s4] sm:$0x8]
  %v3212 = vsel %vm3080, %v3153, %v3211
  %3213 = vst [vmem:[%s4] sm:$0x8] %v3212
  %v3214 = vld [vmem:[%s4 + $0x8] sm:$0x8]
  %v3215 = vsel %vm3080, %v3160, %v3214
  %3216 = vst [vmem:[%s4 + $0x8] sm:$0x8] %v3215
  %v3217 = vld [vmem:[%s4 + $0x10] sm:$0x8]
  %v3218 = vsel %vm3080, %v3167, %v3217
  %3219 = vst [vmem:[%s4 + $0x10] sm:$0x8] %v3218
  %v3220 = vld [vmem:[%s4 + $0x18] sm:$0x8]
  %v3221 = vsel %vm3080, %v3174, %v3220
  %3222 = vst [vmem:[%s4 + $0x18] sm:$0x8] %v3221
  %v3223 = vld [vmem:[%s4 + $0x20] sm:$0x8]
  %v3224 = vsel %vm3080, %v3181, %v3223
  %3225 = vst [vmem:[%s4 + $0x20] sm:$0x8] %v3224
  %v3226 = vld [vmem:[%s4 + $0x28] sm:$0x8]
  %v3227 = vsel %vm3080, %v3188, %v3226
  %3228 = vst [vmem:[%s4 + $0x28] sm:$0x8] %v3227
  %v3229 = vld [vmem:[%s4 + $0x30] sm:$0x8]
  %v3230 = vsel %vm3080, %v3195, %v3229
  %3231 = vst [vmem:[%s4 + $0x30] sm:$0x8] %v3230
  %v3232 = vld [vmem:[%s4 + $0x38] sm:$0x8]
  %v3233 = vsel %vm3080, %v3202, %v3232
  %3234 = vst [vmem:[%s4 + $0x38] sm:$0x8] %v3233
  %s3235 = scalar_lea.vmem %s0, 112
  %v3236 = vld [vmem:[%s3235] sm:$0xff]
  %v3237 = vld [vmem:[%s3235 + $0x8] sm:$0xff]
  %v3238 = vunpack.c.l.bf16 %v3236
  %v3239 = vunpack.c.h.bf16 %v3236
  %v3240 = vunpack.c.l.bf16 %v3237
  %v3241 = vunpack.c.h.bf16 %v3237
  %3242 = vmatprep.subr.mxu0 %v24
  %3243 = vmatpush1.msra.mxu0 %v23
  %3244 = vmatprep.subr.mxu0 %v28
  %3245 = vmatpush1.msra.mxu0 %v27
  %3246 = vmatprep.subr.mxu0 %v32
  %3247 = vmatpush1.msra.mxu0 %v31
  %3248 = vmatprep.subr.mxu0 %v36
  %3249 = vmatpush1.msra.mxu0 %v35
  %3250 = vmatprep.subr.mxu0 %v40
  %3251 = vmatpush1.msra.mxu0 %v39
  %3252 = vmatprep.subr.mxu0 %v44
  %3253 = vmatpush1.msra.mxu0 %v43
  %3254 = vmatprep.subr.mxu0 %v48
  %3255 = vmatpush1.msra.mxu0 %v47
  %3256 = vmatprep.subr.mxu0 %v52
  %3257 = vmatpush1.msra.mxu0 %v51
  %3258 = vmatprep.subr.mxu0 %v56
  %3259 = vmatpush1.msra.mxu0 %v55
  %3260 = vmatprep.subr.mxu0 %v60
  %3261 = vmatpush1.msra.mxu0 %v59
  %3262 = vmatprep.subr.mxu0 %v64
  %3263 = vmatpush1.msra.mxu0 %v63
  %3264 = vmatprep.subr.mxu0 %v68
  %3265 = vmatpush1.msra.mxu0 %v67
  %3266 = vmatprep.subr.mxu0 %v72
  %3267 = vmatpush1.msra.mxu0 %v71
  %3268 = vmatprep.subr.mxu0 %v76
  %3269 = vmatpush1.msra.mxu0 %v75
  %3270 = vmatprep.subr.mxu0 %v80
  %3271 = vmatpush1.msra.mxu0 %v79
  %3272 = vmatprep.subr.mxu0 %v84
  %3273 = vmatpush1.msra.mxu0 %v83
  %3274 = vmatprep.subr.mxu0 0.0
  %3275 = vmatpush1.msra.mxu0 0.0
  %3276 = vmatprep.subr.mxu0 0.0
  %3277 = vmatpush1.msra.mxu0 0.0
  %3278 = vmatprep.subr.mxu0 0.0
  %3279 = vmatpush1.msra.mxu0 0.0
  %3280 = vmatprep.subr.mxu0 0.0
  %3281 = vmatpush1.msra.mxu0 0.0
  %3282 = vmatprep.subr.mxu0 0.0
  %3283 = vmatpush1.msra.mxu0 0.0
  %3284 = vmatprep.subr.mxu0 0.0
  %3285 = vmatpush1.msra.mxu0 0.0
  %3286 = vmatprep.subr.mxu0 0.0
  %3287 = vmatpush1.msra.mxu0 0.0
  %3288 = vmatprep.subr.mxu0 0.0
  %3289 = vmatpush1.msra.mxu0 0.0
  %3290 = vmatprep.subr.mxu0 0.0
  %3291 = vmatpush1.msra.mxu0 0.0
  %3292 = vmatprep.subr.mxu0 0.0
  %3293 = vmatpush1.msra.mxu0 0.0
  %3294 = vmatprep.subr.mxu0 0.0
  %3295 = vmatpush1.msra.mxu0 0.0
  %3296 = vmatprep.subr.mxu0 0.0
  %3297 = vmatpush1.msra.mxu0 0.0
  %3298 = vmatprep.subr.mxu0 0.0
  %3299 = vmatpush1.msra.mxu0 0.0
  %3300 = vmatprep.subr.mxu0 0.0
  %3301 = vmatpush1.msra.mxu0 0.0
  %3302 = vmatprep.subr.mxu0 0.0
  %3303 = vmatpush1.msra.mxu0 0.0
  %3304 = vmatprep.subr.mxu0 0.0
  %3305 = vmatpush1.msra.mxu0 0.0
  %3306 = vmatprep.mubr.f32.mxu0 0.0
  %3307 = vmatmul.mubr.f32.gmra.mrb[0].mxu0 %v2970
  %v3308 = vpop.f32.mrb[0].mxu0
  %v3309 = vadd.f32 0.0, %v3308
  %v3310 = vpop.f32.mrb[0].mxu0
  %v3311 = vadd.f32 0.0, %v3310
  %3312 = vdwg.mxu0
  %3313 = vmatprep.subr.mxu0 %v26
  %3314 = vmatpush1.msra.mxu0 %v25
  %3315 = vmatprep.subr.mxu0 %v30
  %3316 = vmatpush1.msra.mxu0 %v29
  %3317 = vmatprep.subr.mxu0 %v34
  %3318 = vmatpush1.msra.mxu0 %v33
  %3319 = vmatprep.subr.mxu0 %v38
  %3320 = vmatpush1.msra.mxu0 %v37
  %3321 = vmatprep.subr.mxu0 %v42
  %3322 = vmatpush1.msra.mxu0 %v41
  %3323 = vmatprep.subr.mxu0 %v46
  %3324 = vmatpush1.msra.mxu0 %v45
  %3325 = vmatprep.subr.mxu0 %v50
  %3326 = vmatpush1.msra.mxu0 %v49
  %3327 = vmatprep.subr.mxu0 %v54
  %3328 = vmatpush1.msra.mxu0 %v53
  %3329 = vmatprep.subr.mxu0 %v58
  %3330 = vmatpush1.msra.mxu0 %v57
  %3331 = vmatprep.subr.mxu0 %v62
  %3332 = vmatpush1.msra.mxu0 %v61
  %3333 = vmatprep.subr.mxu0 %v66
  %3334 = vmatpush1.msra.mxu0 %v65
  %3335 = vmatprep.subr.mxu0 %v70
  %3336 = vmatpush1.msra.mxu0 %v69
  %3337 = vmatprep.subr.mxu0 %v74
  %3338 = vmatpush1.msra.mxu0 %v73
  %3339 = vmatprep.subr.mxu0 %v78
  %3340 = vmatpush1.msra.mxu0 %v77
  %3341 = vmatprep.subr.mxu0 %v82
  %3342 = vmatpush1.msra.mxu0 %v81
  %3343 = vmatprep.subr.mxu0 %v86
  %3344 = vmatpush1.msra.mxu0 %v85
  %3345 = vmatprep.subr.mxu0 0.0
  %3346 = vmatpush1.msra.mxu0 0.0
  %3347 = vmatprep.subr.mxu0 0.0
  %3348 = vmatpush1.msra.mxu0 0.0
  %3349 = vmatprep.subr.mxu0 0.0
  %3350 = vmatpush1.msra.mxu0 0.0
  %3351 = vmatprep.subr.mxu0 0.0
  %3352 = vmatpush1.msra.mxu0 0.0
  %3353 = vmatprep.subr.mxu0 0.0
  %3354 = vmatpush1.msra.mxu0 0.0
  %3355 = vmatprep.subr.mxu0 0.0
  %3356 = vmatpush1.msra.mxu0 0.0
  %3357 = vmatprep.subr.mxu0 0.0
  %3358 = vmatpush1.msra.mxu0 0.0
  %3359 = vmatprep.subr.mxu0 0.0
  %3360 = vmatpush1.msra.mxu0 0.0
  %3361 = vmatprep.subr.mxu0 0.0
  %3362 = vmatpush1.msra.mxu0 0.0
  %3363 = vmatprep.subr.mxu0 0.0
  %3364 = vmatpush1.msra.mxu0 0.0
  %3365 = vmatprep.subr.mxu0 0.0
  %3366 = vmatpush1.msra.mxu0 0.0
  %3367 = vmatprep.subr.mxu0 0.0
  %3368 = vmatpush1.msra.mxu0 0.0
  %3369 = vmatprep.subr.mxu0 0.0
  %3370 = vmatpush1.msra.mxu0 0.0
  %3371 = vmatprep.subr.mxu0 0.0
  %3372 = vmatpush1.msra.mxu0 0.0
  %3373 = vmatprep.subr.mxu0 0.0
  %3374 = vmatpush1.msra.mxu0 0.0
  %3375 = vmatprep.subr.mxu0 0.0
  %3376 = vmatpush1.msra.mxu0 0.0
  %3377 = vmatprep.mubr.f32.mxu0 0.0
  %3378 = vmatmul.mubr.f32.gmra.mrb[0].mxu0 %v2970
  %v3379 = vpop.f32.mrb[0].mxu0
  %v3380 = vadd.f32 0.0, %v3379
  %v3381 = vpop.f32.mrb[0].mxu0
  %v3382 = vadd.f32 0.0, %v3381
  %3383 = vdwg.mxu0
  %v3384 = vadd.f32 %v3238, %v3309
  %v3385 = vadd.f32 %v3239, %v3311
  %v3386 = vadd.f32 %v3240, %v3380
  %v3387 = vadd.f32 %v3241, %v3382
  %v3388 = vxor.u32 %v3384, 2147483648
  %v3389 = vmul.f32 %v3388, 1.442695
  %v3390 = vpow.pop %v3389
  %v3391 = vadd.f32 %v3390, 1.0
  %v3392 = vrcp.pop %v3391
  %v3393 = vmul.f32 1.0, %v3392
  %v3394 = vxor.u32 %v3385, 2147483648
  %v3395 = vmul.f32 %v3394, 1.442695
  %v3396 = vpow.pop %v3395
  %v3397 = vadd.f32 %v3396, 1.0
  %v3398 = vrcp.pop %v3397
  %v3399 = vmul.f32 1.0, %v3398
  %v3400 = vtanh.pop %v3386
  %v3401 = vxor.u32 %v3387, 2147483648
  %v3402 = vmul.f32 %v3401, 1.442695
  %v3403 = vpow.pop %v3402
  %v3404 = vadd.f32 %v3403, 1.0
  %v3405 = vrcp.pop %v3404
  %v3406 = vmul.f32 1.0, %v3405
  %v3407 = vmul.f32 %v3399, %v2971
  %v3408 = vmul.f32 %v3393, %v3400
  %v3409 = vadd.f32 %v3407, %v3408
  %v3410 = vtanh.pop %v3409
  %v3411 = vmul.f32 %v3406, %v3410
  %s3412 = sadd.s32 %s89, 7
  %v3413 = vstv %s3412
  %vm3414 = vcmp.lt.s32.totalorder %v3413, %v22
  %v3415 = vsel %vm3414, 1, 0
  %3416 = vset.pattern.permute.xlu0 0
  %3417 = vperm.xlu0 %3416, %v3415
  %v3418 = vpop.permute.xlu0 %3417
  %vm3419 = vcmp.eq.s32.totalorder %v3418, 1
  %v3420 = vsel %vm3419, %v3411, %v2970
  %v3421 = vsel %vm3419, %v3409, %v2971
  %v3422 = vpack.c.bf16 %v3420, %v3420
  %v3425 = vunpack.c.l.s4 1966171168
  %v3426 = vunpack.c.0.s8 %v3425
  %v3427 = vlaneseq
  %v3428 = vshrl.u32 %v3427, 7
  %v3429 = vsub.s32 %v3426, %v3428
  %v3430 = vrot.slane %v3422, %v3429
  %v3431 = vcombine.high %v3430, %v3430
  %v3433 = vunpack.c.l.s4 1966171168
  %v3434 = vunpack.c.0.s8 %v3433
  %v3435 = vlaneseq
  %v3436 = vshrl.u32 %v3435, 7
  %v3437 = vsub.s32 %v3434, %v3436
  %v3438 = vrot.slane %v3430, %v3437
  %v3440 = vunpack.c.l.s4 1966171168
  %v3441 = vunpack.c.0.s8 %v3440
  %v3442 = vlaneseq
  %v3443 = vshrl.u32 %v3442, 7
  %v3444 = vsub.s32 %v3441, %v3443
  %v3445 = vrot.slane %v3431, %v3444
  %v3446 = vcombine.high %v3438, %v3438
  %v3447 = vcombine.high %v3445, %v3445
  %v3448 = vunpack.i.l.s16 %v3438
  %v3449 = vunpack.i.h.s16 %v3438
  %v3450 = vunpack.i.l.s16 %v3445
  %v3451 = vunpack.i.h.s16 %v3445
  %v3452 = vunpack.i.l.s16 %v3446
  %v3453 = vunpack.i.h.s16 %v3446
  %v3454 = vunpack.i.l.s16 %v3447
  %v3455 = vunpack.i.h.s16 %v3447
  %v3456 = vpack.i.b16 %v3448, %v3448
  %v3457 = vpack.i.b16 %v3449, %v3449
  %v3458 = vpack.i.b16 %v3450, %v3450
  %v3459 = vpack.i.b16 %v3451, %v3451
  %v3460 = vpack.i.b16 %v3452, %v3452
  %v3461 = vpack.i.b16 %v3453, %v3453
  %v3462 = vpack.i.b16 %v3454, %v3454
  %v3463 = vpack.i.b16 %v3455, %v3455
  %v3465 = vunpack.c.l.s4 286326784
  %v3466 = vunpack.c.0.s8 %v3465
  %v3467 = vlaneseq
  %v3468 = vshrl.u32 %v3467, 7
  %v3469 = vsub.s32 %v3466, %v3468
  %v3470 = vrot.slane %v3456, %v3469
  %v3472 = vunpack.c.l.s4 286326784
  %v3473 = vunpack.c.0.s8 %v3472
  %v3474 = vlaneseq
  %v3475 = vshrl.u32 %v3474, 7
  %v3476 = vsub.s32 %v3473, %v3475
  %v3477 = vrot.slane %v3457, %v3476
  %v3479 = vunpack.c.l.s4 286326784
  %v3480 = vunpack.c.0.s8 %v3479
  %v3481 = vlaneseq
  %v3482 = vshrl.u32 %v3481, 7
  %v3483 = vsub.s32 %v3480, %v3482
  %v3484 = vrot.slane %v3458, %v3483
  %v3486 = vunpack.c.l.s4 286326784
  %v3487 = vunpack.c.0.s8 %v3486
  %v3488 = vlaneseq
  %v3489 = vshrl.u32 %v3488, 7
  %v3490 = vsub.s32 %v3487, %v3489
  %v3491 = vrot.slane %v3459, %v3490
  %v3493 = vunpack.c.l.s4 286326784
  %v3494 = vunpack.c.0.s8 %v3493
  %v3495 = vlaneseq
  %v3496 = vshrl.u32 %v3495, 7
  %v3497 = vsub.s32 %v3494, %v3496
  %v3498 = vrot.slane %v3460, %v3497
  %v3500 = vunpack.c.l.s4 286326784
  %v3501 = vunpack.c.0.s8 %v3500
  %v3502 = vlaneseq
  %v3503 = vshrl.u32 %v3502, 7
  %v3504 = vsub.s32 %v3501, %v3503
  %v3505 = vrot.slane %v3461, %v3504
  %v3507 = vunpack.c.l.s4 286326784
  %v3508 = vunpack.c.0.s8 %v3507
  %v3509 = vlaneseq
  %v3510 = vshrl.u32 %v3509, 7
  %v3511 = vsub.s32 %v3508, %v3510
  %v3512 = vrot.slane %v3462, %v3511
  %v3514 = vunpack.c.l.s4 286326784
  %v3515 = vunpack.c.0.s8 %v3514
  %v3516 = vlaneseq
  %v3517 = vshrl.u32 %v3516, 7
  %v3518 = vsub.s32 %v3515, %v3517
  %v3519 = vrot.slane %v3463, %v3518
  %vm3528 = vsmask.f32 7950
  %vm3529 = vmand %vm3078, %vm3528
  %v3530 = vld [vmem:[%s3] sm:$0x8]
  %v3531 = vsel %vm3529, %v3470, %v3530
  %3532 = vst [vmem:[%s3] sm:$0x8] %v3531
  %v3533 = vld [vmem:[%s3 + $0x8] sm:$0x8]
  %v3534 = vsel %vm3529, %v3477, %v3533
  %3535 = vst [vmem:[%s3 + $0x8] sm:$0x8] %v3534
  %v3536 = vld [vmem:[%s3 + $0x10] sm:$0x8]
  %v3537 = vsel %vm3529, %v3484, %v3536
  %3538 = vst [vmem:[%s3 + $0x10] sm:$0x8] %v3537
  %v3539 = vld [vmem:[%s3 + $0x18] sm:$0x8]
  %v3540 = vsel %vm3529, %v3491, %v3539
  %3541 = vst [vmem:[%s3 + $0x18] sm:$0x8] %v3540
  %v3542 = vld [vmem:[%s3 + $0x20] sm:$0x8]
  %v3543 = vsel %vm3529, %v3498, %v3542
  %3544 = vst [vmem:[%s3 + $0x20] sm:$0x8] %v3543
  %v3545 = vld [vmem:[%s3 + $0x28] sm:$0x8]
  %v3546 = vsel %vm3529, %v3505, %v3545
  %3547 = vst [vmem:[%s3 + $0x28] sm:$0x8] %v3546
  %v3548 = vld [vmem:[%s3 + $0x30] sm:$0x8]
  %v3549 = vsel %vm3529, %v3512, %v3548
  %3550 = vst [vmem:[%s3 + $0x30] sm:$0x8] %v3549
  %v3551 = vld [vmem:[%s3 + $0x38] sm:$0x8]
  %v3552 = vsel %vm3529, %v3519, %v3551
  %3553 = vst [vmem:[%s3 + $0x38] sm:$0x8] %v3552
  %v3554 = vpack.c.bf16 %v3421, %v3421
  %v3557 = vunpack.c.l.s4 1966171168
  %v3558 = vunpack.c.0.s8 %v3557
  %v3559 = vlaneseq
  %v3560 = vshrl.u32 %v3559, 7
  %v3561 = vsub.s32 %v3558, %v3560
  %v3562 = vrot.slane %v3554, %v3561
  %v3563 = vcombine.high %v3562, %v3562
  %v3565 = vunpack.c.l.s4 1966171168
  %v3566 = vunpack.c.0.s8 %v3565
  %v3567 = vlaneseq
  %v3568 = vshrl.u32 %v3567, 7
  %v3569 = vsub.s32 %v3566, %v3568
  %v3570 = vrot.slane %v3562, %v3569
  %v3572 = vunpack.c.l.s4 1966171168
  %v3573 = vunpack.c.0.s8 %v3572
  %v3574 = vlaneseq
  %v3575 = vshrl.u32 %v3574, 7
  %v3576 = vsub.s32 %v3573, %v3575
  %v3577 = vrot.slane %v3563, %v3576
  %v3578 = vcombine.high %v3570, %v3570
  %v3579 = vcombine.high %v3577, %v3577
  %v3580 = vunpack.i.l.s16 %v3570
  %v3581 = vunpack.i.h.s16 %v3570
  %v3582 = vunpack.i.l.s16 %v3577
  %v3583 = vunpack.i.h.s16 %v3577
  %v3584 = vunpack.i.l.s16 %v3578
  %v3585 = vunpack.i.h.s16 %v3578
  %v3586 = vunpack.i.l.s16 %v3579
  %v3587 = vunpack.i.h.s16 %v3579
  %v3588 = vpack.i.b16 %v3580, %v3580
  %v3589 = vpack.i.b16 %v3581, %v3581
  %v3590 = vpack.i.b16 %v3582, %v3582
  %v3591 = vpack.i.b16 %v3583, %v3583
  %v3592 = vpack.i.b16 %v3584, %v3584
  %v3593 = vpack.i.b16 %v3585, %v3585
  %v3594 = vpack.i.b16 %v3586, %v3586
  %v3595 = vpack.i.b16 %v3587, %v3587
  %v3597 = vunpack.c.l.s4 286326784
  %v3598 = vunpack.c.0.s8 %v3597
  %v3599 = vlaneseq
  %v3600 = vshrl.u32 %v3599, 7
  %v3601 = vsub.s32 %v3598, %v3600
  %v3602 = vrot.slane %v3588, %v3601
  %v3604 = vunpack.c.l.s4 286326784
  %v3605 = vunpack.c.0.s8 %v3604
  %v3606 = vlaneseq
  %v3607 = vshrl.u32 %v3606, 7
  %v3608 = vsub.s32 %v3605, %v3607
  %v3609 = vrot.slane %v3589, %v3608
  %v3611 = vunpack.c.l.s4 286326784
  %v3612 = vunpack.c.0.s8 %v3611
  %v3613 = vlaneseq
  %v3614 = vshrl.u32 %v3613, 7
  %v3615 = vsub.s32 %v3612, %v3614
  %v3616 = vrot.slane %v3590, %v3615
  %v3618 = vunpack.c.l.s4 286326784
  %v3619 = vunpack.c.0.s8 %v3618
  %v3620 = vlaneseq
  %v3621 = vshrl.u32 %v3620, 7
  %v3622 = vsub.s32 %v3619, %v3621
  %v3623 = vrot.slane %v3591, %v3622
  %v3625 = vunpack.c.l.s4 286326784
  %v3626 = vunpack.c.0.s8 %v3625
  %v3627 = vlaneseq
  %v3628 = vshrl.u32 %v3627, 7
  %v3629 = vsub.s32 %v3626, %v3628
  %v3630 = vrot.slane %v3592, %v3629
  %v3632 = vunpack.c.l.s4 286326784
  %v3633 = vunpack.c.0.s8 %v3632
  %v3634 = vlaneseq
  %v3635 = vshrl.u32 %v3634, 7
  %v3636 = vsub.s32 %v3633, %v3635
  %v3637 = vrot.slane %v3593, %v3636
  %v3639 = vunpack.c.l.s4 286326784
  %v3640 = vunpack.c.0.s8 %v3639
  %v3641 = vlaneseq
  %v3642 = vshrl.u32 %v3641, 7
  %v3643 = vsub.s32 %v3640, %v3642
  %v3644 = vrot.slane %v3594, %v3643
  %v3646 = vunpack.c.l.s4 286326784
  %v3647 = vunpack.c.0.s8 %v3646
  %v3648 = vlaneseq
  %v3649 = vshrl.u32 %v3648, 7
  %v3650 = vsub.s32 %v3647, %v3649
  %v3651 = vrot.slane %v3595, %v3650
  %v3660 = vld [vmem:[%s4] sm:$0x8]
  %v3661 = vsel %vm3529, %v3602, %v3660
  %3662 = vst [vmem:[%s4] sm:$0x8] %v3661
  %v3663 = vld [vmem:[%s4 + $0x8] sm:$0x8]
  %v3664 = vsel %vm3529, %v3609, %v3663
  %3665 = vst [vmem:[%s4 + $0x8] sm:$0x8] %v3664
  %v3666 = vld [vmem:[%s4 + $0x10] sm:$0x8]
  %v3667 = vsel %vm3529, %v3616, %v3666
  %3668 = vst [vmem:[%s4 + $0x10] sm:$0x8] %v3667
  %v3669 = vld [vmem:[%s4 + $0x18] sm:$0x8]
  %v3670 = vsel %vm3529, %v3623, %v3669
  %3671 = vst [vmem:[%s4 + $0x18] sm:$0x8] %v3670
  %v3672 = vld [vmem:[%s4 + $0x20] sm:$0x8]
  %v3673 = vsel %vm3529, %v3630, %v3672
  %3674 = vst [vmem:[%s4 + $0x20] sm:$0x8] %v3673
  %v3675 = vld [vmem:[%s4 + $0x28] sm:$0x8]
  %v3676 = vsel %vm3529, %v3637, %v3675
  %3677 = vst [vmem:[%s4 + $0x28] sm:$0x8] %v3676
  %v3678 = vld [vmem:[%s4 + $0x30] sm:$0x8]
  %v3679 = vsel %vm3529, %v3644, %v3678
  %3680 = vst [vmem:[%s4 + $0x30] sm:$0x8] %v3679
  %v3681 = vld [vmem:[%s4 + $0x38] sm:$0x8]
  %v3682 = vsel %vm3529, %v3651, %v3681
  %3683 = vst [vmem:[%s4 + $0x38] sm:$0x8] %v3682
  %s3684 = scalar_lea.vmem %s0, 128
  %v3685 = vld [vmem:[%s3684] sm:$0xff]
  %v3686 = vld [vmem:[%s3684 + $0x8] sm:$0xff]
  %v3687 = vunpack.c.l.bf16 %v3685
  %v3688 = vunpack.c.h.bf16 %v3685
  %v3689 = vunpack.c.l.bf16 %v3686
  %v3690 = vunpack.c.h.bf16 %v3686
  %3691 = vmatprep.subr.mxu0 %v24
  %3692 = vmatpush1.msra.mxu0 %v23
  %3693 = vmatprep.subr.mxu0 %v28
  %3694 = vmatpush1.msra.mxu0 %v27
  %3695 = vmatprep.subr.mxu0 %v32
  %3696 = vmatpush1.msra.mxu0 %v31
  %3697 = vmatprep.subr.mxu0 %v36
  %3698 = vmatpush1.msra.mxu0 %v35
  %3699 = vmatprep.subr.mxu0 %v40
  %3700 = vmatpush1.msra.mxu0 %v39
  %3701 = vmatprep.subr.mxu0 %v44
  %3702 = vmatpush1.msra.mxu0 %v43
  %3703 = vmatprep.subr.mxu0 %v48
  %3704 = vmatpush1.msra.mxu0 %v47
  %3705 = vmatprep.subr.mxu0 %v52
  %3706 = vmatpush1.msra.mxu0 %v51
  %3707 = vmatprep.subr.mxu0 %v56
  %3708 = vmatpush1.msra.mxu0 %v55
  %3709 = vmatprep.subr.mxu0 %v60
  %3710 = vmatpush1.msra.mxu0 %v59
  %3711 = vmatprep.subr.mxu0 %v64
  %3712 = vmatpush1.msra.mxu0 %v63
  %3713 = vmatprep.subr.mxu0 %v68
  %3714 = vmatpush1.msra.mxu0 %v67
  %3715 = vmatprep.subr.mxu0 %v72
  %3716 = vmatpush1.msra.mxu0 %v71
  %3717 = vmatprep.subr.mxu0 %v76
  %3718 = vmatpush1.msra.mxu0 %v75
  %3719 = vmatprep.subr.mxu0 %v80
  %3720 = vmatpush1.msra.mxu0 %v79
  %3721 = vmatprep.subr.mxu0 %v84
  %3722 = vmatpush1.msra.mxu0 %v83
  %3723 = vmatprep.subr.mxu0 0.0
  %3724 = vmatpush1.msra.mxu0 0.0
  %3725 = vmatprep.subr.mxu0 0.0
  %3726 = vmatpush1.msra.mxu0 0.0
  %3727 = vmatprep.subr.mxu0 0.0
  %3728 = vmatpush1.msra.mxu0 0.0
  %3729 = vmatprep.subr.mxu0 0.0
  %3730 = vmatpush1.msra.mxu0 0.0
  %3731 = vmatprep.subr.mxu0 0.0
  %3732 = vmatpush1.msra.mxu0 0.0
  %3733 = vmatprep.subr.mxu0 0.0
  %3734 = vmatpush1.msra.mxu0 0.0
  %3735 = vmatprep.subr.mxu0 0.0
  %3736 = vmatpush1.msra.mxu0 0.0
  %3737 = vmatprep.subr.mxu0 0.0
  %3738 = vmatpush1.msra.mxu0 0.0
  %3739 = vmatprep.subr.mxu0 0.0
  %3740 = vmatpush1.msra.mxu0 0.0
  %3741 = vmatprep.subr.mxu0 0.0
  %3742 = vmatpush1.msra.mxu0 0.0
  %3743 = vmatprep.subr.mxu0 0.0
  %3744 = vmatpush1.msra.mxu0 0.0
  %3745 = vmatprep.subr.mxu0 0.0
  %3746 = vmatpush1.msra.mxu0 0.0
  %3747 = vmatprep.subr.mxu0 0.0
  %3748 = vmatpush1.msra.mxu0 0.0
  %3749 = vmatprep.subr.mxu0 0.0
  %3750 = vmatpush1.msra.mxu0 0.0
  %3751 = vmatprep.subr.mxu0 0.0
  %3752 = vmatpush1.msra.mxu0 0.0
  %3753 = vmatprep.subr.mxu0 0.0
  %3754 = vmatpush1.msra.mxu0 0.0
  %3755 = vmatprep.mubr.f32.mxu0 0.0
  %3756 = vmatmul.mubr.f32.gmra.mrb[0].mxu0 %v3420
  %v3757 = vpop.f32.mrb[0].mxu0
  %v3758 = vadd.f32 0.0, %v3757
  %v3759 = vpop.f32.mrb[0].mxu0
  %v3760 = vadd.f32 0.0, %v3759
  %3761 = vdwg.mxu0
  %3762 = vmatprep.subr.mxu0 %v26
  %3763 = vmatpush1.msra.mxu0 %v25
  %3764 = vmatprep.subr.mxu0 %v30
  %3765 = vmatpush1.msra.mxu0 %v29
  %3766 = vmatprep.subr.mxu0 %v34
  %3767 = vmatpush1.msra.mxu0 %v33
  %3768 = vmatprep.subr.mxu0 %v38
  %3769 = vmatpush1.msra.mxu0 %v37
  %3770 = vmatprep.subr.mxu0 %v42
  %3771 = vmatpush1.msra.mxu0 %v41
  %3772 = vmatprep.subr.mxu0 %v46
  %3773 = vmatpush1.msra.mxu0 %v45
  %3774 = vmatprep.subr.mxu0 %v50
  %3775 = vmatpush1.msra.mxu0 %v49
  %3776 = vmatprep.subr.mxu0 %v54
  %3777 = vmatpush1.msra.mxu0 %v53
  %3778 = vmatprep.subr.mxu0 %v58
  %3779 = vmatpush1.msra.mxu0 %v57
  %3780 = vmatprep.subr.mxu0 %v62
  %3781 = vmatpush1.msra.mxu0 %v61
  %3782 = vmatprep.subr.mxu0 %v66
  %3783 = vmatpush1.msra.mxu0 %v65
  %3784 = vmatprep.subr.mxu0 %v70
  %3785 = vmatpush1.msra.mxu0 %v69
  %3786 = vmatprep.subr.mxu0 %v74
  %3787 = vmatpush1.msra.mxu0 %v73
  %3788 = vmatprep.subr.mxu0 %v78
  %3789 = vmatpush1.msra.mxu0 %v77
  %3790 = vmatprep.subr.mxu0 %v82
  %3791 = vmatpush1.msra.mxu0 %v81
  %3792 = vmatprep.subr.mxu0 %v86
  %3793 = vmatpush1.msra.mxu0 %v85
  %3794 = vmatprep.subr.mxu0 0.0
  %3795 = vmatpush1.msra.mxu0 0.0
  %3796 = vmatprep.subr.mxu0 0.0
  %3797 = vmatpush1.msra.mxu0 0.0
  %3798 = vmatprep.subr.mxu0 0.0
  %3799 = vmatpush1.msra.mxu0 0.0
  %3800 = vmatprep.subr.mxu0 0.0
  %3801 = vmatpush1.msra.mxu0 0.0
  %3802 = vmatprep.subr.mxu0 0.0
  %3803 = vmatpush1.msra.mxu0 0.0
  %3804 = vmatprep.subr.mxu0 0.0
  %3805 = vmatpush1.msra.mxu0 0.0
  %3806 = vmatprep.subr.mxu0 0.0
  %3807 = vmatpush1.msra.mxu0 0.0
  %3808 = vmatprep.subr.mxu0 0.0
  %3809 = vmatpush1.msra.mxu0 0.0
  %3810 = vmatprep.subr.mxu0 0.0
  %3811 = vmatpush1.msra.mxu0 0.0
  %3812 = vmatprep.subr.mxu0 0.0
  %3813 = vmatpush1.msra.mxu0 0.0
  %3814 = vmatprep.subr.mxu0 0.0
  %3815 = vmatpush1.msra.mxu0 0.0
  %3816 = vmatprep.subr.mxu0 0.0
  %3817 = vmatpush1.msra.mxu0 0.0
  %3818 = vmatprep.subr.mxu0 0.0
  %3819 = vmatpush1.msra.mxu0 0.0
  %3820 = vmatprep.subr.mxu0 0.0
  %3821 = vmatpush1.msra.mxu0 0.0
  %3822 = vmatprep.subr.mxu0 0.0
  %3823 = vmatpush1.msra.mxu0 0.0
  %3824 = vmatprep.subr.mxu0 0.0
  %3825 = vmatpush1.msra.mxu0 0.0
  %3826 = vmatprep.mubr.f32.mxu0 0.0
  %3827 = vmatmul.mubr.f32.gmra.mrb[0].mxu0 %v3420
  %v3828 = vpop.f32.mrb[0].mxu0
  %v3829 = vadd.f32 0.0, %v3828
  %v3830 = vpop.f32.mrb[0].mxu0
  %v3831 = vadd.f32 0.0, %v3830
  %3832 = vdwg.mxu0
  %v3833 = vadd.f32 %v3687, %v3758
  %v3834 = vadd.f32 %v3688, %v3760
  %v3835 = vadd.f32 %v3689, %v3829
  %v3836 = vadd.f32 %v3690, %v3831
  %v3837 = vxor.u32 %v3833, 2147483648
  %v3838 = vmul.f32 %v3837, 1.442695
  %v3839 = vpow.pop %v3838
  %v3840 = vadd.f32 %v3839, 1.0
  %v3841 = vrcp.pop %v3840
  %v3842 = vmul.f32 1.0, %v3841
  %v3843 = vxor.u32 %v3834, 2147483648
  %v3844 = vmul.f32 %v3843, 1.442695
  %v3845 = vpow.pop %v3844
  %v3846 = vadd.f32 %v3845, 1.0
  %v3847 = vrcp.pop %v3846
  %v3848 = vmul.f32 1.0, %v3847
  %v3849 = vtanh.pop %v3835
  %v3850 = vxor.u32 %v3836, 2147483648
  %v3851 = vmul.f32 %v3850, 1.442695
  %v3852 = vpow.pop %v3851
  %v3853 = vadd.f32 %v3852, 1.0
  %v3854 = vrcp.pop %v3853
  %v3855 = vmul.f32 1.0, %v3854
  %v3856 = vmul.f32 %v3848, %v3421
  %v3857 = vmul.f32 %v3842, %v3849
  %v3858 = vadd.f32 %v3856, %v3857
  %v3859 = vtanh.pop %v3858
  %v3860 = vmul.f32 %v3855, %v3859
  %s3861 = sadd.s32 %s89, 8
  %v3862 = vstv %s3861
  %vm3863 = vcmp.lt.s32.totalorder %v3862, %v22
  %v3864 = vsel %vm3863, 1, 0
  %3865 = vset.pattern.permute.xlu0 0
  %3866 = vperm.xlu0 %3865, %v3864
  %v3867 = vpop.permute.xlu0 %3866
  %vm3868 = vcmp.eq.s32.totalorder %v3867, 1
  %v3869 = vsel %vm3868, %v3860, %v3420
  %v3870 = vsel %vm3868, %v3858, %v3421
  %v3871 = vpack.c.bf16 %v3869, %v3869
  %v3874 = vunpack.c.l.s4 1966171168
  %v3875 = vunpack.c.0.s8 %v3874
  %v3876 = vlaneseq
  %v3877 = vshrl.u32 %v3876, 7
  %v3878 = vsub.s32 %v3875, %v3877
  %v3879 = vrot.slane %v3871, %v3878
  %v3880 = vcombine.high %v3879, %v3879
  %v3882 = vunpack.c.l.s4 1966171168
  %v3883 = vunpack.c.0.s8 %v3882
  %v3884 = vlaneseq
  %v3885 = vshrl.u32 %v3884, 7
  %v3886 = vsub.s32 %v3883, %v3885
  %v3887 = vrot.slane %v3879, %v3886
  %v3889 = vunpack.c.l.s4 1966171168
  %v3890 = vunpack.c.0.s8 %v3889
  %v3891 = vlaneseq
  %v3892 = vshrl.u32 %v3891, 7
  %v3893 = vsub.s32 %v3890, %v3892
  %v3894 = vrot.slane %v3880, %v3893
  %v3895 = vcombine.high %v3887, %v3887
  %v3896 = vcombine.high %v3894, %v3894
  %v3897 = vunpack.i.l.s16 %v3887
  %v3898 = vunpack.i.h.s16 %v3887
  %v3899 = vunpack.i.l.s16 %v3894
  %v3900 = vunpack.i.h.s16 %v3894
  %v3901 = vunpack.i.l.s16 %v3895
  %v3902 = vunpack.i.h.s16 %v3895
  %v3903 = vunpack.i.l.s16 %v3896
  %v3904 = vunpack.i.h.s16 %v3896
  %v3905 = vpack.i.b16 %v3897, %v3897
  %v3906 = vpack.i.b16 %v3898, %v3898
  %v3907 = vpack.i.b16 %v3899, %v3899
  %v3908 = vpack.i.b16 %v3900, %v3900
  %v3909 = vpack.i.b16 %v3901, %v3901
  %v3910 = vpack.i.b16 %v3902, %v3902
  %v3911 = vpack.i.b16 %v3903, %v3903
  %v3912 = vpack.i.b16 %v3904, %v3904
  %v3914 = vunpack.c.l.s4 286326784
  %v3915 = vunpack.c.0.s8 %v3914
  %v3916 = vlaneseq
  %v3917 = vshrl.u32 %v3916, 7
  %v3918 = vsub.s32 %v3915, %v3917
  %v3919 = vrot.slane %v3905, %v3918
  %v3921 = vunpack.c.l.s4 286326784
  %v3922 = vunpack.c.0.s8 %v3921
  %v3923 = vlaneseq
  %v3924 = vshrl.u32 %v3923, 7
  %v3925 = vsub.s32 %v3922, %v3924
  %v3926 = vrot.slane %v3906, %v3925
  %v3928 = vunpack.c.l.s4 286326784
  %v3929 = vunpack.c.0.s8 %v3928
  %v3930 = vlaneseq
  %v3931 = vshrl.u32 %v3930, 7
  %v3932 = vsub.s32 %v3929, %v3931
  %v3933 = vrot.slane %v3907, %v3932
  %v3935 = vunpack.c.l.s4 286326784
  %v3936 = vunpack.c.0.s8 %v3935
  %v3937 = vlaneseq
  %v3938 = vshrl.u32 %v3937, 7
  %v3939 = vsub.s32 %v3936, %v3938
  %v3940 = vrot.slane %v3908, %v3939
  %v3942 = vunpack.c.l.s4 286326784
  %v3943 = vunpack.c.0.s8 %v3942
  %v3944 = vlaneseq
  %v3945 = vshrl.u32 %v3944, 7
  %v3946 = vsub.s32 %v3943, %v3945
  %v3947 = vrot.slane %v3909, %v3946
  %v3949 = vunpack.c.l.s4 286326784
  %v3950 = vunpack.c.0.s8 %v3949
  %v3951 = vlaneseq
  %v3952 = vshrl.u32 %v3951, 7
  %v3953 = vsub.s32 %v3950, %v3952
  %v3954 = vrot.slane %v3910, %v3953
  %v3956 = vunpack.c.l.s4 286326784
  %v3957 = vunpack.c.0.s8 %v3956
  %v3958 = vlaneseq
  %v3959 = vshrl.u32 %v3958, 7
  %v3960 = vsub.s32 %v3957, %v3959
  %v3961 = vrot.slane %v3911, %v3960
  %v3963 = vunpack.c.l.s4 286326784
  %v3964 = vunpack.c.0.s8 %v3963
  %v3965 = vlaneseq
  %v3966 = vshrl.u32 %v3965, 7
  %v3967 = vsub.s32 %v3964, %v3966
  %v3968 = vrot.slane %v3912, %v3967
  %v3977 = vld [vmem:[%s3 + $0x4] sm:$0x1]
  %v3978 = vsel %vm383, %v3919, %v3977
  %3979 = vst [vmem:[%s3 + $0x4] sm:$0x1] %v3978
  %v3980 = vld [vmem:[%s3 + $0xc] sm:$0x1]
  %v3981 = vsel %vm383, %v3926, %v3980
  %3982 = vst [vmem:[%s3 + $0xc] sm:$0x1] %v3981
  %v3983 = vld [vmem:[%s3 + $0x14] sm:$0x1]
  %v3984 = vsel %vm383, %v3933, %v3983
  %3985 = vst [vmem:[%s3 + $0x14] sm:$0x1] %v3984
  %v3986 = vld [vmem:[%s3 + $0x1c] sm:$0x1]
  %v3987 = vsel %vm383, %v3940, %v3986
  %3988 = vst [vmem:[%s3 + $0x1c] sm:$0x1] %v3987
  %v3989 = vld [vmem:[%s3 + $0x24] sm:$0x1]
  %v3990 = vsel %vm383, %v3947, %v3989
  %3991 = vst [vmem:[%s3 + $0x24] sm:$0x1] %v3990
  %v3992 = vld [vmem:[%s3 + $0x2c] sm:$0x1]
  %v3993 = vsel %vm383, %v3954, %v3992
  %3994 = vst [vmem:[%s3 + $0x2c] sm:$0x1] %v3993
  %v3995 = vld [vmem:[%s3 + $0x34] sm:$0x1]
  %v3996 = vsel %vm383, %v3961, %v3995
  %3997 = vst [vmem:[%s3 + $0x34] sm:$0x1] %v3996
  %v3998 = vld [vmem:[%s3 + $0x3c] sm:$0x1]
  %v3999 = vsel %vm383, %v3968, %v3998
  %4000 = vst [vmem:[%s3 + $0x3c] sm:$0x1] %v3999
  %v4001 = vpack.c.bf16 %v3870, %v3870
  %v4004 = vunpack.c.l.s4 1966171168
  %v4005 = vunpack.c.0.s8 %v4004
  %v4006 = vlaneseq
  %v4007 = vshrl.u32 %v4006, 7
  %v4008 = vsub.s32 %v4005, %v4007
  %v4009 = vrot.slane %v4001, %v4008
  %v4010 = vcombine.high %v4009, %v4009
  %v4012 = vunpack.c.l.s4 1966171168
  %v4013 = vunpack.c.0.s8 %v4012
  %v4014 = vlaneseq
  %v4015 = vshrl.u32 %v4014, 7
  %v4016 = vsub.s32 %v4013, %v4015
  %v4017 = vrot.slane %v4009, %v4016
  %v4019 = vunpack.c.l.s4 1966171168
  %v4020 = vunpack.c.0.s8 %v4019
  %v4021 = vlaneseq
  %v4022 = vshrl.u32 %v4021, 7
  %v4023 = vsub.s32 %v4020, %v4022
  %v4024 = vrot.slane %v4010, %v4023
  %v4025 = vcombine.high %v4017, %v4017
  %v4026 = vcombine.high %v4024, %v4024
  %v4027 = vunpack.i.l.s16 %v4017
  %v4028 = vunpack.i.h.s16 %v4017
  %v4029 = vunpack.i.l.s16 %v4024
  %v4030 = vunpack.i.h.s16 %v4024
  %v4031 = vunpack.i.l.s16 %v4025
  %v4032 = vunpack.i.h.s16 %v4025
  %v4033 = vunpack.i.l.s16 %v4026
  %v4034 = vunpack.i.h.s16 %v4026
  %v4035 = vpack.i.b16 %v4027, %v4027
  %v4036 = vpack.i.b16 %v4028, %v4028
  %v4037 = vpack.i.b16 %v4029, %v4029
  %v4038 = vpack.i.b16 %v4030, %v4030
  %v4039 = vpack.i.b16 %v4031, %v4031
  %v4040 = vpack.i.b16 %v4032, %v4032
  %v4041 = vpack.i.b16 %v4033, %v4033
  %v4042 = vpack.i.b16 %v4034, %v4034
  %v4044 = vunpack.c.l.s4 286326784
  %v4045 = vunpack.c.0.s8 %v4044
  %v4046 = vlaneseq
  %v4047 = vshrl.u32 %v4046, 7
  %v4048 = vsub.s32 %v4045, %v4047
  %v4049 = vrot.slane %v4035, %v4048
  %v4051 = vunpack.c.l.s4 286326784
  %v4052 = vunpack.c.0.s8 %v4051
  %v4053 = vlaneseq
  %v4054 = vshrl.u32 %v4053, 7
  %v4055 = vsub.s32 %v4052, %v4054
  %v4056 = vrot.slane %v4036, %v4055
  %v4058 = vunpack.c.l.s4 286326784
  %v4059 = vunpack.c.0.s8 %v4058
  %v4060 = vlaneseq
  %v4061 = vshrl.u32 %v4060, 7
  %v4062 = vsub.s32 %v4059, %v4061
  %v4063 = vrot.slane %v4037, %v4062
  %v4065 = vunpack.c.l.s4 286326784
  %v4066 = vunpack.c.0.s8 %v4065
  %v4067 = vlaneseq
  %v4068 = vshrl.u32 %v4067, 7
  %v4069 = vsub.s32 %v4066, %v4068
  %v4070 = vrot.slane %v4038, %v4069
  %v4072 = vunpack.c.l.s4 286326784
  %v4073 = vunpack.c.0.s8 %v4072
  %v4074 = vlaneseq
  %v4075 = vshrl.u32 %v4074, 7
  %v4076 = vsub.s32 %v4073, %v4075
  %v4077 = vrot.slane %v4039, %v4076
  %v4079 = vunpack.c.l.s4 286326784
  %v4080 = vunpack.c.0.s8 %v4079
  %v4081 = vlaneseq
  %v4082 = vshrl.u32 %v4081, 7
  %v4083 = vsub.s32 %v4080, %v4082
  %v4084 = vrot.slane %v4040, %v4083
  %v4086 = vunpack.c.l.s4 286326784
  %v4087 = vunpack.c.0.s8 %v4086
  %v4088 = vlaneseq
  %v4089 = vshrl.u32 %v4088, 7
  %v4090 = vsub.s32 %v4087, %v4089
  %v4091 = vrot.slane %v4041, %v4090
  %v4093 = vunpack.c.l.s4 286326784
  %v4094 = vunpack.c.0.s8 %v4093
  %v4095 = vlaneseq
  %v4096 = vshrl.u32 %v4095, 7
  %v4097 = vsub.s32 %v4094, %v4096
  %v4098 = vrot.slane %v4042, %v4097
  %v4107 = vld [vmem:[%s4 + $0x4] sm:$0x1]
  %v4108 = vsel %vm383, %v4049, %v4107
  %4109 = vst [vmem:[%s4 + $0x4] sm:$0x1] %v4108
  %v4110 = vld [vmem:[%s4 + $0xc] sm:$0x1]
  %v4111 = vsel %vm383, %v4056, %v4110
  %4112 = vst [vmem:[%s4 + $0xc] sm:$0x1] %v4111
  %v4113 = vld [vmem:[%s4 + $0x14] sm:$0x1]
  %v4114 = vsel %vm383, %v4063, %v4113
  %4115 = vst [vmem:[%s4 + $0x14] sm:$0x1] %v4114
  %v4116 = vld [vmem:[%s4 + $0x1c] sm:$0x1]
  %v4117 = vsel %vm383, %v4070, %v4116
  %4118 = vst [vmem:[%s4 + $0x1c] sm:$0x1] %v4117
  %v4119 = vld [vmem:[%s4 + $0x24] sm:$0x1]
  %v4120 = vsel %vm383, %v4077, %v4119
  %4121 = vst [vmem:[%s4 + $0x24] sm:$0x1] %v4120
  %v4122 = vld [vmem:[%s4 + $0x2c] sm:$0x1]
  %v4123 = vsel %vm383, %v4084, %v4122
  %4124 = vst [vmem:[%s4 + $0x2c] sm:$0x1] %v4123
  %v4125 = vld [vmem:[%s4 + $0x34] sm:$0x1]
  %v4126 = vsel %vm383, %v4091, %v4125
  %4127 = vst [vmem:[%s4 + $0x34] sm:$0x1] %v4126
  %v4128 = vld [vmem:[%s4 + $0x3c] sm:$0x1]
  %v4129 = vsel %vm383, %v4098, %v4128
  %4130 = vst [vmem:[%s4 + $0x3c] sm:$0x1] %v4129
  %s4131 = scalar_lea.vmem %s0, 144
  %v4132 = vld [vmem:[%s4131] sm:$0xff]
  %v4133 = vld [vmem:[%s4131 + $0x8] sm:$0xff]
  %v4134 = vunpack.c.l.bf16 %v4132
  %v4135 = vunpack.c.h.bf16 %v4132
  %v4136 = vunpack.c.l.bf16 %v4133
  %v4137 = vunpack.c.h.bf16 %v4133
  %4138 = vmatprep.subr.mxu0 %v24
  %4139 = vmatpush1.msra.mxu0 %v23
  %4140 = vmatprep.subr.mxu0 %v28
  %4141 = vmatpush1.msra.mxu0 %v27
  %4142 = vmatprep.subr.mxu0 %v32
  %4143 = vmatpush1.msra.mxu0 %v31
  %4144 = vmatprep.subr.mxu0 %v36
  %4145 = vmatpush1.msra.mxu0 %v35
  %4146 = vmatprep.subr.mxu0 %v40
  %4147 = vmatpush1.msra.mxu0 %v39
  %4148 = vmatprep.subr.mxu0 %v44
  %4149 = vmatpush1.msra.mxu0 %v43
  %4150 = vmatprep.subr.mxu0 %v48
  %4151 = vmatpush1.msra.mxu0 %v47
  %4152 = vmatprep.subr.mxu0 %v52
  %4153 = vmatpush1.msra.mxu0 %v51
  %4154 = vmatprep.subr.mxu0 %v56
  %4155 = vmatpush1.msra.mxu0 %v55
  %4156 = vmatprep.subr.mxu0 %v60
  %4157 = vmatpush1.msra.mxu0 %v59
  %4158 = vmatprep.subr.mxu0 %v64
  %4159 = vmatpush1.msra.mxu0 %v63
  %4160 = vmatprep.subr.mxu0 %v68
  %4161 = vmatpush1.msra.mxu0 %v67
  %4162 = vmatprep.subr.mxu0 %v72
  %4163 = vmatpush1.msra.mxu0 %v71
  %4164 = vmatprep.subr.mxu0 %v76
  %4165 = vmatpush1.msra.mxu0 %v75
  %4166 = vmatprep.subr.mxu0 %v80
  %4167 = vmatpush1.msra.mxu0 %v79
  %4168 = vmatprep.subr.mxu0 %v84
  %4169 = vmatpush1.msra.mxu0 %v83
  %4170 = vmatprep.subr.mxu0 0.0
  %4171 = vmatpush1.msra.mxu0 0.0
  %4172 = vmatprep.subr.mxu0 0.0
  %4173 = vmatpush1.msra.mxu0 0.0
  %4174 = vmatprep.subr.mxu0 0.0
  %4175 = vmatpush1.msra.mxu0 0.0
  %4176 = vmatprep.subr.mxu0 0.0
  %4177 = vmatpush1.msra.mxu0 0.0
  %4178 = vmatprep.subr.mxu0 0.0
  %4179 = vmatpush1.msra.mxu0 0.0
  %4180 = vmatprep.subr.mxu0 0.0
  %4181 = vmatpush1.msra.mxu0 0.0
  %4182 = vmatprep.subr.mxu0 0.0
  %4183 = vmatpush1.msra.mxu0 0.0
  %4184 = vmatprep.subr.mxu0 0.0
  %4185 = vmatpush1.msra.mxu0 0.0
  %4186 = vmatprep.subr.mxu0 0.0
  %4187 = vmatpush1.msra.mxu0 0.0
  %4188 = vmatprep.subr.mxu0 0.0
  %4189 = vmatpush1.msra.mxu0 0.0
  %4190 = vmatprep.subr.mxu0 0.0
  %4191 = vmatpush1.msra.mxu0 0.0
  %4192 = vmatprep.subr.mxu0 0.0
  %4193 = vmatpush1.msra.mxu0 0.0
  %4194 = vmatprep.subr.mxu0 0.0
  %4195 = vmatpush1.msra.mxu0 0.0
  %4196 = vmatprep.subr.mxu0 0.0
  %4197 = vmatpush1.msra.mxu0 0.0
  %4198 = vmatprep.subr.mxu0 0.0
  %4199 = vmatpush1.msra.mxu0 0.0
  %4200 = vmatprep.subr.mxu0 0.0
  %4201 = vmatpush1.msra.mxu0 0.0
  %4202 = vmatprep.mubr.f32.mxu0 0.0
  %4203 = vmatmul.mubr.f32.gmra.mrb[0].mxu0 %v3869
  %v4204 = vpop.f32.mrb[0].mxu0
  %v4205 = vadd.f32 0.0, %v4204
  %v4206 = vpop.f32.mrb[0].mxu0
  %v4207 = vadd.f32 0.0, %v4206
  %4208 = vdwg.mxu0
  %4209 = vmatprep.subr.mxu0 %v26
  %4210 = vmatpush1.msra.mxu0 %v25
  %4211 = vmatprep.subr.mxu0 %v30
  %4212 = vmatpush1.msra.mxu0 %v29
  %4213 = vmatprep.subr.mxu0 %v34
  %4214 = vmatpush1.msra.mxu0 %v33
  %4215 = vmatprep.subr.mxu0 %v38
  %4216 = vmatpush1.msra.mxu0 %v37
  %4217 = vmatprep.subr.mxu0 %v42
  %4218 = vmatpush1.msra.mxu0 %v41
  %4219 = vmatprep.subr.mxu0 %v46
  %4220 = vmatpush1.msra.mxu0 %v45
  %4221 = vmatprep.subr.mxu0 %v50
  %4222 = vmatpush1.msra.mxu0 %v49
  %4223 = vmatprep.subr.mxu0 %v54
  %4224 = vmatpush1.msra.mxu0 %v53
  %4225 = vmatprep.subr.mxu0 %v58
  %4226 = vmatpush1.msra.mxu0 %v57
  %4227 = vmatprep.subr.mxu0 %v62
  %4228 = vmatpush1.msra.mxu0 %v61
  %4229 = vmatprep.subr.mxu0 %v66
  %4230 = vmatpush1.msra.mxu0 %v65
  %4231 = vmatprep.subr.mxu0 %v70
  %4232 = vmatpush1.msra.mxu0 %v69
  %4233 = vmatprep.subr.mxu0 %v74
  %4234 = vmatpush1.msra.mxu0 %v73
  %4235 = vmatprep.subr.mxu0 %v78
  %4236 = vmatpush1.msra.mxu0 %v77
  %4237 = vmatprep.subr.mxu0 %v82
  %4238 = vmatpush1.msra.mxu0 %v81
  %4239 = vmatprep.subr.mxu0 %v86
  %4240 = vmatpush1.msra.mxu0 %v85
  %4241 = vmatprep.subr.mxu0 0.0
  %4242 = vmatpush1.msra.mxu0 0.0
  %4243 = vmatprep.subr.mxu0 0.0
  %4244 = vmatpush1.msra.mxu0 0.0
  %4245 = vmatprep.subr.mxu0 0.0
  %4246 = vmatpush1.msra.mxu0 0.0
  %4247 = vmatprep.subr.mxu0 0.0
  %4248 = vmatpush1.msra.mxu0 0.0
  %4249 = vmatprep.subr.mxu0 0.0
  %4250 = vmatpush1.msra.mxu0 0.0
  %4251 = vmatprep.subr.mxu0 0.0
  %4252 = vmatpush1.msra.mxu0 0.0
  %4253 = vmatprep.subr.mxu0 0.0
  %4254 = vmatpush1.msra.mxu0 0.0
  %4255 = vmatprep.subr.mxu0 0.0
  %4256 = vmatpush1.msra.mxu0 0.0
  %4257 = vmatprep.subr.mxu0 0.0
  %4258 = vmatpush1.msra.mxu0 0.0
  %4259 = vmatprep.subr.mxu0 0.0
  %4260 = vmatpush1.msra.mxu0 0.0
  %4261 = vmatprep.subr.mxu0 0.0
  %4262 = vmatpush1.msra.mxu0 0.0
  %4263 = vmatprep.subr.mxu0 0.0
  %4264 = vmatpush1.msra.mxu0 0.0
  %4265 = vmatprep.subr.mxu0 0.0
  %4266 = vmatpush1.msra.mxu0 0.0
  %4267 = vmatprep.subr.mxu0 0.0
  %4268 = vmatpush1.msra.mxu0 0.0
  %4269 = vmatprep.subr.mxu0 0.0
  %4270 = vmatpush1.msra.mxu0 0.0
  %4271 = vmatprep.subr.mxu0 0.0
  %4272 = vmatpush1.msra.mxu0 0.0
  %4273 = vmatprep.mubr.f32.mxu0 0.0
  %4274 = vmatmul.mubr.f32.gmra.mrb[0].mxu0 %v3869
  %v4275 = vpop.f32.mrb[0].mxu0
  %v4276 = vadd.f32 0.0, %v4275
  %v4277 = vpop.f32.mrb[0].mxu0
  %v4278 = vadd.f32 0.0, %v4277
  %4279 = vdwg.mxu0
  %v4280 = vadd.f32 %v4134, %v4205
  %v4281 = vadd.f32 %v4135, %v4207
  %v4282 = vadd.f32 %v4136, %v4276
  %v4283 = vadd.f32 %v4137, %v4278
  %v4284 = vxor.u32 %v4280, 2147483648
  %v4285 = vmul.f32 %v4284, 1.442695
  %v4286 = vpow.pop %v4285
  %v4287 = vadd.f32 %v4286, 1.0
  %v4288 = vrcp.pop %v4287
  %v4289 = vmul.f32 1.0, %v4288
  %v4290 = vxor.u32 %v4281, 2147483648
  %v4291 = vmul.f32 %v4290, 1.442695
  %v4292 = vpow.pop %v4291
  %v4293 = vadd.f32 %v4292, 1.0
  %v4294 = vrcp.pop %v4293
  %v4295 = vmul.f32 1.0, %v4294
  %v4296 = vtanh.pop %v4282
  %v4297 = vxor.u32 %v4283, 2147483648
  %v4298 = vmul.f32 %v4297, 1.442695
  %v4299 = vpow.pop %v4298
  %v4300 = vadd.f32 %v4299, 1.0
  %v4301 = vrcp.pop %v4300
  %v4302 = vmul.f32 1.0, %v4301
  %v4303 = vmul.f32 %v4295, %v3870
  %v4304 = vmul.f32 %v4289, %v4296
  %v4305 = vadd.f32 %v4303, %v4304
  %v4306 = vtanh.pop %v4305
  %v4307 = vmul.f32 %v4302, %v4306
  %s4308 = sadd.s32 %s89, 9
  %v4309 = vstv %s4308
  %vm4310 = vcmp.lt.s32.totalorder %v4309, %v22
  %v4311 = vsel %vm4310, 1, 0
  %4312 = vset.pattern.permute.xlu0 0
  %4313 = vperm.xlu0 %4312, %v4311
  %v4314 = vpop.permute.xlu0 %4313
  %vm4315 = vcmp.eq.s32.totalorder %v4314, 1
  %v4316 = vsel %vm4315, %v4307, %v3869
  %v4317 = vsel %vm4315, %v4305, %v3870
  %v4318 = vpack.c.bf16 %v4316, %v4316
  %v4321 = vunpack.c.l.s4 1966171168
  %v4322 = vunpack.c.0.s8 %v4321
  %v4323 = vlaneseq
  %v4324 = vshrl.u32 %v4323, 7
  %v4325 = vsub.s32 %v4322, %v4324
  %v4326 = vrot.slane %v4318, %v4325
  %v4327 = vcombine.high %v4326, %v4326
  %v4329 = vunpack.c.l.s4 1966171168
  %v4330 = vunpack.c.0.s8 %v4329
  %v4331 = vlaneseq
  %v4332 = vshrl.u32 %v4331, 7
  %v4333 = vsub.s32 %v4330, %v4332
  %v4334 = vrot.slane %v4326, %v4333
  %v4336 = vunpack.c.l.s4 1966171168
  %v4337 = vunpack.c.0.s8 %v4336
  %v4338 = vlaneseq
  %v4339 = vshrl.u32 %v4338, 7
  %v4340 = vsub.s32 %v4337, %v4339
  %v4341 = vrot.slane %v4327, %v4340
  %v4342 = vcombine.high %v4334, %v4334
  %v4343 = vcombine.high %v4341, %v4341
  %v4344 = vunpack.i.l.s16 %v4334
  %v4345 = vunpack.i.h.s16 %v4334
  %v4346 = vunpack.i.l.s16 %v4341
  %v4347 = vunpack.i.h.s16 %v4341
  %v4348 = vunpack.i.l.s16 %v4342
  %v4349 = vunpack.i.h.s16 %v4342
  %v4350 = vunpack.i.l.s16 %v4343
  %v4351 = vunpack.i.h.s16 %v4343
  %v4352 = vpack.i.b16 %v4344, %v4344
  %v4353 = vpack.i.b16 %v4345, %v4345
  %v4354 = vpack.i.b16 %v4346, %v4346
  %v4355 = vpack.i.b16 %v4347, %v4347
  %v4356 = vpack.i.b16 %v4348, %v4348
  %v4357 = vpack.i.b16 %v4349, %v4349
  %v4358 = vpack.i.b16 %v4350, %v4350
  %v4359 = vpack.i.b16 %v4351, %v4351
  %v4361 = vunpack.c.l.s4 286326784
  %v4362 = vunpack.c.0.s8 %v4361
  %v4363 = vlaneseq
  %v4364 = vshrl.u32 %v4363, 7
  %v4365 = vsub.s32 %v4362, %v4364
  %v4366 = vrot.slane %v4352, %v4365
  %v4368 = vunpack.c.l.s4 286326784
  %v4369 = vunpack.c.0.s8 %v4368
  %v4370 = vlaneseq
  %v4371 = vshrl.u32 %v4370, 7
  %v4372 = vsub.s32 %v4369, %v4371
  %v4373 = vrot.slane %v4353, %v4372
  %v4375 = vunpack.c.l.s4 286326784
  %v4376 = vunpack.c.0.s8 %v4375
  %v4377 = vlaneseq
  %v4378 = vshrl.u32 %v4377, 7
  %v4379 = vsub.s32 %v4376, %v4378
  %v4380 = vrot.slane %v4354, %v4379
  %v4382 = vunpack.c.l.s4 286326784
  %v4383 = vunpack.c.0.s8 %v4382
  %v4384 = vlaneseq
  %v4385 = vshrl.u32 %v4384, 7
  %v4386 = vsub.s32 %v4383, %v4385
  %v4387 = vrot.slane %v4355, %v4386
  %v4389 = vunpack.c.l.s4 286326784
  %v4390 = vunpack.c.0.s8 %v4389
  %v4391 = vlaneseq
  %v4392 = vshrl.u32 %v4391, 7
  %v4393 = vsub.s32 %v4390, %v4392
  %v4394 = vrot.slane %v4356, %v4393
  %v4396 = vunpack.c.l.s4 286326784
  %v4397 = vunpack.c.0.s8 %v4396
  %v4398 = vlaneseq
  %v4399 = vshrl.u32 %v4398, 7
  %v4400 = vsub.s32 %v4397, %v4399
  %v4401 = vrot.slane %v4357, %v4400
  %v4403 = vunpack.c.l.s4 286326784
  %v4404 = vunpack.c.0.s8 %v4403
  %v4405 = vlaneseq
  %v4406 = vshrl.u32 %v4405, 7
  %v4407 = vsub.s32 %v4404, %v4406
  %v4408 = vrot.slane %v4358, %v4407
  %v4410 = vunpack.c.l.s4 286326784
  %v4411 = vunpack.c.0.s8 %v4410
  %v4412 = vlaneseq
  %v4413 = vshrl.u32 %v4412, 7
  %v4414 = vsub.s32 %v4411, %v4413
  %v4415 = vrot.slane %v4359, %v4414
  %v4424 = vld [vmem:[%s3 + $0x4] sm:$0x1]
  %v4425 = vsel %vm832, %v4366, %v4424
  %4426 = vst [vmem:[%s3 + $0x4] sm:$0x1] %v4425
  %v4427 = vld [vmem:[%s3 + $0xc] sm:$0x1]
  %v4428 = vsel %vm832, %v4373, %v4427
  %4429 = vst [vmem:[%s3 + $0xc] sm:$0x1] %v4428
  %v4430 = vld [vmem:[%s3 + $0x14] sm:$0x1]
  %v4431 = vsel %vm832, %v4380, %v4430
  %4432 = vst [vmem:[%s3 + $0x14] sm:$0x1] %v4431
  %v4433 = vld [vmem:[%s3 + $0x1c] sm:$0x1]
  %v4434 = vsel %vm832, %v4387, %v4433
  %4435 = vst [vmem:[%s3 + $0x1c] sm:$0x1] %v4434
  %v4436 = vld [vmem:[%s3 + $0x24] sm:$0x1]
  %v4437 = vsel %vm832, %v4394, %v4436
  %4438 = vst [vmem:[%s3 + $0x24] sm:$0x1] %v4437
  %v4439 = vld [vmem:[%s3 + $0x2c] sm:$0x1]
  %v4440 = vsel %vm832, %v4401, %v4439
  %4441 = vst [vmem:[%s3 + $0x2c] sm:$0x1] %v4440
  %v4442 = vld [vmem:[%s3 + $0x34] sm:$0x1]
  %v4443 = vsel %vm832, %v4408, %v4442
  %4444 = vst [vmem:[%s3 + $0x34] sm:$0x1] %v4443
  %v4445 = vld [vmem:[%s3 + $0x3c] sm:$0x1]
  %v4446 = vsel %vm832, %v4415, %v4445
  %4447 = vst [vmem:[%s3 + $0x3c] sm:$0x1] %v4446
  %v4448 = vpack.c.bf16 %v4317, %v4317
  %v4451 = vunpack.c.l.s4 1966171168
  %v4452 = vunpack.c.0.s8 %v4451
  %v4453 = vlaneseq
  %v4454 = vshrl.u32 %v4453, 7
  %v4455 = vsub.s32 %v4452, %v4454
  %v4456 = vrot.slane %v4448, %v4455
  %v4457 = vcombine.high %v4456, %v4456
  %v4459 = vunpack.c.l.s4 1966171168
  %v4460 = vunpack.c.0.s8 %v4459
  %v4461 = vlaneseq
  %v4462 = vshrl.u32 %v4461, 7
  %v4463 = vsub.s32 %v4460, %v4462
  %v4464 = vrot.slane %v4456, %v4463
  %v4466 = vunpack.c.l.s4 1966171168
  %v4467 = vunpack.c.0.s8 %v4466
  %v4468 = vlaneseq
  %v4469 = vshrl.u32 %v4468, 7
  %v4470 = vsub.s32 %v4467, %v4469
  %v4471 = vrot.slane %v4457, %v4470
  %v4472 = vcombine.high %v4464, %v4464
  %v4473 = vcombine.high %v4471, %v4471
  %v4474 = vunpack.i.l.s16 %v4464
  %v4475 = vunpack.i.h.s16 %v4464
  %v4476 = vunpack.i.l.s16 %v4471
  %v4477 = vunpack.i.h.s16 %v4471
  %v4478 = vunpack.i.l.s16 %v4472
  %v4479 = vunpack.i.h.s16 %v4472
  %v4480 = vunpack.i.l.s16 %v4473
  %v4481 = vunpack.i.h.s16 %v4473
  %v4482 = vpack.i.b16 %v4474, %v4474
  %v4483 = vpack.i.b16 %v4475, %v4475
  %v4484 = vpack.i.b16 %v4476, %v4476
  %v4485 = vpack.i.b16 %v4477, %v4477
  %v4486 = vpack.i.b16 %v4478, %v4478
  %v4487 = vpack.i.b16 %v4479, %v4479
  %v4488 = vpack.i.b16 %v4480, %v4480
  %v4489 = vpack.i.b16 %v4481, %v4481
  %v4491 = vunpack.c.l.s4 286326784
  %v4492 = vunpack.c.0.s8 %v4491
  %v4493 = vlaneseq
  %v4494 = vshrl.u32 %v4493, 7
  %v4495 = vsub.s32 %v4492, %v4494
  %v4496 = vrot.slane %v4482, %v4495
  %v4498 = vunpack.c.l.s4 286326784
  %v4499 = vunpack.c.0.s8 %v4498
  %v4500 = vlaneseq
  %v4501 = vshrl.u32 %v4500, 7
  %v4502 = vsub.s32 %v4499, %v4501
  %v4503 = vrot.slane %v4483, %v4502
  %v4505 = vunpack.c.l.s4 286326784
  %v4506 = vunpack.c.0.s8 %v4505
  %v4507 = vlaneseq
  %v4508 = vshrl.u32 %v4507, 7
  %v4509 = vsub.s32 %v4506, %v4508
  %v4510 = vrot.slane %v4484, %v4509
  %v4512 = vunpack.c.l.s4 286326784
  %v4513 = vunpack.c.0.s8 %v4512
  %v4514 = vlaneseq
  %v4515 = vshrl.u32 %v4514, 7
  %v4516 = vsub.s32 %v4513, %v4515
  %v4517 = vrot.slane %v4485, %v4516
  %v4519 = vunpack.c.l.s4 286326784
  %v4520 = vunpack.c.0.s8 %v4519
  %v4521 = vlaneseq
  %v4522 = vshrl.u32 %v4521, 7
  %v4523 = vsub.s32 %v4520, %v4522
  %v4524 = vrot.slane %v4486, %v4523
  %v4526 = vunpack.c.l.s4 286326784
  %v4527 = vunpack.c.0.s8 %v4526
  %v4528 = vlaneseq
  %v4529 = vshrl.u32 %v4528, 7
  %v4530 = vsub.s32 %v4527, %v4529
  %v4531 = vrot.slane %v4487, %v4530
  %v4533 = vunpack.c.l.s4 286326784
  %v4534 = vunpack.c.0.s8 %v4533
  %v4535 = vlaneseq
  %v4536 = vshrl.u32 %v4535, 7
  %v4537 = vsub.s32 %v4534, %v4536
  %v4538 = vrot.slane %v4488, %v4537
  %v4540 = vunpack.c.l.s4 286326784
  %v4541 = vunpack.c.0.s8 %v4540
  %v4542 = vlaneseq
  %v4543 = vshrl.u32 %v4542, 7
  %v4544 = vsub.s32 %v4541, %v4543
  %v4545 = vrot.slane %v4489, %v4544
  %v4554 = vld [vmem:[%s4 + $0x4] sm:$0x1]
  %v4555 = vsel %vm832, %v4496, %v4554
  %4556 = vst [vmem:[%s4 + $0x4] sm:$0x1] %v4555
  %v4557 = vld [vmem:[%s4 + $0xc] sm:$0x1]
  %v4558 = vsel %vm832, %v4503, %v4557
  %4559 = vst [vmem:[%s4 + $0xc] sm:$0x1] %v4558
  %v4560 = vld [vmem:[%s4 + $0x14] sm:$0x1]
  %v4561 = vsel %vm832, %v4510, %v4560
  %4562 = vst [vmem:[%s4 + $0x14] sm:$0x1] %v4561
  %v4563 = vld [vmem:[%s4 + $0x1c] sm:$0x1]
  %v4564 = vsel %vm832, %v4517, %v4563
  %4565 = vst [vmem:[%s4 + $0x1c] sm:$0x1] %v4564
  %v4566 = vld [vmem:[%s4 + $0x24] sm:$0x1]
  %v4567 = vsel %vm832, %v4524, %v4566
  %4568 = vst [vmem:[%s4 + $0x24] sm:$0x1] %v4567
  %v4569 = vld [vmem:[%s4 + $0x2c] sm:$0x1]
  %v4570 = vsel %vm832, %v4531, %v4569
  %4571 = vst [vmem:[%s4 + $0x2c] sm:$0x1] %v4570
  %v4572 = vld [vmem:[%s4 + $0x34] sm:$0x1]
  %v4573 = vsel %vm832, %v4538, %v4572
  %4574 = vst [vmem:[%s4 + $0x34] sm:$0x1] %v4573
  %v4575 = vld [vmem:[%s4 + $0x3c] sm:$0x1]
  %v4576 = vsel %vm832, %v4545, %v4575
  %4577 = vst [vmem:[%s4 + $0x3c] sm:$0x1] %v4576
  %s4578 = scalar_lea.vmem %s0, 160
  %v4579 = vld [vmem:[%s4578] sm:$0xff]
  %v4580 = vld [vmem:[%s4578 + $0x8] sm:$0xff]
  %v4581 = vunpack.c.l.bf16 %v4579
  %v4582 = vunpack.c.h.bf16 %v4579
  %v4583 = vunpack.c.l.bf16 %v4580
  %v4584 = vunpack.c.h.bf16 %v4580
  %4585 = vmatprep.subr.mxu0 %v24
  %4586 = vmatpush1.msra.mxu0 %v23
  %4587 = vmatprep.subr.mxu0 %v28
  %4588 = vmatpush1.msra.mxu0 %v27
  %4589 = vmatprep.subr.mxu0 %v32
  %4590 = vmatpush1.msra.mxu0 %v31
  %4591 = vmatprep.subr.mxu0 %v36
  %4592 = vmatpush1.msra.mxu0 %v35
  %4593 = vmatprep.subr.mxu0 %v40
  %4594 = vmatpush1.msra.mxu0 %v39
  %4595 = vmatprep.subr.mxu0 %v44
  %4596 = vmatpush1.msra.mxu0 %v43
  %4597 = vmatprep.subr.mxu0 %v48
  %4598 = vmatpush1.msra.mxu0 %v47
  %4599 = vmatprep.subr.mxu0 %v52
  %4600 = vmatpush1.msra.mxu0 %v51
  %4601 = vmatprep.subr.mxu0 %v56
  %4602 = vmatpush1.msra.mxu0 %v55
  %4603 = vmatprep.subr.mxu0 %v60
  %4604 = vmatpush1.msra.mxu0 %v59
  %4605 = vmatprep.subr.mxu0 %v64
  %4606 = vmatpush1.msra.mxu0 %v63
  %4607 = vmatprep.subr.mxu0 %v68
  %4608 = vmatpush1.msra.mxu0 %v67
  %4609 = vmatprep.subr.mxu0 %v72
  %4610 = vmatpush1.msra.mxu0 %v71
  %4611 = vmatprep.subr.mxu0 %v76
  %4612 = vmatpush1.msra.mxu0 %v75
  %4613 = vmatprep.subr.mxu0 %v80
  %4614 = vmatpush1.msra.mxu0 %v79
  %4615 = vmatprep.subr.mxu0 %v84
  %4616 = vmatpush1.msra.mxu0 %v83
  %4617 = vmatprep.subr.mxu0 0.0
  %4618 = vmatpush1.msra.mxu0 0.0
  %4619 = vmatprep.subr.mxu0 0.0
  %4620 = vmatpush1.msra.mxu0 0.0
  %4621 = vmatprep.subr.mxu0 0.0
  %4622 = vmatpush1.msra.mxu0 0.0
  %4623 = vmatprep.subr.mxu0 0.0
  %4624 = vmatpush1.msra.mxu0 0.0
  %4625 = vmatprep.subr.mxu0 0.0
  %4626 = vmatpush1.msra.mxu0 0.0
  %4627 = vmatprep.subr.mxu0 0.0
  %4628 = vmatpush1.msra.mxu0 0.0
  %4629 = vmatprep.subr.mxu0 0.0
  %4630 = vmatpush1.msra.mxu0 0.0
  %4631 = vmatprep.subr.mxu0 0.0
  %4632 = vmatpush1.msra.mxu0 0.0
  %4633 = vmatprep.subr.mxu0 0.0
  %4634 = vmatpush1.msra.mxu0 0.0
  %4635 = vmatprep.subr.mxu0 0.0
  %4636 = vmatpush1.msra.mxu0 0.0
  %4637 = vmatprep.subr.mxu0 0.0
  %4638 = vmatpush1.msra.mxu0 0.0
  %4639 = vmatprep.subr.mxu0 0.0
  %4640 = vmatpush1.msra.mxu0 0.0
  %4641 = vmatprep.subr.mxu0 0.0
  %4642 = vmatpush1.msra.mxu0 0.0
  %4643 = vmatprep.subr.mxu0 0.0
  %4644 = vmatpush1.msra.mxu0 0.0
  %4645 = vmatprep.subr.mxu0 0.0
  %4646 = vmatpush1.msra.mxu0 0.0
  %4647 = vmatprep.subr.mxu0 0.0
  %4648 = vmatpush1.msra.mxu0 0.0
  %4649 = vmatprep.mubr.f32.mxu0 0.0
  %4650 = vmatmul.mubr.f32.gmra.mrb[0].mxu0 %v4316
  %v4651 = vpop.f32.mrb[0].mxu0
  %v4652 = vadd.f32 0.0, %v4651
  %v4653 = vpop.f32.mrb[0].mxu0
  %v4654 = vadd.f32 0.0, %v4653
  %4655 = vdwg.mxu0
  %4656 = vmatprep.subr.mxu0 %v26
  %4657 = vmatpush1.msra.mxu0 %v25
  %4658 = vmatprep.subr.mxu0 %v30
  %4659 = vmatpush1.msra.mxu0 %v29
  %4660 = vmatprep.subr.mxu0 %v34
  %4661 = vmatpush1.msra.mxu0 %v33
  %4662 = vmatprep.subr.mxu0 %v38
  %4663 = vmatpush1.msra.mxu0 %v37
  %4664 = vmatprep.subr.mxu0 %v42
  %4665 = vmatpush1.msra.mxu0 %v41
  %4666 = vmatprep.subr.mxu0 %v46
  %4667 = vmatpush1.msra.mxu0 %v45
  %4668 = vmatprep.subr.mxu0 %v50
  %4669 = vmatpush1.msra.mxu0 %v49
  %4670 = vmatprep.subr.mxu0 %v54
  %4671 = vmatpush1.msra.mxu0 %v53
  %4672 = vmatprep.subr.mxu0 %v58
  %4673 = vmatpush1.msra.mxu0 %v57
  %4674 = vmatprep.subr.mxu0 %v62
  %4675 = vmatpush1.msra.mxu0 %v61
  %4676 = vmatprep.subr.mxu0 %v66
  %4677 = vmatpush1.msra.mxu0 %v65
  %4678 = vmatprep.subr.mxu0 %v70
  %4679 = vmatpush1.msra.mxu0 %v69
  %4680 = vmatprep.subr.mxu0 %v74
  %4681 = vmatpush1.msra.mxu0 %v73
  %4682 = vmatprep.subr.mxu0 %v78
  %4683 = vmatpush1.msra.mxu0 %v77
  %4684 = vmatprep.subr.mxu0 %v82
  %4685 = vmatpush1.msra.mxu0 %v81
  %4686 = vmatprep.subr.mxu0 %v86
  %4687 = vmatpush1.msra.mxu0 %v85
  %4688 = vmatprep.subr.mxu0 0.0
  %4689 = vmatpush1.msra.mxu0 0.0
  %4690 = vmatprep.subr.mxu0 0.0
  %4691 = vmatpush1.msra.mxu0 0.0
  %4692 = vmatprep.subr.mxu0 0.0
  %4693 = vmatpush1.msra.mxu0 0.0
  %4694 = vmatprep.subr.mxu0 0.0
  %4695 = vmatpush1.msra.mxu0 0.0
  %4696 = vmatprep.subr.mxu0 0.0
  %4697 = vmatpush1.msra.mxu0 0.0
  %4698 = vmatprep.subr.mxu0 0.0
  %4699 = vmatpush1.msra.mxu0 0.0
  %4700 = vmatprep.subr.mxu0 0.0
  %4701 = vmatpush1.msra.mxu0 0.0
  %4702 = vmatprep.subr.mxu0 0.0
  %4703 = vmatpush1.msra.mxu0 0.0
  %4704 = vmatprep.subr.mxu0 0.0
  %4705 = vmatpush1.msra.mxu0 0.0
  %4706 = vmatprep.subr.mxu0 0.0
  %4707 = vmatpush1.msra.mxu0 0.0
  %4708 = vmatprep.subr.mxu0 0.0
  %4709 = vmatpush1.msra.mxu0 0.0
  %4710 = vmatprep.subr.mxu0 0.0
  %4711 = vmatpush1.msra.mxu0 0.0
  %4712 = vmatprep.subr.mxu0 0.0
  %4713 = vmatpush1.msra.mxu0 0.0
  %4714 = vmatprep.subr.mxu0 0.0
  %4715 = vmatpush1.msra.mxu0 0.0
  %4716 = vmatprep.subr.mxu0 0.0
  %4717 = vmatpush1.msra.mxu0 0.0
  %4718 = vmatprep.subr.mxu0 0.0
  %4719 = vmatpush1.msra.mxu0 0.0
  %4720 = vmatprep.mubr.f32.mxu0 0.0
  %4721 = vmatmul.mubr.f32.gmra.mrb[0].mxu0 %v4316
  %v4722 = vpop.f32.mrb[0].mxu0
  %v4723 = vadd.f32 0.0, %v4722
  %v4724 = vpop.f32.mrb[0].mxu0
  %v4725 = vadd.f32 0.0, %v4724
  %4726 = vdwg.mxu0
  %v4727 = vadd.f32 %v4581, %v4652
  %v4728 = vadd.f32 %v4582, %v4654
  %v4729 = vadd.f32 %v4583, %v4723
  %v4730 = vadd.f32 %v4584, %v4725
  %v4731 = vxor.u32 %v4727, 2147483648
  %v4732 = vmul.f32 %v4731, 1.442695
  %v4733 = vpow.pop %v4732
  %v4734 = vadd.f32 %v4733, 1.0
  %v4735 = vrcp.pop %v4734
  %v4736 = vmul.f32 1.0, %v4735
  %v4737 = vxor.u32 %v4728, 2147483648
  %v4738 = vmul.f32 %v4737, 1.442695
  %v4739 = vpow.pop %v4738
  %v4740 = vadd.f32 %v4739, 1.0
  %v4741 = vrcp.pop %v4740
  %v4742 = vmul.f32 1.0, %v4741
  %v4743 = vtanh.pop %v4729
  %v4744 = vxor.u32 %v4730, 2147483648
  %v4745 = vmul.f32 %v4744, 1.442695
  %v4746 = vpow.pop %v4745
  %v4747 = vadd.f32 %v4746, 1.0
  %v4748 = vrcp.pop %v4747
  %v4749 = vmul.f32 1.0, %v4748
  %v4750 = vmul.f32 %v4742, %v4317
  %v4751 = vmul.f32 %v4736, %v4743
  %v4752 = vadd.f32 %v4750, %v4751
  %v4753 = vtanh.pop %v4752
  %v4754 = vmul.f32 %v4749, %v4753
  %s4755 = sadd.s32 %s89, 10
  %v4756 = vstv %s4755
  %vm4757 = vcmp.lt.s32.totalorder %v4756, %v22
  %v4758 = vsel %vm4757, 1, 0
  %4759 = vset.pattern.permute.xlu0 0
  %4760 = vperm.xlu0 %4759, %v4758
  %v4761 = vpop.permute.xlu0 %4760
  %vm4762 = vcmp.eq.s32.totalorder %v4761, 1
  %v4763 = vsel %vm4762, %v4754, %v4316
  %v4764 = vsel %vm4762, %v4752, %v4317
  %v4765 = vpack.c.bf16 %v4763, %v4763
  %v4768 = vunpack.c.l.s4 1966171168
  %v4769 = vunpack.c.0.s8 %v4768
  %v4770 = vlaneseq
  %v4771 = vshrl.u32 %v4770, 7
  %v4772 = vsub.s32 %v4769, %v4771
  %v4773 = vrot.slane %v4765, %v4772
  %v4774 = vcombine.high %v4773, %v4773
  %v4776 = vunpack.c.l.s4 1966171168
  %v4777 = vunpack.c.0.s8 %v4776
  %v4778 = vlaneseq
  %v4779 = vshrl.u32 %v4778, 7
  %v4780 = vsub.s32 %v4777, %v4779
  %v4781 = vrot.slane %v4773, %v4780
  %v4783 = vunpack.c.l.s4 1966171168
  %v4784 = vunpack.c.0.s8 %v4783
  %v4785 = vlaneseq
  %v4786 = vshrl.u32 %v4785, 7
  %v4787 = vsub.s32 %v4784, %v4786
  %v4788 = vrot.slane %v4774, %v4787
  %v4789 = vcombine.high %v4781, %v4781
  %v4790 = vcombine.high %v4788, %v4788
  %v4791 = vunpack.i.l.s16 %v4781
  %v4792 = vunpack.i.h.s16 %v4781
  %v4793 = vunpack.i.l.s16 %v4788
  %v4794 = vunpack.i.h.s16 %v4788
  %v4795 = vunpack.i.l.s16 %v4789
  %v4796 = vunpack.i.h.s16 %v4789
  %v4797 = vunpack.i.l.s16 %v4790
  %v4798 = vunpack.i.h.s16 %v4790
  %v4799 = vpack.i.b16 %v4791, %v4791
  %v4800 = vpack.i.b16 %v4792, %v4792
  %v4801 = vpack.i.b16 %v4793, %v4793
  %v4802 = vpack.i.b16 %v4794, %v4794
  %v4803 = vpack.i.b16 %v4795, %v4795
  %v4804 = vpack.i.b16 %v4796, %v4796
  %v4805 = vpack.i.b16 %v4797, %v4797
  %v4806 = vpack.i.b16 %v4798, %v4798
  %v4808 = vunpack.c.l.s4 286326784
  %v4809 = vunpack.c.0.s8 %v4808
  %v4810 = vlaneseq
  %v4811 = vshrl.u32 %v4810, 7
  %v4812 = vsub.s32 %v4809, %v4811
  %v4813 = vrot.slane %v4799, %v4812
  %v4815 = vunpack.c.l.s4 286326784
  %v4816 = vunpack.c.0.s8 %v4815
  %v4817 = vlaneseq
  %v4818 = vshrl.u32 %v4817, 7
  %v4819 = vsub.s32 %v4816, %v4818
  %v4820 = vrot.slane %v4800, %v4819
  %v4822 = vunpack.c.l.s4 286326784
  %v4823 = vunpack.c.0.s8 %v4822
  %v4824 = vlaneseq
  %v4825 = vshrl.u32 %v4824, 7
  %v4826 = vsub.s32 %v4823, %v4825
  %v4827 = vrot.slane %v4801, %v4826
  %v4829 = vunpack.c.l.s4 286326784
  %v4830 = vunpack.c.0.s8 %v4829
  %v4831 = vlaneseq
  %v4832 = vshrl.u32 %v4831, 7
  %v4833 = vsub.s32 %v4830, %v4832
  %v4834 = vrot.slane %v4802, %v4833
  %v4836 = vunpack.c.l.s4 286326784
  %v4837 = vunpack.c.0.s8 %v4836
  %v4838 = vlaneseq
  %v4839 = vshrl.u32 %v4838, 7
  %v4840 = vsub.s32 %v4837, %v4839
  %v4841 = vrot.slane %v4803, %v4840
  %v4843 = vunpack.c.l.s4 286326784
  %v4844 = vunpack.c.0.s8 %v4843
  %v4845 = vlaneseq
  %v4846 = vshrl.u32 %v4845, 7
  %v4847 = vsub.s32 %v4844, %v4846
  %v4848 = vrot.slane %v4804, %v4847
  %v4850 = vunpack.c.l.s4 286326784
  %v4851 = vunpack.c.0.s8 %v4850
  %v4852 = vlaneseq
  %v4853 = vshrl.u32 %v4852, 7
  %v4854 = vsub.s32 %v4851, %v4853
  %v4855 = vrot.slane %v4805, %v4854
  %v4857 = vunpack.c.l.s4 286326784
  %v4858 = vunpack.c.0.s8 %v4857
  %v4859 = vlaneseq
  %v4860 = vshrl.u32 %v4859, 7
  %v4861 = vsub.s32 %v4858, %v4860
  %v4862 = vrot.slane %v4806, %v4861
  %v4871 = vld [vmem:[%s3 + $0x4] sm:$0x2]
  %v4872 = vsel %vm1282, %v4813, %v4871
  %4873 = vst [vmem:[%s3 + $0x4] sm:$0x2] %v4872
  %v4874 = vld [vmem:[%s3 + $0xc] sm:$0x2]
  %v4875 = vsel %vm1282, %v4820, %v4874
  %4876 = vst [vmem:[%s3 + $0xc] sm:$0x2] %v4875
  %v4877 = vld [vmem:[%s3 + $0x14] sm:$0x2]
  %v4878 = vsel %vm1282, %v4827, %v4877
  %4879 = vst [vmem:[%s3 + $0x14] sm:$0x2] %v4878
  %v4880 = vld [vmem:[%s3 + $0x1c] sm:$0x2]
  %v4881 = vsel %vm1282, %v4834, %v4880
  %4882 = vst [vmem:[%s3 + $0x1c] sm:$0x2] %v4881
  %v4883 = vld [vmem:[%s3 + $0x24] sm:$0x2]
  %v4884 = vsel %vm1282, %v4841, %v4883
  %4885 = vst [vmem:[%s3 + $0x24] sm:$0x2] %v4884
  %v4886 = vld [vmem:[%s3 + $0x2c] sm:$0x2]
  %v4887 = vsel %vm1282, %v4848, %v4886
  %4888 = vst [vmem:[%s3 + $0x2c] sm:$0x2] %v4887
  %v4889 = vld [vmem:[%s3 + $0x34] sm:$0x2]
  %v4890 = vsel %vm1282, %v4855, %v4889
  %4891 = vst [vmem:[%s3 + $0x34] sm:$0x2] %v4890
  %v4892 = vld [vmem:[%s3 + $0x3c] sm:$0x2]
  %v4893 = vsel %vm1282, %v4862, %v4892
  %4894 = vst [vmem:[%s3 + $0x3c] sm:$0x2] %v4893
  %v4895 = vpack.c.bf16 %v4764, %v4764
  %v4898 = vunpack.c.l.s4 1966171168
  %v4899 = vunpack.c.0.s8 %v4898
  %v4900 = vlaneseq
  %v4901 = vshrl.u32 %v4900, 7
  %v4902 = vsub.s32 %v4899, %v4901
  %v4903 = vrot.slane %v4895, %v4902
  %v4904 = vcombine.high %v4903, %v4903
  %v4906 = vunpack.c.l.s4 1966171168
  %v4907 = vunpack.c.0.s8 %v4906
  %v4908 = vlaneseq
  %v4909 = vshrl.u32 %v4908, 7
  %v4910 = vsub.s32 %v4907, %v4909
  %v4911 = vrot.slane %v4903, %v4910
  %v4913 = vunpack.c.l.s4 1966171168
  %v4914 = vunpack.c.0.s8 %v4913
  %v4915 = vlaneseq
  %v4916 = vshrl.u32 %v4915, 7
  %v4917 = vsub.s32 %v4914, %v4916
  %v4918 = vrot.slane %v4904, %v4917
  %v4919 = vcombine.high %v4911, %v4911
  %v4920 = vcombine.high %v4918, %v4918
  %v4921 = vunpack.i.l.s16 %v4911
  %v4922 = vunpack.i.h.s16 %v4911
  %v4923 = vunpack.i.l.s16 %v4918
  %v4924 = vunpack.i.h.s16 %v4918
  %v4925 = vunpack.i.l.s16 %v4919
  %v4926 = vunpack.i.h.s16 %v4919
  %v4927 = vunpack.i.l.s16 %v4920
  %v4928 = vunpack.i.h.s16 %v4920
  %v4929 = vpack.i.b16 %v4921, %v4921
  %v4930 = vpack.i.b16 %v4922, %v4922
  %v4931 = vpack.i.b16 %v4923, %v4923
  %v4932 = vpack.i.b16 %v4924, %v4924
  %v4933 = vpack.i.b16 %v4925, %v4925
  %v4934 = vpack.i.b16 %v4926, %v4926
  %v4935 = vpack.i.b16 %v4927, %v4927
  %v4936 = vpack.i.b16 %v4928, %v4928
  %v4938 = vunpack.c.l.s4 286326784
  %v4939 = vunpack.c.0.s8 %v4938
  %v4940 = vlaneseq
  %v4941 = vshrl.u32 %v4940, 7
  %v4942 = vsub.s32 %v4939, %v4941
  %v4943 = vrot.slane %v4929, %v4942
  %v4945 = vunpack.c.l.s4 286326784
  %v4946 = vunpack.c.0.s8 %v4945
  %v4947 = vlaneseq
  %v4948 = vshrl.u32 %v4947, 7
  %v4949 = vsub.s32 %v4946, %v4948
  %v4950 = vrot.slane %v4930, %v4949
  %v4952 = vunpack.c.l.s4 286326784
  %v4953 = vunpack.c.0.s8 %v4952
  %v4954 = vlaneseq
  %v4955 = vshrl.u32 %v4954, 7
  %v4956 = vsub.s32 %v4953, %v4955
  %v4957 = vrot.slane %v4931, %v4956
  %v4959 = vunpack.c.l.s4 286326784
  %v4960 = vunpack.c.0.s8 %v4959
  %v4961 = vlaneseq
  %v4962 = vshrl.u32 %v4961, 7
  %v4963 = vsub.s32 %v4960, %v4962
  %v4964 = vrot.slane %v4932, %v4963
  %v4966 = vunpack.c.l.s4 286326784
  %v4967 = vunpack.c.0.s8 %v4966
  %v4968 = vlaneseq
  %v4969 = vshrl.u32 %v4968, 7
  %v4970 = vsub.s32 %v4967, %v4969
  %v4971 = vrot.slane %v4933, %v4970
  %v4973 = vunpack.c.l.s4 286326784
  %v4974 = vunpack.c.0.s8 %v4973
  %v4975 = vlaneseq
  %v4976 = vshrl.u32 %v4975, 7
  %v4977 = vsub.s32 %v4974, %v4976
  %v4978 = vrot.slane %v4934, %v4977
  %v4980 = vunpack.c.l.s4 286326784
  %v4981 = vunpack.c.0.s8 %v4980
  %v4982 = vlaneseq
  %v4983 = vshrl.u32 %v4982, 7
  %v4984 = vsub.s32 %v4981, %v4983
  %v4985 = vrot.slane %v4935, %v4984
  %v4987 = vunpack.c.l.s4 286326784
  %v4988 = vunpack.c.0.s8 %v4987
  %v4989 = vlaneseq
  %v4990 = vshrl.u32 %v4989, 7
  %v4991 = vsub.s32 %v4988, %v4990
  %v4992 = vrot.slane %v4936, %v4991
  %v5001 = vld [vmem:[%s4 + $0x4] sm:$0x2]
  %v5002 = vsel %vm1282, %v4943, %v5001
  %5003 = vst [vmem:[%s4 + $0x4] sm:$0x2] %v5002
  %v5004 = vld [vmem:[%s4 + $0xc] sm:$0x2]
  %v5005 = vsel %vm1282, %v4950, %v5004
  %5006 = vst [vmem:[%s4 + $0xc] sm:$0x2] %v5005
  %v5007 = vld [vmem:[%s4 + $0x14] sm:$0x2]
  %v5008 = vsel %vm1282, %v4957, %v5007
  %5009 = vst [vmem:[%s4 + $0x14] sm:$0x2] %v5008
  %v5010 = vld [vmem:[%s4 + $0x1c] sm:$0x2]
  %v5011 = vsel %vm1282, %v4964, %v5010
  %5012 = vst [vmem:[%s4 + $0x1c] sm:$0x2] %v5011
  %v5013 = vld [vmem:[%s4 + $0x24] sm:$0x2]
  %v5014 = vsel %vm1282, %v4971, %v5013
  %5015 = vst [vmem:[%s4 + $0x24] sm:$0x2] %v5014
  %v5016 = vld [vmem:[%s4 + $0x2c] sm:$0x2]
  %v5017 = vsel %vm1282, %v4978, %v5016
  %5018 = vst [vmem:[%s4 + $0x2c] sm:$0x2] %v5017
  %v5019 = vld [vmem:[%s4 + $0x34] sm:$0x2]
  %v5020 = vsel %vm1282, %v4985, %v5019
  %5021 = vst [vmem:[%s4 + $0x34] sm:$0x2] %v5020
  %v5022 = vld [vmem:[%s4 + $0x3c] sm:$0x2]
  %v5023 = vsel %vm1282, %v4992, %v5022
  %5024 = vst [vmem:[%s4 + $0x3c] sm:$0x2] %v5023
  %s5025 = scalar_lea.vmem %s0, 176
  %v5026 = vld [vmem:[%s5025] sm:$0xff]
  %v5027 = vld [vmem:[%s5025 + $0x8] sm:$0xff]
  %v5028 = vunpack.c.l.bf16 %v5026
  %v5029 = vunpack.c.h.bf16 %v5026
  %v5030 = vunpack.c.l.bf16 %v5027
  %v5031 = vunpack.c.h.bf16 %v5027
  %5032 = vmatprep.subr.mxu0 %v24
  %5033 = vmatpush1.msra.mxu0 %v23
  %5034 = vmatprep.subr.mxu0 %v28
  %5035 = vmatpush1.msra.mxu0 %v27
  %5036 = vmatprep.subr.mxu0 %v32
  %5037 = vmatpush1.msra.mxu0 %v31
  %5038 = vmatprep.subr.mxu0 %v36
  %5039 = vmatpush1.msra.mxu0 %v35
  %5040 = vmatprep.subr.mxu0 %v40
  %5041 = vmatpush1.msra.mxu0 %v39
  %5042 = vmatprep.subr.mxu0 %v44
  %5043 = vmatpush1.msra.mxu0 %v43
  %5044 = vmatprep.subr.mxu0 %v48
  %5045 = vmatpush1.msra.mxu0 %v47
  %5046 = vmatprep.subr.mxu0 %v52
  %5047 = vmatpush1.msra.mxu0 %v51
  %5048 = vmatprep.subr.mxu0 %v56
  %5049 = vmatpush1.msra.mxu0 %v55
  %5050 = vmatprep.subr.mxu0 %v60
  %5051 = vmatpush1.msra.mxu0 %v59
  %5052 = vmatprep.subr.mxu0 %v64
  %5053 = vmatpush1.msra.mxu0 %v63
  %5054 = vmatprep.subr.mxu0 %v68
  %5055 = vmatpush1.msra.mxu0 %v67
  %5056 = vmatprep.subr.mxu0 %v72
  %5057 = vmatpush1.msra.mxu0 %v71
  %5058 = vmatprep.subr.mxu0 %v76
  %5059 = vmatpush1.msra.mxu0 %v75
  %5060 = vmatprep.subr.mxu0 %v80
  %5061 = vmatpush1.msra.mxu0 %v79
  %5062 = vmatprep.subr.mxu0 %v84
  %5063 = vmatpush1.msra.mxu0 %v83
  %5064 = vmatprep.subr.mxu0 0.0
  %5065 = vmatpush1.msra.mxu0 0.0
  %5066 = vmatprep.subr.mxu0 0.0
  %5067 = vmatpush1.msra.mxu0 0.0
  %5068 = vmatprep.subr.mxu0 0.0
  %5069 = vmatpush1.msra.mxu0 0.0
  %5070 = vmatprep.subr.mxu0 0.0
  %5071 = vmatpush1.msra.mxu0 0.0
  %5072 = vmatprep.subr.mxu0 0.0
  %5073 = vmatpush1.msra.mxu0 0.0
  %5074 = vmatprep.subr.mxu0 0.0
  %5075 = vmatpush1.msra.mxu0 0.0
  %5076 = vmatprep.subr.mxu0 0.0
  %5077 = vmatpush1.msra.mxu0 0.0
  %5078 = vmatprep.subr.mxu0 0.0
  %5079 = vmatpush1.msra.mxu0 0.0
  %5080 = vmatprep.subr.mxu0 0.0
  %5081 = vmatpush1.msra.mxu0 0.0
  %5082 = vmatprep.subr.mxu0 0.0
  %5083 = vmatpush1.msra.mxu0 0.0
  %5084 = vmatprep.subr.mxu0 0.0
  %5085 = vmatpush1.msra.mxu0 0.0
  %5086 = vmatprep.subr.mxu0 0.0
  %5087 = vmatpush1.msra.mxu0 0.0
  %5088 = vmatprep.subr.mxu0 0.0
  %5089 = vmatpush1.msra.mxu0 0.0
  %5090 = vmatprep.subr.mxu0 0.0
  %5091 = vmatpush1.msra.mxu0 0.0
  %5092 = vmatprep.subr.mxu0 0.0
  %5093 = vmatpush1.msra.mxu0 0.0
  %5094 = vmatprep.subr.mxu0 0.0
  %5095 = vmatpush1.msra.mxu0 0.0
  %5096 = vmatprep.mubr.f32.mxu0 0.0
  %5097 = vmatmul.mubr.f32.gmra.mrb[0].mxu0 %v4763
  %v5098 = vpop.f32.mrb[0].mxu0
  %v5099 = vadd.f32 0.0, %v5098
  %v5100 = vpop.f32.mrb[0].mxu0
  %v5101 = vadd.f32 0.0, %v5100
  %5102 = vdwg.mxu0
  %5103 = vmatprep.subr.mxu0 %v26
  %5104 = vmatpush1.msra.mxu0 %v25
  %5105 = vmatprep.subr.mxu0 %v30
  %5106 = vmatpush1.msra.mxu0 %v29
  %5107 = vmatprep.subr.mxu0 %v34
  %5108 = vmatpush1.msra.mxu0 %v33
  %5109 = vmatprep.subr.mxu0 %v38
  %5110 = vmatpush1.msra.mxu0 %v37
  %5111 = vmatprep.subr.mxu0 %v42
  %5112 = vmatpush1.msra.mxu0 %v41
  %5113 = vmatprep.subr.mxu0 %v46
  %5114 = vmatpush1.msra.mxu0 %v45
  %5115 = vmatprep.subr.mxu0 %v50
  %5116 = vmatpush1.msra.mxu0 %v49
  %5117 = vmatprep.subr.mxu0 %v54
  %5118 = vmatpush1.msra.mxu0 %v53
  %5119 = vmatprep.subr.mxu0 %v58
  %5120 = vmatpush1.msra.mxu0 %v57
  %5121 = vmatprep.subr.mxu0 %v62
  %5122 = vmatpush1.msra.mxu0 %v61
  %5123 = vmatprep.subr.mxu0 %v66
  %5124 = vmatpush1.msra.mxu0 %v65
  %5125 = vmatprep.subr.mxu0 %v70
  %5126 = vmatpush1.msra.mxu0 %v69
  %5127 = vmatprep.subr.mxu0 %v74
  %5128 = vmatpush1.msra.mxu0 %v73
  %5129 = vmatprep.subr.mxu0 %v78
  %5130 = vmatpush1.msra.mxu0 %v77
  %5131 = vmatprep.subr.mxu0 %v82
  %5132 = vmatpush1.msra.mxu0 %v81
  %5133 = vmatprep.subr.mxu0 %v86
  %5134 = vmatpush1.msra.mxu0 %v85
  %5135 = vmatprep.subr.mxu0 0.0
  %5136 = vmatpush1.msra.mxu0 0.0
  %5137 = vmatprep.subr.mxu0 0.0
  %5138 = vmatpush1.msra.mxu0 0.0
  %5139 = vmatprep.subr.mxu0 0.0
  %5140 = vmatpush1.msra.mxu0 0.0
  %5141 = vmatprep.subr.mxu0 0.0
  %5142 = vmatpush1.msra.mxu0 0.0
  %5143 = vmatprep.subr.mxu0 0.0
  %5144 = vmatpush1.msra.mxu0 0.0
  %5145 = vmatprep.subr.mxu0 0.0
  %5146 = vmatpush1.msra.mxu0 0.0
  %5147 = vmatprep.subr.mxu0 0.0
  %5148 = vmatpush1.msra.mxu0 0.0
  %5149 = vmatprep.subr.mxu0 0.0
  %5150 = vmatpush1.msra.mxu0 0.0
  %5151 = vmatprep.subr.mxu0 0.0
  %5152 = vmatpush1.msra.mxu0 0.0
  %5153 = vmatprep.subr.mxu0 0.0
  %5154 = vmatpush1.msra.mxu0 0.0
  %5155 = vmatprep.subr.mxu0 0.0
  %5156 = vmatpush1.msra.mxu0 0.0
  %5157 = vmatprep.subr.mxu0 0.0
  %5158 = vmatpush1.msra.mxu0 0.0
  %5159 = vmatprep.subr.mxu0 0.0
  %5160 = vmatpush1.msra.mxu0 0.0
  %5161 = vmatprep.subr.mxu0 0.0
  %5162 = vmatpush1.msra.mxu0 0.0
  %5163 = vmatprep.subr.mxu0 0.0
  %5164 = vmatpush1.msra.mxu0 0.0
  %5165 = vmatprep.subr.mxu0 0.0
  %5166 = vmatpush1.msra.mxu0 0.0
  %5167 = vmatprep.mubr.f32.mxu0 0.0
  %5168 = vmatmul.mubr.f32.gmra.mrb[0].mxu0 %v4763
  %v5169 = vpop.f32.mrb[0].mxu0
  %v5170 = vadd.f32 0.0, %v5169
  %v5171 = vpop.f32.mrb[0].mxu0
  %v5172 = vadd.f32 0.0, %v5171
  %5173 = vdwg.mxu0
  %v5174 = vadd.f32 %v5028, %v5099
  %v5175 = vadd.f32 %v5029, %v5101
  %v5176 = vadd.f32 %v5030, %v5170
  %v5177 = vadd.f32 %v5031, %v5172
  %v5178 = vxor.u32 %v5174, 2147483648
  %v5179 = vmul.f32 %v5178, 1.442695
  %v5180 = vpow.pop %v5179
  %v5181 = vadd.f32 %v5180, 1.0
  %v5182 = vrcp.pop %v5181
  %v5183 = vmul.f32 1.0, %v5182
  %v5184 = vxor.u32 %v5175, 2147483648
  %v5185 = vmul.f32 %v5184, 1.442695
  %v5186 = vpow.pop %v5185
  %v5187 = vadd.f32 %v5186, 1.0
  %v5188 = vrcp.pop %v5187
  %v5189 = vmul.f32 1.0, %v5188
  %v5190 = vtanh.pop %v5176
  %v5191 = vxor.u32 %v5177, 2147483648
  %v5192 = vmul.f32 %v5191, 1.442695
  %v5193 = vpow.pop %v5192
  %v5194 = vadd.f32 %v5193, 1.0
  %v5195 = vrcp.pop %v5194
  %v5196 = vmul.f32 1.0, %v5195
  %v5197 = vmul.f32 %v5189, %v4764
  %v5198 = vmul.f32 %v5183, %v5190
  %v5199 = vadd.f32 %v5197, %v5198
  %v5200 = vtanh.pop %v5199
  %v5201 = vmul.f32 %v5196, %v5200
  %s5202 = sadd.s32 %s89, 11
  %v5203 = vstv %s5202
  %vm5204 = vcmp.lt.s32.totalorder %v5203, %v22
  %v5205 = vsel %vm5204, 1, 0
  %5206 = vset.pattern.permute.xlu0 0
  %5207 = vperm.xlu0 %5206, %v5205
  %v5208 = vpop.permute.xlu0 %5207
  %vm5209 = vcmp.eq.s32.totalorder %v5208, 1
  %v5210 = vsel %vm5209, %v5201, %v4763
  %v5211 = vsel %vm5209, %v5199, %v4764
  %v5212 = vpack.c.bf16 %v5210, %v5210
  %v5215 = vunpack.c.l.s4 1966171168
  %v5216 = vunpack.c.0.s8 %v5215
  %v5217 = vlaneseq
  %v5218 = vshrl.u32 %v5217, 7
  %v5219 = vsub.s32 %v5216, %v5218
  %v5220 = vrot.slane %v5212, %v5219
  %v5221 = vcombine.high %v5220, %v5220
  %v5223 = vunpack.c.l.s4 1966171168
  %v5224 = vunpack.c.0.s8 %v5223
  %v5225 = vlaneseq
  %v5226 = vshrl.u32 %v5225, 7
  %v5227 = vsub.s32 %v5224, %v5226
  %v5228 = vrot.slane %v5220, %v5227
  %v5230 = vunpack.c.l.s4 1966171168
  %v5231 = vunpack.c.0.s8 %v5230
  %v5232 = vlaneseq
  %v5233 = vshrl.u32 %v5232, 7
  %v5234 = vsub.s32 %v5231, %v5233
  %v5235 = vrot.slane %v5221, %v5234
  %v5236 = vcombine.high %v5228, %v5228
  %v5237 = vcombine.high %v5235, %v5235
  %v5238 = vunpack.i.l.s16 %v5228
  %v5239 = vunpack.i.h.s16 %v5228
  %v5240 = vunpack.i.l.s16 %v5235
  %v5241 = vunpack.i.h.s16 %v5235
  %v5242 = vunpack.i.l.s16 %v5236
  %v5243 = vunpack.i.h.s16 %v5236
  %v5244 = vunpack.i.l.s16 %v5237
  %v5245 = vunpack.i.h.s16 %v5237
  %v5246 = vpack.i.b16 %v5238, %v5238
  %v5247 = vpack.i.b16 %v5239, %v5239
  %v5248 = vpack.i.b16 %v5240, %v5240
  %v5249 = vpack.i.b16 %v5241, %v5241
  %v5250 = vpack.i.b16 %v5242, %v5242
  %v5251 = vpack.i.b16 %v5243, %v5243
  %v5252 = vpack.i.b16 %v5244, %v5244
  %v5253 = vpack.i.b16 %v5245, %v5245
  %v5255 = vunpack.c.l.s4 286326784
  %v5256 = vunpack.c.0.s8 %v5255
  %v5257 = vlaneseq
  %v5258 = vshrl.u32 %v5257, 7
  %v5259 = vsub.s32 %v5256, %v5258
  %v5260 = vrot.slane %v5246, %v5259
  %v5262 = vunpack.c.l.s4 286326784
  %v5263 = vunpack.c.0.s8 %v5262
  %v5264 = vlaneseq
  %v5265 = vshrl.u32 %v5264, 7
  %v5266 = vsub.s32 %v5263, %v5265
  %v5267 = vrot.slane %v5247, %v5266
  %v5269 = vunpack.c.l.s4 286326784
  %v5270 = vunpack.c.0.s8 %v5269
  %v5271 = vlaneseq
  %v5272 = vshrl.u32 %v5271, 7
  %v5273 = vsub.s32 %v5270, %v5272
  %v5274 = vrot.slane %v5248, %v5273
  %v5276 = vunpack.c.l.s4 286326784
  %v5277 = vunpack.c.0.s8 %v5276
  %v5278 = vlaneseq
  %v5279 = vshrl.u32 %v5278, 7
  %v5280 = vsub.s32 %v5277, %v5279
  %v5281 = vrot.slane %v5249, %v5280
  %v5283 = vunpack.c.l.s4 286326784
  %v5284 = vunpack.c.0.s8 %v5283
  %v5285 = vlaneseq
  %v5286 = vshrl.u32 %v5285, 7
  %v5287 = vsub.s32 %v5284, %v5286
  %v5288 = vrot.slane %v5250, %v5287
  %v5290 = vunpack.c.l.s4 286326784
  %v5291 = vunpack.c.0.s8 %v5290
  %v5292 = vlaneseq
  %v5293 = vshrl.u32 %v5292, 7
  %v5294 = vsub.s32 %v5291, %v5293
  %v5295 = vrot.slane %v5251, %v5294
  %v5297 = vunpack.c.l.s4 286326784
  %v5298 = vunpack.c.0.s8 %v5297
  %v5299 = vlaneseq
  %v5300 = vshrl.u32 %v5299, 7
  %v5301 = vsub.s32 %v5298, %v5300
  %v5302 = vrot.slane %v5252, %v5301
  %v5304 = vunpack.c.l.s4 286326784
  %v5305 = vunpack.c.0.s8 %v5304
  %v5306 = vlaneseq
  %v5307 = vshrl.u32 %v5306, 7
  %v5308 = vsub.s32 %v5305, %v5307
  %v5309 = vrot.slane %v5253, %v5308
  %v5318 = vld [vmem:[%s3 + $0x4] sm:$0x2]
  %v5319 = vsel %vm1731, %v5260, %v5318
  %5320 = vst [vmem:[%s3 + $0x4] sm:$0x2] %v5319
  %v5321 = vld [vmem:[%s3 + $0xc] sm:$0x2]
  %v5322 = vsel %vm1731, %v5267, %v5321
  %5323 = vst [vmem:[%s3 + $0xc] sm:$0x2] %v5322
  %v5324 = vld [vmem:[%s3 + $0x14] sm:$0x2]
  %v5325 = vsel %vm1731, %v5274, %v5324
  %5326 = vst [vmem:[%s3 + $0x14] sm:$0x2] %v5325
  %v5327 = vld [vmem:[%s3 + $0x1c] sm:$0x2]
  %v5328 = vsel %vm1731, %v5281, %v5327
  %5329 = vst [vmem:[%s3 + $0x1c] sm:$0x2] %v5328
  %v5330 = vld [vmem:[%s3 + $0x24] sm:$0x2]
  %v5331 = vsel %vm1731, %v5288, %v5330
  %5332 = vst [vmem:[%s3 + $0x24] sm:$0x2] %v5331
  %v5333 = vld [vmem:[%s3 + $0x2c] sm:$0x2]
  %v5334 = vsel %vm1731, %v5295, %v5333
  %5335 = vst [vmem:[%s3 + $0x2c] sm:$0x2] %v5334
  %v5336 = vld [vmem:[%s3 + $0x34] sm:$0x2]
  %v5337 = vsel %vm1731, %v5302, %v5336
  %5338 = vst [vmem:[%s3 + $0x34] sm:$0x2] %v5337
  %v5339 = vld [vmem:[%s3 + $0x3c] sm:$0x2]
  %v5340 = vsel %vm1731, %v5309, %v5339
  %5341 = vst [vmem:[%s3 + $0x3c] sm:$0x2] %v5340
  %v5342 = vpack.c.bf16 %v5211, %v5211
  %v5345 = vunpack.c.l.s4 1966171168
  %v5346 = vunpack.c.0.s8 %v5345
  %v5347 = vlaneseq
  %v5348 = vshrl.u32 %v5347, 7
  %v5349 = vsub.s32 %v5346, %v5348
  %v5350 = vrot.slane %v5342, %v5349
  %v5351 = vcombine.high %v5350, %v5350
  %v5353 = vunpack.c.l.s4 1966171168
  %v5354 = vunpack.c.0.s8 %v5353
  %v5355 = vlaneseq
  %v5356 = vshrl.u32 %v5355, 7
  %v5357 = vsub.s32 %v5354, %v5356
  %v5358 = vrot.slane %v5350, %v5357
  %v5360 = vunpack.c.l.s4 1966171168
  %v5361 = vunpack.c.0.s8 %v5360
  %v5362 = vlaneseq
  %v5363 = vshrl.u32 %v5362, 7
  %v5364 = vsub.s32 %v5361, %v5363
  %v5365 = vrot.slane %v5351, %v5364
  %v5366 = vcombine.high %v5358, %v5358
  %v5367 = vcombine.high %v5365, %v5365
  %v5368 = vunpack.i.l.s16 %v5358
  %v5369 = vunpack.i.h.s16 %v5358
  %v5370 = vunpack.i.l.s16 %v5365
  %v5371 = vunpack.i.h.s16 %v5365
  %v5372 = vunpack.i.l.s16 %v5366
  %v5373 = vunpack.i.h.s16 %v5366
  %v5374 = vunpack.i.l.s16 %v5367
  %v5375 = vunpack.i.h.s16 %v5367
  %v5376 = vpack.i.b16 %v5368, %v5368
  %v5377 = vpack.i.b16 %v5369, %v5369
  %v5378 = vpack.i.b16 %v5370, %v5370
  %v5379 = vpack.i.b16 %v5371, %v5371
  %v5380 = vpack.i.b16 %v5372, %v5372
  %v5381 = vpack.i.b16 %v5373, %v5373
  %v5382 = vpack.i.b16 %v5374, %v5374
  %v5383 = vpack.i.b16 %v5375, %v5375
  %v5385 = vunpack.c.l.s4 286326784
  %v5386 = vunpack.c.0.s8 %v5385
  %v5387 = vlaneseq
  %v5388 = vshrl.u32 %v5387, 7
  %v5389 = vsub.s32 %v5386, %v5388
  %v5390 = vrot.slane %v5376, %v5389
  %v5392 = vunpack.c.l.s4 286326784
  %v5393 = vunpack.c.0.s8 %v5392
  %v5394 = vlaneseq
  %v5395 = vshrl.u32 %v5394, 7
  %v5396 = vsub.s32 %v5393, %v5395
  %v5397 = vrot.slane %v5377, %v5396
  %v5399 = vunpack.c.l.s4 286326784
  %v5400 = vunpack.c.0.s8 %v5399
  %v5401 = vlaneseq
  %v5402 = vshrl.u32 %v5401, 7
  %v5403 = vsub.s32 %v5400, %v5402
  %v5404 = vrot.slane %v5378, %v5403
  %v5406 = vunpack.c.l.s4 286326784
  %v5407 = vunpack.c.0.s8 %v5406
  %v5408 = vlaneseq
  %v5409 = vshrl.u32 %v5408, 7
  %v5410 = vsub.s32 %v5407, %v5409
  %v5411 = vrot.slane %v5379, %v5410
  %v5413 = vunpack.c.l.s4 286326784
  %v5414 = vunpack.c.0.s8 %v5413
  %v5415 = vlaneseq
  %v5416 = vshrl.u32 %v5415, 7
  %v5417 = vsub.s32 %v5414, %v5416
  %v5418 = vrot.slane %v5380, %v5417
  %v5420 = vunpack.c.l.s4 286326784
  %v5421 = vunpack.c.0.s8 %v5420
  %v5422 = vlaneseq
  %v5423 = vshrl.u32 %v5422, 7
  %v5424 = vsub.s32 %v5421, %v5423
  %v5425 = vrot.slane %v5381, %v5424
  %v5427 = vunpack.c.l.s4 286326784
  %v5428 = vunpack.c.0.s8 %v5427
  %v5429 = vlaneseq
  %v5430 = vshrl.u32 %v5429, 7
  %v5431 = vsub.s32 %v5428, %v5430
  %v5432 = vrot.slane %v5382, %v5431
  %v5434 = vunpack.c.l.s4 286326784
  %v5435 = vunpack.c.0.s8 %v5434
  %v5436 = vlaneseq
  %v5437 = vshrl.u32 %v5436, 7
  %v5438 = vsub.s32 %v5435, %v5437
  %v5439 = vrot.slane %v5383, %v5438
  %v5448 = vld [vmem:[%s4 + $0x4] sm:$0x2]
  %v5449 = vsel %vm1731, %v5390, %v5448
  %5450 = vst [vmem:[%s4 + $0x4] sm:$0x2] %v5449
  %v5451 = vld [vmem:[%s4 + $0xc] sm:$0x2]
  %v5452 = vsel %vm1731, %v5397, %v5451
  %5453 = vst [vmem:[%s4 + $0xc] sm:$0x2] %v5452
  %v5454 = vld [vmem:[%s4 + $0x14] sm:$0x2]
  %v5455 = vsel %vm1731, %v5404, %v5454
  %5456 = vst [vmem:[%s4 + $0x14] sm:$0x2] %v5455
  %v5457 = vld [vmem:[%s4 + $0x1c] sm:$0x2]
  %v5458 = vsel %vm1731, %v5411, %v5457
  %5459 = vst [vmem:[%s4 + $0x1c] sm:$0x2] %v5458
  %v5460 = vld [vmem:[%s4 + $0x24] sm:$0x2]
  %v5461 = vsel %vm1731, %v5418, %v5460
  %5462 = vst [vmem:[%s4 + $0x24] sm:$0x2] %v5461
  %v5463 = vld [vmem:[%s4 + $0x2c] sm:$0x2]
  %v5464 = vsel %vm1731, %v5425, %v5463
  %5465 = vst [vmem:[%s4 + $0x2c] sm:$0x2] %v5464
  %v5466 = vld [vmem:[%s4 + $0x34] sm:$0x2]
  %v5467 = vsel %vm1731, %v5432, %v5466
  %5468 = vst [vmem:[%s4 + $0x34] sm:$0x2] %v5467
  %v5469 = vld [vmem:[%s4 + $0x3c] sm:$0x2]
  %v5470 = vsel %vm1731, %v5439, %v5469
  %5471 = vst [vmem:[%s4 + $0x3c] sm:$0x2] %v5470
  %s5472 = scalar_lea.vmem %s0, 192
  %v5473 = vld [vmem:[%s5472] sm:$0xff]
  %v5474 = vld [vmem:[%s5472 + $0x8] sm:$0xff]
  %v5475 = vunpack.c.l.bf16 %v5473
  %v5476 = vunpack.c.h.bf16 %v5473
  %v5477 = vunpack.c.l.bf16 %v5474
  %v5478 = vunpack.c.h.bf16 %v5474
  %5479 = vmatprep.subr.mxu0 %v24
  %5480 = vmatpush1.msra.mxu0 %v23
  %5481 = vmatprep.subr.mxu0 %v28
  %5482 = vmatpush1.msra.mxu0 %v27
  %5483 = vmatprep.subr.mxu0 %v32
  %5484 = vmatpush1.msra.mxu0 %v31
  %5485 = vmatprep.subr.mxu0 %v36
  %5486 = vmatpush1.msra.mxu0 %v35
  %5487 = vmatprep.subr.mxu0 %v40
  %5488 = vmatpush1.msra.mxu0 %v39
  %5489 = vmatprep.subr.mxu0 %v44
  %5490 = vmatpush1.msra.mxu0 %v43
  %5491 = vmatprep.subr.mxu0 %v48
  %5492 = vmatpush1.msra.mxu0 %v47
  %5493 = vmatprep.subr.mxu0 %v52
  %5494 = vmatpush1.msra.mxu0 %v51
  %5495 = vmatprep.subr.mxu0 %v56
  %5496 = vmatpush1.msra.mxu0 %v55
  %5497 = vmatprep.subr.mxu0 %v60
  %5498 = vmatpush1.msra.mxu0 %v59
  %5499 = vmatprep.subr.mxu0 %v64
  %5500 = vmatpush1.msra.mxu0 %v63
  %5501 = vmatprep.subr.mxu0 %v68
  %5502 = vmatpush1.msra.mxu0 %v67
  %5503 = vmatprep.subr.mxu0 %v72
  %5504 = vmatpush1.msra.mxu0 %v71
  %5505 = vmatprep.subr.mxu0 %v76
  %5506 = vmatpush1.msra.mxu0 %v75
  %5507 = vmatprep.subr.mxu0 %v80
  %5508 = vmatpush1.msra.mxu0 %v79
  %5509 = vmatprep.subr.mxu0 %v84
  %5510 = vmatpush1.msra.mxu0 %v83
  %5511 = vmatprep.subr.mxu0 0.0
  %5512 = vmatpush1.msra.mxu0 0.0
  %5513 = vmatprep.subr.mxu0 0.0
  %5514 = vmatpush1.msra.mxu0 0.0
  %5515 = vmatprep.subr.mxu0 0.0
  %5516 = vmatpush1.msra.mxu0 0.0
  %5517 = vmatprep.subr.mxu0 0.0
  %5518 = vmatpush1.msra.mxu0 0.0
  %5519 = vmatprep.subr.mxu0 0.0
  %5520 = vmatpush1.msra.mxu0 0.0
  %5521 = vmatprep.subr.mxu0 0.0
  %5522 = vmatpush1.msra.mxu0 0.0
  %5523 = vmatprep.subr.mxu0 0.0
  %5524 = vmatpush1.msra.mxu0 0.0
  %5525 = vmatprep.subr.mxu0 0.0
  %5526 = vmatpush1.msra.mxu0 0.0
  %5527 = vmatprep.subr.mxu0 0.0
  %5528 = vmatpush1.msra.mxu0 0.0
  %5529 = vmatprep.subr.mxu0 0.0
  %5530 = vmatpush1.msra.mxu0 0.0
  %5531 = vmatprep.subr.mxu0 0.0
  %5532 = vmatpush1.msra.mxu0 0.0
  %5533 = vmatprep.subr.mxu0 0.0
  %5534 = vmatpush1.msra.mxu0 0.0
  %5535 = vmatprep.subr.mxu0 0.0
  %5536 = vmatpush1.msra.mxu0 0.0
  %5537 = vmatprep.subr.mxu0 0.0
  %5538 = vmatpush1.msra.mxu0 0.0
  %5539 = vmatprep.subr.mxu0 0.0
  %5540 = vmatpush1.msra.mxu0 0.0
  %5541 = vmatprep.subr.mxu0 0.0
  %5542 = vmatpush1.msra.mxu0 0.0
  %5543 = vmatprep.mubr.f32.mxu0 0.0
  %5544 = vmatmul.mubr.f32.gmra.mrb[0].mxu0 %v5210
  %v5545 = vpop.f32.mrb[0].mxu0
  %v5546 = vadd.f32 0.0, %v5545
  %v5547 = vpop.f32.mrb[0].mxu0
  %v5548 = vadd.f32 0.0, %v5547
  %5549 = vdwg.mxu0
  %5550 = vmatprep.subr.mxu0 %v26
  %5551 = vmatpush1.msra.mxu0 %v25
  %5552 = vmatprep.subr.mxu0 %v30
  %5553 = vmatpush1.msra.mxu0 %v29
  %5554 = vmatprep.subr.mxu0 %v34
  %5555 = vmatpush1.msra.mxu0 %v33
  %5556 = vmatprep.subr.mxu0 %v38
  %5557 = vmatpush1.msra.mxu0 %v37
  %5558 = vmatprep.subr.mxu0 %v42
  %5559 = vmatpush1.msra.mxu0 %v41
  %5560 = vmatprep.subr.mxu0 %v46
  %5561 = vmatpush1.msra.mxu0 %v45
  %5562 = vmatprep.subr.mxu0 %v50
  %5563 = vmatpush1.msra.mxu0 %v49
  %5564 = vmatprep.subr.mxu0 %v54
  %5565 = vmatpush1.msra.mxu0 %v53
  %5566 = vmatprep.subr.mxu0 %v58
  %5567 = vmatpush1.msra.mxu0 %v57
  %5568 = vmatprep.subr.mxu0 %v62
  %5569 = vmatpush1.msra.mxu0 %v61
  %5570 = vmatprep.subr.mxu0 %v66
  %5571 = vmatpush1.msra.mxu0 %v65
  %5572 = vmatprep.subr.mxu0 %v70
  %5573 = vmatpush1.msra.mxu0 %v69
  %5574 = vmatprep.subr.mxu0 %v74
  %5575 = vmatpush1.msra.mxu0 %v73
  %5576 = vmatprep.subr.mxu0 %v78
  %5577 = vmatpush1.msra.mxu0 %v77
  %5578 = vmatprep.subr.mxu0 %v82
  %5579 = vmatpush1.msra.mxu0 %v81
  %5580 = vmatprep.subr.mxu0 %v86
  %5581 = vmatpush1.msra.mxu0 %v85
  %5582 = vmatprep.subr.mxu0 0.0
  %5583 = vmatpush1.msra.mxu0 0.0
  %5584 = vmatprep.subr.mxu0 0.0
  %5585 = vmatpush1.msra.mxu0 0.0
  %5586 = vmatprep.subr.mxu0 0.0
  %5587 = vmatpush1.msra.mxu0 0.0
  %5588 = vmatprep.subr.mxu0 0.0
  %5589 = vmatpush1.msra.mxu0 0.0
  %5590 = vmatprep.subr.mxu0 0.0
  %5591 = vmatpush1.msra.mxu0 0.0
  %5592 = vmatprep.subr.mxu0 0.0
  %5593 = vmatpush1.msra.mxu0 0.0
  %5594 = vmatprep.subr.mxu0 0.0
  %5595 = vmatpush1.msra.mxu0 0.0
  %5596 = vmatprep.subr.mxu0 0.0
  %5597 = vmatpush1.msra.mxu0 0.0
  %5598 = vmatprep.subr.mxu0 0.0
  %5599 = vmatpush1.msra.mxu0 0.0
  %5600 = vmatprep.subr.mxu0 0.0
  %5601 = vmatpush1.msra.mxu0 0.0
  %5602 = vmatprep.subr.mxu0 0.0
  %5603 = vmatpush1.msra.mxu0 0.0
  %5604 = vmatprep.subr.mxu0 0.0
  %5605 = vmatpush1.msra.mxu0 0.0
  %5606 = vmatprep.subr.mxu0 0.0
  %5607 = vmatpush1.msra.mxu0 0.0
  %5608 = vmatprep.subr.mxu0 0.0
  %5609 = vmatpush1.msra.mxu0 0.0
  %5610 = vmatprep.subr.mxu0 0.0
  %5611 = vmatpush1.msra.mxu0 0.0
  %5612 = vmatprep.subr.mxu0 0.0
  %5613 = vmatpush1.msra.mxu0 0.0
  %5614 = vmatprep.mubr.f32.mxu0 0.0
  %5615 = vmatmul.mubr.f32.gmra.mrb[0].mxu0 %v5210
  %v5616 = vpop.f32.mrb[0].mxu0
  %v5617 = vadd.f32 0.0, %v5616
  %v5618 = vpop.f32.mrb[0].mxu0
  %v5619 = vadd.f32 0.0, %v5618
  %5620 = vdwg.mxu0
  %v5621 = vadd.f32 %v5475, %v5546
  %v5622 = vadd.f32 %v5476, %v5548
  %v5623 = vadd.f32 %v5477, %v5617
  %v5624 = vadd.f32 %v5478, %v5619
  %v5625 = vxor.u32 %v5621, 2147483648
  %v5626 = vmul.f32 %v5625, 1.442695
  %v5627 = vpow.pop %v5626
  %v5628 = vadd.f32 %v5627, 1.0
  %v5629 = vrcp.pop %v5628
  %v5630 = vmul.f32 1.0, %v5629
  %v5631 = vxor.u32 %v5622, 2147483648
  %v5632 = vmul.f32 %v5631, 1.442695
  %v5633 = vpow.pop %v5632
  %v5634 = vadd.f32 %v5633, 1.0
  %v5635 = vrcp.pop %v5634
  %v5636 = vmul.f32 1.0, %v5635
  %v5637 = vtanh.pop %v5623
  %v5638 = vxor.u32 %v5624, 2147483648
  %v5639 = vmul.f32 %v5638, 1.442695
  %v5640 = vpow.pop %v5639
  %v5641 = vadd.f32 %v5640, 1.0
  %v5642 = vrcp.pop %v5641
  %v5643 = vmul.f32 1.0, %v5642
  %v5644 = vmul.f32 %v5636, %v5211
  %v5645 = vmul.f32 %v5630, %v5637
  %v5646 = vadd.f32 %v5644, %v5645
  %v5647 = vtanh.pop %v5646
  %v5648 = vmul.f32 %v5643, %v5647
  %s5649 = sadd.s32 %s89, 12
  %v5650 = vstv %s5649
  %vm5651 = vcmp.lt.s32.totalorder %v5650, %v22
  %v5652 = vsel %vm5651, 1, 0
  %5653 = vset.pattern.permute.xlu0 0
  %5654 = vperm.xlu0 %5653, %v5652
  %v5655 = vpop.permute.xlu0 %5654
  %vm5656 = vcmp.eq.s32.totalorder %v5655, 1
  %v5657 = vsel %vm5656, %v5648, %v5210
  %v5658 = vsel %vm5656, %v5646, %v5211
  %v5659 = vpack.c.bf16 %v5657, %v5657
  %v5662 = vunpack.c.l.s4 1966171168
  %v5663 = vunpack.c.0.s8 %v5662
  %v5664 = vlaneseq
  %v5665 = vshrl.u32 %v5664, 7
  %v5666 = vsub.s32 %v5663, %v5665
  %v5667 = vrot.slane %v5659, %v5666
  %v5668 = vcombine.high %v5667, %v5667
  %v5670 = vunpack.c.l.s4 1966171168
  %v5671 = vunpack.c.0.s8 %v5670
  %v5672 = vlaneseq
  %v5673 = vshrl.u32 %v5672, 7
  %v5674 = vsub.s32 %v5671, %v5673
  %v5675 = vrot.slane %v5667, %v5674
  %v5677 = vunpack.c.l.s4 1966171168
  %v5678 = vunpack.c.0.s8 %v5677
  %v5679 = vlaneseq
  %v5680 = vshrl.u32 %v5679, 7
  %v5681 = vsub.s32 %v5678, %v5680
  %v5682 = vrot.slane %v5668, %v5681
  %v5683 = vcombine.high %v5675, %v5675
  %v5684 = vcombine.high %v5682, %v5682
  %v5685 = vunpack.i.l.s16 %v5675
  %v5686 = vunpack.i.h.s16 %v5675
  %v5687 = vunpack.i.l.s16 %v5682
  %v5688 = vunpack.i.h.s16 %v5682
  %v5689 = vunpack.i.l.s16 %v5683
  %v5690 = vunpack.i.h.s16 %v5683
  %v5691 = vunpack.i.l.s16 %v5684
  %v5692 = vunpack.i.h.s16 %v5684
  %v5693 = vpack.i.b16 %v5685, %v5685
  %v5694 = vpack.i.b16 %v5686, %v5686
  %v5695 = vpack.i.b16 %v5687, %v5687
  %v5696 = vpack.i.b16 %v5688, %v5688
  %v5697 = vpack.i.b16 %v5689, %v5689
  %v5698 = vpack.i.b16 %v5690, %v5690
  %v5699 = vpack.i.b16 %v5691, %v5691
  %v5700 = vpack.i.b16 %v5692, %v5692
  %v5702 = vunpack.c.l.s4 286326784
  %v5703 = vunpack.c.0.s8 %v5702
  %v5704 = vlaneseq
  %v5705 = vshrl.u32 %v5704, 7
  %v5706 = vsub.s32 %v5703, %v5705
  %v5707 = vrot.slane %v5693, %v5706
  %v5709 = vunpack.c.l.s4 286326784
  %v5710 = vunpack.c.0.s8 %v5709
  %v5711 = vlaneseq
  %v5712 = vshrl.u32 %v5711, 7
  %v5713 = vsub.s32 %v5710, %v5712
  %v5714 = vrot.slane %v5694, %v5713
  %v5716 = vunpack.c.l.s4 286326784
  %v5717 = vunpack.c.0.s8 %v5716
  %v5718 = vlaneseq
  %v5719 = vshrl.u32 %v5718, 7
  %v5720 = vsub.s32 %v5717, %v5719
  %v5721 = vrot.slane %v5695, %v5720
  %v5723 = vunpack.c.l.s4 286326784
  %v5724 = vunpack.c.0.s8 %v5723
  %v5725 = vlaneseq
  %v5726 = vshrl.u32 %v5725, 7
  %v5727 = vsub.s32 %v5724, %v5726
  %v5728 = vrot.slane %v5696, %v5727
  %v5730 = vunpack.c.l.s4 286326784
  %v5731 = vunpack.c.0.s8 %v5730
  %v5732 = vlaneseq
  %v5733 = vshrl.u32 %v5732, 7
  %v5734 = vsub.s32 %v5731, %v5733
  %v5735 = vrot.slane %v5697, %v5734
  %v5737 = vunpack.c.l.s4 286326784
  %v5738 = vunpack.c.0.s8 %v5737
  %v5739 = vlaneseq
  %v5740 = vshrl.u32 %v5739, 7
  %v5741 = vsub.s32 %v5738, %v5740
  %v5742 = vrot.slane %v5698, %v5741
  %v5744 = vunpack.c.l.s4 286326784
  %v5745 = vunpack.c.0.s8 %v5744
  %v5746 = vlaneseq
  %v5747 = vshrl.u32 %v5746, 7
  %v5748 = vsub.s32 %v5745, %v5747
  %v5749 = vrot.slane %v5699, %v5748
  %v5751 = vunpack.c.l.s4 286326784
  %v5752 = vunpack.c.0.s8 %v5751
  %v5753 = vlaneseq
  %v5754 = vshrl.u32 %v5753, 7
  %v5755 = vsub.s32 %v5752, %v5754
  %v5756 = vrot.slane %v5700, %v5755
  %v5765 = vld [vmem:[%s3 + $0x4] sm:$0x4]
  %v5766 = vsel %vm2181, %v5707, %v5765
  %5767 = vst [vmem:[%s3 + $0x4] sm:$0x4] %v5766
  %v5768 = vld [vmem:[%s3 + $0xc] sm:$0x4]
  %v5769 = vsel %vm2181, %v5714, %v5768
  %5770 = vst [vmem:[%s3 + $0xc] sm:$0x4] %v5769
  %v5771 = vld [vmem:[%s3 + $0x14] sm:$0x4]
  %v5772 = vsel %vm2181, %v5721, %v5771
  %5773 = vst [vmem:[%s3 + $0x14] sm:$0x4] %v5772
  %v5774 = vld [vmem:[%s3 + $0x1c] sm:$0x4]
  %v5775 = vsel %vm2181, %v5728, %v5774
  %5776 = vst [vmem:[%s3 + $0x1c] sm:$0x4] %v5775
  %v5777 = vld [vmem:[%s3 + $0x24] sm:$0x4]
  %v5778 = vsel %vm2181, %v5735, %v5777
  %5779 = vst [vmem:[%s3 + $0x24] sm:$0x4] %v5778
  %v5780 = vld [vmem:[%s3 + $0x2c] sm:$0x4]
  %v5781 = vsel %vm2181, %v5742, %v5780
  %5782 = vst [vmem:[%s3 + $0x2c] sm:$0x4] %v5781
  %v5783 = vld [vmem:[%s3 + $0x34] sm:$0x4]
  %v5784 = vsel %vm2181, %v5749, %v5783
  %5785 = vst [vmem:[%s3 + $0x34] sm:$0x4] %v5784
  %v5786 = vld [vmem:[%s3 + $0x3c] sm:$0x4]
  %v5787 = vsel %vm2181, %v5756, %v5786
  %5788 = vst [vmem:[%s3 + $0x3c] sm:$0x4] %v5787
  %v5789 = vpack.c.bf16 %v5658, %v5658
  %v5792 = vunpack.c.l.s4 1966171168
  %v5793 = vunpack.c.0.s8 %v5792
  %v5794 = vlaneseq
  %v5795 = vshrl.u32 %v5794, 7
  %v5796 = vsub.s32 %v5793, %v5795
  %v5797 = vrot.slane %v5789, %v5796
  %v5798 = vcombine.high %v5797, %v5797
  %v5800 = vunpack.c.l.s4 1966171168
  %v5801 = vunpack.c.0.s8 %v5800
  %v5802 = vlaneseq
  %v5803 = vshrl.u32 %v5802, 7
  %v5804 = vsub.s32 %v5801, %v5803
  %v5805 = vrot.slane %v5797, %v5804
  %v5807 = vunpack.c.l.s4 1966171168
  %v5808 = vunpack.c.0.s8 %v5807
  %v5809 = vlaneseq
  %v5810 = vshrl.u32 %v5809, 7
  %v5811 = vsub.s32 %v5808, %v5810
  %v5812 = vrot.slane %v5798, %v5811
  %v5813 = vcombine.high %v5805, %v5805
  %v5814 = vcombine.high %v5812, %v5812
  %v5815 = vunpack.i.l.s16 %v5805
  %v5816 = vunpack.i.h.s16 %v5805
  %v5817 = vunpack.i.l.s16 %v5812
  %v5818 = vunpack.i.h.s16 %v5812
  %v5819 = vunpack.i.l.s16 %v5813
  %v5820 = vunpack.i.h.s16 %v5813
  %v5821 = vunpack.i.l.s16 %v5814
  %v5822 = vunpack.i.h.s16 %v5814
  %v5823 = vpack.i.b16 %v5815, %v5815
  %v5824 = vpack.i.b16 %v5816, %v5816
  %v5825 = vpack.i.b16 %v5817, %v5817
  %v5826 = vpack.i.b16 %v5818, %v5818
  %v5827 = vpack.i.b16 %v5819, %v5819
  %v5828 = vpack.i.b16 %v5820, %v5820
  %v5829 = vpack.i.b16 %v5821, %v5821
  %v5830 = vpack.i.b16 %v5822, %v5822
  %v5832 = vunpack.c.l.s4 286326784
  %v5833 = vunpack.c.0.s8 %v5832
  %v5834 = vlaneseq
  %v5835 = vshrl.u32 %v5834, 7
  %v5836 = vsub.s32 %v5833, %v5835
  %v5837 = vrot.slane %v5823, %v5836
  %v5839 = vunpack.c.l.s4 286326784
  %v5840 = vunpack.c.0.s8 %v5839
  %v5841 = vlaneseq
  %v5842 = vshrl.u32 %v5841, 7
  %v5843 = vsub.s32 %v5840, %v5842
  %v5844 = vrot.slane %v5824, %v5843
  %v5846 = vunpack.c.l.s4 286326784
  %v5847 = vunpack.c.0.s8 %v5846
  %v5848 = vlaneseq
  %v5849 = vshrl.u32 %v5848, 7
  %v5850 = vsub.s32 %v5847, %v5849
  %v5851 = vrot.slane %v5825, %v5850
  %v5853 = vunpack.c.l.s4 286326784
  %v5854 = vunpack.c.0.s8 %v5853
  %v5855 = vlaneseq
  %v5856 = vshrl.u32 %v5855, 7
  %v5857 = vsub.s32 %v5854, %v5856
  %v5858 = vrot.slane %v5826, %v5857
  %v5860 = vunpack.c.l.s4 286326784
  %v5861 = vunpack.c.0.s8 %v5860
  %v5862 = vlaneseq
  %v5863 = vshrl.u32 %v5862, 7
  %v5864 = vsub.s32 %v5861, %v5863
  %v5865 = vrot.slane %v5827, %v5864
  %v5867 = vunpack.c.l.s4 286326784
  %v5868 = vunpack.c.0.s8 %v5867
  %v5869 = vlaneseq
  %v5870 = vshrl.u32 %v5869, 7
  %v5871 = vsub.s32 %v5868, %v5870
  %v5872 = vrot.slane %v5828, %v5871
  %v5874 = vunpack.c.l.s4 286326784
  %v5875 = vunpack.c.0.s8 %v5874
  %v5876 = vlaneseq
  %v5877 = vshrl.u32 %v5876, 7
  %v5878 = vsub.s32 %v5875, %v5877
  %v5879 = vrot.slane %v5829, %v5878
  %v5881 = vunpack.c.l.s4 286326784
  %v5882 = vunpack.c.0.s8 %v5881
  %v5883 = vlaneseq
  %v5884 = vshrl.u32 %v5883, 7
  %v5885 = vsub.s32 %v5882, %v5884
  %v5886 = vrot.slane %v5830, %v5885
  %v5895 = vld [vmem:[%s4 + $0x4] sm:$0x4]
  %v5896 = vsel %vm2181, %v5837, %v5895
  %5897 = vst [vmem:[%s4 + $0x4] sm:$0x4] %v5896
  %v5898 = vld [vmem:[%s4 + $0xc] sm:$0x4]
  %v5899 = vsel %vm2181, %v5844, %v5898
  %5900 = vst [vmem:[%s4 + $0xc] sm:$0x4] %v5899
  %v5901 = vld [vmem:[%s4 + $0x14] sm:$0x4]
  %v5902 = vsel %vm2181, %v5851, %v5901
  %5903 = vst [vmem:[%s4 + $0x14] sm:$0x4] %v5902
  %v5904 = vld [vmem:[%s4 + $0x1c] sm:$0x4]
  %v5905 = vsel %vm2181, %v5858, %v5904
  %5906 = vst [vmem:[%s4 + $0x1c] sm:$0x4] %v5905
  %v5907 = vld [vmem:[%s4 + $0x24] sm:$0x4]
  %v5908 = vsel %vm2181, %v5865, %v5907
  %5909 = vst [vmem:[%s4 + $0x24] sm:$0x4] %v5908
  %v5910 = vld [vmem:[%s4 + $0x2c] sm:$0x4]
  %v5911 = vsel %vm2181, %v5872, %v5910
  %5912 = vst [vmem:[%s4 + $0x2c] sm:$0x4] %v5911
  %v5913 = vld [vmem:[%s4 + $0x34] sm:$0x4]
  %v5914 = vsel %vm2181, %v5879, %v5913
  %5915 = vst [vmem:[%s4 + $0x34] sm:$0x4] %v5914
  %v5916 = vld [vmem:[%s4 + $0x3c] sm:$0x4]
  %v5917 = vsel %vm2181, %v5886, %v5916
  %5918 = vst [vmem:[%s4 + $0x3c] sm:$0x4] %v5917
  %s5919 = scalar_lea.vmem %s0, 208
  %v5920 = vld [vmem:[%s5919] sm:$0xff]
  %v5921 = vld [vmem:[%s5919 + $0x8] sm:$0xff]
  %v5922 = vunpack.c.l.bf16 %v5920
  %v5923 = vunpack.c.h.bf16 %v5920
  %v5924 = vunpack.c.l.bf16 %v5921
  %v5925 = vunpack.c.h.bf16 %v5921
  %5926 = vmatprep.subr.mxu0 %v24
  %5927 = vmatpush1.msra.mxu0 %v23
  %5928 = vmatprep.subr.mxu0 %v28
  %5929 = vmatpush1.msra.mxu0 %v27
  %5930 = vmatprep.subr.mxu0 %v32
  %5931 = vmatpush1.msra.mxu0 %v31
  %5932 = vmatprep.subr.mxu0 %v36
  %5933 = vmatpush1.msra.mxu0 %v35
  %5934 = vmatprep.subr.mxu0 %v40
  %5935 = vmatpush1.msra.mxu0 %v39
  %5936 = vmatprep.subr.mxu0 %v44
  %5937 = vmatpush1.msra.mxu0 %v43
  %5938 = vmatprep.subr.mxu0 %v48
  %5939 = vmatpush1.msra.mxu0 %v47
  %5940 = vmatprep.subr.mxu0 %v52
  %5941 = vmatpush1.msra.mxu0 %v51
  %5942 = vmatprep.subr.mxu0 %v56
  %5943 = vmatpush1.msra.mxu0 %v55
  %5944 = vmatprep.subr.mxu0 %v60
  %5945 = vmatpush1.msra.mxu0 %v59
  %5946 = vmatprep.subr.mxu0 %v64
  %5947 = vmatpush1.msra.mxu0 %v63
  %5948 = vmatprep.subr.mxu0 %v68
  %5949 = vmatpush1.msra.mxu0 %v67
  %5950 = vmatprep.subr.mxu0 %v72
  %5951 = vmatpush1.msra.mxu0 %v71
  %5952 = vmatprep.subr.mxu0 %v76
  %5953 = vmatpush1.msra.mxu0 %v75
  %5954 = vmatprep.subr.mxu0 %v80
  %5955 = vmatpush1.msra.mxu0 %v79
  %5956 = vmatprep.subr.mxu0 %v84
  %5957 = vmatpush1.msra.mxu0 %v83
  %5958 = vmatprep.subr.mxu0 0.0
  %5959 = vmatpush1.msra.mxu0 0.0
  %5960 = vmatprep.subr.mxu0 0.0
  %5961 = vmatpush1.msra.mxu0 0.0
  %5962 = vmatprep.subr.mxu0 0.0
  %5963 = vmatpush1.msra.mxu0 0.0
  %5964 = vmatprep.subr.mxu0 0.0
  %5965 = vmatpush1.msra.mxu0 0.0
  %5966 = vmatprep.subr.mxu0 0.0
  %5967 = vmatpush1.msra.mxu0 0.0
  %5968 = vmatprep.subr.mxu0 0.0
  %5969 = vmatpush1.msra.mxu0 0.0
  %5970 = vmatprep.subr.mxu0 0.0
  %5971 = vmatpush1.msra.mxu0 0.0
  %5972 = vmatprep.subr.mxu0 0.0
  %5973 = vmatpush1.msra.mxu0 0.0
  %5974 = vmatprep.subr.mxu0 0.0
  %5975 = vmatpush1.msra.mxu0 0.0
  %5976 = vmatprep.subr.mxu0 0.0
  %5977 = vmatpush1.msra.mxu0 0.0
  %5978 = vmatprep.subr.mxu0 0.0
  %5979 = vmatpush1.msra.mxu0 0.0
  %5980 = vmatprep.subr.mxu0 0.0
  %5981 = vmatpush1.msra.mxu0 0.0
  %5982 = vmatprep.subr.mxu0 0.0
  %5983 = vmatpush1.msra.mxu0 0.0
  %5984 = vmatprep.subr.mxu0 0.0
  %5985 = vmatpush1.msra.mxu0 0.0
  %5986 = vmatprep.subr.mxu0 0.0
  %5987 = vmatpush1.msra.mxu0 0.0
  %5988 = vmatprep.subr.mxu0 0.0
  %5989 = vmatpush1.msra.mxu0 0.0
  %5990 = vmatprep.mubr.f32.mxu0 0.0
  %5991 = vmatmul.mubr.f32.gmra.mrb[0].mxu0 %v5657
  %v5992 = vpop.f32.mrb[0].mxu0
  %v5993 = vadd.f32 0.0, %v5992
  %v5994 = vpop.f32.mrb[0].mxu0
  %v5995 = vadd.f32 0.0, %v5994
  %5996 = vdwg.mxu0
  %5997 = vmatprep.subr.mxu0 %v26
  %5998 = vmatpush1.msra.mxu0 %v25
  %5999 = vmatprep.subr.mxu0 %v30
  %6000 = vmatpush1.msra.mxu0 %v29
  %6001 = vmatprep.subr.mxu0 %v34
  %6002 = vmatpush1.msra.mxu0 %v33
  %6003 = vmatprep.subr.mxu0 %v38
  %6004 = vmatpush1.msra.mxu0 %v37
  %6005 = vmatprep.subr.mxu0 %v42
  %6006 = vmatpush1.msra.mxu0 %v41
  %6007 = vmatprep.subr.mxu0 %v46
  %6008 = vmatpush1.msra.mxu0 %v45
  %6009 = vmatprep.subr.mxu0 %v50
  %6010 = vmatpush1.msra.mxu0 %v49
  %6011 = vmatprep.subr.mxu0 %v54
  %6012 = vmatpush1.msra.mxu0 %v53
  %6013 = vmatprep.subr.mxu0 %v58
  %6014 = vmatpush1.msra.mxu0 %v57
  %6015 = vmatprep.subr.mxu0 %v62
  %6016 = vmatpush1.msra.mxu0 %v61
  %6017 = vmatprep.subr.mxu0 %v66
  %6018 = vmatpush1.msra.mxu0 %v65
  %6019 = vmatprep.subr.mxu0 %v70
  %6020 = vmatpush1.msra.mxu0 %v69
  %6021 = vmatprep.subr.mxu0 %v74
  %6022 = vmatpush1.msra.mxu0 %v73
  %6023 = vmatprep.subr.mxu0 %v78
  %6024 = vmatpush1.msra.mxu0 %v77
  %6025 = vmatprep.subr.mxu0 %v82
  %6026 = vmatpush1.msra.mxu0 %v81
  %6027 = vmatprep.subr.mxu0 %v86
  %6028 = vmatpush1.msra.mxu0 %v85
  %6029 = vmatprep.subr.mxu0 0.0
  %6030 = vmatpush1.msra.mxu0 0.0
  %6031 = vmatprep.subr.mxu0 0.0
  %6032 = vmatpush1.msra.mxu0 0.0
  %6033 = vmatprep.subr.mxu0 0.0
  %6034 = vmatpush1.msra.mxu0 0.0
  %6035 = vmatprep.subr.mxu0 0.0
  %6036 = vmatpush1.msra.mxu0 0.0
  %6037 = vmatprep.subr.mxu0 0.0
  %6038 = vmatpush1.msra.mxu0 0.0
  %6039 = vmatprep.subr.mxu0 0.0
  %6040 = vmatpush1.msra.mxu0 0.0
  %6041 = vmatprep.subr.mxu0 0.0
  %6042 = vmatpush1.msra.mxu0 0.0
  %6043 = vmatprep.subr.mxu0 0.0
  %6044 = vmatpush1.msra.mxu0 0.0
  %6045 = vmatprep.subr.mxu0 0.0
  %6046 = vmatpush1.msra.mxu0 0.0
  %6047 = vmatprep.subr.mxu0 0.0
  %6048 = vmatpush1.msra.mxu0 0.0
  %6049 = vmatprep.subr.mxu0 0.0
  %6050 = vmatpush1.msra.mxu0 0.0
  %6051 = vmatprep.subr.mxu0 0.0
  %6052 = vmatpush1.msra.mxu0 0.0
  %6053 = vmatprep.subr.mxu0 0.0
  %6054 = vmatpush1.msra.mxu0 0.0
  %6055 = vmatprep.subr.mxu0 0.0
  %6056 = vmatpush1.msra.mxu0 0.0
  %6057 = vmatprep.subr.mxu0 0.0
  %6058 = vmatpush1.msra.mxu0 0.0
  %6059 = vmatprep.subr.mxu0 0.0
  %6060 = vmatpush1.msra.mxu0 0.0
  %6061 = vmatprep.mubr.f32.mxu0 0.0
  %6062 = vmatmul.mubr.f32.gmra.mrb[0].mxu0 %v5657
  %v6063 = vpop.f32.mrb[0].mxu0
  %v6064 = vadd.f32 0.0, %v6063
  %v6065 = vpop.f32.mrb[0].mxu0
  %v6066 = vadd.f32 0.0, %v6065
  %6067 = vdwg.mxu0
  %v6068 = vadd.f32 %v5922, %v5993
  %v6069 = vadd.f32 %v5923, %v5995
  %v6070 = vadd.f32 %v5924, %v6064
  %v6071 = vadd.f32 %v5925, %v6066
  %v6072 = vxor.u32 %v6068, 2147483648
  %v6073 = vmul.f32 %v6072, 1.442695
  %v6074 = vpow.pop %v6073
  %v6075 = vadd.f32 %v6074, 1.0
  %v6076 = vrcp.pop %v6075
  %v6077 = vmul.f32 1.0, %v6076
  %v6078 = vxor.u32 %v6069, 2147483648
  %v6079 = vmul.f32 %v6078, 1.442695
  %v6080 = vpow.pop %v6079
  %v6081 = vadd.f32 %v6080, 1.0
  %v6082 = vrcp.pop %v6081
  %v6083 = vmul.f32 1.0, %v6082
  %v6084 = vtanh.pop %v6070
  %v6085 = vxor.u32 %v6071, 2147483648
  %v6086 = vmul.f32 %v6085, 1.442695
  %v6087 = vpow.pop %v6086
  %v6088 = vadd.f32 %v6087, 1.0
  %v6089 = vrcp.pop %v6088
  %v6090 = vmul.f32 1.0, %v6089
  %v6091 = vmul.f32 %v6083, %v5658
  %v6092 = vmul.f32 %v6077, %v6084
  %v6093 = vadd.f32 %v6091, %v6092
  %v6094 = vtanh.pop %v6093
  %v6095 = vmul.f32 %v6090, %v6094
  %s6096 = sadd.s32 %s89, 13
  %v6097 = vstv %s6096
  %vm6098 = vcmp.lt.s32.totalorder %v6097, %v22
  %v6099 = vsel %vm6098, 1, 0
  %6100 = vset.pattern.permute.xlu0 0
  %6101 = vperm.xlu0 %6100, %v6099
  %v6102 = vpop.permute.xlu0 %6101
  %vm6103 = vcmp.eq.s32.totalorder %v6102, 1
  %v6104 = vsel %vm6103, %v6095, %v5657
  %v6105 = vsel %vm6103, %v6093, %v5658
  %v6106 = vpack.c.bf16 %v6104, %v6104
  %v6109 = vunpack.c.l.s4 1966171168
  %v6110 = vunpack.c.0.s8 %v6109
  %v6111 = vlaneseq
  %v6112 = vshrl.u32 %v6111, 7
  %v6113 = vsub.s32 %v6110, %v6112
  %v6114 = vrot.slane %v6106, %v6113
  %v6115 = vcombine.high %v6114, %v6114
  %v6117 = vunpack.c.l.s4 1966171168
  %v6118 = vunpack.c.0.s8 %v6117
  %v6119 = vlaneseq
  %v6120 = vshrl.u32 %v6119, 7
  %v6121 = vsub.s32 %v6118, %v6120
  %v6122 = vrot.slane %v6114, %v6121
  %v6124 = vunpack.c.l.s4 1966171168
  %v6125 = vunpack.c.0.s8 %v6124
  %v6126 = vlaneseq
  %v6127 = vshrl.u32 %v6126, 7
  %v6128 = vsub.s32 %v6125, %v6127
  %v6129 = vrot.slane %v6115, %v6128
  %v6130 = vcombine.high %v6122, %v6122
  %v6131 = vcombine.high %v6129, %v6129
  %v6132 = vunpack.i.l.s16 %v6122
  %v6133 = vunpack.i.h.s16 %v6122
  %v6134 = vunpack.i.l.s16 %v6129
  %v6135 = vunpack.i.h.s16 %v6129
  %v6136 = vunpack.i.l.s16 %v6130
  %v6137 = vunpack.i.h.s16 %v6130
  %v6138 = vunpack.i.l.s16 %v6131
  %v6139 = vunpack.i.h.s16 %v6131
  %v6140 = vpack.i.b16 %v6132, %v6132
  %v6141 = vpack.i.b16 %v6133, %v6133
  %v6142 = vpack.i.b16 %v6134, %v6134
  %v6143 = vpack.i.b16 %v6135, %v6135
  %v6144 = vpack.i.b16 %v6136, %v6136
  %v6145 = vpack.i.b16 %v6137, %v6137
  %v6146 = vpack.i.b16 %v6138, %v6138
  %v6147 = vpack.i.b16 %v6139, %v6139
  %v6149 = vunpack.c.l.s4 286326784
  %v6150 = vunpack.c.0.s8 %v6149
  %v6151 = vlaneseq
  %v6152 = vshrl.u32 %v6151, 7
  %v6153 = vsub.s32 %v6150, %v6152
  %v6154 = vrot.slane %v6140, %v6153
  %v6156 = vunpack.c.l.s4 286326784
  %v6157 = vunpack.c.0.s8 %v6156
  %v6158 = vlaneseq
  %v6159 = vshrl.u32 %v6158, 7
  %v6160 = vsub.s32 %v6157, %v6159
  %v6161 = vrot.slane %v6141, %v6160
  %v6163 = vunpack.c.l.s4 286326784
  %v6164 = vunpack.c.0.s8 %v6163
  %v6165 = vlaneseq
  %v6166 = vshrl.u32 %v6165, 7
  %v6167 = vsub.s32 %v6164, %v6166
  %v6168 = vrot.slane %v6142, %v6167
  %v6170 = vunpack.c.l.s4 286326784
  %v6171 = vunpack.c.0.s8 %v6170
  %v6172 = vlaneseq
  %v6173 = vshrl.u32 %v6172, 7
  %v6174 = vsub.s32 %v6171, %v6173
  %v6175 = vrot.slane %v6143, %v6174
  %v6177 = vunpack.c.l.s4 286326784
  %v6178 = vunpack.c.0.s8 %v6177
  %v6179 = vlaneseq
  %v6180 = vshrl.u32 %v6179, 7
  %v6181 = vsub.s32 %v6178, %v6180
  %v6182 = vrot.slane %v6144, %v6181
  %v6184 = vunpack.c.l.s4 286326784
  %v6185 = vunpack.c.0.s8 %v6184
  %v6186 = vlaneseq
  %v6187 = vshrl.u32 %v6186, 7
  %v6188 = vsub.s32 %v6185, %v6187
  %v6189 = vrot.slane %v6145, %v6188
  %v6191 = vunpack.c.l.s4 286326784
  %v6192 = vunpack.c.0.s8 %v6191
  %v6193 = vlaneseq
  %v6194 = vshrl.u32 %v6193, 7
  %v6195 = vsub.s32 %v6192, %v6194
  %v6196 = vrot.slane %v6146, %v6195
  %v6198 = vunpack.c.l.s4 286326784
  %v6199 = vunpack.c.0.s8 %v6198
  %v6200 = vlaneseq
  %v6201 = vshrl.u32 %v6200, 7
  %v6202 = vsub.s32 %v6199, %v6201
  %v6203 = vrot.slane %v6147, %v6202
  %v6212 = vld [vmem:[%s3 + $0x4] sm:$0x4]
  %v6213 = vsel %vm2630, %v6154, %v6212
  %6214 = vst [vmem:[%s3 + $0x4] sm:$0x4] %v6213
  %v6215 = vld [vmem:[%s3 + $0xc] sm:$0x4]
  %v6216 = vsel %vm2630, %v6161, %v6215
  %6217 = vst [vmem:[%s3 + $0xc] sm:$0x4] %v6216
  %v6218 = vld [vmem:[%s3 + $0x14] sm:$0x4]
  %v6219 = vsel %vm2630, %v6168, %v6218
  %6220 = vst [vmem:[%s3 + $0x14] sm:$0x4] %v6219
  %v6221 = vld [vmem:[%s3 + $0x1c] sm:$0x4]
  %v6222 = vsel %vm2630, %v6175, %v6221
  %6223 = vst [vmem:[%s3 + $0x1c] sm:$0x4] %v6222
  %v6224 = vld [vmem:[%s3 + $0x24] sm:$0x4]
  %v6225 = vsel %vm2630, %v6182, %v6224
  %6226 = vst [vmem:[%s3 + $0x24] sm:$0x4] %v6225
  %v6227 = vld [vmem:[%s3 + $0x2c] sm:$0x4]
  %v6228 = vsel %vm2630, %v6189, %v6227
  %6229 = vst [vmem:[%s3 + $0x2c] sm:$0x4] %v6228
  %v6230 = vld [vmem:[%s3 + $0x34] sm:$0x4]
  %v6231 = vsel %vm2630, %v6196, %v6230
  %6232 = vst [vmem:[%s3 + $0x34] sm:$0x4] %v6231
  %v6233 = vld [vmem:[%s3 + $0x3c] sm:$0x4]
  %v6234 = vsel %vm2630, %v6203, %v6233
  %6235 = vst [vmem:[%s3 + $0x3c] sm:$0x4] %v6234
  %v6236 = vpack.c.bf16 %v6105, %v6105
  %v6239 = vunpack.c.l.s4 1966171168
  %v6240 = vunpack.c.0.s8 %v6239
  %v6241 = vlaneseq
  %v6242 = vshrl.u32 %v6241, 7
  %v6243 = vsub.s32 %v6240, %v6242
  %v6244 = vrot.slane %v6236, %v6243
  %v6245 = vcombine.high %v6244, %v6244
  %v6247 = vunpack.c.l.s4 1966171168
  %v6248 = vunpack.c.0.s8 %v6247
  %v6249 = vlaneseq
  %v6250 = vshrl.u32 %v6249, 7
  %v6251 = vsub.s32 %v6248, %v6250
  %v6252 = vrot.slane %v6244, %v6251
  %v6254 = vunpack.c.l.s4 1966171168
  %v6255 = vunpack.c.0.s8 %v6254
  %v6256 = vlaneseq
  %v6257 = vshrl.u32 %v6256, 7
  %v6258 = vsub.s32 %v6255, %v6257
  %v6259 = vrot.slane %v6245, %v6258
  %v6260 = vcombine.high %v6252, %v6252
  %v6261 = vcombine.high %v6259, %v6259
  %v6262 = vunpack.i.l.s16 %v6252
  %v6263 = vunpack.i.h.s16 %v6252
  %v6264 = vunpack.i.l.s16 %v6259
  %v6265 = vunpack.i.h.s16 %v6259
  %v6266 = vunpack.i.l.s16 %v6260
  %v6267 = vunpack.i.h.s16 %v6260
  %v6268 = vunpack.i.l.s16 %v6261
  %v6269 = vunpack.i.h.s16 %v6261
  %v6270 = vpack.i.b16 %v6262, %v6262
  %v6271 = vpack.i.b16 %v6263, %v6263
  %v6272 = vpack.i.b16 %v6264, %v6264
  %v6273 = vpack.i.b16 %v6265, %v6265
  %v6274 = vpack.i.b16 %v6266, %v6266
  %v6275 = vpack.i.b16 %v6267, %v6267
  %v6276 = vpack.i.b16 %v6268, %v6268
  %v6277 = vpack.i.b16 %v6269, %v6269
  %v6279 = vunpack.c.l.s4 286326784
  %v6280 = vunpack.c.0.s8 %v6279
  %v6281 = vlaneseq
  %v6282 = vshrl.u32 %v6281, 7
  %v6283 = vsub.s32 %v6280, %v6282
  %v6284 = vrot.slane %v6270, %v6283
  %v6286 = vunpack.c.l.s4 286326784
  %v6287 = vunpack.c.0.s8 %v6286
  %v6288 = vlaneseq
  %v6289 = vshrl.u32 %v6288, 7
  %v6290 = vsub.s32 %v6287, %v6289
  %v6291 = vrot.slane %v6271, %v6290
  %v6293 = vunpack.c.l.s4 286326784
  %v6294 = vunpack.c.0.s8 %v6293
  %v6295 = vlaneseq
  %v6296 = vshrl.u32 %v6295, 7
  %v6297 = vsub.s32 %v6294, %v6296
  %v6298 = vrot.slane %v6272, %v6297
  %v6300 = vunpack.c.l.s4 286326784
  %v6301 = vunpack.c.0.s8 %v6300
  %v6302 = vlaneseq
  %v6303 = vshrl.u32 %v6302, 7
  %v6304 = vsub.s32 %v6301, %v6303
  %v6305 = vrot.slane %v6273, %v6304
  %v6307 = vunpack.c.l.s4 286326784
  %v6308 = vunpack.c.0.s8 %v6307
  %v6309 = vlaneseq
  %v6310 = vshrl.u32 %v6309, 7
  %v6311 = vsub.s32 %v6308, %v6310
  %v6312 = vrot.slane %v6274, %v6311
  %v6314 = vunpack.c.l.s4 286326784
  %v6315 = vunpack.c.0.s8 %v6314
  %v6316 = vlaneseq
  %v6317 = vshrl.u32 %v6316, 7
  %v6318 = vsub.s32 %v6315, %v6317
  %v6319 = vrot.slane %v6275, %v6318
  %v6321 = vunpack.c.l.s4 286326784
  %v6322 = vunpack.c.0.s8 %v6321
  %v6323 = vlaneseq
  %v6324 = vshrl.u32 %v6323, 7
  %v6325 = vsub.s32 %v6322, %v6324
  %v6326 = vrot.slane %v6276, %v6325
  %v6328 = vunpack.c.l.s4 286326784
  %v6329 = vunpack.c.0.s8 %v6328
  %v6330 = vlaneseq
  %v6331 = vshrl.u32 %v6330, 7
  %v6332 = vsub.s32 %v6329, %v6331
  %v6333 = vrot.slane %v6277, %v6332
  %v6342 = vld [vmem:[%s4 + $0x4] sm:$0x4]
  %v6343 = vsel %vm2630, %v6284, %v6342
  %6344 = vst [vmem:[%s4 + $0x4] sm:$0x4] %v6343
  %v6345 = vld [vmem:[%s4 + $0xc] sm:$0x4]
  %v6346 = vsel %vm2630, %v6291, %v6345
  %6347 = vst [vmem:[%s4 + $0xc] sm:$0x4] %v6346
  %v6348 = vld [vmem:[%s4 + $0x14] sm:$0x4]
  %v6349 = vsel %vm2630, %v6298, %v6348
  %6350 = vst [vmem:[%s4 + $0x14] sm:$0x4] %v6349
  %v6351 = vld [vmem:[%s4 + $0x1c] sm:$0x4]
  %v6352 = vsel %vm2630, %v6305, %v6351
  %6353 = vst [vmem:[%s4 + $0x1c] sm:$0x4] %v6352
  %v6354 = vld [vmem:[%s4 + $0x24] sm:$0x4]
  %v6355 = vsel %vm2630, %v6312, %v6354
  %6356 = vst [vmem:[%s4 + $0x24] sm:$0x4] %v6355
  %v6357 = vld [vmem:[%s4 + $0x2c] sm:$0x4]
  %v6358 = vsel %vm2630, %v6319, %v6357
  %6359 = vst [vmem:[%s4 + $0x2c] sm:$0x4] %v6358
  %v6360 = vld [vmem:[%s4 + $0x34] sm:$0x4]
  %v6361 = vsel %vm2630, %v6326, %v6360
  %6362 = vst [vmem:[%s4 + $0x34] sm:$0x4] %v6361
  %v6363 = vld [vmem:[%s4 + $0x3c] sm:$0x4]
  %v6364 = vsel %vm2630, %v6333, %v6363
  %6365 = vst [vmem:[%s4 + $0x3c] sm:$0x4] %v6364
  %s6366 = scalar_lea.vmem %s0, 224
  %v6367 = vld [vmem:[%s6366] sm:$0xff]
  %v6368 = vld [vmem:[%s6366 + $0x8] sm:$0xff]
  %v6369 = vunpack.c.l.bf16 %v6367
  %v6370 = vunpack.c.h.bf16 %v6367
  %v6371 = vunpack.c.l.bf16 %v6368
  %v6372 = vunpack.c.h.bf16 %v6368
  %6373 = vmatprep.subr.mxu0 %v24
  %6374 = vmatpush1.msra.mxu0 %v23
  %6375 = vmatprep.subr.mxu0 %v28
  %6376 = vmatpush1.msra.mxu0 %v27
  %6377 = vmatprep.subr.mxu0 %v32
  %6378 = vmatpush1.msra.mxu0 %v31
  %6379 = vmatprep.subr.mxu0 %v36
  %6380 = vmatpush1.msra.mxu0 %v35
  %6381 = vmatprep.subr.mxu0 %v40
  %6382 = vmatpush1.msra.mxu0 %v39
  %6383 = vmatprep.subr.mxu0 %v44
  %6384 = vmatpush1.msra.mxu0 %v43
  %6385 = vmatprep.subr.mxu0 %v48
  %6386 = vmatpush1.msra.mxu0 %v47
  %6387 = vmatprep.subr.mxu0 %v52
  %6388 = vmatpush1.msra.mxu0 %v51
  %6389 = vmatprep.subr.mxu0 %v56
  %6390 = vmatpush1.msra.mxu0 %v55
  %6391 = vmatprep.subr.mxu0 %v60
  %6392 = vmatpush1.msra.mxu0 %v59
  %6393 = vmatprep.subr.mxu0 %v64
  %6394 = vmatpush1.msra.mxu0 %v63
  %6395 = vmatprep.subr.mxu0 %v68
  %6396 = vmatpush1.msra.mxu0 %v67
  %6397 = vmatprep.subr.mxu0 %v72
  %6398 = vmatpush1.msra.mxu0 %v71
  %6399 = vmatprep.subr.mxu0 %v76
  %6400 = vmatpush1.msra.mxu0 %v75
  %6401 = vmatprep.subr.mxu0 %v80
  %6402 = vmatpush1.msra.mxu0 %v79
  %6403 = vmatprep.subr.mxu0 %v84
  %6404 = vmatpush1.msra.mxu0 %v83
  %6405 = vmatprep.subr.mxu0 0.0
  %6406 = vmatpush1.msra.mxu0 0.0
  %6407 = vmatprep.subr.mxu0 0.0
  %6408 = vmatpush1.msra.mxu0 0.0
  %6409 = vmatprep.subr.mxu0 0.0
  %6410 = vmatpush1.msra.mxu0 0.0
  %6411 = vmatprep.subr.mxu0 0.0
  %6412 = vmatpush1.msra.mxu0 0.0
  %6413 = vmatprep.subr.mxu0 0.0
  %6414 = vmatpush1.msra.mxu0 0.0
  %6415 = vmatprep.subr.mxu0 0.0
  %6416 = vmatpush1.msra.mxu0 0.0
  %6417 = vmatprep.subr.mxu0 0.0
  %6418 = vmatpush1.msra.mxu0 0.0
  %6419 = vmatprep.subr.mxu0 0.0
  %6420 = vmatpush1.msra.mxu0 0.0
  %6421 = vmatprep.subr.mxu0 0.0
  %6422 = vmatpush1.msra.mxu0 0.0
  %6423 = vmatprep.subr.mxu0 0.0
  %6424 = vmatpush1.msra.mxu0 0.0
  %6425 = vmatprep.subr.mxu0 0.0
  %6426 = vmatpush1.msra.mxu0 0.0
  %6427 = vmatprep.subr.mxu0 0.0
  %6428 = vmatpush1.msra.mxu0 0.0
  %6429 = vmatprep.subr.mxu0 0.0
  %6430 = vmatpush1.msra.mxu0 0.0
  %6431 = vmatprep.subr.mxu0 0.0
  %6432 = vmatpush1.msra.mxu0 0.0
  %6433 = vmatprep.subr.mxu0 0.0
  %6434 = vmatpush1.msra.mxu0 0.0
  %6435 = vmatprep.subr.mxu0 0.0
  %6436 = vmatpush1.msra.mxu0 0.0
  %6437 = vmatprep.mubr.f32.mxu0 0.0
  %6438 = vmatmul.mubr.f32.gmra.mrb[0].mxu0 %v6104
  %v6439 = vpop.f32.mrb[0].mxu0
  %v6440 = vadd.f32 0.0, %v6439
  %v6441 = vpop.f32.mrb[0].mxu0
  %v6442 = vadd.f32 0.0, %v6441
  %6443 = vdwg.mxu0
  %6444 = vmatprep.subr.mxu0 %v26
  %6445 = vmatpush1.msra.mxu0 %v25
  %6446 = vmatprep.subr.mxu0 %v30
  %6447 = vmatpush1.msra.mxu0 %v29
  %6448 = vmatprep.subr.mxu0 %v34
  %6449 = vmatpush1.msra.mxu0 %v33
  %6450 = vmatprep.subr.mxu0 %v38
  %6451 = vmatpush1.msra.mxu0 %v37
  %6452 = vmatprep.subr.mxu0 %v42
  %6453 = vmatpush1.msra.mxu0 %v41
  %6454 = vmatprep.subr.mxu0 %v46
  %6455 = vmatpush1.msra.mxu0 %v45
  %6456 = vmatprep.subr.mxu0 %v50
  %6457 = vmatpush1.msra.mxu0 %v49
  %6458 = vmatprep.subr.mxu0 %v54
  %6459 = vmatpush1.msra.mxu0 %v53
  %6460 = vmatprep.subr.mxu0 %v58
  %6461 = vmatpush1.msra.mxu0 %v57
  %6462 = vmatprep.subr.mxu0 %v62
  %6463 = vmatpush1.msra.mxu0 %v61
  %6464 = vmatprep.subr.mxu0 %v66
  %6465 = vmatpush1.msra.mxu0 %v65
  %6466 = vmatprep.subr.mxu0 %v70
  %6467 = vmatpush1.msra.mxu0 %v69
  %6468 = vmatprep.subr.mxu0 %v74
  %6469 = vmatpush1.msra.mxu0 %v73
  %6470 = vmatprep.subr.mxu0 %v78
  %6471 = vmatpush1.msra.mxu0 %v77
  %6472 = vmatprep.subr.mxu0 %v82
  %6473 = vmatpush1.msra.mxu0 %v81
  %6474 = vmatprep.subr.mxu0 %v86
  %6475 = vmatpush1.msra.mxu0 %v85
  %6476 = vmatprep.subr.mxu0 0.0
  %6477 = vmatpush1.msra.mxu0 0.0
  %6478 = vmatprep.subr.mxu0 0.0
  %6479 = vmatpush1.msra.mxu0 0.0
  %6480 = vmatprep.subr.mxu0 0.0
  %6481 = vmatpush1.msra.mxu0 0.0
  %6482 = vmatprep.subr.mxu0 0.0
  %6483 = vmatpush1.msra.mxu0 0.0
  %6484 = vmatprep.subr.mxu0 0.0
  %6485 = vmatpush1.msra.mxu0 0.0
  %6486 = vmatprep.subr.mxu0 0.0
  %6487 = vmatpush1.msra.mxu0 0.0
  %6488 = vmatprep.subr.mxu0 0.0
  %6489 = vmatpush1.msra.mxu0 0.0
  %6490 = vmatprep.subr.mxu0 0.0
  %6491 = vmatpush1.msra.mxu0 0.0
  %6492 = vmatprep.subr.mxu0 0.0
  %6493 = vmatpush1.msra.mxu0 0.0
  %6494 = vmatprep.subr.mxu0 0.0
  %6495 = vmatpush1.msra.mxu0 0.0
  %6496 = vmatprep.subr.mxu0 0.0
  %6497 = vmatpush1.msra.mxu0 0.0
  %6498 = vmatprep.subr.mxu0 0.0
  %6499 = vmatpush1.msra.mxu0 0.0
  %6500 = vmatprep.subr.mxu0 0.0
  %6501 = vmatpush1.msra.mxu0 0.0
  %6502 = vmatprep.subr.mxu0 0.0
  %6503 = vmatpush1.msra.mxu0 0.0
  %6504 = vmatprep.subr.mxu0 0.0
  %6505 = vmatpush1.msra.mxu0 0.0
  %6506 = vmatprep.subr.mxu0 0.0
  %6507 = vmatpush1.msra.mxu0 0.0
  %6508 = vmatprep.mubr.f32.mxu0 0.0
  %6509 = vmatmul.mubr.f32.gmra.mrb[0].mxu0 %v6104
  %v6510 = vpop.f32.mrb[0].mxu0
  %v6511 = vadd.f32 0.0, %v6510
  %v6512 = vpop.f32.mrb[0].mxu0
  %v6513 = vadd.f32 0.0, %v6512
  %6514 = vdwg.mxu0
  %v6515 = vadd.f32 %v6369, %v6440
  %v6516 = vadd.f32 %v6370, %v6442
  %v6517 = vadd.f32 %v6371, %v6511
  %v6518 = vadd.f32 %v6372, %v6513
  %v6519 = vxor.u32 %v6515, 2147483648
  %v6520 = vmul.f32 %v6519, 1.442695
  %v6521 = vpow.pop %v6520
  %v6522 = vadd.f32 %v6521, 1.0
  %v6523 = vrcp.pop %v6522
  %v6524 = vmul.f32 1.0, %v6523
  %v6525 = vxor.u32 %v6516, 2147483648
  %v6526 = vmul.f32 %v6525, 1.442695
  %v6527 = vpow.pop %v6526
  %v6528 = vadd.f32 %v6527, 1.0
  %v6529 = vrcp.pop %v6528
  %v6530 = vmul.f32 1.0, %v6529
  %v6531 = vtanh.pop %v6517
  %v6532 = vxor.u32 %v6518, 2147483648
  %v6533 = vmul.f32 %v6532, 1.442695
  %v6534 = vpow.pop %v6533
  %v6535 = vadd.f32 %v6534, 1.0
  %v6536 = vrcp.pop %v6535
  %v6537 = vmul.f32 1.0, %v6536
  %v6538 = vmul.f32 %v6530, %v6105
  %v6539 = vmul.f32 %v6524, %v6531
  %v6540 = vadd.f32 %v6538, %v6539
  %v6541 = vtanh.pop %v6540
  %v6542 = vmul.f32 %v6537, %v6541
  %s6543 = sadd.s32 %s89, 14
  %v6544 = vstv %s6543
  %vm6545 = vcmp.lt.s32.totalorder %v6544, %v22
  %v6546 = vsel %vm6545, 1, 0
  %6547 = vset.pattern.permute.xlu0 0
  %6548 = vperm.xlu0 %6547, %v6546
  %v6549 = vpop.permute.xlu0 %6548
  %vm6550 = vcmp.eq.s32.totalorder %v6549, 1
  %v6551 = vsel %vm6550, %v6542, %v6104
  %v6552 = vsel %vm6550, %v6540, %v6105
  %v6553 = vpack.c.bf16 %v6551, %v6551
  %v6556 = vunpack.c.l.s4 1966171168
  %v6557 = vunpack.c.0.s8 %v6556
  %v6558 = vlaneseq
  %v6559 = vshrl.u32 %v6558, 7
  %v6560 = vsub.s32 %v6557, %v6559
  %v6561 = vrot.slane %v6553, %v6560
  %v6562 = vcombine.high %v6561, %v6561
  %v6564 = vunpack.c.l.s4 1966171168
  %v6565 = vunpack.c.0.s8 %v6564
  %v6566 = vlaneseq
  %v6567 = vshrl.u32 %v6566, 7
  %v6568 = vsub.s32 %v6565, %v6567
  %v6569 = vrot.slane %v6561, %v6568
  %v6571 = vunpack.c.l.s4 1966171168
  %v6572 = vunpack.c.0.s8 %v6571
  %v6573 = vlaneseq
  %v6574 = vshrl.u32 %v6573, 7
  %v6575 = vsub.s32 %v6572, %v6574
  %v6576 = vrot.slane %v6562, %v6575
  %v6577 = vcombine.high %v6569, %v6569
  %v6578 = vcombine.high %v6576, %v6576
  %v6579 = vunpack.i.l.s16 %v6569
  %v6580 = vunpack.i.h.s16 %v6569
  %v6581 = vunpack.i.l.s16 %v6576
  %v6582 = vunpack.i.h.s16 %v6576
  %v6583 = vunpack.i.l.s16 %v6577
  %v6584 = vunpack.i.h.s16 %v6577
  %v6585 = vunpack.i.l.s16 %v6578
  %v6586 = vunpack.i.h.s16 %v6578
  %v6587 = vpack.i.b16 %v6579, %v6579
  %v6588 = vpack.i.b16 %v6580, %v6580
  %v6589 = vpack.i.b16 %v6581, %v6581
  %v6590 = vpack.i.b16 %v6582, %v6582
  %v6591 = vpack.i.b16 %v6583, %v6583
  %v6592 = vpack.i.b16 %v6584, %v6584
  %v6593 = vpack.i.b16 %v6585, %v6585
  %v6594 = vpack.i.b16 %v6586, %v6586
  %v6596 = vunpack.c.l.s4 286326784
  %v6597 = vunpack.c.0.s8 %v6596
  %v6598 = vlaneseq
  %v6599 = vshrl.u32 %v6598, 7
  %v6600 = vsub.s32 %v6597, %v6599
  %v6601 = vrot.slane %v6587, %v6600
  %v6603 = vunpack.c.l.s4 286326784
  %v6604 = vunpack.c.0.s8 %v6603
  %v6605 = vlaneseq
  %v6606 = vshrl.u32 %v6605, 7
  %v6607 = vsub.s32 %v6604, %v6606
  %v6608 = vrot.slane %v6588, %v6607
  %v6610 = vunpack.c.l.s4 286326784
  %v6611 = vunpack.c.0.s8 %v6610
  %v6612 = vlaneseq
  %v6613 = vshrl.u32 %v6612, 7
  %v6614 = vsub.s32 %v6611, %v6613
  %v6615 = vrot.slane %v6589, %v6614
  %v6617 = vunpack.c.l.s4 286326784
  %v6618 = vunpack.c.0.s8 %v6617
  %v6619 = vlaneseq
  %v6620 = vshrl.u32 %v6619, 7
  %v6621 = vsub.s32 %v6618, %v6620
  %v6622 = vrot.slane %v6590, %v6621
  %v6624 = vunpack.c.l.s4 286326784
  %v6625 = vunpack.c.0.s8 %v6624
  %v6626 = vlaneseq
  %v6627 = vshrl.u32 %v6626, 7
  %v6628 = vsub.s32 %v6625, %v6627
  %v6629 = vrot.slane %v6591, %v6628
  %v6631 = vunpack.c.l.s4 286326784
  %v6632 = vunpack.c.0.s8 %v6631
  %v6633 = vlaneseq
  %v6634 = vshrl.u32 %v6633, 7
  %v6635 = vsub.s32 %v6632, %v6634
  %v6636 = vrot.slane %v6592, %v6635
  %v6638 = vunpack.c.l.s4 286326784
  %v6639 = vunpack.c.0.s8 %v6638
  %v6640 = vlaneseq
  %v6641 = vshrl.u32 %v6640, 7
  %v6642 = vsub.s32 %v6639, %v6641
  %v6643 = vrot.slane %v6593, %v6642
  %v6645 = vunpack.c.l.s4 286326784
  %v6646 = vunpack.c.0.s8 %v6645
  %v6647 = vlaneseq
  %v6648 = vshrl.u32 %v6647, 7
  %v6649 = vsub.s32 %v6646, %v6648
  %v6650 = vrot.slane %v6594, %v6649
  %v6659 = vld [vmem:[%s3 + $0x4] sm:$0x8]
  %v6660 = vsel %vm3080, %v6601, %v6659
  %6661 = vst [vmem:[%s3 + $0x4] sm:$0x8] %v6660
  %v6662 = vld [vmem:[%s3 + $0xc] sm:$0x8]
  %v6663 = vsel %vm3080, %v6608, %v6662
  %6664 = vst [vmem:[%s3 + $0xc] sm:$0x8] %v6663
  %v6665 = vld [vmem:[%s3 + $0x14] sm:$0x8]
  %v6666 = vsel %vm3080, %v6615, %v6665
  %6667 = vst [vmem:[%s3 + $0x14] sm:$0x8] %v6666
  %v6668 = vld [vmem:[%s3 + $0x1c] sm:$0x8]
  %v6669 = vsel %vm3080, %v6622, %v6668
  %6670 = vst [vmem:[%s3 + $0x1c] sm:$0x8] %v6669
  %v6671 = vld [vmem:[%s3 + $0x24] sm:$0x8]
  %v6672 = vsel %vm3080, %v6629, %v6671
  %6673 = vst [vmem:[%s3 + $0x24] sm:$0x8] %v6672
  %v6674 = vld [vmem:[%s3 + $0x2c] sm:$0x8]
  %v6675 = vsel %vm3080, %v6636, %v6674
  %6676 = vst [vmem:[%s3 + $0x2c] sm:$0x8] %v6675
  %v6677 = vld [vmem:[%s3 + $0x34] sm:$0x8]
  %v6678 = vsel %vm3080, %v6643, %v6677
  %6679 = vst [vmem:[%s3 + $0x34] sm:$0x8] %v6678
  %v6680 = vld [vmem:[%s3 + $0x3c] sm:$0x8]
  %v6681 = vsel %vm3080, %v6650, %v6680
  %6682 = vst [vmem:[%s3 + $0x3c] sm:$0x8] %v6681
  %v6683 = vpack.c.bf16 %v6552, %v6552
  %v6686 = vunpack.c.l.s4 1966171168
  %v6687 = vunpack.c.0.s8 %v6686
  %v6688 = vlaneseq
  %v6689 = vshrl.u32 %v6688, 7
  %v6690 = vsub.s32 %v6687, %v6689
  %v6691 = vrot.slane %v6683, %v6690
  %v6692 = vcombine.high %v6691, %v6691
  %v6694 = vunpack.c.l.s4 1966171168
  %v6695 = vunpack.c.0.s8 %v6694
  %v6696 = vlaneseq
  %v6697 = vshrl.u32 %v6696, 7
  %v6698 = vsub.s32 %v6695, %v6697
  %v6699 = vrot.slane %v6691, %v6698
  %v6701 = vunpack.c.l.s4 1966171168
  %v6702 = vunpack.c.0.s8 %v6701
  %v6703 = vlaneseq
  %v6704 = vshrl.u32 %v6703, 7
  %v6705 = vsub.s32 %v6702, %v6704
  %v6706 = vrot.slane %v6692, %v6705
  %v6707 = vcombine.high %v6699, %v6699
  %v6708 = vcombine.high %v6706, %v6706
  %v6709 = vunpack.i.l.s16 %v6699
  %v6710 = vunpack.i.h.s16 %v6699
  %v6711 = vunpack.i.l.s16 %v6706
  %v6712 = vunpack.i.h.s16 %v6706
  %v6713 = vunpack.i.l.s16 %v6707
  %v6714 = vunpack.i.h.s16 %v6707
  %v6715 = vunpack.i.l.s16 %v6708
  %v6716 = vunpack.i.h.s16 %v6708
  %v6717 = vpack.i.b16 %v6709, %v6709
  %v6718 = vpack.i.b16 %v6710, %v6710
  %v6719 = vpack.i.b16 %v6711, %v6711
  %v6720 = vpack.i.b16 %v6712, %v6712
  %v6721 = vpack.i.b16 %v6713, %v6713
  %v6722 = vpack.i.b16 %v6714, %v6714
  %v6723 = vpack.i.b16 %v6715, %v6715
  %v6724 = vpack.i.b16 %v6716, %v6716
  %v6726 = vunpack.c.l.s4 286326784
  %v6727 = vunpack.c.0.s8 %v6726
  %v6728 = vlaneseq
  %v6729 = vshrl.u32 %v6728, 7
  %v6730 = vsub.s32 %v6727, %v6729
  %v6731 = vrot.slane %v6717, %v6730
  %v6733 = vunpack.c.l.s4 286326784
  %v6734 = vunpack.c.0.s8 %v6733
  %v6735 = vlaneseq
  %v6736 = vshrl.u32 %v6735, 7
  %v6737 = vsub.s32 %v6734, %v6736
  %v6738 = vrot.slane %v6718, %v6737
  %v6740 = vunpack.c.l.s4 286326784
  %v6741 = vunpack.c.0.s8 %v6740
  %v6742 = vlaneseq
  %v6743 = vshrl.u32 %v6742, 7
  %v6744 = vsub.s32 %v6741, %v6743
  %v6745 = vrot.slane %v6719, %v6744
  %v6747 = vunpack.c.l.s4 286326784
  %v6748 = vunpack.c.0.s8 %v6747
  %v6749 = vlaneseq
  %v6750 = vshrl.u32 %v6749, 7
  %v6751 = vsub.s32 %v6748, %v6750
  %v6752 = vrot.slane %v6720, %v6751
  %v6754 = vunpack.c.l.s4 286326784
  %v6755 = vunpack.c.0.s8 %v6754
  %v6756 = vlaneseq
  %v6757 = vshrl.u32 %v6756, 7
  %v6758 = vsub.s32 %v6755, %v6757
  %v6759 = vrot.slane %v6721, %v6758
  %v6761 = vunpack.c.l.s4 286326784
  %v6762 = vunpack.c.0.s8 %v6761
  %v6763 = vlaneseq
  %v6764 = vshrl.u32 %v6763, 7
  %v6765 = vsub.s32 %v6762, %v6764
  %v6766 = vrot.slane %v6722, %v6765
  %v6768 = vunpack.c.l.s4 286326784
  %v6769 = vunpack.c.0.s8 %v6768
  %v6770 = vlaneseq
  %v6771 = vshrl.u32 %v6770, 7
  %v6772 = vsub.s32 %v6769, %v6771
  %v6773 = vrot.slane %v6723, %v6772
  %v6775 = vunpack.c.l.s4 286326784
  %v6776 = vunpack.c.0.s8 %v6775
  %v6777 = vlaneseq
  %v6778 = vshrl.u32 %v6777, 7
  %v6779 = vsub.s32 %v6776, %v6778
  %v6780 = vrot.slane %v6724, %v6779
  %v6789 = vld [vmem:[%s4 + $0x4] sm:$0x8]
  %v6790 = vsel %vm3080, %v6731, %v6789
  %6791 = vst [vmem:[%s4 + $0x4] sm:$0x8] %v6790
  %v6792 = vld [vmem:[%s4 + $0xc] sm:$0x8]
  %v6793 = vsel %vm3080, %v6738, %v6792
  %6794 = vst [vmem:[%s4 + $0xc] sm:$0x8] %v6793
  %v6795 = vld [vmem:[%s4 + $0x14] sm:$0x8]
  %v6796 = vsel %vm3080, %v6745, %v6795
  %6797 = vst [vmem:[%s4 + $0x14] sm:$0x8] %v6796
  %v6798 = vld [vmem:[%s4 + $0x1c] sm:$0x8]
  %v6799 = vsel %vm3080, %v6752, %v6798
  %6800 = vst [vmem:[%s4 + $0x1c] sm:$0x8] %v6799
  %v6801 = vld [vmem:[%s4 + $0x24] sm:$0x8]
  %v6802 = vsel %vm3080, %v6759, %v6801
  %6803 = vst [vmem:[%s4 + $0x24] sm:$0x8] %v6802
  %v6804 = vld [vmem:[%s4 + $0x2c] sm:$0x8]
  %v6805 = vsel %vm3080, %v6766, %v6804
  %6806 = vst [vmem:[%s4 + $0x2c] sm:$0x8] %v6805
  %v6807 = vld [vmem:[%s4 + $0x34] sm:$0x8]
  %v6808 = vsel %vm3080, %v6773, %v6807
  %6809 = vst [vmem:[%s4 + $0x34] sm:$0x8] %v6808
  %v6810 = vld [vmem:[%s4 + $0x3c] sm:$0x8]
  %v6811 = vsel %vm3080, %v6780, %v6810
  %6812 = vst [vmem:[%s4 + $0x3c] sm:$0x8] %v6811
  %s6813 = scalar_lea.vmem %s0, 240
  %v6814 = vld [vmem:[%s6813] sm:$0xff]
  %v6815 = vld [vmem:[%s6813 + $0x8] sm:$0xff]
  %v6816 = vunpack.c.l.bf16 %v6814
  %v6817 = vunpack.c.h.bf16 %v6814
  %v6818 = vunpack.c.l.bf16 %v6815
  %v6819 = vunpack.c.h.bf16 %v6815
  %6820 = vmatprep.subr.mxu0 %v24
  %6821 = vmatpush1.msra.mxu0 %v23
  %6822 = vmatprep.subr.mxu0 %v28
  %6823 = vmatpush1.msra.mxu0 %v27
  %6824 = vmatprep.subr.mxu0 %v32
  %6825 = vmatpush1.msra.mxu0 %v31
  %6826 = vmatprep.subr.mxu0 %v36
  %6827 = vmatpush1.msra.mxu0 %v35
  %6828 = vmatprep.subr.mxu0 %v40
  %6829 = vmatpush1.msra.mxu0 %v39
  %6830 = vmatprep.subr.mxu0 %v44
  %6831 = vmatpush1.msra.mxu0 %v43
  %6832 = vmatprep.subr.mxu0 %v48
  %6833 = vmatpush1.msra.mxu0 %v47
  %6834 = vmatprep.subr.mxu0 %v52
  %6835 = vmatpush1.msra.mxu0 %v51
  %6836 = vmatprep.subr.mxu0 %v56
  %6837 = vmatpush1.msra.mxu0 %v55
  %6838 = vmatprep.subr.mxu0 %v60
  %6839 = vmatpush1.msra.mxu0 %v59
  %6840 = vmatprep.subr.mxu0 %v64
  %6841 = vmatpush1.msra.mxu0 %v63
  %6842 = vmatprep.subr.mxu0 %v68
  %6843 = vmatpush1.msra.mxu0 %v67
  %6844 = vmatprep.subr.mxu0 %v72
  %6845 = vmatpush1.msra.mxu0 %v71
  %6846 = vmatprep.subr.mxu0 %v76
  %6847 = vmatpush1.msra.mxu0 %v75
  %6848 = vmatprep.subr.mxu0 %v80
  %6849 = vmatpush1.msra.mxu0 %v79
  %6850 = vmatprep.subr.mxu0 %v84
  %6851 = vmatpush1.msra.mxu0 %v83
  %6852 = vmatprep.subr.mxu0 0.0
  %6853 = vmatpush1.msra.mxu0 0.0
  %6854 = vmatprep.subr.mxu0 0.0
  %6855 = vmatpush1.msra.mxu0 0.0
  %6856 = vmatprep.subr.mxu0 0.0
  %6857 = vmatpush1.msra.mxu0 0.0
  %6858 = vmatprep.subr.mxu0 0.0
  %6859 = vmatpush1.msra.mxu0 0.0
  %6860 = vmatprep.subr.mxu0 0.0
  %6861 = vmatpush1.msra.mxu0 0.0
  %6862 = vmatprep.subr.mxu0 0.0
  %6863 = vmatpush1.msra.mxu0 0.0
  %6864 = vmatprep.subr.mxu0 0.0
  %6865 = vmatpush1.msra.mxu0 0.0
  %6866 = vmatprep.subr.mxu0 0.0
  %6867 = vmatpush1.msra.mxu0 0.0
  %6868 = vmatprep.subr.mxu0 0.0
  %6869 = vmatpush1.msra.mxu0 0.0
  %6870 = vmatprep.subr.mxu0 0.0
  %6871 = vmatpush1.msra.mxu0 0.0
  %6872 = vmatprep.subr.mxu0 0.0
  %6873 = vmatpush1.msra.mxu0 0.0
  %6874 = vmatprep.subr.mxu0 0.0
  %6875 = vmatpush1.msra.mxu0 0.0
  %6876 = vmatprep.subr.mxu0 0.0
  %6877 = vmatpush1.msra.mxu0 0.0
  %6878 = vmatprep.subr.mxu0 0.0
  %6879 = vmatpush1.msra.mxu0 0.0
  %6880 = vmatprep.subr.mxu0 0.0
  %6881 = vmatpush1.msra.mxu0 0.0
  %6882 = vmatprep.subr.mxu0 0.0
  %6883 = vmatpush1.msra.mxu0 0.0
  %6884 = vmatprep.mubr.f32.mxu0 0.0
  %6885 = vmatmul.mubr.f32.gmra.mrb[0].mxu0 %v6551
  %v6886 = vpop.f32.mrb[0].mxu0
  %v6887 = vadd.f32 0.0, %v6886
  %v6888 = vpop.f32.mrb[0].mxu0
  %v6889 = vadd.f32 0.0, %v6888
  %6890 = vdwg.mxu0
  %6891 = vmatprep.subr.mxu0 %v26
  %6892 = vmatpush1.msra.mxu0 %v25
  %6893 = vmatprep.subr.mxu0 %v30
  %6894 = vmatpush1.msra.mxu0 %v29
  %6895 = vmatprep.subr.mxu0 %v34
  %6896 = vmatpush1.msra.mxu0 %v33
  %6897 = vmatprep.subr.mxu0 %v38
  %6898 = vmatpush1.msra.mxu0 %v37
  %6899 = vmatprep.subr.mxu0 %v42
  %6900 = vmatpush1.msra.mxu0 %v41
  %6901 = vmatprep.subr.mxu0 %v46
  %6902 = vmatpush1.msra.mxu0 %v45
  %6903 = vmatprep.subr.mxu0 %v50
  %6904 = vmatpush1.msra.mxu0 %v49
  %6905 = vmatprep.subr.mxu0 %v54
  %6906 = vmatpush1.msra.mxu0 %v53
  %6907 = vmatprep.subr.mxu0 %v58
  %6908 = vmatpush1.msra.mxu0 %v57
  %6909 = vmatprep.subr.mxu0 %v62
  %6910 = vmatpush1.msra.mxu0 %v61
  %6911 = vmatprep.subr.mxu0 %v66
  %6912 = vmatpush1.msra.mxu0 %v65
  %6913 = vmatprep.subr.mxu0 %v70
  %6914 = vmatpush1.msra.mxu0 %v69
  %6915 = vmatprep.subr.mxu0 %v74
  %6916 = vmatpush1.msra.mxu0 %v73
  %6917 = vmatprep.subr.mxu0 %v78
  %6918 = vmatpush1.msra.mxu0 %v77
  %6919 = vmatprep.subr.mxu0 %v82
  %6920 = vmatpush1.msra.mxu0 %v81
  %6921 = vmatprep.subr.mxu0 %v86
  %6922 = vmatpush1.msra.mxu0 %v85
  %6923 = vmatprep.subr.mxu0 0.0
  %6924 = vmatpush1.msra.mxu0 0.0
  %6925 = vmatprep.subr.mxu0 0.0
  %6926 = vmatpush1.msra.mxu0 0.0
  %6927 = vmatprep.subr.mxu0 0.0
  %6928 = vmatpush1.msra.mxu0 0.0
  %6929 = vmatprep.subr.mxu0 0.0
  %6930 = vmatpush1.msra.mxu0 0.0
  %6931 = vmatprep.subr.mxu0 0.0
  %6932 = vmatpush1.msra.mxu0 0.0
  %6933 = vmatprep.subr.mxu0 0.0
  %6934 = vmatpush1.msra.mxu0 0.0
  %6935 = vmatprep.subr.mxu0 0.0
  %6936 = vmatpush1.msra.mxu0 0.0
  %6937 = vmatprep.subr.mxu0 0.0
  %6938 = vmatpush1.msra.mxu0 0.0
  %6939 = vmatprep.subr.mxu0 0.0
  %6940 = vmatpush1.msra.mxu0 0.0
  %6941 = vmatprep.subr.mxu0 0.0
  %6942 = vmatpush1.msra.mxu0 0.0
  %6943 = vmatprep.subr.mxu0 0.0
  %6944 = vmatpush1.msra.mxu0 0.0
  %6945 = vmatprep.subr.mxu0 0.0
  %6946 = vmatpush1.msra.mxu0 0.0
  %6947 = vmatprep.subr.mxu0 0.0
  %6948 = vmatpush1.msra.mxu0 0.0
  %6949 = vmatprep.subr.mxu0 0.0
  %6950 = vmatpush1.msra.mxu0 0.0
  %6951 = vmatprep.subr.mxu0 0.0
  %6952 = vmatpush1.msra.mxu0 0.0
  %6953 = vmatprep.subr.mxu0 0.0
  %6954 = vmatpush1.msra.mxu0 0.0
  %6955 = vmatprep.mubr.f32.mxu0 0.0
  %6956 = vmatmul.mubr.f32.gmra.mrb[0].mxu0 %v6551
  %v6957 = vpop.f32.mrb[0].mxu0
  %v6958 = vadd.f32 0.0, %v6957
  %v6959 = vpop.f32.mrb[0].mxu0
  %v6960 = vadd.f32 0.0, %v6959
  %6961 = vdwg.mxu0
  %v6962 = vadd.f32 %v6816, %v6887
  %v6963 = vadd.f32 %v6817, %v6889
  %v6964 = vadd.f32 %v6818, %v6958
  %v6965 = vadd.f32 %v6819, %v6960
  %v6966 = vxor.u32 %v6962, 2147483648
  %v6967 = vmul.f32 %v6966, 1.442695
  %v6968 = vpow.pop %v6967
  %v6969 = vadd.f32 %v6968, 1.0
  %v6970 = vrcp.pop %v6969
  %v6971 = vmul.f32 1.0, %v6970
  %v6972 = vxor.u32 %v6963, 2147483648
  %v6973 = vmul.f32 %v6972, 1.442695
  %v6974 = vpow.pop %v6973
  %v6975 = vadd.f32 %v6974, 1.0
  %v6976 = vrcp.pop %v6975
  %v6977 = vmul.f32 1.0, %v6976
  %v6978 = vtanh.pop %v6964
  %v6979 = vxor.u32 %v6965, 2147483648
  %v6980 = vmul.f32 %v6979, 1.442695
  %v6981 = vpow.pop %v6980
  %v6982 = vadd.f32 %v6981, 1.0
  %v6983 = vrcp.pop %v6982
  %v6984 = vmul.f32 1.0, %v6983
  %v6985 = vmul.f32 %v6977, %v6552
  %v6986 = vmul.f32 %v6971, %v6978
  %v6987 = vadd.f32 %v6985, %v6986
  %v6988 = vtanh.pop %v6987
  %v6989 = vmul.f32 %v6984, %v6988
  %s6990 = sadd.s32 %s89, 15
  %v6991 = vstv %s6990
  %vm6992 = vcmp.lt.s32.totalorder %v6991, %v22
  %v6993 = vsel %vm6992, 1, 0
  %6994 = vset.pattern.permute.xlu0 0
  %6995 = vperm.xlu0 %6994, %v6993
  %v6996 = vpop.permute.xlu0 %6995
  %vm6997 = vcmp.eq.s32.totalorder %v6996, 1
  %v6998 = vsel %vm6997, %v6989, %v6551
  %v6999 = vsel %vm6997, %v6987, %v6552
  %v7000 = vpack.c.bf16 %v6998, %v6998
  %v7003 = vunpack.c.l.s4 1966171168
  %v7004 = vunpack.c.0.s8 %v7003
  %v7005 = vlaneseq
  %v7006 = vshrl.u32 %v7005, 7
  %v7007 = vsub.s32 %v7004, %v7006
  %v7008 = vrot.slane %v7000, %v7007
  %v7009 = vcombine.high %v7008, %v7008
  %v7011 = vunpack.c.l.s4 1966171168
  %v7012 = vunpack.c.0.s8 %v7011
  %v7013 = vlaneseq
  %v7014 = vshrl.u32 %v7013, 7
  %v7015 = vsub.s32 %v7012, %v7014
  %v7016 = vrot.slane %v7008, %v7015
  %v7018 = vunpack.c.l.s4 1966171168
  %v7019 = vunpack.c.0.s8 %v7018
  %v7020 = vlaneseq
  %v7021 = vshrl.u32 %v7020, 7
  %v7022 = vsub.s32 %v7019, %v7021
  %v7023 = vrot.slane %v7009, %v7022
  %v7024 = vcombine.high %v7016, %v7016
  %v7025 = vcombine.high %v7023, %v7023
  %v7026 = vunpack.i.l.s16 %v7016
  %v7027 = vunpack.i.h.s16 %v7016
  %v7028 = vunpack.i.l.s16 %v7023
  %v7029 = vunpack.i.h.s16 %v7023
  %v7030 = vunpack.i.l.s16 %v7024
  %v7031 = vunpack.i.h.s16 %v7024
  %v7032 = vunpack.i.l.s16 %v7025
  %v7033 = vunpack.i.h.s16 %v7025
  %v7034 = vpack.i.b16 %v7026, %v7026
  %v7035 = vpack.i.b16 %v7027, %v7027
  %v7036 = vpack.i.b16 %v7028, %v7028
  %v7037 = vpack.i.b16 %v7029, %v7029
  %v7038 = vpack.i.b16 %v7030, %v7030
  %v7039 = vpack.i.b16 %v7031, %v7031
  %v7040 = vpack.i.b16 %v7032, %v7032
  %v7041 = vpack.i.b16 %v7033, %v7033
  %v7043 = vunpack.c.l.s4 286326784
  %v7044 = vunpack.c.0.s8 %v7043
  %v7045 = vlaneseq
  %v7046 = vshrl.u32 %v7045, 7
  %v7047 = vsub.s32 %v7044, %v7046
  %v7048 = vrot.slane %v7034, %v7047
  %v7050 = vunpack.c.l.s4 286326784
  %v7051 = vunpack.c.0.s8 %v7050
  %v7052 = vlaneseq
  %v7053 = vshrl.u32 %v7052, 7
  %v7054 = vsub.s32 %v7051, %v7053
  %v7055 = vrot.slane %v7035, %v7054
  %v7057 = vunpack.c.l.s4 286326784
  %v7058 = vunpack.c.0.s8 %v7057
  %v7059 = vlaneseq
  %v7060 = vshrl.u32 %v7059, 7
  %v7061 = vsub.s32 %v7058, %v7060
  %v7062 = vrot.slane %v7036, %v7061
  %v7064 = vunpack.c.l.s4 286326784
  %v7065 = vunpack.c.0.s8 %v7064
  %v7066 = vlaneseq
  %v7067 = vshrl.u32 %v7066, 7
  %v7068 = vsub.s32 %v7065, %v7067
  %v7069 = vrot.slane %v7037, %v7068
  %v7071 = vunpack.c.l.s4 286326784
  %v7072 = vunpack.c.0.s8 %v7071
  %v7073 = vlaneseq
  %v7074 = vshrl.u32 %v7073, 7
  %v7075 = vsub.s32 %v7072, %v7074
  %v7076 = vrot.slane %v7038, %v7075
  %v7078 = vunpack.c.l.s4 286326784
  %v7079 = vunpack.c.0.s8 %v7078
  %v7080 = vlaneseq
  %v7081 = vshrl.u32 %v7080, 7
  %v7082 = vsub.s32 %v7079, %v7081
  %v7083 = vrot.slane %v7039, %v7082
  %v7085 = vunpack.c.l.s4 286326784
  %v7086 = vunpack.c.0.s8 %v7085
  %v7087 = vlaneseq
  %v7088 = vshrl.u32 %v7087, 7
  %v7089 = vsub.s32 %v7086, %v7088
  %v7090 = vrot.slane %v7040, %v7089
  %v7092 = vunpack.c.l.s4 286326784
  %v7093 = vunpack.c.0.s8 %v7092
  %v7094 = vlaneseq
  %v7095 = vshrl.u32 %v7094, 7
  %v7096 = vsub.s32 %v7093, %v7095
  %v7097 = vrot.slane %v7041, %v7096
  %v7106 = vld [vmem:[%s3 + $0x4] sm:$0x8]
  %v7107 = vsel %vm3529, %v7048, %v7106
  %7108 = vst [vmem:[%s3 + $0x4] sm:$0x8] %v7107
  %v7109 = vld [vmem:[%s3 + $0xc] sm:$0x8]
  %v7110 = vsel %vm3529, %v7055, %v7109
  %7111 = vst [vmem:[%s3 + $0xc] sm:$0x8] %v7110
  %v7112 = vld [vmem:[%s3 + $0x14] sm:$0x8]
  %v7113 = vsel %vm3529, %v7062, %v7112
  %7114 = vst [vmem:[%s3 + $0x14] sm:$0x8] %v7113
  %v7115 = vld [vmem:[%s3 + $0x1c] sm:$0x8]
  %v7116 = vsel %vm3529, %v7069, %v7115
  %7117 = vst [vmem:[%s3 + $0x1c] sm:$0x8] %v7116
  %v7118 = vld [vmem:[%s3 + $0x24] sm:$0x8]
  %v7119 = vsel %vm3529, %v7076, %v7118
  %7120 = vst [vmem:[%s3 + $0x24] sm:$0x8] %v7119
  %v7121 = vld [vmem:[%s3 + $0x2c] sm:$0x8]
  %v7122 = vsel %vm3529, %v7083, %v7121
  %7123 = vst [vmem:[%s3 + $0x2c] sm:$0x8] %v7122
  %v7124 = vld [vmem:[%s3 + $0x34] sm:$0x8]
  %v7125 = vsel %vm3529, %v7090, %v7124
  %7126 = vst [vmem:[%s3 + $0x34] sm:$0x8] %v7125
  %v7127 = vld [vmem:[%s3 + $0x3c] sm:$0x8]
  %v7128 = vsel %vm3529, %v7097, %v7127
  %7129 = vst [vmem:[%s3 + $0x3c] sm:$0x8] %v7128
  %v7130 = vpack.c.bf16 %v6999, %v6999
  %v7133 = vunpack.c.l.s4 1966171168
  %v7134 = vunpack.c.0.s8 %v7133
  %v7135 = vlaneseq
  %v7136 = vshrl.u32 %v7135, 7
  %v7137 = vsub.s32 %v7134, %v7136
  %v7138 = vrot.slane %v7130, %v7137
  %v7139 = vcombine.high %v7138, %v7138
  %v7141 = vunpack.c.l.s4 1966171168
  %v7142 = vunpack.c.0.s8 %v7141
  %v7143 = vlaneseq
  %v7144 = vshrl.u32 %v7143, 7
  %v7145 = vsub.s32 %v7142, %v7144
  %v7146 = vrot.slane %v7138, %v7145
  %v7148 = vunpack.c.l.s4 1966171168
  %v7149 = vunpack.c.0.s8 %v7148
  %v7150 = vlaneseq
  %v7151 = vshrl.u32 %v7150, 7
  %v7152 = vsub.s32 %v7149, %v7151
  %v7153 = vrot.slane %v7139, %v7152
  %v7154 = vcombine.high %v7146, %v7146
  %v7155 = vcombine.high %v7153, %v7153
  %v7156 = vunpack.i.l.s16 %v7146
  %v7157 = vunpack.i.h.s16 %v7146
  %v7158 = vunpack.i.l.s16 %v7153
  %v7159 = vunpack.i.h.s16 %v7153
  %v7160 = vunpack.i.l.s16 %v7154
  %v7161 = vunpack.i.h.s16 %v7154
  %v7162 = vunpack.i.l.s16 %v7155
  %v7163 = vunpack.i.h.s16 %v7155
  %v7164 = vpack.i.b16 %v7156, %v7156
  %v7165 = vpack.i.b16 %v7157, %v7157
  %v7166 = vpack.i.b16 %v7158, %v7158
  %v7167 = vpack.i.b16 %v7159, %v7159
  %v7168 = vpack.i.b16 %v7160, %v7160
  %v7169 = vpack.i.b16 %v7161, %v7161
  %v7170 = vpack.i.b16 %v7162, %v7162
  %v7171 = vpack.i.b16 %v7163, %v7163
  %v7173 = vunpack.c.l.s4 286326784
  %v7174 = vunpack.c.0.s8 %v7173
  %v7175 = vlaneseq
  %v7176 = vshrl.u32 %v7175, 7
  %v7177 = vsub.s32 %v7174, %v7176
  %v7178 = vrot.slane %v7164, %v7177
  %v7180 = vunpack.c.l.s4 286326784
  %v7181 = vunpack.c.0.s8 %v7180
  %v7182 = vlaneseq
  %v7183 = vshrl.u32 %v7182, 7
  %v7184 = vsub.s32 %v7181, %v7183
  %v7185 = vrot.slane %v7165, %v7184
  %v7187 = vunpack.c.l.s4 286326784
  %v7188 = vunpack.c.0.s8 %v7187
  %v7189 = vlaneseq
  %v7190 = vshrl.u32 %v7189, 7
  %v7191 = vsub.s32 %v7188, %v7190
  %v7192 = vrot.slane %v7166, %v7191
  %v7194 = vunpack.c.l.s4 286326784
  %v7195 = vunpack.c.0.s8 %v7194
  %v7196 = vlaneseq
  %v7197 = vshrl.u32 %v7196, 7
  %v7198 = vsub.s32 %v7195, %v7197
  %v7199 = vrot.slane %v7167, %v7198
  %v7201 = vunpack.c.l.s4 286326784
  %v7202 = vunpack.c.0.s8 %v7201
  %v7203 = vlaneseq
  %v7204 = vshrl.u32 %v7203, 7
  %v7205 = vsub.s32 %v7202, %v7204
  %v7206 = vrot.slane %v7168, %v7205
  %v7208 = vunpack.c.l.s4 286326784
  %v7209 = vunpack.c.0.s8 %v7208
  %v7210 = vlaneseq
  %v7211 = vshrl.u32 %v7210, 7
  %v7212 = vsub.s32 %v7209, %v7211
  %v7213 = vrot.slane %v7169, %v7212
  %v7215 = vunpack.c.l.s4 286326784
  %v7216 = vunpack.c.0.s8 %v7215
  %v7217 = vlaneseq
  %v7218 = vshrl.u32 %v7217, 7
  %v7219 = vsub.s32 %v7216, %v7218
  %v7220 = vrot.slane %v7170, %v7219
  %v7222 = vunpack.c.l.s4 286326784
  %v7223 = vunpack.c.0.s8 %v7222
  %v7224 = vlaneseq
  %v7225 = vshrl.u32 %v7224, 7
  %v7226 = vsub.s32 %v7223, %v7225
  %v7227 = vrot.slane %v7171, %v7226
  %v7236 = vld [vmem:[%s4 + $0x4] sm:$0x8]
  %v7237 = vsel %vm3529, %v7178, %v7236
  %7238 = vst [vmem:[%s4 + $0x4] sm:$0x8] %v7237
  %v7239 = vld [vmem:[%s4 + $0xc] sm:$0x8]
  %v7240 = vsel %vm3529, %v7185, %v7239
  %7241 = vst [vmem:[%s4 + $0xc] sm:$0x8] %v7240
  %v7242 = vld [vmem:[%s4 + $0x14] sm:$0x8]
  %v7243 = vsel %vm3529, %v7192, %v7242
  %7244 = vst [vmem:[%s4 + $0x14] sm:$0x8] %v7243
  %v7245 = vld [vmem:[%s4 + $0x1c] sm:$0x8]
  %v7246 = vsel %vm3529, %v7199, %v7245
  %7247 = vst [vmem:[%s4 + $0x1c] sm:$0x8] %v7246
  %v7248 = vld [vmem:[%s4 + $0x24] sm:$0x8]
  %v7249 = vsel %vm3529, %v7206, %v7248
  %7250 = vst [vmem:[%s4 + $0x24] sm:$0x8] %v7249
  %v7251 = vld [vmem:[%s4 + $0x2c] sm:$0x8]
  %v7252 = vsel %vm3529, %v7213, %v7251
  %7253 = vst [vmem:[%s4 + $0x2c] sm:$0x8] %v7252
  %v7254 = vld [vmem:[%s4 + $0x34] sm:$0x8]
  %v7255 = vsel %vm3529, %v7220, %v7254
  %7256 = vst [vmem:[%s4 + $0x34] sm:$0x8] %v7255
  %v7257 = vld [vmem:[%s4 + $0x3c] sm:$0x8]
  %v7258 = vsel %vm3529, %v7227, %v7257
  %7259 = vst [vmem:[%s4 + $0x3c] sm:$0x8] %v7258
  %7260 = vst [vmem:[#allocation2] sm:$0xff] %v6998
  %7261 = vst [vmem:[#allocation3] sm:$0xff] %v6999
  // Predicated region
  $region18: #{encoder_forward.1} parent=0 // pred_check
    _
  $region19: #{encoder_forward.1} parent=0 // pred_check_branch
    %7263 = sbr.rel (0) target = $region21
  $region20: #{encoder_forward.1} parent=0 // pred_region
    _
  $region21: #{encoder_forward.1} parent=0 // pred_fallthru
    _
  // Predicated region
  $region22: #{encoder_forward.1} parent=0 // pred_check
    _
  $region23: #{encoder_forward.1} parent=0 // pred_check_branch
    %7265 = sbr.rel (0) target = $region25
  $region24: #{encoder_forward.1} parent=0 // pred_region
    _
  $region25: #{encoder_forward.1} parent=0 // pred_fallthru
    _
  // Predicated region
  $region26: #{encoder_forward.1} parent=0 // pred_check
    _
  $region27: #{encoder_forward.1} parent=0 // pred_check_branch
    %7267 = sbr.rel (0) target = $region29
  $region28: #{encoder_forward.1} parent=0 // pred_region
    _
  $region29: #{encoder_forward.1} parent=0 // pred_fallthru
    _
  // Predicated region
  $region30: #{encoder_forward.1} parent=0 // pred_check
    _
  $region31: #{encoder_forward.1} parent=0 // pred_check_branch
    %7269 = sbr.rel (0) target = $region33
  $region32: #{encoder_forward.1} parent=0 // pred_region
    _
  $region33: #{encoder_forward.1} parent=0 // pred_fallthru
    _

</llo_original>
